<compile_context>
chip_gen: v7x
topology: tpu7x:2x2x1
jax: 0.10.0
libtpu: 0.0.40
codegen_flags: <defaults>
</compile_context>

<pallas_src>
import functools

import jax
import jax.numpy as jnp
from jax.experimental import pallas as pl
from jax.experimental.pallas import tpu as pltpu

EPS = 1e-5                       # nn.BatchNorm2d default eps
_VMEM_LIMIT = 32 * 1024 * 1024   # safe on v5e / v6e / v7x; tiles sized well below it


def _cdiv(a, b):
    return -(-a // b)


def _round_up(a, b):
    return _cdiv(a, b) * b


# ---------------------------------------------------------------- kernels ---


def _conv_matmul_kernel(xph_ref, w_ref, b_ref, mask_ref,
                        z_ref, psum_ref, psq_ref, lhs_ref,
                        *, taps, tile_m, cin, precision):
    """One (image, row-tile) step of a 3x3 conv as a single K=9*Cin matmul.

    Taps are gathered with contiguous dynamic slices of the flattened
    phase-decomposed padded input (no im2col tensor ever exists in HBM) and
    packed into a VMEM scratch; per-channel sum / sum-of-squares of the valid
    rows are emitted so BatchNorm stats can be finalized across all tiles.
    """
    m0 = pl.program_id(1) * tile_m
    for t, (p, off) in enumerate(taps):          # statically unrolled (9 taps)
        lhs_ref[:, t * cin:(t + 1) * cin] = (
            xph_ref[0, p, pl.ds(m0 + off, tile_m), :])
    lhs = lhs_ref[...].astype(w_ref.dtype)       # bf16 MXU operands (f32 acc)
    acc = jnp.dot(lhs, w_ref[...], preferred_element_type=jnp.float32,
                  precision=precision)
    acc = acc + b_ref[...]                       # conv bias (f32)
    masked = acc * mask_ref[...]                 # zero garbage cols / pad rows
    psum_ref[...] = jnp.sum(masked, axis=0).reshape(1, 1, 1, -1)
    psq_ref[...] = jnp.sum(masked * acc, axis=0).reshape(1, 1, 1, -1)
    z_ref[0] = acc


def _bn_scale_shift(psum, psq, gamma, beta, inv_count):
    """Finalize batch statistics (one-pass E[x^2]-mean^2) -> scale, shift."""
    tot = jnp.sum(psum, axis=(0, 1, 2))
    totsq = jnp.sum(psq, axis=(0, 1, 2))
    mean = tot * inv_count
    var = jnp.maximum(totsq * inv_count - mean * mean, 0.0)
    scale = gamma * jax.lax.rsqrt(var + EPS)
    shift = beta - mean * scale
    return scale, shift


def _bn_relu_kernel(z_ref, psum_ref, psq_ref, g_ref, b_ref, y_ref, *, inv_count):
    scale, shift = _bn_scale_shift(psum_ref[...], psq_ref[...],
                                   g_ref[0], b_ref[0], inv_count)
    y_ref[0] = jnp.maximum(z_ref[0] * scale + shift, 0.0)


def _bn_skip_relu_kernel(*refs, inv_count, has_proj, precision):
    if has_proj:
        z_ref, psum_ref, psq_ref, g_ref, b_ref, xres_ref, w3_ref, b3_ref, o_ref = refs
    else:
        z_ref, psum_ref, psq_ref, g_ref, b_ref, xres_ref, o_ref = refs
    scale, shift = _bn_scale_shift(psum_ref[...], psq_ref[...],
                                   g_ref[0], b_ref[0], inv_count)
    y = z_ref[0] * scale + shift
    if has_proj:
        res = jnp.dot(xres_ref[0], w3_ref[...],
                      preferred_element_type=jnp.float32, precision=precision)
        res = res + b3_ref[...]
    else:
        res = xres_ref[0]                        # identity skip: direct add
    o_ref[0] = jnp.maximum(y + res, 0.0)


# ------------------------------------------------------------------- glue ---


def _prep_conv_input(x_nhwc, stride, tile_req, op_dtype):
    """Phase-decomposed, flattened, zero-padded conv input (no duplication).

    Tap (ky,kx) of the 3x3 window at stride s is a contiguous row-slice of
    phase (ky%s, kx%s) at static offset (ky//s)*Wq + kx//s in the flattened
    (row-major) phase array, where outputs are indexed "wide" as oy*Wq + ox.
    Columns ox >= Wo of each wide row are garbage and masked / discarded.
    """
    del op_dtype  # tap gather kept in f32 (dynamic sublane slicing); matmul casts to bf16
    n, h, w, c = x_nhwc.shape
    s = stride
    ho = (h - 1) // s + 1
    wo = (w - 1) // s + 1
    hq = _cdiv(h + 2, s)
    wq = _cdiv(w + 2, s)
    xpad = jnp.pad(x_nhwc, ((0, 0), (1, 1), (1, 1), (0, 0)))
    phases = []
    for py in range(s):
        for px in range(s):
            ph = xpad[:, py::s, px::s, :]
            ph = jnp.pad(ph, ((0, 0), (0, hq - ph.shape[1]),
                              (0, wq - ph.shape[2]), (0, 0)))
            phases.append(ph.reshape(n, hq * wq, c))
    xph = jnp.stack(phases, axis=1)                        # (N, s*s, Hq*Wq, C)

    m_wide = ho * wq
    n_tiles = _cdiv(m_wide, tile_req)
    tile_m = _round_up(_cdiv(m_wide, n_tiles), 8)          # sublane aligned
    m_pad = tile_m * n_tiles
    max_off = (2 // s) * wq + (2 // s)
    l_pad = m_pad + max_off
    cur = xph.shape[2]
    if cur < l_pad:
        xph = jnp.pad(xph, ((0, 0), (0, 0), (0, l_pad - cur), (0, 0)))
    else:
        xph = xph[:, :, :l_pad, :]
    xph = xph.astype(jnp.float32)

    taps = tuple(((ky % s) * s + (kx % s), (ky // s) * wq + (kx // s))
                 for ky in range(3) for kx in range(3))

    m_idx = jnp.arange(m_pad)
    mask = ((m_idx < m_wide) & (m_idx % wq < wo)).astype(jnp.float32)
    mask = mask.reshape(m_pad, 1)

    geom = dict(n=n, ho=ho, wo=wo, wq=wq, m_wide=m_wide, m_pad=m_pad,
                tile_m=tile_m, n_tiles=n_tiles)
    return xph, taps, mask, geom


def _conv_bias_stats(xph, w_kc, bias, mask, taps, geom, precision):
    n, n_tiles, tile_m, m_pad = geom["n"], geom["n_tiles"], geom["tile_m"], geom["m_pad"]
    nph, l_pad, cin = xph.shape[1], xph.shape[2], xph.shape[3]
    k, cout = w_kc.shape
    kernel = functools.partial(_conv_matmul_kernel, taps=taps, tile_m=tile_m,
                               cin=cin, precision=precision)
    # Grid: images outer, row-tiles inner, so the (tiny) per-image flat input
    # block stays VMEM-resident across its row tiles.  NOTE: tile_m is derived
    # from tile_req and should be sized against the scoped VMEM budget
    # (halve for v7x's 64 MiB physical VMEM).
    return pl.pallas_call(
        kernel,
        grid=(n, n_tiles),
        in_specs=[
            pl.BlockSpec((1, nph, l_pad, cin), lambda i, j: (i, 0, 0, 0)),
            pl.BlockSpec((k, cout), lambda i, j: (0, 0)),
            pl.BlockSpec((1, cout), lambda i, j: (0, 0)),
            pl.BlockSpec((tile_m, 1), lambda i, j: (j, 0)),
        ],
        out_specs=(
            pl.BlockSpec((1, tile_m, cout), lambda i, j: (i, j, 0)),
            pl.BlockSpec((1, 1, 1, cout), lambda i, j: (i, j, 0, 0)),
            pl.BlockSpec((1, 1, 1, cout), lambda i, j: (i, j, 0, 0)),
        ),
        out_shape=(
            jax.ShapeDtypeStruct((n, m_pad, cout), jnp.float32),
            jax.ShapeDtypeStruct((n, n_tiles, 1, cout), jnp.float32),
            jax.ShapeDtypeStruct((n, n_tiles, 1, cout), jnp.float32),
        ),
        scratch_shapes=[pltpu.VMEM((tile_m, k), jnp.float32)],
        compiler_params=pltpu.CompilerParams(
            dimension_semantics=("parallel", "parallel"),
            vmem_limit_bytes=_VMEM_LIMIT),
    )(xph, w_kc, bias, mask)


def _bn_relu(z, psum, psq, gamma, beta, geom, count):
    n, n_tiles, tile_m, m_pad = geom["n"], geom["n_tiles"], geom["tile_m"], geom["m_pad"]
    cout = z.shape[-1]
    kernel = functools.partial(_bn_relu_kernel, inv_count=1.0 / count)
    tile_spec = pl.BlockSpec((1, tile_m, cout), lambda i, j: (i, j, 0))
    stat_spec = pl.BlockSpec((n, n_tiles, 1, cout), lambda i, j: (0, 0, 0, 0))
    vec_spec = pl.BlockSpec((1, cout), lambda i, j: (0, 0))
    return pl.pallas_call(
        kernel,
        grid=(n, n_tiles),
        in_specs=[tile_spec, stat_spec, stat_spec, vec_spec, vec_spec],
        out_specs=tile_spec,
        out_shape=jax.ShapeDtypeStruct((n, m_pad, cout), jnp.float32),
        compiler_params=pltpu.CompilerParams(
            dimension_semantics=("parallel", "parallel"),
            vmem_limit_bytes=_VMEM_LIMIT),
    )(z, psum, psq, gamma, beta)


def _bn_skip_relu(z, psum, psq, gamma, beta, xres, w3, b3, geom, count, precision):
    n, n_tiles, tile_m, m_pad = geom["n"], geom["n_tiles"], geom["tile_m"], geom["m_pad"]
    cout = z.shape[-1]
    cres = xres.shape[-1]
    has_proj = w3 is not None
    kernel = functools.partial(_bn_skip_relu_kernel, inv_count=1.0 / count,
                               has_proj=has_proj, precision=precision)
    tile_spec = pl.BlockSpec((1, tile_m, cout), lambda i, j: (i, j, 0))
    stat_spec = pl.BlockSpec((n, n_tiles, 1, cout), lambda i, j: (0, 0, 0, 0))
    vec_spec = pl.BlockSpec((1, cout), lambda i, j: (0, 0))
    res_spec = pl.BlockSpec((1, tile_m, cres), lambda i, j: (i, j, 0))
    in_specs = [tile_spec, stat_spec, stat_spec, vec_spec, vec_spec, res_spec]
    args = [z, psum, psq, gamma, beta, xres]
    if has_proj:
        in_specs += [pl.BlockSpec((cres, cout), lambda i, j: (0, 0)), vec_spec]
        args += [w3, b3]
    return pl.pallas_call(
        kernel,
        grid=(n, n_tiles),
        in_specs=in_specs,
        out_specs=tile_spec,
        out_shape=jax.ShapeDtypeStruct((n, m_pad, cout), jnp.float32),
        compiler_params=pltpu.CompilerParams(
            dimension_semantics=("parallel", "parallel"),
            vmem_limit_bytes=_VMEM_LIMIT),
    )(*args)


def _widen_rows(a_nhwc, wq, m_pad, dtype):
    """Lay a (N, Ho, Wo, C) tensor out in the same 'wide' row indexing m=oy*Wq+ox."""
    n, ho, wo, c = a_nhwc.shape
    aw = jnp.pad(a_nhwc, ((0, 0), (0, 0), (0, wq - wo), (0, 0)))
    af = aw.reshape(n, ho * wq, c)
    af = jnp.pad(af, ((0, 0), (0, m_pad - ho * wq), (0, 0)))
    return af.astype(dtype)


def _unwiden(a_flat, geom, cout):
    n, ho, wo, wq, m_wide = geom["n"], geom["ho"], geom["wo"], geom["wq"], geom["m_wide"]
    return a_flat[:, :m_wide, :].reshape(n, ho, wq, cout)[:, :, :wo, :]


def residual_forward(x_nchw, params, *, use_1x1conv, stride,
                     compute_dtype=jnp.bfloat16, tile_rows=256):
    x = jnp.transpose(x_nchw, (0, 2, 3, 1)).astype(jnp.float32)   # NCHW -> NHWC
    n, h, w, cin = x.shape
    cout = params["w1"].shape[0]
    f32 = jnp.float32
    op_dtype = jnp.dtype(compute_dtype)
    precision = (jax.lax.Precision.HIGHEST
                 if op_dtype == jnp.dtype(jnp.float32) else None)

    # PyTorch conv weight (Cout, Cin, 3, 3) -> (9*Cin, Cout), tap order (ky, kx)
    w1 = jnp.transpose(params["w1"], (2, 3, 1, 0)).reshape(9 * cin, cout).astype(op_dtype)
    w2 = jnp.transpose(params["w2"], (2, 3, 1, 0)).reshape(9 * cout, cout).astype(op_dtype)
    b1 = params["b1"].reshape(1, cout).astype(f32)
    b2 = params["b2"].reshape(1, cout).astype(f32)
    g1 = params["g1"].reshape(1, cout).astype(f32)
    be1 = params["be1"].reshape(1, cout).astype(f32)
    g2 = params["g2"].reshape(1, cout).astype(f32)
    be2 = params["be2"].reshape(1, cout).astype(f32)

    # ---- conv1 (+bias, partial BN stats), then BN1+ReLU ----
    xph1, taps1, mask1, geo1 = _prep_conv_input(x, stride, tile_rows, op_dtype)
    z1, ps1, pq1 = _conv_bias_stats(xph1, w1, b1, mask1, taps1, geo1, precision)
    count1 = float(n * geo1["ho"] * geo1["wo"])
    y1w = _bn_relu(z1, ps1, pq1, g1, be1, geo1, count1)
    y1 = _unwiden(y1w, geo1, cout)            # (N, Ho, Wo, Cout), valid pixels

    # ---- conv2 (stride 1) ----
    xph2, taps2, mask2, geo2 = _prep_conv_input(y1, 1, tile_rows, op_dtype)
    z2, ps2, pq2 = _conv_bias_stats(xph2, w2, b2, mask2, taps2, geo2, precision)
    count2 = float(n * geo2["ho"] * geo2["wo"])

    # ---- skip branch ----
    ho, wo = geo1["ho"], geo1["wo"]
    if use_1x1conv:
        xs = x[:, ::stride, ::stride, :][:, :ho, :wo, :]
        xres = _widen_rows(xs, geo2["wq"], geo2["m_pad"], op_dtype)
        w3 = params["w3"].reshape(cout, cin).T.astype(op_dtype)   # (Cin, Cout)
        b3 = params["b3"].reshape(1, cout).astype(f32)
    else:
        assert cin == cout and stride == 1, "identity skip needs matching shapes"
        xres = _widen_rows(x, geo2["wq"], geo2["m_pad"], f32)     # exact identity add
        w3 = b3 = None

    # ---- BN2 + skip add + ReLU ----
    outw = _bn_skip_relu(z2, ps2, pq2, g2, be2, xres, w3, b3, geo2, count2, precision)
    out = _unwiden(outw, geo2, cout)
    return jnp.transpose(out, (0, 3, 1, 2))   # back to NCHW


# --------------------------------------------------------------- reference ---


def _ref_forward(x, p, *, use_1x1conv, stride):
    def conv(x, w, b, s):
        pad = ((1, 1), (1, 1)) if w.shape[-1] == 3 else ((0, 0), (0, 0))
        y = jax.lax.conv_general_dilated(
            x, w, (s, s), pad, dimension_numbers=("NCHW", "OIHW", "NCHW"),
            precision=jax.lax.Precision.HIGHEST)
        return y + b[None, :, None, None]

    def bn(y, g, be):
        mean = jnp.mean(y, axis=(0, 2, 3), keepdims=True)
        var = jnp.mean((y - mean) ** 2, axis=(0, 2, 3), keepdims=True)
        return (g[None, :, None, None] * (y - mean) * jax.lax.rsqrt(var + EPS)
                + be[None, :, None, None])

    y = jax.nn.relu(bn(conv(x, p["w1"], p["b1"], stride), p["g1"], p["be1"]))
    y = bn(conv(y, p["w2"], p["b2"], 1), p["g2"], p["be2"])
    if use_1x1conv:
        x = conv(x, p["w3"], p["b3"], stride)
    return jax.nn.relu(y + x)


def _make_params(key, cin, cout, use_1x1conv):
    ks = jax.random.split(key, 6)
    p = {
        "w1": jax.random.normal(ks[0], (cout, cin, 3, 3), jnp.float32) * 0.1,
        "b1": jax.random.normal(ks[1], (cout,), jnp.float32) * 0.1,
        "g1": jnp.ones((cout,), jnp.float32),   # BatchNorm2d default init
        "be1": jnp.zeros((cout,), jnp.float32),
        "w2": jax.random.normal(ks[2], (cout, cout, 3, 3), jnp.float32) * 0.1,
        "b2": jax.random.normal(ks[3], (cout,), jnp.float32) * 0.1,
        "g2": jnp.ones((cout,), jnp.float32),
        "be2": jnp.zeros((cout,), jnp.float32),
    }
    if use_1x1conv:
        p["w3"] = jax.random.normal(ks[4], (cout, cin, 1, 1), jnp.float32) * 0.1
        p["b3"] = jax.random.normal(ks[5], (cout,), jnp.float32) * 0.1
    return p


if __name__ == "__main__":
    key = jax.random.PRNGKey(0)
    kx, kp1, kp2 = jax.random.split(key, 3)

    x = jax.random.normal(kx, (2, 4, 16, 16), jnp.float32)

    configs = [
        # (name, params, use_1x1conv, stride, expected output shape)
        ("downsample", _make_params(kp1, 4, 8, True), True, 2, (2, 8, 8, 8)),
        ("identity", _make_params(kp2, 4, 4, False), False, 1, (2, 4, 16, 16)),
    ]
    for name, p, use_1x1, stride, exp_shape in configs:
        ref = _ref_forward(x, p, use_1x1conv=use_1x1, stride=stride)
        # f32 path: tight numerical check; bf16 path: bf16-operand MXU check.
        for dt, tol in ((jnp.float32, 1e-4), (jnp.bfloat16, 1e-1)):
            fwd = jax.jit(functools.partial(
                residual_forward, use_1x1conv=use_1x1, stride=stride,
                compute_dtype=dt))
            out = jax.block_until_ready(fwd(x, p))
            assert out.shape == exp_shape, (name, out.shape)
            err = float(jnp.max(jnp.abs(out - ref)))
            assert err < tol, (name, str(dt), err)

    print("KERNEL_OK")
</pallas_src>

<mosaic_0001>
module attributes {stable_mosaic.version = 11 : i64} {
  func.func @_conv_matmul_kernel(%arg0: i32, %arg1: i32, %arg2: memref<1x4x82x4xf32, #tpu.memory_space<vmem>>, %arg3: memref<36x8xf32, #tpu.memory_space<vmem>>, %arg4: memref<1x8xf32, #tpu.memory_space<vmem>>, %arg5: memref<72x1xf32, #tpu.memory_space<vmem>>, %arg6: memref<1x72x8xf32, #tpu.memory_space<vmem>>, %arg7: memref<1x1x1x8xf32, #tpu.memory_space<vmem>>, %arg8: memref<1x1x1x8xf32, #tpu.memory_space<vmem>>, %arg9: memref<72x36xf32, #tpu.memory_space<vmem>>) attributes {dimension_semantics = [#tpu.dimension_semantics<parallel>, #tpu.dimension_semantics<parallel>], iteration_bounds = array<i64: 2, 1>, scalar_prefetch = 0 : i64, scratch_operands = 1 : i64, tpu.core_type = #tpu.core_type<tc>, window_params = [{transform_indices = @transform_0, window_bounds = array<i64: 1, 4, 82, 4>}, {pipeline_mode = #tpu.pipeline_mode<synchronous>, transform_indices = @transform_1, window_bounds = array<i64: 36, 8>}, {pipeline_mode = #tpu.pipeline_mode<synchronous>, transform_indices = @transform_2, window_bounds = array<i64: 1, 8>}, {transform_indices = @transform_3, window_bounds = array<i64: 72, 1>}, {transform_indices = @transform_4, window_bounds = array<i64: 1, 72, 8>}, {transform_indices = @transform_5, window_bounds = array<i64: 1, 1, 1, 8>}, {transform_indices = @transform_6, window_bounds = array<i64: 1, 1, 1, 8>}]} {
    %c72_i32 = arith.constant 72 : i32
    %0 = arith.muli %arg1, %c72_i32 : i32
    %c0_i32 = arith.constant 0 : i32
    %1 = arith.addi %0, %c0_i32 : i32
    %c0 = arith.constant 0 : index
    %c0_0 = arith.constant 0 : index
    %2 = arith.index_cast %1 : i32 to index
    %c0_1 = arith.constant 0 : index
    %3 = vector.load %arg2[%c0, %c0_0, %2, %c0_1] : memref<1x4x82x4xf32, #tpu.memory_space<vmem>>, vector<1x1x72x4xf32>
    %4 = vector.shape_cast %3 : vector<1x1x72x4xf32> to vector<72x4xf32>
    %c0_2 = arith.constant 0 : index
    %c0_3 = arith.constant 0 : index
    %5 = vector.load %arg9[%c0_2, %c0_3] : memref<72x36xf32, #tpu.memory_space<vmem>>, vector<72x4xf32>
    tpu.vector_store %arg9[%c0_2, %c0_3], %4 {strides = array<i32>} : memref<72x36xf32, #tpu.memory_space<vmem>>, vector<72x4xf32>,
    %c0_i32_4 = arith.constant 0 : i32
    %6 = arith.addi %0, %c0_i32_4 : i32
    %c0_5 = arith.constant 0 : index
    %c1 = arith.constant 1 : index
    %7 = arith.index_cast %6 : i32 to index
    %c0_6 = arith.constant 0 : index
    %8 = vector.load %arg2[%c0_5, %c1, %7, %c0_6] : memref<1x4x82x4xf32, #tpu.memory_space<vmem>>, vector<1x1x72x4xf32>
    %9 = vector.shape_cast %8 : vector<1x1x72x4xf32> to vector<72x4xf32>
    %c0_7 = arith.constant 0 : index
    %c4 = arith.constant 4 : index
    %10 = vector.load %arg9[%c0_7, %c4] : memref<72x36xf32, #tpu.memory_space<vmem>>, vector<72x4xf32>
    tpu.vector_store %arg9[%c0_7, %c4], %9 {strides = array<i32>} : memref<72x36xf32, #tpu.memory_space<vmem>>, vector<72x4xf32>,
    %c1_i32 = arith.constant 1 : i32
    %11 = arith.addi %0, %c1_i32 : i32
    %c0_8 = arith.constant 0 : index
    %c0_9 = arith.constant 0 : index
    %12 = arith.index_cast %11 : i32 to index
    %c0_10 = arith.constant 0 : index
    %13 = vector.load %arg2[%c0_8, %c0_9, %12, %c0_10] : memref<1x4x82x4xf32, #tpu.memory_space<vmem>>, vector<1x1x72x4xf32>
    %14 = vector.shape_cast %13 : vector<1x1x72x4xf32> to vector<72x4xf32>
    %c0_11 = arith.constant 0 : index
    %c8 = arith.constant 8 : index
    %15 = vector.load %arg9[%c0_11, %c8] : memref<72x36xf32, #tpu.memory_space<vmem>>, vector<72x4xf32>
    tpu.vector_store %arg9[%c0_11, %c8], %14 {strides = array<i32>} : memref<72x36xf32, #tpu.memory_space<vmem>>, vector<72x4xf32>,
    %c0_i32_12 = arith.constant 0 : i32
    %16 = arith.addi %0, %c0_i32_12 : i32
    %c0_13 = arith.constant 0 : index
    %c2 = arith.constant 2 : index
    %17 = arith.index_cast %16 : i32 to index
    %c0_14 = arith.constant 0 : index
    %18 = vector.load %arg2[%c0_13, %c2, %17, %c0_14] : memref<1x4x82x4xf32, #tpu.memory_space<vmem>>, vector<1x1x72x4xf32>
    %19 = vector.shape_cast %18 : vector<1x1x72x4xf32> to vector<72x4xf32>
    %c0_15 = arith.constant 0 : index
    %c12 = arith.constant 12 : index
    %20 = vector.load %arg9[%c0_15, %c12] : memref<72x36xf32, #tpu.memory_space<vmem>>, vector<72x4xf32>
    tpu.vector_store %arg9[%c0_15, %c12], %19 {strides = array<i32>} : memref<72x36xf32, #tpu.memory_space<vmem>>, vector<72x4xf32>,
    %c0_i32_16 = arith.constant 0 : i32
    %21 = arith.addi %0, %c0_i32_16 : i32
    %c0_17 = arith.constant 0 : index
    %c3 = arith.constant 3 : index
    %22 = arith.index_cast %21 : i32 to index
    %c0_18 = arith.constant 0 : index
    %23 = vector.load %arg2[%c0_17, %c3, %22, %c0_18] : memref<1x4x82x4xf32, #tpu.memory_space<vmem>>, vector<1x1x72x4xf32>
    %24 = vector.shape_cast %23 : vector<1x1x72x4xf32> to vector<72x4xf32>
    %c0_19 = arith.constant 0 : index
    %c16 = arith.constant 16 : index
    %25 = vector.load %arg9[%c0_19, %c16] : memref<72x36xf32, #tpu.memory_space<vmem>>, vector<72x4xf32>
    tpu.vector_store %arg9[%c0_19, %c16], %24 {strides = array<i32>} : memref<72x36xf32, #tpu.memory_space<vmem>>, vector<72x4xf32>,
    %c1_i32_20 = arith.constant 1 : i32
    %26 = arith.addi %0, %c1_i32_20 : i32
    %c0_21 = arith.constant 0 : index
    %c2_22 = arith.constant 2 : index
    %27 = arith.index_cast %26 : i32 to index
    %c0_23 = arith.constant 0 : index
    %28 = vector.load %arg2[%c0_21, %c2_22, %27, %c0_23] : memref<1x4x82x4xf32, #tpu.memory_space<vmem>>, vector<1x1x72x4xf32>
    %29 = vector.shape_cast %28 : vector<1x1x72x4xf32> to vector<72x4xf32>
    %c0_24 = arith.constant 0 : index
    %c20 = arith.constant 20 : index
    %30 = vector.load %arg9[%c0_24, %c20] : memref<72x36xf32, #tpu.memory_space<vmem>>, vector<72x4xf32>
    tpu.vector_store %arg9[%c0_24, %c20], %29 {strides = array<i32>} : memref<72x36xf32, #tpu.memory_space<vmem>>, vector<72x4xf32>,
    %c9_i32 = arith.constant 9 : i32
    %31 = arith.addi %0, %c9_i32 : i32
    %c0_25 = arith.constant 0 : index
    %c0_26 = arith.constant 0 : index
    %32 = arith.index_cast %31 : i32 to index
    %c0_27 = arith.constant 0 : index
    %33 = vector.load %arg2[%c0_25, %c0_26, %32, %c0_27] : memref<1x4x82x4xf32, #tpu.memory_space<vmem>>, vector<1x1x72x4xf32>
    %34 = vector.shape_cast %33 : vector<1x1x72x4xf32> to vector<72x4xf32>
    %c0_28 = arith.constant 0 : index
    %c24 = arith.constant 24 : index
    %35 = vector.load %arg9[%c0_28, %c24] : memref<72x36xf32, #tpu.memory_space<vmem>>, vector<72x4xf32>
    tpu.vector_store %arg9[%c0_28, %c24], %34 {strides = array<i32>} : memref<72x36xf32, #tpu.memory_space<vmem>>, vector<72x4xf32>,
    %c9_i32_29 = arith.constant 9 : i32
    %36 = arith.addi %0, %c9_i32_29 : i32
    %c0_30 = arith.constant 0 : index
    %c1_31 = arith.constant 1 : index
    %37 = arith.index_cast %36 : i32 to index
    %c0_32 = arith.constant 0 : index
    %38 = vector.load %arg2[%c0_30, %c1_31, %37, %c0_32] : memref<1x4x82x4xf32, #tpu.memory_space<vmem>>, vector<1x1x72x4xf32>
    %39 = vector.shape_cast %38 : vector<1x1x72x4xf32> to vector<72x4xf32>
    %c0_33 = arith.constant 0 : index
    %c28 = arith.constant 28 : index
    %40 = vector.load %arg9[%c0_33, %c28] : memref<72x36xf32, #tpu.memory_space<vmem>>, vector<72x4xf32>
    tpu.vector_store %arg9[%c0_33, %c28], %39 {strides = array<i32>} : memref<72x36xf32, #tpu.memory_space<vmem>>, vector<72x4xf32>,
    %c10_i32 = arith.constant 10 : i32
    %41 = arith.addi %0, %c10_i32 : i32
    %c0_34 = arith.constant 0 : index
    %c0_35 = arith.constant 0 : index
    %42 = arith.index_cast %41 : i32 to index
    %c0_36 = arith.constant 0 : index
    %43 = vector.load %arg2[%c0_34, %c0_35, %42, %c0_36] : memref<1x4x82x4xf32, #tpu.memory_space<vmem>>, vector<1x1x72x4xf32>
    %44 = vector.shape_cast %43 : vector<1x1x72x4xf32> to vector<72x4xf32>
    %c0_37 = arith.constant 0 : index
    %c32 = arith.constant 32 : index
    %45 = vector.load %arg9[%c0_37, %c32] : memref<72x36xf32, #tpu.memory_space<vmem>>, vector<72x4xf32>
    tpu.vector_store %arg9[%c0_37, %c32], %44 {strides = array<i32>} : memref<72x36xf32, #tpu.memory_space<vmem>>, vector<72x4xf32>,
    %c0_38 = arith.constant 0 : index
    %c0_39 = arith.constant 0 : index
    %46 = vector.load %arg9[%c0_38, %c0_39] : memref<72x36xf32, #tpu.memory_space<vmem>>, vector<72x36xf32>
    %c0_40 = arith.constant 0 : index
    %c0_41 = arith.constant 0 : index
    %47 = vector.load %arg3[%c0_40, %c0_41] : memref<36x8xf32, #tpu.memory_space<vmem>>, vector<36x8xf32>
    %cst = arith.constant dense<0.000000e+00> : vector<72x8xf32>
    %48 = tpu.matmul %46, %47, %cst {dimension_numbers = #tpu.dot_dimension_numbers<[1], [0], [0], [1], [0, 0, 1, 1], [], []>, precision = #tpu.contract_precision<fp32>} : vector<72x36xf32>, vector<36x8xf32>, vector<72x8xf32> -> vector<72x8xf32>
    %c0_42 = arith.constant 0 : index
    %c0_43 = arith.constant 0 : index
    %49 = vector.load %arg4[%c0_42, %c0_43] : memref<1x8xf32, #tpu.memory_space<vmem>>, vector<1x8xf32>
    %50 = vector.broadcast %49 : vector<1x8xf32> to vector<72x8xf32>
    %51 = arith.addf %48, %50 : vector<72x8xf32>
    %c0_44 = arith.constant 0 : index
    %c0_45 = arith.constant 0 : index
    %52 = vector.load %arg5[%c0_44, %c0_45] : memref<72x1xf32, #tpu.memory_space<vmem>>, vector<72x1xf32>
    %53 = vector.broadcast %52 : vector<72x1xf32> to vector<72x8xf32>
    %54 = arith.mulf %51, %53 : vector<72x8xf32>
    %cst_46 = arith.constant dense<0.000000e+00> : vector<8xf32>
    %55 = vector.multi_reduction <add>, %54, %cst_46 [0] : vector<72x8xf32> to vector<8xf32>
    %56 = vector.shape_cast %55 : vector<8xf32> to vector<1x1x1x8xf32>
    %c0_47 = arith.constant 0 : index
    %c0_48 = arith.constant 0 : index
    %c0_49 = arith.constant 0 : index
    %c0_50 = arith.constant 0 : index
    %57 = vector.load %arg7[%c0_47, %c0_48, %c0_49, %c0_50] : memref<1x1x1x8xf32, #tpu.memory_space<vmem>>, vector<1x1x1x8xf32>
    tpu.vector_store %arg7[%c0_47, %c0_48, %c0_49, %c0_50], %56 {strides = array<i32>} : memref<1x1x1x8xf32, #tpu.memory_space<vmem>>, vector<1x1x1x8xf32>,
    %58 = arith.mulf %54, %51 : vector<72x8xf32>
    %cst_51 = arith.constant dense<0.000000e+00> : vector<8xf32>
    %59 = vector.multi_reduction <add>, %58, %cst_51 [0] : vector<72x8xf32> to vector<8xf32>
    %60 = vector.shape_cast %59 : vector<8xf32> to vector<1x1x1x8xf32>
    %c0_52 = arith.constant 0 : index
    %c0_53 = arith.constant 0 : index
    %c0_54 = arith.constant 0 : index
    %c0_55 = arith.constant 0 : index
    %61 = vector.load %arg8[%c0_52, %c0_53, %c0_54, %c0_55] : memref<1x1x1x8xf32, #tpu.memory_space<vmem>>, vector<1x1x1x8xf32>
    tpu.vector_store %arg8[%c0_52, %c0_53, %c0_54, %c0_55], %60 {strides = array<i32>} : memref<1x1x1x8xf32, #tpu.memory_space<vmem>>, vector<1x1x1x8xf32>,
    %c0_56 = arith.constant 0 : index
    %c0_57 = arith.constant 0 : index
    %c0_58 = arith.constant 0 : index
    %62 = vector.load %arg6[%c0_56, %c0_57, %c0_58] : memref<1x72x8xf32, #tpu.memory_space<vmem>>, vector<1x72x8xf32>
    %63 = vector.shape_cast %62 : vector<1x72x8xf32> to vector<72x8xf32>
    %64 = vector.shape_cast %51 : vector<72x8xf32> to vector<1x72x8xf32>
    tpu.vector_store %arg6[%c0_56, %c0_57, %c0_58], %64 {strides = array<i32>} : memref<1x72x8xf32, #tpu.memory_space<vmem>>, vector<1x72x8xf32>,
    return
  }
  func.func @transform_0(%arg0: i32, %arg1: i32) -> (i32, i32, i32, i32) {
    %c0_i32 = arith.constant 0 : i32
    %c0_i32_0 = arith.constant 0 : i32
    %c0_i32_1 = arith.constant 0 : i32
    %c0_i32_2 = arith.constant 0 : i32
    return %arg0, %c0_i32, %c0_i32_0, %c0_i32_1 : i32, i32, i32, i32
  }
  func.func @transform_1(%arg0: i32, %arg1: i32) -> (i32, i32) {
    %c0_i32 = arith.constant 0 : i32
    %c0_i32_0 = arith.constant 0 : i32
    %c0_i32_1 = arith.constant 0 : i32
    return %c0_i32, %c0_i32_0 : i32, i32
  }
  func.func @transform_2(%arg0: i32, %arg1: i32) -> (i32, i32) {
    %c0_i32 = arith.constant 0 : i32
    %c0_i32_0 = arith.constant 0 : i32
    %c0_i32_1 = arith.constant 0 : i32
    return %c0_i32, %c0_i32_0 : i32, i32
  }
  func.func @transform_3(%arg0: i32, %arg1: i32) -> (i32, i32) {
    %c0_i32 = arith.constant 0 : i32
    %c0_i32_0 = arith.constant 0 : i32
    return %arg1, %c0_i32 : i32, i32
  }
  func.func @transform_4(%arg0: i32, %arg1: i32) -> (i32, i32, i32) {
    %c0_i32 = arith.constant 0 : i32
    %c0_i32_0 = arith.constant 0 : i32
    return %arg0, %arg1, %c0_i32 : i32, i32, i32
  }
  func.func @transform_5(%arg0: i32, %arg1: i32) -> (i32, i32, i32, i32) {
    %c0_i32 = arith.constant 0 : i32
    %c0_i32_0 = arith.constant 0 : i32
    %c0_i32_1 = arith.constant 0 : i32
    return %arg0, %arg1, %c0_i32, %c0_i32_0 : i32, i32, i32, i32
  }
  func.func @transform_6(%arg0: i32, %arg1: i32) -> (i32, i32, i32, i32) {
    %c0_i32 = arith.constant 0 : i32
    %c0_i32_0 = arith.constant 0 : i32
    %c0_i32_1 = arith.constant 0 : i32
    return %arg0, %arg1, %c0_i32, %c0_i32_0 : i32, i32, i32, i32
  }
}

module attributes {stable_mosaic.version = 11 : i64} {
  func.func @_bn_relu_kernel(%arg0: i32, %arg1: i32, %arg2: memref<1x72x8xf32, #tpu.memory_space<vmem>>, %arg3: memref<2x1x1x8xf32, #tpu.memory_space<vmem>>, %arg4: memref<2x1x1x8xf32, #tpu.memory_space<vmem>>, %arg5: memref<1x8xf32, #tpu.memory_space<vmem>>, %arg6: memref<1x8xf32, #tpu.memory_space<vmem>>, %arg7: memref<1x72x8xf32, #tpu.memory_space<vmem>>) attributes {dimension_semantics = [#tpu.dimension_semantics<parallel>, #tpu.dimension_semantics<parallel>], iteration_bounds = array<i64: 2, 1>, scalar_prefetch = 0 : i64, scratch_operands = 0 : i64, tpu.core_type = #tpu.core_type<tc>, window_params = [{transform_indices = @transform_0, window_bounds = array<i64: 1, 72, 8>}, {pipeline_mode = #tpu.pipeline_mode<synchronous>, transform_indices = @transform_1, window_bounds = array<i64: 2, 1, 1, 8>}, {pipeline_mode = #tpu.pipeline_mode<synchronous>, transform_indices = @transform_2, window_bounds = array<i64: 2, 1, 1, 8>}, {pipeline_mode = #tpu.pipeline_mode<synchronous>, transform_indices = @transform_3, window_bounds = array<i64: 1, 8>}, {pipeline_mode = #tpu.pipeline_mode<synchronous>, transform_indices = @transform_4, window_bounds = array<i64: 1, 8>}, {transform_indices = @transform_5, window_bounds = array<i64: 1, 72, 8>}]} {
    %c0 = arith.constant 0 : index
    %c0_0 = arith.constant 0 : index
    %c0_1 = arith.constant 0 : index
    %c0_2 = arith.constant 0 : index
    %0 = vector.load %arg3[%c0, %c0_0, %c0_1, %c0_2] : memref<2x1x1x8xf32, #tpu.memory_space<vmem>>, vector<2x1x1x8xf32>
    %c0_3 = arith.constant 0 : index
    %c0_4 = arith.constant 0 : index
    %c0_5 = arith.constant 0 : index
    %c0_6 = arith.constant 0 : index
    %1 = vector.load %arg4[%c0_3, %c0_4, %c0_5, %c0_6] : memref<2x1x1x8xf32, #tpu.memory_space<vmem>>, vector<2x1x1x8xf32>
    %c0_7 = arith.constant 0 : index
    %c0_8 = arith.constant 0 : index
    %2 = vector.load %arg5[%c0_7, %c0_8] : memref<1x8xf32, #tpu.memory_space<vmem>>, vector<1x8xf32>
    %3 = vector.shape_cast %2 : vector<1x8xf32> to vector<8xf32>
    %c0_9 = arith.constant 0 : index
    %c0_10 = arith.constant 0 : index
    %4 = vector.load %arg6[%c0_9, %c0_10] : memref<1x8xf32, #tpu.memory_space<vmem>>, vector<1x8xf32>
    %5 = vector.shape_cast %4 : vector<1x8xf32> to vector<8xf32>
    %cst = arith.constant dense<0.000000e+00> : vector<8xf32>
    %6 = vector.multi_reduction <add>, %0, %cst [0, 1, 2] : vector<2x1x1x8xf32> to vector<8xf32>
    %cst_11 = arith.constant dense<0.000000e+00> : vector<8xf32>
    %7 = vector.multi_reduction <add>, %1, %cst_11 [0, 1, 2] : vector<2x1x1x8xf32> to vector<8xf32>
    %cst_12 = arith.constant 7.812500e-03 : f32
    %8 = vector.broadcast %cst_12 : f32 to vector<8xf32>
    %9 = arith.mulf %6, %8 : vector<8xf32>
    %cst_13 = arith.constant 7.812500e-03 : f32
    %10 = vector.broadcast %cst_13 : f32 to vector<8xf32>
    %11 = arith.mulf %7, %10 : vector<8xf32>
    %12 = arith.mulf %9, %9 : vector<8xf32>
    %13 = arith.subf %11, %12 : vector<8xf32>
    %cst_14 = arith.constant 0.000000e+00 : f32
    %14 = vector.broadcast %cst_14 : f32 to vector<8xf32>
    %15 = arith.maximumf %13, %14 : vector<8xf32>
    %cst_15 = arith.constant 9.99999974E-6 : f32
    %16 = vector.broadcast %cst_15 : f32 to vector<8xf32>
    %17 = arith.addf %15, %16 : vector<8xf32>
    %18 = math.rsqrt %17 : vector<8xf32>
    %19 = arith.mulf %3, %18 : vector<8xf32>
    %20 = arith.mulf %9, %19 : vector<8xf32>
    %21 = arith.subf %5, %20 : vector<8xf32>
    %c0_16 = arith.constant 0 : index
    %c0_17 = arith.constant 0 : index
    %c0_18 = arith.constant 0 : index
    %22 = vector.load %arg2[%c0_16, %c0_17, %c0_18] : memref<1x72x8xf32, #tpu.memory_space<vmem>>, vector<1x72x8xf32>
    %23 = vector.shape_cast %22 : vector<1x72x8xf32> to vector<72x8xf32>
    %24 = vector.shape_cast %19 : vector<8xf32> to vector<1x8xf32>
    %25 = vector.broadcast %24 : vector<1x8xf32> to vector<72x8xf32>
    %26 = arith.mulf %23, %25 : vector<72x8xf32>
    %27 = vector.shape_cast %21 : vector<8xf32> to vector<1x8xf32>
    %28 = vector.broadcast %27 : vector<1x8xf32> to vector<72x8xf32>
    %29 = arith.addf %26, %28 : vector<72x8xf32>
    %cst_19 = arith.constant 0.000000e+00 : f32
    %30 = vector.broadcast %cst_19 : f32 to vector<72x8xf32>
    %31 = arith.maximumf %29, %30 : vector<72x8xf32>
    %c0_20 = arith.constant 0 : index
    %c0_21 = arith.constant 0 : index
    %c0_22 = arith.constant 0 : index
    %32 = vector.load %arg7[%c0_20, %c0_21, %c0_22] : memref<1x72x8xf32, #tpu.memory_space<vmem>>, vector<1x72x8xf32>
    %33 = vector.shape_cast %32 : vector<1x72x8xf32> to vector<72x8xf32>
    %34 = vector.shape_cast %31 : vector<72x8xf32> to vector<1x72x8xf32>
    tpu.vector_store %arg7[%c0_20, %c0_21, %c0_22], %34 {strides = array<i32>} : memref<1x72x8xf32, #tpu.memory_space<vmem>>, vector<1x72x8xf32>,
    return
  }
  func.func @transform_0(%arg0: i32, %arg1: i32) -> (i32, i32, i32) {
    %c0_i32 = arith.constant 0 : i32
    %c0_i32_0 = arith.constant 0 : i32
    return %arg0, %arg1, %c0_i32 : i32, i32, i32
  }
  func.func @transform_1(%arg0: i32, %arg1: i32) -> (i32, i32, i32, i32) {
    %c0_i32 = arith.constant 0 : i32
    %c0_i32_0 = arith.constant 0 : i32
    %c0_i32_1 = arith.constant 0 : i32
    %c0_i32_2 = arith.constant 0 : i32
    %c0_i32_3 = arith.constant 0 : i32
    return %c0_i32, %c0_i32_0, %c0_i32_1, %c0_i32_2 : i32, i32, i32, i32
  }
  func.func @transform_2(%arg0: i32, %arg1: i32) -> (i32, i32, i32, i32) {
    %c0_i32 = arith.constant 0 : i32
    %c0_i32_0 = arith.constant 0 : i32
    %c0_i32_1 = arith.constant 0 : i32
    %c0_i32_2 = arith.constant 0 : i32
    %c0_i32_3 = arith.constant 0 : i32
    return %c0_i32, %c0_i32_0, %c0_i32_1, %c0_i32_2 : i32, i32, i32, i32
  }
  func.func @transform_3(%arg0: i32, %arg1: i32) -> (i32, i32) {
    %c0_i32 = arith.constant 0 : i32
    %c0_i32_0 = arith.constant 0 : i32
    %c0_i32_1 = arith.constant 0 : i32
    return %c0_i32, %c0_i32_0 : i32, i32
  }
  func.func @transform_4(%arg0: i32, %arg1: i32) -> (i32, i32) {
    %c0_i32 = arith.constant 0 : i32
    %c0_i32_0 = arith.constant 0 : i32
    %c0_i32_1 = arith.constant 0 : i32
    return %c0_i32, %c0_i32_0 : i32, i32
  }
  func.func @transform_5(%arg0: i32, %arg1: i32) -> (i32, i32, i32) {
    %c0_i32 = arith.constant 0 : i32
    %c0_i32_0 = arith.constant 0 : i32
    return %arg0, %arg1, %c0_i32 : i32, i32, i32
  }
}

module attributes {stable_mosaic.version = 11 : i64} {
  func.func @_conv_matmul_kernel(%arg0: i32, %arg1: i32, %arg2: memref<1x1x102x8xf32, #tpu.memory_space<vmem>>, %arg3: memref<72x8xf32, #tpu.memory_space<vmem>>, %arg4: memref<1x8xf32, #tpu.memory_space<vmem>>, %arg5: memref<80x1xf32, #tpu.memory_space<vmem>>, %arg6: memref<1x80x8xf32, #tpu.memory_space<vmem>>, %arg7: memref<1x1x1x8xf32, #tpu.memory_space<vmem>>, %arg8: memref<1x1x1x8xf32, #tpu.memory_space<vmem>>, %arg9: memref<80x72xf32, #tpu.memory_space<vmem>>) attributes {dimension_semantics = [#tpu.dimension_semantics<parallel>, #tpu.dimension_semantics<parallel>], iteration_bounds = array<i64: 2, 1>, scalar_prefetch = 0 : i64, scratch_operands = 1 : i64, tpu.core_type = #tpu.core_type<tc>, window_params = [{transform_indices = @transform_0, window_bounds = array<i64: 1, 1, 102, 8>}, {pipeline_mode = #tpu.pipeline_mode<synchronous>, transform_indices = @transform_1, window_bounds = array<i64: 72, 8>}, {pipeline_mode = #tpu.pipeline_mode<synchronous>, transform_indices = @transform_2, window_bounds = array<i64: 1, 8>}, {transform_indices = @transform_3, window_bounds = array<i64: 80, 1>}, {transform_indices = @transform_4, window_bounds = array<i64: 1, 80, 8>}, {transform_indices = @transform_5, window_bounds = array<i64: 1, 1, 1, 8>}, {transform_indices = @transform_6, window_bounds = array<i64: 1, 1, 1, 8>}]} {
    %c80_i32 = arith.constant 80 : i32
    %0 = arith.muli %arg1, %c80_i32 : i32
    %c0_i32 = arith.constant 0 : i32
    %1 = arith.addi %0, %c0_i32 : i32
    %c0 = arith.constant 0 : index
    %c0_0 = arith.constant 0 : index
    %2 = arith.index_cast %1 : i32 to index
    %c0_1 = arith.constant 0 : index
    %3 = vector.load %arg2[%c0, %c0_0, %2, %c0_1] : memref<1x1x102x8xf32, #tpu.memory_space<vmem>>, vector<1x1x80x8xf32>
    %4 = vector.shape_cast %3 : vector<1x1x80x8xf32> to vector<80x8xf32>
    %c0_2 = arith.constant 0 : index
    %c0_3 = arith.constant 0 : index
    %5 = vector.load %arg9[%c0_2, %c0_3] : memref<80x72xf32, #tpu.memory_space<vmem>>, vector<80x8xf32>
    tpu.vector_store %arg9[%c0_2, %c0_3], %4 {strides = array<i32>} : memref<80x72xf32, #tpu.memory_space<vmem>>, vector<80x8xf32>,
    %c1_i32 = arith.constant 1 : i32
    %6 = arith.addi %0, %c1_i32 : i32
    %c0_4 = arith.constant 0 : index
    %c0_5 = arith.constant 0 : index
    %7 = arith.index_cast %6 : i32 to index
    %c0_6 = arith.constant 0 : index
    %8 = vector.load %arg2[%c0_4, %c0_5, %7, %c0_6] : memref<1x1x102x8xf32, #tpu.memory_space<vmem>>, vector<1x1x80x8xf32>
    %9 = vector.shape_cast %8 : vector<1x1x80x8xf32> to vector<80x8xf32>
    %c0_7 = arith.constant 0 : index
    %c8 = arith.constant 8 : index
    %10 = vector.load %arg9[%c0_7, %c8] : memref<80x72xf32, #tpu.memory_space<vmem>>, vector<80x8xf32>
    tpu.vector_store %arg9[%c0_7, %c8], %9 {strides = array<i32>} : memref<80x72xf32, #tpu.memory_space<vmem>>, vector<80x8xf32>,
    %c2_i32 = arith.constant 2 : i32
    %11 = arith.addi %0, %c2_i32 : i32
    %c0_8 = arith.constant 0 : index
    %c0_9 = arith.constant 0 : index
    %12 = arith.index_cast %11 : i32 to index
    %c0_10 = arith.constant 0 : index
    %13 = vector.load %arg2[%c0_8, %c0_9, %12, %c0_10] : memref<1x1x102x8xf32, #tpu.memory_space<vmem>>, vector<1x1x80x8xf32>
    %14 = vector.shape_cast %13 : vector<1x1x80x8xf32> to vector<80x8xf32>
    %c0_11 = arith.constant 0 : index
    %c16 = arith.constant 16 : index
    %15 = vector.load %arg9[%c0_11, %c16] : memref<80x72xf32, #tpu.memory_space<vmem>>, vector<80x8xf32>
    tpu.vector_store %arg9[%c0_11, %c16], %14 {strides = array<i32>} : memref<80x72xf32, #tpu.memory_space<vmem>>, vector<80x8xf32>,
    %c10_i32 = arith.constant 10 : i32
    %16 = arith.addi %0, %c10_i32 : i32
    %c0_12 = arith.constant 0 : index
    %c0_13 = arith.constant 0 : index
    %17 = arith.index_cast %16 : i32 to index
    %c0_14 = arith.constant 0 : index
    %18 = vector.load %arg2[%c0_12, %c0_13, %17, %c0_14] : memref<1x1x102x8xf32, #tpu.memory_space<vmem>>, vector<1x1x80x8xf32>
    %19 = vector.shape_cast %18 : vector<1x1x80x8xf32> to vector<80x8xf32>
    %c0_15 = arith.constant 0 : index
    %c24 = arith.constant 24 : index
    %20 = vector.load %arg9[%c0_15, %c24] : memref<80x72xf32, #tpu.memory_space<vmem>>, vector<80x8xf32>
    tpu.vector_store %arg9[%c0_15, %c24], %19 {strides = array<i32>} : memref<80x72xf32, #tpu.memory_space<vmem>>, vector<80x8xf32>,
    %c11_i32 = arith.constant 11 : i32
    %21 = arith.addi %0, %c11_i32 : i32
    %c0_16 = arith.constant 0 : index
    %c0_17 = arith.constant 0 : index
    %22 = arith.index_cast %21 : i32 to index
    %c0_18 = arith.constant 0 : index
    %23 = vector.load %arg2[%c0_16, %c0_17, %22, %c0_18] : memref<1x1x102x8xf32, #tpu.memory_space<vmem>>, vector<1x1x80x8xf32>
    %24 = vector.shape_cast %23 : vector<1x1x80x8xf32> to vector<80x8xf32>
    %c0_19 = arith.constant 0 : index
    %c32 = arith.constant 32 : index
    %25 = vector.load %arg9[%c0_19, %c32] : memref<80x72xf32, #tpu.memory_space<vmem>>, vector<80x8xf32>
    tpu.vector_store %arg9[%c0_19, %c32], %24 {strides = array<i32>} : memref<80x72xf32, #tpu.memory_space<vmem>>, vector<80x8xf32>,
    %c12_i32 = arith.constant 12 : i32
    %26 = arith.addi %0, %c12_i32 : i32
    %c0_20 = arith.constant 0 : index
    %c0_21 = arith.constant 0 : index
    %27 = arith.index_cast %26 : i32 to index
    %c0_22 = arith.constant 0 : index
    %28 = vector.load %arg2[%c0_20, %c0_21, %27, %c0_22] : memref<1x1x102x8xf32, #tpu.memory_space<vmem>>, vector<1x1x80x8xf32>
    %29 = vector.shape_cast %28 : vector<1x1x80x8xf32> to vector<80x8xf32>
    %c0_23 = arith.constant 0 : index
    %c40 = arith.constant 40 : index
    %30 = vector.load %arg9[%c0_23, %c40] : memref<80x72xf32, #tpu.memory_space<vmem>>, vector<80x8xf32>
    tpu.vector_store %arg9[%c0_23, %c40], %29 {strides = array<i32>} : memref<80x72xf32, #tpu.memory_space<vmem>>, vector<80x8xf32>,
    %c20_i32 = arith.constant 20 : i32
    %31 = arith.addi %0, %c20_i32 : i32
    %c0_24 = arith.constant 0 : index
    %c0_25 = arith.constant 0 : index
    %32 = arith.index_cast %31 : i32 to index
    %c0_26 = arith.constant 0 : index
    %33 = vector.load %arg2[%c0_24, %c0_25, %32, %c0_26] : memref<1x1x102x8xf32, #tpu.memory_space<vmem>>, vector<1x1x80x8xf32>
    %34 = vector.shape_cast %33 : vector<1x1x80x8xf32> to vector<80x8xf32>
    %c0_27 = arith.constant 0 : index
    %c48 = arith.constant 48 : index
    %35 = vector.load %arg9[%c0_27, %c48] : memref<80x72xf32, #tpu.memory_space<vmem>>, vector<80x8xf32>
    tpu.vector_store %arg9[%c0_27, %c48], %34 {strides = array<i32>} : memref<80x72xf32, #tpu.memory_space<vmem>>, vector<80x8xf32>,
    %c21_i32 = arith.constant 21 : i32
    %36 = arith.addi %0, %c21_i32 : i32
    %c0_28 = arith.constant 0 : index
    %c0_29 = arith.constant 0 : index
    %37 = arith.index_cast %36 : i32 to index
    %c0_30 = arith.constant 0 : index
    %38 = vector.load %arg2[%c0_28, %c0_29, %37, %c0_30] : memref<1x1x102x8xf32, #tpu.memory_space<vmem>>, vector<1x1x80x8xf32>
    %39 = vector.shape_cast %38 : vector<1x1x80x8xf32> to vector<80x8xf32>
    %c0_31 = arith.constant 0 : index
    %c56 = arith.constant 56 : index
    %40 = vector.load %arg9[%c0_31, %c56] : memref<80x72xf32, #tpu.memory_space<vmem>>, vector<80x8xf32>
    tpu.vector_store %arg9[%c0_31, %c56], %39 {strides = array<i32>} : memref<80x72xf32, #tpu.memory_space<vmem>>, vector<80x8xf32>,
    %c22_i32 = arith.constant 22 : i32
    %41 = arith.addi %0, %c22_i32 : i32
    %c0_32 = arith.constant 0 : index
    %c0_33 = arith.constant 0 : index
    %42 = arith.index_cast %41 : i32 to index
    %c0_34 = arith.constant 0 : index
    %43 = vector.load %arg2[%c0_32, %c0_33, %42, %c0_34] : memref<1x1x102x8xf32, #tpu.memory_space<vmem>>, vector<1x1x80x8xf32>
    %44 = vector.shape_cast %43 : vector<1x1x80x8xf32> to vector<80x8xf32>
    %c0_35 = arith.constant 0 : index
    %c64 = arith.constant 64 : index
    %45 = vector.load %arg9[%c0_35, %c64] : memref<80x72xf32, #tpu.memory_space<vmem>>, vector<80x8xf32>
    tpu.vector_store %arg9[%c0_35, %c64], %44 {strides = array<i32>} : memref<80x72xf32, #tpu.memory_space<vmem>>, vector<80x8xf32>,
    %c0_36 = arith.constant 0 : index
    %c0_37 = arith.constant 0 : index
    %46 = vector.load %arg9[%c0_36, %c0_37] : memref<80x72xf32, #tpu.memory_space<vmem>>, vector<80x72xf32>
    %c0_38 = arith.constant 0 : index
    %c0_39 = arith.constant 0 : index
    %47 = vector.load %arg3[%c0_38, %c0_39] : memref<72x8xf32, #tpu.memory_space<vmem>>, vector<72x8xf32>
    %cst = arith.constant dense<0.000000e+00> : vector<80x8xf32>
    %48 = tpu.matmul %46, %47, %cst {dimension_numbers = #tpu.dot_dimension_numbers<[1], [0], [0], [1], [0, 0, 1, 1], [], []>, precision = #tpu.contract_precision<fp32>} : vector<80x72xf32>, vector<72x8xf32>, vector<80x8xf32> -> vector<80x8xf32>
    %c0_40 = arith.constant 0 : index
    %c0_41 = arith.constant 0 : index
    %49 = vector.load %arg4[%c0_40, %c0_41] : memref<1x8xf32, #tpu.memory_space<vmem>>, vector<1x8xf32>
    %50 = vector.broadcast %49 : vector<1x8xf32> to vector<80x8xf32>
    %51 = arith.addf %48, %50 : vector<80x8xf32>
    %c0_42 = arith.constant 0 : index
    %c0_43 = arith.constant 0 : index
    %52 = vector.load %arg5[%c0_42, %c0_43] : memref<80x1xf32, #tpu.memory_space<vmem>>, vector<80x1xf32>
    %53 = vector.broadcast %52 : vector<80x1xf32> to vector<80x8xf32>
    %54 = arith.mulf %51, %53 : vector<80x8xf32>
    %cst_44 = arith.constant dense<0.000000e+00> : vector<8xf32>
    %55 = vector.multi_reduction <add>, %54, %cst_44 [0] : vector<80x8xf32> to vector<8xf32>
    %56 = vector.shape_cast %55 : vector<8xf32> to vector<1x1x1x8xf32>
    %c0_45 = arith.constant 0 : index
    %c0_46 = arith.constant 0 : index
    %c0_47 = arith.constant 0 : index
    %c0_48 = arith.constant 0 : index
    %57 = vector.load %arg7[%c0_45, %c0_46, %c0_47, %c0_48] : memref<1x1x1x8xf32, #tpu.memory_space<vmem>>, vector<1x1x1x8xf32>
    tpu.vector_store %arg7[%c0_45, %c0_46, %c0_47, %c0_48], %56 {strides = array<i32>} : memref<1x1x1x8xf32, #tpu.memory_space<vmem>>, vector<1x1x1x8xf32>,
    %58 = arith.mulf %54, %51 : vector<80x8xf32>
    %cst_49 = arith.constant dense<0.000000e+00> : vector<8xf32>
    %59 = vector.multi_reduction <add>, %58, %cst_49 [0] : vector<80x8xf32> to vector<8xf32>
    %60 = vector.shape_cast %59 : vector<8xf32> to vector<1x1x1x8xf32>
    %c0_50 = arith.constant 0 : index
    %c0_51 = arith.constant 0 : index
    %c0_52 = arith.constant 0 : index
    %c0_53 = arith.constant 0 : index
    %61 = vector.load %arg8[%c0_50, %c0_51, %c0_52, %c0_53] : memref<1x1x1x8xf32, #tpu.memory_space<vmem>>, vector<1x1x1x8xf32>
    tpu.vector_store %arg8[%c0_50, %c0_51, %c0_52, %c0_53], %60 {strides = array<i32>} : memref<1x1x1x8xf32, #tpu.memory_space<vmem>>, vector<1x1x1x8xf32>,
    %c0_54 = arith.constant 0 : index
    %c0_55 = arith.constant 0 : index
    %c0_56 = arith.constant 0 : index
    %62 = vector.load %arg6[%c0_54, %c0_55, %c0_56] : memref<1x80x8xf32, #tpu.memory_space<vmem>>, vector<1x80x8xf32>
    %63 = vector.shape_cast %62 : vector<1x80x8xf32> to vector<80x8xf32>
    %64 = vector.shape_cast %51 : vector<80x8xf32> to vector<1x80x8xf32>
    tpu.vector_store %arg6[%c0_54, %c0_55, %c0_56], %64 {strides = array<i32>} : memref<1x80x8xf32, #tpu.memory_space<vmem>>, vector<1x80x8xf32>,
    return
  }
  func.func @transform_0(%arg0: i32, %arg1: i32) -> (i32, i32, i32, i32) {
    %c0_i32 = arith.constant 0 : i32
    %c0_i32_0 = arith.constant 0 : i32
    %c0_i32_1 = arith.constant 0 : i32
    %c0_i32_2 = arith.constant 0 : i32
    return %arg0, %c0_i32, %c0_i32_0, %c0_i32_1 : i32, i32, i32, i32
  }
  func.func @transform_1(%arg0: i32, %arg1: i32) -> (i32, i32) {
    %c0_i32 = arith.constant 0 : i32
    %c0_i32_0 = arith.constant 0 : i32
    %c0_i32_1 = arith.constant 0 : i32
    return %c0_i32, %c0_i32_0 : i32, i32
  }
  func.func @transform_2(%arg0: i32, %arg1: i32) -> (i32, i32) {
    %c0_i32 = arith.constant 0 : i32
    %c0_i32_0 = arith.constant 0 : i32
    %c0_i32_1 = arith.constant 0 : i32
    return %c0_i32, %c0_i32_0 : i32, i32
  }
  func.func @transform_3(%arg0: i32, %arg1: i32) -> (i32, i32) {
    %c0_i32 = arith.constant 0 : i32
    %c0_i32_0 = arith.constant 0 : i32
    return %arg1, %c0_i32 : i32, i32
  }
  func.func @transform_4(%arg0: i32, %arg1: i32) -> (i32, i32, i32) {
    %c0_i32 = arith.constant 0 : i32
    %c0_i32_0 = arith.constant 0 : i32
    return %arg0, %arg1, %c0_i32 : i32, i32, i32
  }
  func.func @transform_5(%arg0: i32, %arg1: i32) -> (i32, i32, i32, i32) {
    %c0_i32 = arith.constant 0 : i32
    %c0_i32_0 = arith.constant 0 : i32
    %c0_i32_1 = arith.constant 0 : i32
    return %arg0, %arg1, %c0_i32, %c0_i32_0 : i32, i32, i32, i32
  }
  func.func @transform_6(%arg0: i32, %arg1: i32) -> (i32, i32, i32, i32) {
    %c0_i32 = arith.constant 0 : i32
    %c0_i32_0 = arith.constant 0 : i32
    %c0_i32_1 = arith.constant 0 : i32
    return %arg0, %arg1, %c0_i32, %c0_i32_0 : i32, i32, i32, i32
  }
}

module attributes {stable_mosaic.version = 11 : i64} {
  func.func @_bn_skip_relu_kernel(%arg0: i32, %arg1: i32, %arg2: memref<1x80x8xf32, #tpu.memory_space<vmem>>, %arg3: memref<2x1x1x8xf32, #tpu.memory_space<vmem>>, %arg4: memref<2x1x1x8xf32, #tpu.memory_space<vmem>>, %arg5: memref<1x8xf32, #tpu.memory_space<vmem>>, %arg6: memref<1x8xf32, #tpu.memory_space<vmem>>, %arg7: memref<1x80x4xf32, #tpu.memory_space<vmem>>, %arg8: memref<4x8xf32, #tpu.memory_space<vmem>>, %arg9: memref<1x8xf32, #tpu.memory_space<vmem>>, %arg10: memref<1x80x8xf32, #tpu.memory_space<vmem>>) attributes {dimension_semantics = [#tpu.dimension_semantics<parallel>, #tpu.dimension_semantics<parallel>], iteration_bounds = array<i64: 2, 1>, scalar_prefetch = 0 : i64, scratch_operands = 0 : i64, tpu.core_type = #tpu.core_type<tc>, window_params = [{transform_indices = @transform_0, window_bounds = array<i64: 1, 80, 8>}, {pipeline_mode = #tpu.pipeline_mode<synchronous>, transform_indices = @transform_1, window_bounds = array<i64: 2, 1, 1, 8>}, {pipeline_mode = #tpu.pipeline_mode<synchronous>, transform_indices = @transform_2, window_bounds = array<i64: 2, 1, 1, 8>}, {pipeline_mode = #tpu.pipeline_mode<synchronous>, transform_indices = @transform_3, window_bounds = array<i64: 1, 8>}, {pipeline_mode = #tpu.pipeline_mode<synchronous>, transform_indices = @transform_4, window_bounds = array<i64: 1, 8>}, {transform_indices = @transform_5, window_bounds = array<i64: 1, 80, 4>}, {pipeline_mode = #tpu.pipeline_mode<synchronous>, transform_indices = @transform_6, window_bounds = array<i64: 4, 8>}, {pipeline_mode = #tpu.pipeline_mode<synchronous>, transform_indices = @transform_7, window_bounds = array<i64: 1, 8>}, {transform_indices = @transform_8, window_bounds = array<i64: 1, 80, 8>}]} {
    %c0 = arith.constant 0 : index
    %c0_0 = arith.constant 0 : index
    %c0_1 = arith.constant 0 : index
    %c0_2 = arith.constant 0 : index
    %0 = vector.load %arg3[%c0, %c0_0, %c0_1, %c0_2] : memref<2x1x1x8xf32, #tpu.memory_space<vmem>>, vector<2x1x1x8xf32>
    %c0_3 = arith.constant 0 : index
    %c0_4 = arith.constant 0 : index
    %c0_5 = arith.constant 0 : index
    %c0_6 = arith.constant 0 : index
    %1 = vector.load %arg4[%c0_3, %c0_4, %c0_5, %c0_6] : memref<2x1x1x8xf32, #tpu.memory_space<vmem>>, vector<2x1x1x8xf32>
    %c0_7 = arith.constant 0 : index
    %c0_8 = arith.constant 0 : index
    %2 = vector.load %arg5[%c0_7, %c0_8] : memref<1x8xf32, #tpu.memory_space<vmem>>, vector<1x8xf32>
    %3 = vector.shape_cast %2 : vector<1x8xf32> to vector<8xf32>
    %c0_9 = arith.constant 0 : index
    %c0_10 = arith.constant 0 : index
    %4 = vector.load %arg6[%c0_9, %c0_10] : memref<1x8xf32, #tpu.memory_space<vmem>>, vector<1x8xf32>
    %5 = vector.shape_cast %4 : vector<1x8xf32> to vector<8xf32>
    %cst = arith.constant dense<0.000000e+00> : vector<8xf32>
    %6 = vector.multi_reduction <add>, %0, %cst [0, 1, 2] : vector<2x1x1x8xf32> to vector<8xf32>
    %cst_11 = arith.constant dense<0.000000e+00> : vector<8xf32>
    %7 = vector.multi_reduction <add>, %1, %cst_11 [0, 1, 2] : vector<2x1x1x8xf32> to vector<8xf32>
    %cst_12 = arith.constant 7.812500e-03 : f32
    %8 = vector.broadcast %cst_12 : f32 to vector<8xf32>
    %9 = arith.mulf %6, %8 : vector<8xf32>
    %cst_13 = arith.constant 7.812500e-03 : f32
    %10 = vector.broadcast %cst_13 : f32 to vector<8xf32>
    %11 = arith.mulf %7, %10 : vector<8xf32>
    %12 = arith.mulf %9, %9 : vector<8xf32>
    %13 = arith.subf %11, %12 : vector<8xf32>
    %cst_14 = arith.constant 0.000000e+00 : f32
    %14 = vector.broadcast %cst_14 : f32 to vector<8xf32>
    %15 = arith.maximumf %13, %14 : vector<8xf32>
    %cst_15 = arith.constant 9.99999974E-6 : f32
    %16 = vector.broadcast %cst_15 : f32 to vector<8xf32>
    %17 = arith.addf %15, %16 : vector<8xf32>
    %18 = math.rsqrt %17 : vector<8xf32>
    %19 = arith.mulf %3, %18 : vector<8xf32>
    %20 = arith.mulf %9, %19 : vector<8xf32>
    %21 = arith.subf %5, %20 : vector<8xf32>
    %c0_16 = arith.constant 0 : index
    %c0_17 = arith.constant 0 : index
    %c0_18 = arith.constant 0 : index
    %22 = vector.load %arg2[%c0_16, %c0_17, %c0_18] : memref<1x80x8xf32, #tpu.memory_space<vmem>>, vector<1x80x8xf32>
    %23 = vector.shape_cast %22 : vector<1x80x8xf32> to vector<80x8xf32>
    %24 = vector.shape_cast %19 : vector<8xf32> to vector<1x8xf32>
    %25 = vector.broadcast %24 : vector<1x8xf32> to vector<80x8xf32>
    %26 = arith.mulf %23, %25 : vector<80x8xf32>
    %27 = vector.shape_cast %21 : vector<8xf32> to vector<1x8xf32>
    %28 = vector.broadcast %27 : vector<1x8xf32> to vector<80x8xf32>
    %29 = arith.addf %26, %28 : vector<80x8xf32>
    %c0_19 = arith.constant 0 : index
    %c0_20 = arith.constant 0 : index
    %c0_21 = arith.constant 0 : index
    %30 = vector.load %arg7[%c0_19, %c0_20, %c0_21] : memref<1x80x4xf32, #tpu.memory_space<vmem>>, vector<1x80x4xf32>
    %31 = vector.shape_cast %30 : vector<1x80x4xf32> to vector<80x4xf32>
    %c0_22 = arith.constant 0 : index
    %c0_23 = arith.constant 0 : index
    %32 = vector.load %arg8[%c0_22, %c0_23] : memref<4x8xf32, #tpu.memory_space<vmem>>, vector<4x8xf32>
    %cst_24 = arith.constant dense<0.000000e+00> : vector<80x8xf32>
    %33 = tpu.matmul %31, %32, %cst_24 {dimension_numbers = #tpu.dot_dimension_numbers<[1], [0], [0], [1], [0, 0, 1, 1], [], []>, precision = #tpu.contract_precision<fp32>} : vector<80x4xf32>, vector<4x8xf32>, vector<80x8xf32> -> vector<80x8xf32>
    %c0_25 = arith.constant 0 : index
    %c0_26 = arith.constant 0 : index
    %34 = vector.load %arg9[%c0_25, %c0_26] : memref<1x8xf32, #tpu.memory_space<vmem>>, vector<1x8xf32>
    %35 = vector.broadcast %34 : vector<1x8xf32> to vector<80x8xf32>
    %36 = arith.addf %33, %35 : vector<80x8xf32>
    %37 = arith.addf %29, %36 : vector<80x8xf32>
    %cst_27 = arith.constant 0.000000e+00 : f32
    %38 = vector.broadcast %cst_27 : f32 to vector<80x8xf32>
    %39 = arith.maximumf %37, %38 : vector<80x8xf32>
    %c0_28 = arith.constant 0 : index
    %c0_29 = arith.constant 0 : index
    %c0_30 = arith.constant 0 : index
    %40 = vector.load %arg10[%c0_28, %c0_29, %c0_30] : memref<1x80x8xf32, #tpu.memory_space<vmem>>, vector<1x80x8xf32>
    %41 = vector.shape_cast %40 : vector<1x80x8xf32> to vector<80x8xf32>
    %42 = vector.shape_cast %39 : vector<80x8xf32> to vector<1x80x8xf32>
    tpu.vector_store %arg10[%c0_28, %c0_29, %c0_30], %42 {strides = array<i32>} : memref<1x80x8xf32, #tpu.memory_space<vmem>>, vector<1x80x8xf32>,
    return
  }
  func.func @transform_0(%arg0: i32, %arg1: i32) -> (i32, i32, i32) {
    %c0_i32 = arith.constant 0 : i32
    %c0_i32_0 = arith.constant 0 : i32
    return %arg0, %arg1, %c0_i32 : i32, i32, i32
  }
  func.func @transform_1(%arg0: i32, %arg1: i32) -> (i32, i32, i32, i32) {
    %c0_i32 = arith.constant 0 : i32
    %c0_i32_0 = arith.constant 0 : i32
    %c0_i32_1 = arith.constant 0 : i32
    %c0_i32_2 = arith.constant 0 : i32
    %c0_i32_3 = arith.constant 0 : i32
    return %c0_i32, %c0_i32_0, %c0_i32_1, %c0_i32_2 : i32, i32, i32, i32
  }
  func.func @transform_2(%arg0: i32, %arg1: i32) -> (i32, i32, i32, i32) {
    %c0_i32 = arith.constant 0 : i32
    %c0_i32_0 = arith.constant 0 : i32
    %c0_i32_1 = arith.constant 0 : i32
    %c0_i32_2 = arith.constant 0 : i32
    %c0_i32_3 = arith.constant 0 : i32
    return %c0_i32, %c0_i32_0, %c0_i32_1, %c0_i32_2 : i32, i32, i32, i32
  }
  func.func @transform_3(%arg0: i32, %arg1: i32) -> (i32, i32) {
    %c0_i32 = arith.constant 0 : i32
    %c0_i32_0 = arith.constant 0 : i32
    %c0_i32_1 = arith.constant 0 : i32
    return %c0_i32, %c0_i32_0 : i32, i32
  }
  func.func @transform_4(%arg0: i32, %arg1: i32) -> (i32, i32) {
    %c0_i32 = arith.constant 0 : i32
    %c0_i32_0 = arith.constant 0 : i32
    %c0_i32_1 = arith.constant 0 : i32
    return %c0_i32, %c0_i32_0 : i32, i32
  }
  func.func @transform_5(%arg0: i32, %arg1: i32) -> (i32, i32, i32) {
    %c0_i32 = arith.constant 0 : i32
    %c0_i32_0 = arith.constant 0 : i32
    return %arg0, %arg1, %c0_i32 : i32, i32, i32
  }
  func.func @transform_6(%arg0: i32, %arg1: i32) -> (i32, i32) {
    %c0_i32 = arith.constant 0 : i32
    %c0_i32_0 = arith.constant 0 : i32
    %c0_i32_1 = arith.constant 0 : i32
    return %c0_i32, %c0_i32_0 : i32, i32
  }
  func.func @transform_7(%arg0: i32, %arg1: i32) -> (i32, i32) {
    %c0_i32 = arith.constant 0 : i32
    %c0_i32_0 = arith.constant 0 : i32
    %c0_i32_1 = arith.constant 0 : i32
    return %c0_i32, %c0_i32_0 : i32, i32
  }
  func.func @transform_8(%arg0: i32, %arg1: i32) -> (i32, i32, i32) {
    %c0_i32 = arith.constant 0 : i32
    %c0_i32_0 = arith.constant 0 : i32
    return %arg0, %arg1, %c0_i32 : i32, i32, i32
  }
}

</mosaic_0001>

<llo_original>
// kernel: residual_forward.5
$region0: #{residual_forward.5}
  #allocation0 [shape = 'u32[]', space=smem, size = 0x4, offset = 0x4, fixed_abs, tag = 'smem constant byte address 0x4 - core index']
  #allocation1 [shape = 'u32[144,128]{1,0:T(1,128)}', space=vmem, size = 0x12000, scoped, tag = 'internal scratch']
  %s0 = inlined_call_operand.vmem [shape: f32[2,72,8], index: 0, kind: input, shape index: {}]
  %s1 = inlined_call_operand.vmem [shape: f32[2,1,1,8], index: 1, kind: input, shape index: {}]
  %s2 = inlined_call_operand.vmem [shape: f32[2,1,1,8], index: 2, kind: input, shape index: {}]
  %s3 = inlined_call_operand.vmem [shape: f32[1,8], index: 3, kind: input, shape index: {}]
  %s4 = inlined_call_operand.vmem [shape: f32[1,8], index: 4, kind: input, shape index: {}]
  %s5 = inlined_call_operand.vmem [shape: f32[2,72,8], index: 5, kind: output, shape index: {}]
  %s6 = sld [smem:[#allocation0]]
  $region53: #{residual_forward.5} parent=0
    _
  %s8 = ssub.s32 1, %s6
  %s9 = scalar_select 0, %s8, %s6
  loop: start=0, step=1, limit=4
  $region2: #{residual_forward.5} parent=0 // loop_pre_header
    _
  $region3: #{residual_forward.5} parent=0 // loop_header
    %s11 = sphi 0, %s15
    %p12 = scmp.ge.s32.totalorder %s11, 4
    %s18 = sphi 0, %s30
    %s19 = sphi 0, %s26
    %s20 = sphi 0, %s18
    %s21 = sphi 0, %s19
    %s22 = sphi 0, %s20
    %s23 = sphi 0, %s21
    %s35 = sphi 0, %s37
    %s38 = sphi 0, %s35
    %s39 = sphi 0, %s38
    %s55 = sphi 0, %s39
    %s59 = sphi 0, %s59
    %s61 = sphi 0, %s59
    %s62 = sphi 0, %s61
    %s76 = sphi 0, %s62
    %s80 = sphi 0, %s80
    %s82 = sphi 0, %s80
    %s83 = sphi 0, %s82
    %s97 = sphi 0, %s83
    %s101 = sphi 0, %s101
    %s103 = sphi 0, %s101
    %s104 = sphi 0, %s103
    %s118 = sphi 0, %s104
    %s122 = sphi 0, %s122
    %s124 = sphi 0, %s122
    %s125 = sphi 0, %s124
    %s139 = sphi 0, %s125
    %s147 = sphi 0, %s149
    %s150 = sphi 0, %s147
    %s151 = sphi 0, %s150
    %s167 = sphi 0, %s151
  $region4: #{residual_forward.5} parent=0 // loop_header_branch
    %14 = sbr.rel (%p12) target = $region8
  $region5: #{residual_forward.5} parent=0 // loop_body
    %s16 = ssub.s32 %s11, 1
    %s17 = ssub.s32 %s11, 2
    %s24 = sadd.s32 1, %s19
    %p25 = scmp.ge.s32.totalorder %s24, 1
    %s26 = scalar_select %p25, 0, %s24
    %s27 = sadd.s32 1, %s18
    %s28 = scalar_select %p25, %s27, %s18
    %p29 = scmp.ge.s32.totalorder %s28, 2
    %s30 = scalar_select %p29, 0, %s28
    %s31 = ssub.s32 %s18, %s30
    %s32 = ssub.s32 %s19, %s26
    %s33 = sor.u32 %s31, %s32
    %p34 = scmp.eq.s32.totalorder %s33, 0
    %s36 = sadd.s32 %s35, 1
    %s37 = scalar_select %p34, %s35, %s36
    %p40 = pneg %p34
    %p41 = scmp.eq.s32.totalorder %s11, 1
    %p42 = por %p40, %p41
    %p43 = scmp.ne.s32.totalorder %s35, %s38
    %p44 = scmp.eq.s32.totalorder %s11, 0
    %p45 = por %p43, %p44
    %p46 = scmp.ne.s32.totalorder %s35, %s38
    %p47 = scmp.eq.s32.totalorder %s16, 1
    %p48 = por %p46, %p47
    %p49 = scmp.ne.s32.totalorder %s38, %s39
    %p50 = scmp.eq.s32.totalorder %s16, 0
    %p51 = por %p49, %p50
    %p52 = scmp.ne.s32.totalorder %s38, %s39
    %p53 = scmp.eq.s32.totalorder %s17, 1
    %p54 = por %p52, %p53
    %p56 = scmp.ne.s32.totalorder %s39, %s55
    %p57 = scmp.eq.s32.totalorder %s17, 0
    %p58 = por %p56, %p57
    %s60 = sadd.s32 %s59, 1
    %p63 = scmp.eq.s32.totalorder %s11, 1
    %p64 = scmp.ne.s32.totalorder %s59, %s61
    %p65 = scmp.eq.s32.totalorder %s11, 0
    %p66 = por %p64, %p65
    %p67 = scmp.ne.s32.totalorder %s59, %s61
    %p68 = scmp.eq.s32.totalorder %s16, 1
    %p69 = por %p67, %p68
    %p70 = scmp.ne.s32.totalorder %s61, %s62
    %p71 = scmp.eq.s32.totalorder %s16, 0
    %p72 = por %p70, %p71
    %p73 = scmp.ne.s32.totalorder %s61, %s62
    %p74 = scmp.eq.s32.totalorder %s17, 1
    %p75 = por %p73, %p74
    %p77 = scmp.ne.s32.totalorder %s62, %s76
    %p78 = scmp.eq.s32.totalorder %s17, 0
    %p79 = por %p77, %p78
    %s81 = sadd.s32 %s80, 1
    %p84 = scmp.eq.s32.totalorder %s11, 1
    %p85 = scmp.ne.s32.totalorder %s80, %s82
    %p86 = scmp.eq.s32.totalorder %s11, 0
    %p87 = por %p85, %p86
    %p88 = scmp.ne.s32.totalorder %s80, %s82
    %p89 = scmp.eq.s32.totalorder %s16, 1
    %p90 = por %p88, %p89
    %p91 = scmp.ne.s32.totalorder %s82, %s83
    %p92 = scmp.eq.s32.totalorder %s16, 0
    %p93 = por %p91, %p92
    %p94 = scmp.ne.s32.totalorder %s82, %s83
    %p95 = scmp.eq.s32.totalorder %s17, 1
    %p96 = por %p94, %p95
    %p98 = scmp.ne.s32.totalorder %s83, %s97
    %p99 = scmp.eq.s32.totalorder %s17, 0
    %p100 = por %p98, %p99
    %s102 = sadd.s32 %s101, 1
    %p105 = scmp.eq.s32.totalorder %s11, 1
    %p106 = scmp.ne.s32.totalorder %s101, %s103
    %p107 = scmp.eq.s32.totalorder %s11, 0
    %p108 = por %p106, %p107
    %p109 = scmp.ne.s32.totalorder %s101, %s103
    %p110 = scmp.eq.s32.totalorder %s16, 1
    %p111 = por %p109, %p110
    %p112 = scmp.ne.s32.totalorder %s103, %s104
    %p113 = scmp.eq.s32.totalorder %s16, 0
    %p114 = por %p112, %p113
    %p115 = scmp.ne.s32.totalorder %s103, %s104
    %p116 = scmp.eq.s32.totalorder %s17, 1
    %p117 = por %p115, %p116
    %p119 = scmp.ne.s32.totalorder %s104, %s118
    %p120 = scmp.eq.s32.totalorder %s17, 0
    %p121 = por %p119, %p120
    %s123 = sadd.s32 %s122, 1
    %p126 = scmp.eq.s32.totalorder %s11, 1
    %p127 = scmp.ne.s32.totalorder %s122, %s124
    %p128 = scmp.eq.s32.totalorder %s11, 0
    %p129 = por %p127, %p128
    %p130 = scmp.ne.s32.totalorder %s122, %s124
    %p131 = scmp.eq.s32.totalorder %s16, 1
    %p132 = por %p130, %p131
    %p133 = scmp.ne.s32.totalorder %s124, %s125
    %p134 = scmp.eq.s32.totalorder %s16, 0
    %p135 = por %p133, %p134
    %p136 = scmp.ne.s32.totalorder %s124, %s125
    %p137 = scmp.eq.s32.totalorder %s17, 1
    %p138 = por %p136, %p137
    %p140 = scmp.ne.s32.totalorder %s125, %s139
    %p141 = scmp.eq.s32.totalorder %s17, 0
    %p142 = por %p140, %p141
    %s143 = ssub.s32 %s18, %s30
    %s144 = ssub.s32 %s19, %s26
    %s145 = sor.u32 %s143, %s144
    %p146 = scmp.eq.s32.totalorder %s145, 0
    %s148 = sadd.s32 %s147, 1
    %s149 = scalar_select %p146, %s147, %s148
    %p152 = pneg %p146
    %p153 = scmp.eq.s32.totalorder %s11, 1
    %p154 = por %p152, %p153
    %p155 = scmp.ne.s32.totalorder %s147, %s150
    %p156 = scmp.eq.s32.totalorder %s11, 0
    %p157 = por %p155, %p156
    %p158 = scmp.ne.s32.totalorder %s147, %s150
    %p159 = scmp.eq.s32.totalorder %s16, 1
    %p160 = por %p158, %p159
    %p161 = scmp.ne.s32.totalorder %s150, %s151
    %p162 = scmp.eq.s32.totalorder %s16, 0
    %p163 = por %p161, %p162
    %p164 = scmp.ne.s32.totalorder %s150, %s151
    %p165 = scmp.eq.s32.totalorder %s17, 1
    %p166 = por %p164, %p165
    %p168 = scmp.ne.s32.totalorder %s151, %s167
    %p169 = scmp.eq.s32.totalorder %s17, 0
    %p170 = por %p168, %p169
    %p171 = scmp.le.s32.totalorder 1, %s11
    %p172 = scmp.lt.s32.totalorder %s11, 3
    %p173 = pnand %p171, %p172
    %p174 = pneg %p173
    // Predicated region
    $region9: #{residual_forward.5} parent=5 // pred_check
      _
    $region10: #{residual_forward.5} parent=5 // pred_check_branch
      %176 = sbr.rel (%p173) target = $region12
    $region11: #{residual_forward.5} parent=5 // pred_region
      %s177 = ssub.s32 %s11, 1
      // Predicated region
      $region13: #{residual_forward.5} parent=11 // pred_check
        %p178 = pneg %p72
      $region14: #{residual_forward.5} parent=11 // pred_check_branch
        %180 = sbr.rel (%p178) target = $region16
      $region15: #{residual_forward.5} parent=11 // pred_region
        _
      $region16: #{residual_forward.5} parent=11 // pred_fallthru
        _
      // Predicated region
      $region17: #{residual_forward.5} parent=11 // pred_check
        %p181 = pneg %p93
      $region18: #{residual_forward.5} parent=11 // pred_check_branch
        %183 = sbr.rel (%p181) target = $region20
      $region19: #{residual_forward.5} parent=11 // pred_region
        _
      $region20: #{residual_forward.5} parent=11 // pred_fallthru
        _
      // Predicated region
      $region21: #{residual_forward.5} parent=11 // pred_check
        %p184 = pneg %p114
      $region22: #{residual_forward.5} parent=11 // pred_check_branch
        %186 = sbr.rel (%p184) target = $region24
      $region23: #{residual_forward.5} parent=11 // pred_region
        _
      $region24: #{residual_forward.5} parent=11 // pred_fallthru
        _
      // Predicated region
      $region25: #{residual_forward.5} parent=11 // pred_check
        %p187 = pneg %p135
      $region26: #{residual_forward.5} parent=11 // pred_check_branch
        %189 = sbr.rel (%p187) target = $region28
      $region27: #{residual_forward.5} parent=11 // pred_region
        _
      $region28: #{residual_forward.5} parent=11 // pred_fallthru
        _
    $region12: #{residual_forward.5} parent=5 // pred_fallthru
      _
    %p190 = scmp.lt.s32.totalorder %s11, 2
    // Predicated region
    $region29: #{residual_forward.5} parent=5 // pred_check
      %p191 = pneg %p190
    $region30: #{residual_forward.5} parent=5 // pred_check_branch
      %193 = sbr.rel (%p191) target = $region32
    $region31: #{residual_forward.5} parent=5 // pred_region
      // Predicated region
      $region33: #{residual_forward.5} parent=31 // pred_check
        %p194 = pneg %p45
      $region34: #{residual_forward.5} parent=31 // pred_check_branch
        %196 = sbr.rel (%p194) target = $region36
      $region35: #{residual_forward.5} parent=31 // pred_region
        %s197 = smul.u32 9, %s19
        %p198 = scmp.lt.s32.totalorder %s18, 1
        %s199 = scalar_select %p198, %s18, 1
        %p200 = scmp.lt.s32.totalorder %s197, 8
        %s201 = scalar_select %p200, %s197, 8
        %s202 = smul.addr %s199, 9
        %s203 = sadd.s32 %s201, %s202
        %s204 = smul.addr %s203, 8
        %s205 = scalar_lea.vmem %s0, %s204
        %s206 = smul.u32 9, %s19
      $region36: #{residual_forward.5} parent=31 // pred_fallthru
        _
    $region32: #{residual_forward.5} parent=5 // pred_fallthru
      _
    %p207 = scmp.le.s32.totalorder 1, %s11
    %p208 = scmp.lt.s32.totalorder %s11, 3
    %p209 = pnand %p207, %p208
    %p210 = pneg %p209
    // Predicated region
    $region37: #{residual_forward.5} parent=5 // pred_check
      _
    $region38: #{residual_forward.5} parent=5 // pred_check_branch
      %212 = sbr.rel (%p209) target = $region40
    $region39: #{residual_forward.5} parent=5 // pred_region
      %s213 = ssub.s32 %s11, 1
      %s214 = smul.u32 9, %s21
      %p215 = scmp.lt.s32.totalorder %s20, 1
      %s216 = scalar_select %p215, %s20, 1
      %p217 = scmp.lt.s32.totalorder %s214, 8
      %s218 = scalar_select %p217, %s214, 8
      %s219 = smul.addr %s216, 9
      %s220 = sadd.s32 %s218, %s219
      %s221 = smul.addr %s220, 8
      %s222 = scalar_lea.vmem %s0, %s221
      %p223 = pneg %p51
      %p224 = pneg %p48
      %p225 = pneg %p72
      %p226 = pneg %p69
      %p227 = pneg %p93
      %p228 = pneg %p90
      %p229 = pneg %p114
      %p230 = pneg %p111
      %p231 = pneg %p135
      %p232 = pneg %p132
      %p233 = pneg %p163
      %p234 = pneg %p160
      %s235 = smul.u32 9, %s21
      %p236 = scmp.lt.s32.totalorder %s20, 1
      %s237 = scalar_select %p236, %s20, 1
      %p238 = scmp.lt.s32.totalorder %s235, 8
      %s239 = scalar_select %p238, %s235, 8
      %s240 = smul.addr %s237, 9
      %s241 = sadd.s32 %s239, %s240
      %s242 = smul.addr %s241, 8
      %s243 = scalar_lea.vmem %s5, %s242
      %s244 = smul.u32 9, %s21
      %p245 = scmp.lt.s32.totalorder %s20, 1
      %s246 = scalar_select %p245, %s20, 1
      %p247 = scmp.lt.s32.totalorder %s244, 8
      %s248 = scalar_select %p247, %s244, 8
      %s249 = smul.addr %s246, 9
      %s250 = sadd.s32 %s248, %s249
      %s251 = smul.addr %s250, 8
      %s252 = scalar_lea.vmem %s0, %s251
      %s253 = smul.u32 9, %s21
      %s254 = smul.u32 9, %s21
      %p255 = scmp.lt.s32.totalorder %s20, 1
      %s256 = scalar_select %p255, %s20, 1
      %p257 = scmp.lt.s32.totalorder %s254, 8
      %s258 = scalar_select %p257, %s254, 8
      %s259 = smul.addr %s256, 9
      %s260 = sadd.s32 %s258, %s259
      %s261 = smul.addr %s260, 8
      %s262 = scalar_lea.vmem %s5, %s261
      %s263 = smul.u32 9, %s21
      %v264 = vld [vmem:[%s1] sm:$0x1]
      %v265 = vld [vmem:[%s1 + $0x1] sm:$0x1]
      %v266 = vld [vmem:[%s2] sm:$0x1]
      %v267 = vld [vmem:[%s2 + $0x1] sm:$0x1]
      %v268 = vld [vmem:[%s3] sm:$0x1]
      %v269 = vld [vmem:[%s4] sm:$0x1]
      %vm270 = vcmask 57344
      %v271 = vsel %vm270, %v264, 0.0
      %v272 = vsel %vm270, %v265, 0.0
      %v273 = vadd.f32 %v271, %v272
      %v274 = vrot.slane %v273, 4
      %v275 = vadd.f32 %v273, %v274
      %v276 = vrot.slane %v275, 2
      %v277 = vadd.f32 %v275, %v276
      %v278 = vrot.slane %v277, 1
      %v279 = vadd.f32 %v277, %v278
      %v280 = vsel %vm270, %v266, 0.0
      %v281 = vsel %vm270, %v267, 0.0
      %v282 = vadd.f32 %v280, %v281
      %v283 = vrot.slane %v282, 4
      %v284 = vadd.f32 %v282, %v283
      %v285 = vrot.slane %v284, 2
      %v286 = vadd.f32 %v284, %v285
      %v287 = vrot.slane %v286, 1
      %v288 = vadd.f32 %v286, %v287
      %v289 = vmul.f32 %v279, 0.0078125
      %v290 = vmul.f32 %v288, 0.0078125
      %v291 = vmul.f32 %v289, %v289
      %v292 = vsub.f32 %v290, %v291
      %v293 = vmax.f32 %v292, 0.0
      %v294 = vadd.f32 %v293, 1e-05
      %v295 = vrsqrt.pop %v294
      %v296 = vmul.f32 %v268, %v295
      %v297 = vmul.f32 %v289, %v296
      %v298 = vsub.f32 %v269, %v297
      %v299 = vld [vmem:[%s252] sm:$0xff]
      %v300 = vld [vmem:[%s252 + $0x8] sm:$0xff]
      %v301 = vld [vmem:[%s252 + $0x10] sm:$0xff]
      %v302 = vld [vmem:[%s252 + $0x18] sm:$0xff]
      %v303 = vld [vmem:[%s252 + $0x20] sm:$0xff]
      %v304 = vld [vmem:[%s252 + $0x28] sm:$0xff]
      %v305 = vld [vmem:[%s252 + $0x30] sm:$0xff]
      %v306 = vld [vmem:[%s252 + $0x38] sm:$0xff]
      %v307 = vld [vmem:[%s252 + $0x40] sm:$0xff]
      %v309 = vlaneseq
      %v310 = vshrl.u32 %v309, 7
      %v311 = vsub.s32 0, %v310
      %v312 = vrot.slane %v296, %v311
      %v314 = vmul.f32 %v299, %v312
      %v315 = vmul.f32 %v300, %v312
      %v316 = vmul.f32 %v301, %v312
      %v317 = vmul.f32 %v302, %v312
      %v318 = vmul.f32 %v303, %v312
      %v319 = vmul.f32 %v304, %v312
      %v320 = vmul.f32 %v305, %v312
      %v321 = vmul.f32 %v306, %v312
      %v322 = vmul.f32 %v307, %v312
      %v324 = vlaneseq
      %v325 = vshrl.u32 %v324, 7
      %v326 = vsub.s32 0, %v325
      %v327 = vrot.slane %v298, %v326
      %v329 = vadd.f32 %v314, %v327
      %v330 = vadd.f32 %v315, %v327
      %v331 = vadd.f32 %v316, %v327
      %v332 = vadd.f32 %v317, %v327
      %v333 = vadd.f32 %v318, %v327
      %v334 = vadd.f32 %v319, %v327
      %v335 = vadd.f32 %v320, %v327
      %v336 = vadd.f32 %v321, %v327
      %v337 = vadd.f32 %v322, %v327
      %v338 = vmax.f32 %v329, 0.0
      %v339 = vmax.f32 %v330, 0.0
      %v340 = vmax.f32 %v331, 0.0
      %v341 = vmax.f32 %v332, 0.0
      %v342 = vmax.f32 %v333, 0.0
      %v343 = vmax.f32 %v334, 0.0
      %v344 = vmax.f32 %v335, 0.0
      %v345 = vmax.f32 %v336, 0.0
      %v346 = vmax.f32 %v337, 0.0
      %vm347 = vcmask 64512
      %348 = vst.msk [vmem:[%s262] sm:$0xff] %vm347, %v338
      %349 = vst.msk [vmem:[%s262 + $0x8] sm:$0xff] %vm347, %v339
      %350 = vst.msk [vmem:[%s262 + $0x10] sm:$0xff] %vm347, %v340
      %351 = vst.msk [vmem:[%s262 + $0x18] sm:$0xff] %vm347, %v341
      %352 = vst.msk [vmem:[%s262 + $0x20] sm:$0xff] %vm347, %v342
      %353 = vst.msk [vmem:[%s262 + $0x28] sm:$0xff] %vm347, %v343
      %354 = vst.msk [vmem:[%s262 + $0x30] sm:$0xff] %vm347, %v344
      %355 = vst.msk [vmem:[%s262 + $0x38] sm:$0xff] %vm347, %v345
      %356 = vst.msk [vmem:[%s262 + $0x40] sm:$0xff] %vm347, %v346
      %s357 = smul.u32 9, %s21
      %p358 = scmp.lt.s32.totalorder %s20, 1
      %s359 = scalar_select %p358, %s20, 1
      %p360 = scmp.lt.s32.totalorder %s357, 8
      %s361 = scalar_select %p360, %s357, 8
      %s362 = smul.addr %s359, 9
      %s363 = sadd.s32 %s361, %s362
      %s364 = smul.addr %s363, 8
      %s365 = scalar_lea.vmem %s5, %s364
      // Predicated region
      $region41: #{residual_forward.5} parent=39 // pred_check
        %p366 = pneg %p160
      $region42: #{residual_forward.5} parent=39 // pred_check_branch
        %368 = sbr.rel (%p366) target = $region44
      $region43: #{residual_forward.5} parent=39 // pred_region
        %s369 = smul.u32 9, %s21
      $region44: #{residual_forward.5} parent=39 // pred_fallthru
        _
    $region40: #{residual_forward.5} parent=5 // pred_fallthru
      _
    %p370 = scmp.le.s32.totalorder 2, %s11
    // Predicated region
    $region45: #{residual_forward.5} parent=5 // pred_check
      %p371 = pneg %p370
    $region46: #{residual_forward.5} parent=5 // pred_check_branch
      %373 = sbr.rel (%p371) target = $region48
    $region47: #{residual_forward.5} parent=5 // pred_region
      %s374 = ssub.s32 %s11, 2
      // Predicated region
      $region49: #{residual_forward.5} parent=47 // pred_check
        %p375 = pneg %p166
      $region50: #{residual_forward.5} parent=47 // pred_check_branch
        %377 = sbr.rel (%p375) target = $region52
      $region51: #{residual_forward.5} parent=47 // pred_region
        %s378 = smul.u32 9, %s23
        %p379 = scmp.lt.s32.totalorder %s22, 1
        %s380 = scalar_select %p379, %s22, 1
        %p381 = scmp.lt.s32.totalorder %s378, 8
        %s382 = scalar_select %p381, %s378, 8
        %s383 = smul.addr %s380, 9
        %s384 = sadd.s32 %s382, %s383
        %s385 = smul.addr %s384, 8
        %s386 = scalar_lea.vmem %s5, %s385
      $region52: #{residual_forward.5} parent=47 // pred_fallthru
        _
    $region48: #{residual_forward.5} parent=5 // pred_fallthru
      _
  $region6: #{residual_forward.5} parent=0 // loop_footer
    %s15 = sadd.s32 1, %s11
  $region7: #{residual_forward.5} parent=0 // loop_footer_branch
    %10 = sbr.rel target = $region3
  $region8: #{residual_forward.5} parent=0 // loop_exit
    _

// kernel: residual_forward.4
$region0: #{residual_forward.4}
  #allocation0 [shape = 'u32[]', space=smem, size = 0x4, offset = 0x4, fixed_abs, tag = 'smem constant byte address 0x4 - core index']
  #allocation1 [shape = 'u32[144,128]{1,0:T(1,128)}', space=vmem, size = 0x12000, scoped, tag = 'internal scratch']
  #allocation2 [shape = 'f32[72,36]{1,0:T(8,128)}', space=vmem, size = 0x9000, scoped, tag = 'scratch operand']
  %s0 = inlined_call_operand.vmem [shape: f32[2,4,82,4], index: 0, kind: input, shape index: {}]
  %s1 = inlined_call_operand.vmem [shape: f32[36,8], index: 1, kind: input, shape index: {}]
  %s2 = inlined_call_operand.vmem [shape: f32[1,8], index: 2, kind: input, shape index: {}]
  %s3 = inlined_call_operand.vmem [shape: f32[72,1], index: 3, kind: input, shape index: {}]
  %s4 = inlined_call_operand.vmem [shape: f32[2,72,8], index: 4, kind: output, shape index: {0}]
  %s5 = inlined_call_operand.vmem [shape: f32[2,1,1,8], index: 5, kind: output, shape index: {1}]
  %s6 = inlined_call_operand.vmem [shape: f32[2,1,1,8], index: 6, kind: output, shape index: {2}]
  %7 = xla_tuple %s4, %s5, %s6
  %s8 = sld [smem:[#allocation0]]
  $region65: #{residual_forward.4} parent=0
    _
  %s10 = ssub.s32 1, %s8
  %s11 = scalar_select 0, %s10, %s8
  loop: start=0, step=1, limit=4
  $region2: #{residual_forward.4} parent=0 // loop_pre_header
    _
  $region3: #{residual_forward.4} parent=0 // loop_header
    %s13 = sphi 0, %s17
    %p14 = scmp.ge.s32.totalorder %s13, 4
    %s20 = sphi 0, %s32
    %s21 = sphi 0, %s28
    %s22 = sphi 0, %s20
    %s23 = sphi 0, %s21
    %s24 = sphi 0, %s22
    %s25 = sphi 0, %s23
    %s35 = sphi 0, %s37
    %s38 = sphi 0, %s35
    %s39 = sphi 0, %s38
    %s55 = sphi 0, %s39
    %s59 = sphi 0, %s59
    %s61 = sphi 0, %s59
    %s62 = sphi 0, %s61
    %s76 = sphi 0, %s62
    %s80 = sphi 0, %s80
    %s82 = sphi 0, %s80
    %s83 = sphi 0, %s82
    %s97 = sphi 0, %s83
    %s103 = sphi 0, %s105
    %s106 = sphi 0, %s103
    %s107 = sphi 0, %s106
    %s123 = sphi 0, %s107
    %s131 = sphi 0, %s133
    %s134 = sphi 0, %s131
    %s135 = sphi 0, %s134
    %s151 = sphi 0, %s135
    %s159 = sphi 0, %s161
    %s162 = sphi 0, %s159
    %s163 = sphi 0, %s162
    %s179 = sphi 0, %s163
    %s187 = sphi 0, %s189
    %s190 = sphi 0, %s187
    %s191 = sphi 0, %s190
    %s207 = sphi 0, %s191
  $region4: #{residual_forward.4} parent=0 // loop_header_branch
    %16 = sbr.rel (%p14) target = $region8
  $region5: #{residual_forward.4} parent=0 // loop_body
    %s18 = ssub.s32 %s13, 1
    %s19 = ssub.s32 %s13, 2
    %s26 = sadd.s32 1, %s21
    %p27 = scmp.ge.s32.totalorder %s26, 1
    %s28 = scalar_select %p27, 0, %s26
    %s29 = sadd.s32 1, %s20
    %s30 = scalar_select %p27, %s29, %s20
    %p31 = scmp.ge.s32.totalorder %s30, 2
    %s32 = scalar_select %p31, 0, %s30
    %s33 = ssub.s32 %s20, %s32
    %p34 = scmp.eq.s32.totalorder %s33, 0
    %s36 = sadd.s32 %s35, 1
    %s37 = scalar_select %p34, %s35, %s36
    %p40 = pneg %p34
    %p41 = scmp.eq.s32.totalorder %s13, 1
    %p42 = por %p40, %p41
    %p43 = scmp.ne.s32.totalorder %s35, %s38
    %p44 = scmp.eq.s32.totalorder %s13, 0
    %p45 = por %p43, %p44
    %p46 = scmp.ne.s32.totalorder %s35, %s38
    %p47 = scmp.eq.s32.totalorder %s18, 1
    %p48 = por %p46, %p47
    %p49 = scmp.ne.s32.totalorder %s38, %s39
    %p50 = scmp.eq.s32.totalorder %s18, 0
    %p51 = por %p49, %p50
    %p52 = scmp.ne.s32.totalorder %s38, %s39
    %p53 = scmp.eq.s32.totalorder %s19, 1
    %p54 = por %p52, %p53
    %p56 = scmp.ne.s32.totalorder %s39, %s55
    %p57 = scmp.eq.s32.totalorder %s19, 0
    %p58 = por %p56, %p57
    %s60 = sadd.s32 %s59, 1
    %p63 = scmp.eq.s32.totalorder %s13, 1
    %p64 = scmp.ne.s32.totalorder %s59, %s61
    %p65 = scmp.eq.s32.totalorder %s13, 0
    %p66 = por %p64, %p65
    %p67 = scmp.ne.s32.totalorder %s59, %s61
    %p68 = scmp.eq.s32.totalorder %s18, 1
    %p69 = por %p67, %p68
    %p70 = scmp.ne.s32.totalorder %s61, %s62
    %p71 = scmp.eq.s32.totalorder %s18, 0
    %p72 = por %p70, %p71
    %p73 = scmp.ne.s32.totalorder %s61, %s62
    %p74 = scmp.eq.s32.totalorder %s19, 1
    %p75 = por %p73, %p74
    %p77 = scmp.ne.s32.totalorder %s62, %s76
    %p78 = scmp.eq.s32.totalorder %s19, 0
    %p79 = por %p77, %p78
    %s81 = sadd.s32 %s80, 1
    %p84 = scmp.eq.s32.totalorder %s13, 1
    %p85 = scmp.ne.s32.totalorder %s80, %s82
    %p86 = scmp.eq.s32.totalorder %s13, 0
    %p87 = por %p85, %p86
    %p88 = scmp.ne.s32.totalorder %s80, %s82
    %p89 = scmp.eq.s32.totalorder %s18, 1
    %p90 = por %p88, %p89
    %p91 = scmp.ne.s32.totalorder %s82, %s83
    %p92 = scmp.eq.s32.totalorder %s18, 0
    %p93 = por %p91, %p92
    %p94 = scmp.ne.s32.totalorder %s82, %s83
    %p95 = scmp.eq.s32.totalorder %s19, 1
    %p96 = por %p94, %p95
    %p98 = scmp.ne.s32.totalorder %s83, %s97
    %p99 = scmp.eq.s32.totalorder %s19, 0
    %p100 = por %p98, %p99
    %s101 = ssub.s32 %s21, %s28
    %p102 = scmp.eq.s32.totalorder %s101, 0
    %s104 = sadd.s32 %s103, 1
    %s105 = scalar_select %p102, %s103, %s104
    %p108 = pneg %p102
    %p109 = scmp.eq.s32.totalorder %s13, 1
    %p110 = por %p108, %p109
    %p111 = scmp.ne.s32.totalorder %s103, %s106
    %p112 = scmp.eq.s32.totalorder %s13, 0
    %p113 = por %p111, %p112
    %p114 = scmp.ne.s32.totalorder %s103, %s106
    %p115 = scmp.eq.s32.totalorder %s18, 1
    %p116 = por %p114, %p115
    %p117 = scmp.ne.s32.totalorder %s106, %s107
    %p118 = scmp.eq.s32.totalorder %s18, 0
    %p119 = por %p117, %p118
    %p120 = scmp.ne.s32.totalorder %s106, %s107
    %p121 = scmp.eq.s32.totalorder %s19, 1
    %p122 = por %p120, %p121
    %p124 = scmp.ne.s32.totalorder %s107, %s123
    %p125 = scmp.eq.s32.totalorder %s19, 0
    %p126 = por %p124, %p125
    %s127 = ssub.s32 %s20, %s32
    %s128 = ssub.s32 %s21, %s28
    %s129 = sor.u32 %s127, %s128
    %p130 = scmp.eq.s32.totalorder %s129, 0
    %s132 = sadd.s32 %s131, 1
    %s133 = scalar_select %p130, %s131, %s132
    %p136 = pneg %p130
    %p137 = scmp.eq.s32.totalorder %s13, 1
    %p138 = por %p136, %p137
    %p139 = scmp.ne.s32.totalorder %s131, %s134
    %p140 = scmp.eq.s32.totalorder %s13, 0
    %p141 = por %p139, %p140
    %p142 = scmp.ne.s32.totalorder %s131, %s134
    %p143 = scmp.eq.s32.totalorder %s18, 1
    %p144 = por %p142, %p143
    %p145 = scmp.ne.s32.totalorder %s134, %s135
    %p146 = scmp.eq.s32.totalorder %s18, 0
    %p147 = por %p145, %p146
    %p148 = scmp.ne.s32.totalorder %s134, %s135
    %p149 = scmp.eq.s32.totalorder %s19, 1
    %p150 = por %p148, %p149
    %p152 = scmp.ne.s32.totalorder %s135, %s151
    %p153 = scmp.eq.s32.totalorder %s19, 0
    %p154 = por %p152, %p153
    %s155 = ssub.s32 %s20, %s32
    %s156 = ssub.s32 %s21, %s28
    %s157 = sor.u32 %s155, %s156
    %p158 = scmp.eq.s32.totalorder %s157, 0
    %s160 = sadd.s32 %s159, 1
    %s161 = scalar_select %p158, %s159, %s160
    %p164 = pneg %p158
    %p165 = scmp.eq.s32.totalorder %s13, 1
    %p166 = por %p164, %p165
    %p167 = scmp.ne.s32.totalorder %s159, %s162
    %p168 = scmp.eq.s32.totalorder %s13, 0
    %p169 = por %p167, %p168
    %p170 = scmp.ne.s32.totalorder %s159, %s162
    %p171 = scmp.eq.s32.totalorder %s18, 1
    %p172 = por %p170, %p171
    %p173 = scmp.ne.s32.totalorder %s162, %s163
    %p174 = scmp.eq.s32.totalorder %s18, 0
    %p175 = por %p173, %p174
    %p176 = scmp.ne.s32.totalorder %s162, %s163
    %p177 = scmp.eq.s32.totalorder %s19, 1
    %p178 = por %p176, %p177
    %p180 = scmp.ne.s32.totalorder %s163, %s179
    %p181 = scmp.eq.s32.totalorder %s19, 0
    %p182 = por %p180, %p181
    %s183 = ssub.s32 %s20, %s32
    %s184 = ssub.s32 %s21, %s28
    %s185 = sor.u32 %s183, %s184
    %p186 = scmp.eq.s32.totalorder %s185, 0
    %s188 = sadd.s32 %s187, 1
    %s189 = scalar_select %p186, %s187, %s188
    %p192 = pneg %p186
    %p193 = scmp.eq.s32.totalorder %s13, 1
    %p194 = por %p192, %p193
    %p195 = scmp.ne.s32.totalorder %s187, %s190
    %p196 = scmp.eq.s32.totalorder %s13, 0
    %p197 = por %p195, %p196
    %p198 = scmp.ne.s32.totalorder %s187, %s190
    %p199 = scmp.eq.s32.totalorder %s18, 1
    %p200 = por %p198, %p199
    %p201 = scmp.ne.s32.totalorder %s190, %s191
    %p202 = scmp.eq.s32.totalorder %s18, 0
    %p203 = por %p201, %p202
    %p204 = scmp.ne.s32.totalorder %s190, %s191
    %p205 = scmp.eq.s32.totalorder %s19, 1
    %p206 = por %p204, %p205
    %p208 = scmp.ne.s32.totalorder %s191, %s207
    %p209 = scmp.eq.s32.totalorder %s19, 0
    %p210 = por %p208, %p209
    %p211 = scmp.le.s32.totalorder 1, %s13
    %p212 = scmp.lt.s32.totalorder %s13, 3
    %p213 = pnand %p211, %p212
    %p214 = pneg %p213
    // Predicated region
    $region9: #{residual_forward.4} parent=5 // pred_check
      _
    $region10: #{residual_forward.4} parent=5 // pred_check_branch
      %216 = sbr.rel (%p213) target = $region12
    $region11: #{residual_forward.4} parent=5 // pred_region
      %s217 = ssub.s32 %s13, 1
      // Predicated region
      $region13: #{residual_forward.4} parent=11 // pred_check
        %p218 = pneg %p72
      $region14: #{residual_forward.4} parent=11 // pred_check_branch
        %220 = sbr.rel (%p218) target = $region16
      $region15: #{residual_forward.4} parent=11 // pred_region
        _
      $region16: #{residual_forward.4} parent=11 // pred_fallthru
        _
      // Predicated region
      $region17: #{residual_forward.4} parent=11 // pred_check
        %p221 = pneg %p93
      $region18: #{residual_forward.4} parent=11 // pred_check_branch
        %223 = sbr.rel (%p221) target = $region20
      $region19: #{residual_forward.4} parent=11 // pred_region
        _
      $region20: #{residual_forward.4} parent=11 // pred_fallthru
        _
      // Predicated region
      $region21: #{residual_forward.4} parent=11 // pred_check
        %p224 = pneg %p119
      $region22: #{residual_forward.4} parent=11 // pred_check_branch
        %226 = sbr.rel (%p224) target = $region24
      $region23: #{residual_forward.4} parent=11 // pred_region
        %s227 = smul.u32 9, %s23
        %p228 = scmp.lt.s32.totalorder %s227, 8
        %s229 = scalar_select %p228, %s227, 8
        %s230 = smul.addr %s229, 8
        %s231 = scalar_lea.vmem %s3, %s230
        %s232 = smul.u32 9, %s23
      $region24: #{residual_forward.4} parent=11 // pred_fallthru
        _
    $region12: #{residual_forward.4} parent=5 // pred_fallthru
      _
    %p233 = scmp.lt.s32.totalorder %s13, 2
    // Predicated region
    $region25: #{residual_forward.4} parent=5 // pred_check
      %p234 = pneg %p233
    $region26: #{residual_forward.4} parent=5 // pred_check_branch
      %236 = sbr.rel (%p234) target = $region28
    $region27: #{residual_forward.4} parent=5 // pred_region
      // Predicated region
      $region29: #{residual_forward.4} parent=27 // pred_check
        %p237 = pneg %p45
      $region30: #{residual_forward.4} parent=27 // pred_check_branch
        %239 = sbr.rel (%p237) target = $region32
      $region31: #{residual_forward.4} parent=27 // pred_region
        %p240 = scmp.lt.s32.totalorder %s20, 1
        %s241 = scalar_select %p240, %s20, 1
        %s242 = smul.addr %s241, 44
        %s243 = smul.addr %s242, 8
        %s244 = scalar_lea.vmem %s0, %s243
      $region32: #{residual_forward.4} parent=27 // pred_fallthru
        _
    $region28: #{residual_forward.4} parent=5 // pred_fallthru
      _
    %p245 = scmp.le.s32.totalorder 1, %s13
    %p246 = scmp.lt.s32.totalorder %s13, 3
    %p247 = pnand %p245, %p246
    %p248 = pneg %p247
    // Predicated region
    $region33: #{residual_forward.4} parent=5 // pred_check
      _
    $region34: #{residual_forward.4} parent=5 // pred_check_branch
      %250 = sbr.rel (%p247) target = $region36
    $region35: #{residual_forward.4} parent=5 // pred_region
      %s251 = ssub.s32 %s13, 1
      %p252 = scmp.lt.s32.totalorder %s22, 1
      %s253 = scalar_select %p252, %s22, 1
      %s254 = smul.addr %s253, 44
      %s255 = smul.addr %s254, 8
      %s256 = scalar_lea.vmem %s0, %s255
      %p257 = pneg %p51
      %p258 = pneg %p48
      %p259 = pneg %p72
      %p260 = pneg %p69
      %p261 = pneg %p93
      %p262 = pneg %p90
      %s263 = smul.u32 9, %s23
      %p264 = scmp.lt.s32.totalorder %s263, 8
      %s265 = scalar_select %p264, %s263, 8
      %s266 = smul.addr %s265, 8
      %s267 = scalar_lea.vmem %s3, %s266
      %p268 = pneg %p119
      %p269 = pneg %p116
      %p270 = pneg %p147
      %p271 = pneg %p144
      %s272 = smul.u32 9, %s23
      %p273 = scmp.lt.s32.totalorder %s22, 1
      %s274 = scalar_select %p273, %s22, 1
      %p275 = scmp.lt.s32.totalorder %s272, 8
      %s276 = scalar_select %p275, %s272, 8
      %s277 = smul.addr %s274, 9
      %s278 = sadd.s32 %s276, %s277
      %s279 = smul.addr %s278, 8
      %s280 = scalar_lea.vmem %s4, %s279
      %p281 = pneg %p175
      %p282 = pneg %p172
      %p283 = scmp.lt.s32.totalorder %s22, 1
      %s284 = scalar_select %p283, %s22, 1
      %p285 = scmp.lt.s32.totalorder %s23, 0
      %s286 = scalar_select %p285, %s23, 0
      %s287 = sadd.s32 %s286, %s284
      %s288 = scalar_lea.vmem %s5, %s287
      %p289 = pneg %p203
      %p290 = pneg %p200
      %p291 = scmp.lt.s32.totalorder %s22, 1
      %s292 = scalar_select %p291, %s22, 1
      %p293 = scmp.lt.s32.totalorder %s23, 0
      %s294 = scalar_select %p293, %s23, 0
      %s295 = sadd.s32 %s294, %s292
      %s296 = scalar_lea.vmem %s6, %s295
      %p297 = scmp.lt.s32.totalorder %s22, 1
      %s298 = scalar_select %p297, %s22, 1
      %s299 = smul.addr %s298, 44
      %s300 = smul.addr %s299, 8
      %s301 = scalar_lea.vmem %s0, %s300
      %s302 = smul.u32 9, %s23
      %p303 = scmp.lt.s32.totalorder %s302, 8
      %s304 = scalar_select %p303, %s302, 8
      %s305 = smul.addr %s304, 8
      %s306 = scalar_lea.vmem %s3, %s305
      %s307 = smul.u32 9, %s23
      %s308 = smul.u32 9, %s23
      %p309 = scmp.lt.s32.totalorder %s22, 1
      %s310 = scalar_select %p309, %s22, 1
      %p311 = scmp.lt.s32.totalorder %s308, 8
      %s312 = scalar_select %p311, %s308, 8
      %s313 = smul.addr %s310, 9
      %s314 = sadd.s32 %s312, %s313
      %s315 = smul.addr %s314, 8
      %s316 = scalar_lea.vmem %s4, %s315
      %s317 = smul.u32 9, %s23
      %p318 = scmp.lt.s32.totalorder %s22, 1
      %s319 = scalar_select %p318, %s22, 1
      %p320 = scmp.lt.s32.totalorder %s23, 0
      %s321 = scalar_select %p320, %s23, 0
      %s322 = sadd.s32 %s321, %s319
      %s323 = scalar_lea.vmem %s5, %s322
      %p324 = scmp.lt.s32.totalorder %s22, 1
      %s325 = scalar_select %p324, %s22, 1
      %p326 = scmp.lt.s32.totalorder %s23, 0
      %s327 = scalar_select %p326, %s23, 0
      %s328 = sadd.s32 %s327, %s325
      %s329 = scalar_lea.vmem %s6, %s328
      %s330 = smul.u32 %s23, 72
      %s331 = scalar_lea.vmem %s301, %s330
      %v332 = vld [vmem:[%s331] sm:$0xff]
      %v333 = vld [vmem:[%s331 + $0x8] sm:$0xff]
      %v334 = vld [vmem:[%s331 + $0x10] sm:$0xff]
      %v335 = vld [vmem:[%s331 + $0x18] sm:$0xff]
      %v336 = vld [vmem:[%s331 + $0x20] sm:$0xff]
      %v337 = vld [vmem:[%s331 + $0x28] sm:$0xff]
      %v338 = vld [vmem:[%s331 + $0x30] sm:$0xff]
      %v339 = vld [vmem:[%s331 + $0x38] sm:$0xff]
      %v340 = vld [vmem:[%s331 + $0x40] sm:$0xff]
      %vm341 = vcmask 31744
      %342 = vst.msk [vmem:[#allocation2] sm:$0xff] %vm341, %v332
      %343 = vst.msk [vmem:[#allocation2 + $0x8] sm:$0xff] %vm341, %v333
      %344 = vst.msk [vmem:[#allocation2 + $0x10] sm:$0xff] %vm341, %v334
      %345 = vst.msk [vmem:[#allocation2 + $0x18] sm:$0xff] %vm341, %v335
      %346 = vst.msk [vmem:[#allocation2 + $0x20] sm:$0xff] %vm341, %v336
      %347 = vst.msk [vmem:[#allocation2 + $0x28] sm:$0xff] %vm341, %v337
      %348 = vst.msk [vmem:[#allocation2 + $0x30] sm:$0xff] %vm341, %v338
      %349 = vst.msk [vmem:[#allocation2 + $0x38] sm:$0xff] %vm341, %v339
      %350 = vst.msk [vmem:[#allocation2 + $0x40] sm:$0xff] %vm341, %v340
      %s351 = sadd.s32 %s330, 88
      %s352 = scalar_lea.vmem %s301, %s351
      %v353 = vld [vmem:[%s352] sm:$0xff]
      %v354 = vld [vmem:[%s352 + $0x8] sm:$0xff]
      %v355 = vld [vmem:[%s352 + $0x10] sm:$0xff]
      %v356 = vld [vmem:[%s352 + $0x18] sm:$0xff]
      %v357 = vld [vmem:[%s352 + $0x20] sm:$0xff]
      %v358 = vld [vmem:[%s352 + $0x28] sm:$0xff]
      %v359 = vld [vmem:[%s352 + $0x30] sm:$0xff]
      %v360 = vld [vmem:[%s352 + $0x38] sm:$0xff]
      %v361 = vld [vmem:[%s352 + $0x40] sm:$0xff]
      %371 = vrot.lane.b32.xlu0 %v353, 4
      %v372 = vpop.permute.xlu0 %371
      %373 = vrot.lane.b32.xlu0 %v354, 4
      %v374 = vpop.permute.xlu0 %373
      %375 = vrot.lane.b32.xlu0 %v355, 4
      %v376 = vpop.permute.xlu0 %375
      %377 = vrot.lane.b32.xlu0 %v356, 4
      %v378 = vpop.permute.xlu0 %377
      %379 = vrot.lane.b32.xlu0 %v357, 4
      %v380 = vpop.permute.xlu0 %379
      %381 = vrot.lane.b32.xlu0 %v358, 4
      %v382 = vpop.permute.xlu0 %381
      %383 = vrot.lane.b32.xlu0 %v359, 4
      %v384 = vpop.permute.xlu0 %383
      %385 = vrot.lane.b32.xlu0 %v360, 4
      %v386 = vpop.permute.xlu0 %385
      %387 = vrot.lane.b32.xlu0 %v361, 4
      %v388 = vpop.permute.xlu0 %387
      %vm398 = vcmask 64544
      %399 = vst.msk [vmem:[#allocation2] sm:$0xff] %vm398, %v372
      %400 = vst.msk [vmem:[#allocation2 + $0x8] sm:$0xff] %vm398, %v374
      %401 = vst.msk [vmem:[#allocation2 + $0x10] sm:$0xff] %vm398, %v376
      %402 = vst.msk [vmem:[#allocation2 + $0x18] sm:$0xff] %vm398, %v378
      %403 = vst.msk [vmem:[#allocation2 + $0x20] sm:$0xff] %vm398, %v380
      %404 = vst.msk [vmem:[#allocation2 + $0x28] sm:$0xff] %vm398, %v382
      %405 = vst.msk [vmem:[#allocation2 + $0x30] sm:$0xff] %vm398, %v384
      %406 = vst.msk [vmem:[#allocation2 + $0x38] sm:$0xff] %vm398, %v386
      %407 = vst.msk [vmem:[#allocation2 + $0x40] sm:$0xff] %vm398, %v388
      %s408 = sadd.s32 %s330, 1
      %s409 = scalar_lea.vmem %s301, %s408
      %v410 = vld [vmem:[%s409] sm:$0xff]
      %v411 = vld [vmem:[%s409 + $0x8] sm:$0xff]
      %v412 = vld [vmem:[%s409 + $0x10] sm:$0xff]
      %v413 = vld [vmem:[%s409 + $0x18] sm:$0xff]
      %v414 = vld [vmem:[%s409 + $0x20] sm:$0xff]
      %v415 = vld [vmem:[%s409 + $0x28] sm:$0xff]
      %v416 = vld [vmem:[%s409 + $0x30] sm:$0xff]
      %v417 = vld [vmem:[%s409 + $0x38] sm:$0xff]
      %v418 = vld [vmem:[%s409 + $0x40] sm:$0xff]
      %428 = vrot.lane.b32.xlu0 %v410, 8
      %v429 = vpop.permute.xlu0 %428
      %430 = vrot.lane.b32.xlu0 %v411, 8
      %v431 = vpop.permute.xlu0 %430
      %432 = vrot.lane.b32.xlu0 %v412, 8
      %v433 = vpop.permute.xlu0 %432
      %434 = vrot.lane.b32.xlu0 %v413, 8
      %v435 = vpop.permute.xlu0 %434
      %436 = vrot.lane.b32.xlu0 %v414, 8
      %v437 = vpop.permute.xlu0 %436
      %438 = vrot.lane.b32.xlu0 %v415, 8
      %v439 = vpop.permute.xlu0 %438
      %440 = vrot.lane.b32.xlu0 %v416, 8
      %v441 = vpop.permute.xlu0 %440
      %442 = vrot.lane.b32.xlu0 %v417, 8
      %v443 = vpop.permute.xlu0 %442
      %444 = vrot.lane.b32.xlu0 %v418, 8
      %v445 = vpop.permute.xlu0 %444
      %vm455 = vcmask 97344
      %456 = vst.msk [vmem:[#allocation2] sm:$0xff] %vm455, %v429
      %457 = vst.msk [vmem:[#allocation2 + $0x8] sm:$0xff] %vm455, %v431
      %458 = vst.msk [vmem:[#allocation2 + $0x10] sm:$0xff] %vm455, %v433
      %459 = vst.msk [vmem:[#allocation2 + $0x18] sm:$0xff] %vm455, %v435
      %460 = vst.msk [vmem:[#allocation2 + $0x20] sm:$0xff] %vm455, %v437
      %461 = vst.msk [vmem:[#allocation2 + $0x28] sm:$0xff] %vm455, %v439
      %462 = vst.msk [vmem:[#allocation2 + $0x30] sm:$0xff] %vm455, %v441
      %463 = vst.msk [vmem:[#allocation2 + $0x38] sm:$0xff] %vm455, %v443
      %464 = vst.msk [vmem:[#allocation2 + $0x40] sm:$0xff] %vm455, %v445
      %s465 = sadd.s32 %s330, 176
      %s466 = scalar_lea.vmem %s301, %s465
      %v467 = vld [vmem:[%s466] sm:$0xff]
      %v468 = vld [vmem:[%s466 + $0x8] sm:$0xff]
      %v469 = vld [vmem:[%s466 + $0x10] sm:$0xff]
      %v470 = vld [vmem:[%s466 + $0x18] sm:$0xff]
      %v471 = vld [vmem:[%s466 + $0x20] sm:$0xff]
      %v472 = vld [vmem:[%s466 + $0x28] sm:$0xff]
      %v473 = vld [vmem:[%s466 + $0x30] sm:$0xff]
      %v474 = vld [vmem:[%s466 + $0x38] sm:$0xff]
      %v475 = vld [vmem:[%s466 + $0x40] sm:$0xff]
      %485 = vrot.lane.b32.xlu0 %v467, 12
      %v486 = vpop.permute.xlu0 %485
      %487 = vrot.lane.b32.xlu0 %v468, 12
      %v488 = vpop.permute.xlu0 %487
      %489 = vrot.lane.b32.xlu0 %v469, 12
      %v490 = vpop.permute.xlu0 %489
      %491 = vrot.lane.b32.xlu0 %v470, 12
      %v492 = vpop.permute.xlu0 %491
      %493 = vrot.lane.b32.xlu0 %v471, 12
      %v494 = vpop.permute.xlu0 %493
      %495 = vrot.lane.b32.xlu0 %v472, 12
      %v496 = vpop.permute.xlu0 %495
      %497 = vrot.lane.b32.xlu0 %v473, 12
      %v498 = vpop.permute.xlu0 %497
      %499 = vrot.lane.b32.xlu0 %v474, 12
      %v500 = vpop.permute.xlu0 %499
      %501 = vrot.lane.b32.xlu0 %v475, 12
      %v502 = vpop.permute.xlu0 %501
      %vm512 = vcmask 130144
      %513 = vst.msk [vmem:[#allocation2] sm:$0xff] %vm512, %v486
      %514 = vst.msk [vmem:[#allocation2 + $0x8] sm:$0xff] %vm512, %v488
      %515 = vst.msk [vmem:[#allocation2 + $0x10] sm:$0xff] %vm512, %v490
      %516 = vst.msk [vmem:[#allocation2 + $0x18] sm:$0xff] %vm512, %v492
      %517 = vst.msk [vmem:[#allocation2 + $0x20] sm:$0xff] %vm512, %v494
      %518 = vst.msk [vmem:[#allocation2 + $0x28] sm:$0xff] %vm512, %v496
      %519 = vst.msk [vmem:[#allocation2 + $0x30] sm:$0xff] %vm512, %v498
      %520 = vst.msk [vmem:[#allocation2 + $0x38] sm:$0xff] %vm512, %v500
      %521 = vst.msk [vmem:[#allocation2 + $0x40] sm:$0xff] %vm512, %v502
      %s522 = sadd.s32 %s330, 264
      %s523 = scalar_lea.vmem %s301, %s522
      %v524 = vld [vmem:[%s523] sm:$0xff]
      %v525 = vld [vmem:[%s523 + $0x8] sm:$0xff]
      %v526 = vld [vmem:[%s523 + $0x10] sm:$0xff]
      %v527 = vld [vmem:[%s523 + $0x18] sm:$0xff]
      %v528 = vld [vmem:[%s523 + $0x20] sm:$0xff]
      %v529 = vld [vmem:[%s523 + $0x28] sm:$0xff]
      %v530 = vld [vmem:[%s523 + $0x30] sm:$0xff]
      %v531 = vld [vmem:[%s523 + $0x38] sm:$0xff]
      %v532 = vld [vmem:[%s523 + $0x40] sm:$0xff]
      %542 = vrot.lane.b32.xlu0 %v524, 16
      %v543 = vpop.permute.xlu0 %542
      %544 = vrot.lane.b32.xlu0 %v525, 16
      %v545 = vpop.permute.xlu0 %544
      %546 = vrot.lane.b32.xlu0 %v526, 16
      %v547 = vpop.permute.xlu0 %546
      %548 = vrot.lane.b32.xlu0 %v527, 16
      %v549 = vpop.permute.xlu0 %548
      %550 = vrot.lane.b32.xlu0 %v528, 16
      %v551 = vpop.permute.xlu0 %550
      %552 = vrot.lane.b32.xlu0 %v529, 16
      %v553 = vpop.permute.xlu0 %552
      %554 = vrot.lane.b32.xlu0 %v530, 16
      %v555 = vpop.permute.xlu0 %554
      %556 = vrot.lane.b32.xlu0 %v531, 16
      %v557 = vpop.permute.xlu0 %556
      %558 = vrot.lane.b32.xlu0 %v532, 16
      %v559 = vpop.permute.xlu0 %558
      %vm569 = vcmask 162944
      %570 = vst.msk [vmem:[#allocation2] sm:$0xff] %vm569, %v543
      %571 = vst.msk [vmem:[#allocation2 + $0x8] sm:$0xff] %vm569, %v545
      %572 = vst.msk [vmem:[#allocation2 + $0x10] sm:$0xff] %vm569, %v547
      %573 = vst.msk [vmem:[#allocation2 + $0x18] sm:$0xff] %vm569, %v549
      %574 = vst.msk [vmem:[#allocation2 + $0x20] sm:$0xff] %vm569, %v551
      %575 = vst.msk [vmem:[#allocation2 + $0x28] sm:$0xff] %vm569, %v553
      %576 = vst.msk [vmem:[#allocation2 + $0x30] sm:$0xff] %vm569, %v555
      %577 = vst.msk [vmem:[#allocation2 + $0x38] sm:$0xff] %vm569, %v557
      %578 = vst.msk [vmem:[#allocation2 + $0x40] sm:$0xff] %vm569, %v559
      %s579 = sadd.s32 %s408, 176
      %s580 = scalar_lea.vmem %s301, %s579
      %v581 = vld [vmem:[%s580] sm:$0xff]
      %v582 = vld [vmem:[%s580 + $0x8] sm:$0xff]
      %v583 = vld [vmem:[%s580 + $0x10] sm:$0xff]
      %v584 = vld [vmem:[%s580 + $0x18] sm:$0xff]
      %v585 = vld [vmem:[%s580 + $0x20] sm:$0xff]
      %v586 = vld [vmem:[%s580 + $0x28] sm:$0xff]
      %v587 = vld [vmem:[%s580 + $0x30] sm:$0xff]
      %v588 = vld [vmem:[%s580 + $0x38] sm:$0xff]
      %v589 = vld [vmem:[%s580 + $0x40] sm:$0xff]
      %599 = vrot.lane.b32.xlu0 %v581, 20
      %v600 = vpop.permute.xlu0 %599
      %601 = vrot.lane.b32.xlu0 %v582, 20
      %v602 = vpop.permute.xlu0 %601
      %603 = vrot.lane.b32.xlu0 %v583, 20
      %v604 = vpop.permute.xlu0 %603
      %605 = vrot.lane.b32.xlu0 %v584, 20
      %v606 = vpop.permute.xlu0 %605
      %607 = vrot.lane.b32.xlu0 %v585, 20
      %v608 = vpop.permute.xlu0 %607
      %609 = vrot.lane.b32.xlu0 %v586, 20
      %v610 = vpop.permute.xlu0 %609
      %611 = vrot.lane.b32.xlu0 %v587, 20
      %v612 = vpop.permute.xlu0 %611
      %613 = vrot.lane.b32.xlu0 %v588, 20
      %v614 = vpop.permute.xlu0 %613
      %615 = vrot.lane.b32.xlu0 %v589, 20
      %v616 = vpop.permute.xlu0 %615
      %vm626 = vcmask 195744
      %627 = vst.msk [vmem:[#allocation2] sm:$0xff] %vm626, %v600
      %628 = vst.msk [vmem:[#allocation2 + $0x8] sm:$0xff] %vm626, %v602
      %629 = vst.msk [vmem:[#allocation2 + $0x10] sm:$0xff] %vm626, %v604
      %630 = vst.msk [vmem:[#allocation2 + $0x18] sm:$0xff] %vm626, %v606
      %631 = vst.msk [vmem:[#allocation2 + $0x20] sm:$0xff] %vm626, %v608
      %632 = vst.msk [vmem:[#allocation2 + $0x28] sm:$0xff] %vm626, %v610
      %633 = vst.msk [vmem:[#allocation2 + $0x30] sm:$0xff] %vm626, %v612
      %634 = vst.msk [vmem:[#allocation2 + $0x38] sm:$0xff] %vm626, %v614
      %635 = vst.msk [vmem:[#allocation2 + $0x40] sm:$0xff] %vm626, %v616
      %s636 = sadd.s32 %s330, 9
      %s637 = scalar_lea.vmem %s301, %s636
      %v638 = vld [vmem:[%s637] sm:$0xff]
      %v639 = vld [vmem:[%s637 + $0x8] sm:$0xff]
      %v640 = vld [vmem:[%s637 + $0x10] sm:$0xff]
      %v641 = vld [vmem:[%s637 + $0x18] sm:$0xff]
      %v642 = vld [vmem:[%s637 + $0x20] sm:$0xff]
      %v643 = vld [vmem:[%s637 + $0x28] sm:$0xff]
      %v644 = vld [vmem:[%s637 + $0x30] sm:$0xff]
      %v645 = vld [vmem:[%s637 + $0x38] sm:$0xff]
      %v646 = vld [vmem:[%s637 + $0x40] sm:$0xff]
      %656 = vrot.lane.b32.xlu0 %v638, 24
      %v657 = vpop.permute.xlu0 %656
      %658 = vrot.lane.b32.xlu0 %v639, 24
      %v659 = vpop.permute.xlu0 %658
      %660 = vrot.lane.b32.xlu0 %v640, 24
      %v661 = vpop.permute.xlu0 %660
      %662 = vrot.lane.b32.xlu0 %v641, 24
      %v663 = vpop.permute.xlu0 %662
      %664 = vrot.lane.b32.xlu0 %v642, 24
      %v665 = vpop.permute.xlu0 %664
      %666 = vrot.lane.b32.xlu0 %v643, 24
      %v667 = vpop.permute.xlu0 %666
      %668 = vrot.lane.b32.xlu0 %v644, 24
      %v669 = vpop.permute.xlu0 %668
      %670 = vrot.lane.b32.xlu0 %v645, 24
      %v671 = vpop.permute.xlu0 %670
      %672 = vrot.lane.b32.xlu0 %v646, 24
      %v673 = vpop.permute.xlu0 %672
      %vm683 = vcmask 228544
      %684 = vst.msk [vmem:[#allocation2] sm:$0xff] %vm683, %v657
      %685 = vst.msk [vmem:[#allocation2 + $0x8] sm:$0xff] %vm683, %v659
      %686 = vst.msk [vmem:[#allocation2 + $0x10] sm:$0xff] %vm683, %v661
      %687 = vst.msk [vmem:[#allocation2 + $0x18] sm:$0xff] %vm683, %v663
      %688 = vst.msk [vmem:[#allocation2 + $0x20] sm:$0xff] %vm683, %v665
      %689 = vst.msk [vmem:[#allocation2 + $0x28] sm:$0xff] %vm683, %v667
      %690 = vst.msk [vmem:[#allocation2 + $0x30] sm:$0xff] %vm683, %v669
      %691 = vst.msk [vmem:[#allocation2 + $0x38] sm:$0xff] %vm683, %v671
      %692 = vst.msk [vmem:[#allocation2 + $0x40] sm:$0xff] %vm683, %v673
      %s693 = sadd.s32 %s636, 88
      %s694 = scalar_lea.vmem %s301, %s693
      %v695 = vld [vmem:[%s694] sm:$0xff]
      %v696 = vld [vmem:[%s694 + $0x8] sm:$0xff]
      %v697 = vld [vmem:[%s694 + $0x10] sm:$0xff]
      %v698 = vld [vmem:[%s694 + $0x18] sm:$0xff]
      %v699 = vld [vmem:[%s694 + $0x20] sm:$0xff]
      %v700 = vld [vmem:[%s694 + $0x28] sm:$0xff]
      %v701 = vld [vmem:[%s694 + $0x30] sm:$0xff]
      %v702 = vld [vmem:[%s694 + $0x38] sm:$0xff]
      %v703 = vld [vmem:[%s694 + $0x40] sm:$0xff]
      %713 = vrot.lane.b32.xlu0 %v695, 28
      %v714 = vpop.permute.xlu0 %713
      %715 = vrot.lane.b32.xlu0 %v696, 28
      %v716 = vpop.permute.xlu0 %715
      %717 = vrot.lane.b32.xlu0 %v697, 28
      %v718 = vpop.permute.xlu0 %717
      %719 = vrot.lane.b32.xlu0 %v698, 28
      %v720 = vpop.permute.xlu0 %719
      %721 = vrot.lane.b32.xlu0 %v699, 28
      %v722 = vpop.permute.xlu0 %721
      %723 = vrot.lane.b32.xlu0 %v700, 28
      %v724 = vpop.permute.xlu0 %723
      %725 = vrot.lane.b32.xlu0 %v701, 28
      %v726 = vpop.permute.xlu0 %725
      %727 = vrot.lane.b32.xlu0 %v702, 28
      %v728 = vpop.permute.xlu0 %727
      %729 = vrot.lane.b32.xlu0 %v703, 28
      %v730 = vpop.permute.xlu0 %729
      %vm740 = vcmask 261344
      %741 = vst.msk [vmem:[#allocation2] sm:$0xff] %vm740, %v714
      %742 = vst.msk [vmem:[#allocation2 + $0x8] sm:$0xff] %vm740, %v716
      %743 = vst.msk [vmem:[#allocation2 + $0x10] sm:$0xff] %vm740, %v718
      %744 = vst.msk [vmem:[#allocation2 + $0x18] sm:$0xff] %vm740, %v720
      %745 = vst.msk [vmem:[#allocation2 + $0x20] sm:$0xff] %vm740, %v722
      %746 = vst.msk [vmem:[#allocation2 + $0x28] sm:$0xff] %vm740, %v724
      %747 = vst.msk [vmem:[#allocation2 + $0x30] sm:$0xff] %vm740, %v726
      %748 = vst.msk [vmem:[#allocation2 + $0x38] sm:$0xff] %vm740, %v728
      %749 = vst.msk [vmem:[#allocation2 + $0x40] sm:$0xff] %vm740, %v730
      %s750 = sadd.s32 %s330, 10
      %s751 = scalar_lea.vmem %s301, %s750
      %v752 = vld [vmem:[%s751] sm:$0xff]
      %v753 = vld [vmem:[%s751 + $0x8] sm:$0xff]
      %v754 = vld [vmem:[%s751 + $0x10] sm:$0xff]
      %v755 = vld [vmem:[%s751 + $0x18] sm:$0xff]
      %v756 = vld [vmem:[%s751 + $0x20] sm:$0xff]
      %v757 = vld [vmem:[%s751 + $0x28] sm:$0xff]
      %v758 = vld [vmem:[%s751 + $0x30] sm:$0xff]
      %v759 = vld [vmem:[%s751 + $0x38] sm:$0xff]
      %v760 = vld [vmem:[%s751 + $0x40] sm:$0xff]
      %770 = vrot.lane.b32.xlu0 %v752, 32
      %v771 = vpop.permute.xlu0 %770
      %772 = vrot.lane.b32.xlu0 %v753, 32
      %v773 = vpop.permute.xlu0 %772
      %774 = vrot.lane.b32.xlu0 %v754, 32
      %v775 = vpop.permute.xlu0 %774
      %776 = vrot.lane.b32.xlu0 %v755, 32
      %v777 = vpop.permute.xlu0 %776
      %778 = vrot.lane.b32.xlu0 %v756, 32
      %v779 = vpop.permute.xlu0 %778
      %780 = vrot.lane.b32.xlu0 %v757, 32
      %v781 = vpop.permute.xlu0 %780
      %782 = vrot.lane.b32.xlu0 %v758, 32
      %v783 = vpop.permute.xlu0 %782
      %784 = vrot.lane.b32.xlu0 %v759, 32
      %v785 = vpop.permute.xlu0 %784
      %786 = vrot.lane.b32.xlu0 %v760, 32
      %v787 = vpop.permute.xlu0 %786
      %vm797 = vcmask 294144
      %798 = vst.msk [vmem:[#allocation2] sm:$0xff] %vm797, %v771
      %799 = vst.msk [vmem:[#allocation2 + $0x8] sm:$0xff] %vm797, %v773
      %800 = vst.msk [vmem:[#allocation2 + $0x10] sm:$0xff] %vm797, %v775
      %801 = vst.msk [vmem:[#allocation2 + $0x18] sm:$0xff] %vm797, %v777
      %802 = vst.msk [vmem:[#allocation2 + $0x20] sm:$0xff] %vm797, %v779
      %803 = vst.msk [vmem:[#allocation2 + $0x28] sm:$0xff] %vm797, %v781
      %804 = vst.msk [vmem:[#allocation2 + $0x30] sm:$0xff] %vm797, %v783
      %805 = vst.msk [vmem:[#allocation2 + $0x38] sm:$0xff] %vm797, %v785
      %806 = vst.msk [vmem:[#allocation2 + $0x40] sm:$0xff] %vm797, %v787
      %v807 = vld [vmem:[#allocation2] sm:$0xff]
      %v808 = vld [vmem:[#allocation2 + $0x8] sm:$0xff]
      %v809 = vld [vmem:[#allocation2 + $0x10] sm:$0xff]
      %v810 = vld [vmem:[#allocation2 + $0x18] sm:$0xff]
      %v811 = vld [vmem:[#allocation2 + $0x20] sm:$0xff]
      %v812 = vld [vmem:[#allocation2 + $0x28] sm:$0xff]
      %v813 = vld [vmem:[#allocation2 + $0x30] sm:$0xff]
      %v814 = vld [vmem:[#allocation2 + $0x38] sm:$0xff]
      %v815 = vld [vmem:[#allocation2 + $0x40] sm:$0xff]
      %v816 = vld [vmem:[%s1] sm:$0xff]
      %v817 = vld [vmem:[%s1 + $0x8] sm:$0xff]
      %v818 = vld [vmem:[%s1 + $0x10] sm:$0xff]
      %v819 = vld [vmem:[%s1 + $0x18] sm:$0xff]
      %v820 = vld [vmem:[%s1 + $0x20] sm:$0xf]
      %v821 = vld [vmem:[%s2] sm:$0x1]
      %v823 = vlaneseq
      %v824 = vshrl.u32 %v823, 7
      %v825 = vsub.s32 0, %v824
      %v826 = vrot.slane %v821, %v825
      %vm828 = vcmask 293888
      %v830 = vsel %vm828, %v807, 0
      %v833 = vsel %vm828, %v808, 0
      %v836 = vsel %vm828, %v809, 0
      %v839 = vsel %vm828, %v810, 0
      %v842 = vsel %vm828, %v811, 0
      %v845 = vsel %vm828, %v812, 0
      %v848 = vsel %vm828, %v813, 0
      %v851 = vsel %vm828, %v814, 0
      %v854 = vsel %vm828, %v815, 0
      %vm856 = vcmask 1043456
      %v858 = vsel %vm856, %v820, 0
      %860 = vmatprep.subr.mxu0 0.0
      %v861 = vand.u32 %v816, 4294901760
      %862 = vmatpush1.msra.mxu0 %v861
      %863 = vmatprep.subr.mxu0 0.0
      %v864 = vand.u32 %v817, 4294901760
      %865 = vmatpush1.msra.mxu0 %v864
      %866 = vmatprep.subr.mxu0 0.0
      %v867 = vand.u32 %v818, 4294901760
      %868 = vmatpush1.msra.mxu0 %v867
      %869 = vmatprep.subr.mxu0 0.0
      %v870 = vand.u32 %v819, 4294901760
      %871 = vmatpush1.msra.mxu0 %v870
      %872 = vmatprep.subr.mxu0 0.0
      %v873 = vand.u32 %v858, 4294901760
      %874 = vmatpush1.msra.mxu0 %v873
      %875 = vmatprep.subr.mxu0 0.0
      %876 = vmatpush1.msra.mxu0 0.0
      %877 = vmatprep.subr.mxu0 0.0
      %878 = vmatpush1.msra.mxu0 0.0
      %879 = vmatprep.subr.mxu0 0.0
      %880 = vmatpush1.msra.mxu0 0.0
      %881 = vmatprep.subr.mxu0 0.0
      %882 = vmatpush1.msra.mxu0 0.0
      %883 = vmatprep.subr.mxu0 0.0
      %884 = vmatpush1.msra.mxu0 0.0
      %885 = vmatprep.subr.mxu0 0.0
      %886 = vmatpush1.msra.mxu0 0.0
      %887 = vmatprep.subr.mxu0 0.0
      %888 = vmatpush1.msra.mxu0 0.0
      %889 = vmatprep.subr.mxu0 0.0
      %890 = vmatpush1.msra.mxu0 0.0
      %891 = vmatprep.subr.mxu0 0.0
      %892 = vmatpush1.msra.mxu0 0.0
      %893 = vmatprep.subr.mxu0 0.0
      %894 = vmatpush1.msra.mxu0 0.0
      %895 = vmatprep.subr.mxu0 0.0
      %896 = vmatpush1.msra.mxu0 0.0
      %897 = vmatprep.subr.mxu0 0.0
      %898 = vmatpush1.msra.mxu0 0.0
      %899 = vmatprep.subr.mxu0 0.0
      %900 = vmatpush1.msra.mxu0 0.0
      %901 = vmatprep.subr.mxu0 0.0
      %902 = vmatpush1.msra.mxu0 0.0
      %903 = vmatprep.subr.mxu0 0.0
      %904 = vmatpush1.msra.mxu0 0.0
      %905 = vmatprep.subr.mxu0 0.0
      %906 = vmatpush1.msra.mxu0 0.0
      %907 = vmatprep.subr.mxu0 0.0
      %908 = vmatpush1.msra.mxu0 0.0
      %909 = vmatprep.subr.mxu0 0.0
      %910 = vmatpush1.msra.mxu0 0.0
      %911 = vmatprep.subr.mxu0 0.0
      %912 = vmatpush1.msra.mxu0 0.0
      %913 = vmatprep.subr.mxu0 0.0
      %914 = vmatpush1.msra.mxu0 0.0
      %915 = vmatprep.subr.mxu0 0.0
      %916 = vmatpush1.msra.mxu0 0.0
      %917 = vmatprep.subr.mxu0 0.0
      %918 = vmatpush1.msra.mxu0 0.0
      %919 = vmatprep.subr.mxu0 0.0
      %920 = vmatpush1.msra.mxu0 0.0
      %921 = vmatprep.subr.mxu0 0.0
      %922 = vmatpush1.msra.mxu0 0.0
      %923 = vmatprep.subr.mxu0 0.0
      %924 = vmatpush1.msra.mxu0 0.0
      %925 = vmatprep.subr.mxu0 0.0
      %926 = vmatpush1.msra.mxu0 0.0
      %927 = vmatprep.subr.mxu0 0.0
      %928 = vmatpush1.msra.mxu0 0.0
      %929 = vmatprep.mubr.f32.mxu0 0.0
      %v930 = vand.u32 %v830, 4294901760
      %v931 = vsub.f32 %v830, %v930
      %v932 = vand.u32 %v931, 4294901760
      %v933 = vsub.f32 %v931, %v932
      %v934 = vand.u32 %v933, 4294901760
      %935 = vmatmul.mubr.f32.gmra.mrb[0].mxu0 %v934
      %v936 = vpop.f32.mrb[0].mxu0
      %v937 = vadd.f32 %v826, %v936
      %v938 = vpop.f32.mrb[0].mxu0
      %939 = vmatprep.mubr.f32.mxu0 0.0
      %v940 = vand.u32 %v833, 4294901760
      %v941 = vsub.f32 %v833, %v940
      %v942 = vand.u32 %v941, 4294901760
      %v943 = vsub.f32 %v941, %v942
      %v944 = vand.u32 %v943, 4294901760
      %945 = vmatmul.mubr.f32.gmra.mrb[0].mxu0 %v944
      %v946 = vpop.f32.mrb[0].mxu0
      %v947 = vadd.f32 %v826, %v946
      %v948 = vpop.f32.mrb[0].mxu0
      %949 = vmatprep.mubr.f32.mxu0 0.0
      %v950 = vand.u32 %v836, 4294901760
      %v951 = vsub.f32 %v836, %v950
      %v952 = vand.u32 %v951, 4294901760
      %v953 = vsub.f32 %v951, %v952
      %v954 = vand.u32 %v953, 4294901760
      %955 = vmatmul.mubr.f32.gmra.mrb[0].mxu0 %v954
      %v956 = vpop.f32.mrb[0].mxu0
      %v957 = vadd.f32 %v826, %v956
      %v958 = vpop.f32.mrb[0].mxu0
      %959 = vmatprep.mubr.f32.mxu0 0.0
      %v960 = vand.u32 %v839, 4294901760
      %v961 = vsub.f32 %v839, %v960
      %v962 = vand.u32 %v961, 4294901760
      %v963 = vsub.f32 %v961, %v962
      %v964 = vand.u32 %v963, 4294901760
      %965 = vmatmul.mubr.f32.gmra.mrb[0].mxu0 %v964
      %v966 = vpop.f32.mrb[0].mxu0
      %v967 = vadd.f32 %v826, %v966
      %v968 = vpop.f32.mrb[0].mxu0
      %969 = vmatprep.mubr.f32.mxu0 0.0
      %v970 = vand.u32 %v842, 4294901760
      %v971 = vsub.f32 %v842, %v970
      %v972 = vand.u32 %v971, 4294901760
      %v973 = vsub.f32 %v971, %v972
      %v974 = vand.u32 %v973, 4294901760
      %975 = vmatmul.mubr.f32.gmra.mrb[0].mxu0 %v974
      %v976 = vpop.f32.mrb[0].mxu0
      %v977 = vadd.f32 %v826, %v976
      %v978 = vpop.f32.mrb[0].mxu0
      %979 = vmatprep.mubr.f32.mxu0 0.0
      %v980 = vand.u32 %v845, 4294901760
      %v981 = vsub.f32 %v845, %v980
      %v982 = vand.u32 %v981, 4294901760
      %v983 = vsub.f32 %v981, %v982
      %v984 = vand.u32 %v983, 4294901760
      %985 = vmatmul.mubr.f32.gmra.mrb[0].mxu0 %v984
      %v986 = vpop.f32.mrb[0].mxu0
      %v987 = vadd.f32 %v826, %v986
      %v988 = vpop.f32.mrb[0].mxu0
      %989 = vmatprep.mubr.f32.mxu0 0.0
      %v990 = vand.u32 %v848, 4294901760
      %v991 = vsub.f32 %v848, %v990
      %v992 = vand.u32 %v991, 4294901760
      %v993 = vsub.f32 %v991, %v992
      %v994 = vand.u32 %v993, 4294901760
      %995 = vmatmul.mubr.f32.gmra.mrb[0].mxu0 %v994
      %v996 = vpop.f32.mrb[0].mxu0
      %v997 = vadd.f32 %v826, %v996
      %v998 = vpop.f32.mrb[0].mxu0
      %999 = vmatprep.mubr.f32.mxu0 0.0
      %v1000 = vand.u32 %v851, 4294901760
      %v1001 = vsub.f32 %v851, %v1000
      %v1002 = vand.u32 %v1001, 4294901760
      %v1003 = vsub.f32 %v1001, %v1002
      %v1004 = vand.u32 %v1003, 4294901760
      %1005 = vmatmul.mubr.f32.gmra.mrb[0].mxu0 %v1004
      %v1006 = vpop.f32.mrb[0].mxu0
      %v1007 = vadd.f32 %v826, %v1006
      %v1008 = vpop.f32.mrb[0].mxu0
      %1009 = vmatprep.mubr.f32.mxu0 0.0
      %v1010 = vand.u32 %v854, 4294901760
      %v1011 = vsub.f32 %v854, %v1010
      %v1012 = vand.u32 %v1011, 4294901760
      %v1013 = vsub.f32 %v1011, %v1012
      %v1014 = vand.u32 %v1013, 4294901760
      %1015 = vmatmul.mubr.f32.gmra.mrb[0].mxu0 %v1014
      %v1016 = vpop.f32.mrb[0].mxu0
      %v1017 = vadd.f32 %v826, %v1016
      %v1018 = vpop.f32.mrb[0].mxu0
      %1019 = vdwg.mxu0
      %1020 = vmatprep.subr.mxu0 0.0
      %v1021 = vand.u32 %v816, 4294901760
      %v1022 = vsub.f32 %v816, %v1021
      %v1023 = vand.u32 %v1022, 4294901760
      %v1024 = vsub.f32 %v1022, %v1023
      %v1025 = vand.u32 %v1024, 4294901760
      %1026 = vmatpush1.msra.mxu0 %v1025
      %1027 = vmatprep.subr.mxu0 0.0
      %v1028 = vand.u32 %v817, 4294901760
      %v1029 = vsub.f32 %v817, %v1028
      %v1030 = vand.u32 %v1029, 4294901760
      %v1031 = vsub.f32 %v1029, %v1030
      %v1032 = vand.u32 %v1031, 4294901760
      %1033 = vmatpush1.msra.mxu0 %v1032
      %1034 = vmatprep.subr.mxu0 0.0
      %v1035 = vand.u32 %v818, 4294901760
      %v1036 = vsub.f32 %v818, %v1035
      %v1037 = vand.u32 %v1036, 4294901760
      %v1038 = vsub.f32 %v1036, %v1037
      %v1039 = vand.u32 %v1038, 4294901760
      %1040 = vmatpush1.msra.mxu0 %v1039
      %1041 = vmatprep.subr.mxu0 0.0
      %v1042 = vand.u32 %v819, 4294901760
      %v1043 = vsub.f32 %v819, %v1042
      %v1044 = vand.u32 %v1043, 4294901760
      %v1045 = vsub.f32 %v1043, %v1044
      %v1046 = vand.u32 %v1045, 4294901760
      %1047 = vmatpush1.msra.mxu0 %v1046
      %1048 = vmatprep.subr.mxu0 0.0
      %v1049 = vand.u32 %v858, 4294901760
      %v1050 = vsub.f32 %v858, %v1049
      %v1051 = vand.u32 %v1050, 4294901760
      %v1052 = vsub.f32 %v1050, %v1051
      %v1053 = vand.u32 %v1052, 4294901760
      %1054 = vmatpush1.msra.mxu0 %v1053
      %1055 = vmatprep.subr.mxu0 0.0
      %1056 = vmatpush1.msra.mxu0 0.0
      %1057 = vmatprep.subr.mxu0 0.0
      %1058 = vmatpush1.msra.mxu0 0.0
      %1059 = vmatprep.subr.mxu0 0.0
      %1060 = vmatpush1.msra.mxu0 0.0
      %1061 = vmatprep.subr.mxu0 0.0
      %1062 = vmatpush1.msra.mxu0 0.0
      %1063 = vmatprep.subr.mxu0 0.0
      %1064 = vmatpush1.msra.mxu0 0.0
      %1065 = vmatprep.subr.mxu0 0.0
      %1066 = vmatpush1.msra.mxu0 0.0
      %1067 = vmatprep.subr.mxu0 0.0
      %1068 = vmatpush1.msra.mxu0 0.0
      %1069 = vmatprep.subr.mxu0 0.0
      %1070 = vmatpush1.msra.mxu0 0.0
      %1071 = vmatprep.subr.mxu0 0.0
      %1072 = vmatpush1.msra.mxu0 0.0
      %1073 = vmatprep.subr.mxu0 0.0
      %1074 = vmatpush1.msra.mxu0 0.0
      %1075 = vmatprep.subr.mxu0 0.0
      %1076 = vmatpush1.msra.mxu0 0.0
      %1077 = vmatprep.subr.mxu0 0.0
      %1078 = vmatpush1.msra.mxu0 0.0
      %1079 = vmatprep.subr.mxu0 0.0
      %1080 = vmatpush1.msra.mxu0 0.0
      %1081 = vmatprep.subr.mxu0 0.0
      %1082 = vmatpush1.msra.mxu0 0.0
      %1083 = vmatprep.subr.mxu0 0.0
      %1084 = vmatpush1.msra.mxu0 0.0
      %1085 = vmatprep.subr.mxu0 0.0
      %1086 = vmatpush1.msra.mxu0 0.0
      %1087 = vmatprep.subr.mxu0 0.0
      %1088 = vmatpush1.msra.mxu0 0.0
      %1089 = vmatprep.subr.mxu0 0.0
      %1090 = vmatpush1.msra.mxu0 0.0
      %1091 = vmatprep.subr.mxu0 0.0
      %1092 = vmatpush1.msra.mxu0 0.0
      %1093 = vmatprep.subr.mxu0 0.0
      %1094 = vmatpush1.msra.mxu0 0.0
      %1095 = vmatprep.subr.mxu0 0.0
      %1096 = vmatpush1.msra.mxu0 0.0
      %1097 = vmatprep.subr.mxu0 0.0
      %1098 = vmatpush1.msra.mxu0 0.0
      %1099 = vmatprep.subr.mxu0 0.0
      %1100 = vmatpush1.msra.mxu0 0.0
      %1101 = vmatprep.subr.mxu0 0.0
      %1102 = vmatpush1.msra.mxu0 0.0
      %1103 = vmatprep.subr.mxu0 0.0
      %1104 = vmatpush1.msra.mxu0 0.0
      %1105 = vmatprep.subr.mxu0 0.0
      %1106 = vmatpush1.msra.mxu0 0.0
      %1107 = vmatprep.subr.mxu0 0.0
      %1108 = vmatpush1.msra.mxu0 0.0
      %1109 = vmatprep.mubr.f32.mxu0 0.0
      %v1110 = vand.u32 %v830, 4294901760
      %1111 = vmatmul.mubr.f32.gmra.mrb[0].mxu0 %v1110
      %v1112 = vpop.f32.mrb[0].mxu0
      %v1113 = vadd.f32 %v937, %v1112
      %v1114 = vpop.f32.mrb[0].mxu0
      %1115 = vmatprep.mubr.f32.mxu0 0.0
      %v1116 = vand.u32 %v833, 4294901760
      %1117 = vmatmul.mubr.f32.gmra.mrb[0].mxu0 %v1116
      %v1118 = vpop.f32.mrb[0].mxu0
      %v1119 = vadd.f32 %v947, %v1118
      %v1120 = vpop.f32.mrb[0].mxu0
      %1121 = vmatprep.mubr.f32.mxu0 0.0
      %v1122 = vand.u32 %v836, 4294901760
      %1123 = vmatmul.mubr.f32.gmra.mrb[0].mxu0 %v1122
      %v1124 = vpop.f32.mrb[0].mxu0
      %v1125 = vadd.f32 %v957, %v1124
      %v1126 = vpop.f32.mrb[0].mxu0
      %1127 = vmatprep.mubr.f32.mxu0 0.0
      %v1128 = vand.u32 %v839, 4294901760
      %1129 = vmatmul.mubr.f32.gmra.mrb[0].mxu0 %v1128
      %v1130 = vpop.f32.mrb[0].mxu0
      %v1131 = vadd.f32 %v967, %v1130
      %v1132 = vpop.f32.mrb[0].mxu0
      %1133 = vmatprep.mubr.f32.mxu0 0.0
      %v1134 = vand.u32 %v842, 4294901760
      %1135 = vmatmul.mubr.f32.gmra.mrb[0].mxu0 %v1134
      %v1136 = vpop.f32.mrb[0].mxu0
      %v1137 = vadd.f32 %v977, %v1136
      %v1138 = vpop.f32.mrb[0].mxu0
      %1139 = vmatprep.mubr.f32.mxu0 0.0
      %v1140 = vand.u32 %v845, 4294901760
      %1141 = vmatmul.mubr.f32.gmra.mrb[0].mxu0 %v1140
      %v1142 = vpop.f32.mrb[0].mxu0
      %v1143 = vadd.f32 %v987, %v1142
      %v1144 = vpop.f32.mrb[0].mxu0
      %1145 = vmatprep.mubr.f32.mxu0 0.0
      %v1146 = vand.u32 %v848, 4294901760
      %1147 = vmatmul.mubr.f32.gmra.mrb[0].mxu0 %v1146
      %v1148 = vpop.f32.mrb[0].mxu0
      %v1149 = vadd.f32 %v997, %v1148
      %v1150 = vpop.f32.mrb[0].mxu0
      %1151 = vmatprep.mubr.f32.mxu0 0.0
      %v1152 = vand.u32 %v851, 4294901760
      %1153 = vmatmul.mubr.f32.gmra.mrb[0].mxu0 %v1152
      %v1154 = vpop.f32.mrb[0].mxu0
      %v1155 = vadd.f32 %v1007, %v1154
      %v1156 = vpop.f32.mrb[0].mxu0
      %1157 = vmatprep.mubr.f32.mxu0 0.0
      %v1158 = vand.u32 %v854, 4294901760
      %1159 = vmatmul.mubr.f32.gmra.mrb[0].mxu0 %v1158
      %v1160 = vpop.f32.mrb[0].mxu0
      %v1161 = vadd.f32 %v1017, %v1160
      %v1162 = vpop.f32.mrb[0].mxu0
      %1163 = vdwg.mxu0
      %1164 = vmatprep.subr.mxu0 0.0
      %v1165 = vand.u32 %v816, 4294901760
      %v1166 = vsub.f32 %v816, %v1165
      %1167 = vmatpush1.msra.mxu0 %v1166
      %1168 = vmatprep.subr.mxu0 0.0
      %v1169 = vand.u32 %v817, 4294901760
      %v1170 = vsub.f32 %v817, %v1169
      %1171 = vmatpush1.msra.mxu0 %v1170
      %1172 = vmatprep.subr.mxu0 0.0
      %v1173 = vand.u32 %v818, 4294901760
      %v1174 = vsub.f32 %v818, %v1173
      %1175 = vmatpush1.msra.mxu0 %v1174
      %1176 = vmatprep.subr.mxu0 0.0
      %v1177 = vand.u32 %v819, 4294901760
      %v1178 = vsub.f32 %v819, %v1177
      %1179 = vmatpush1.msra.mxu0 %v1178
      %1180 = vmatprep.subr.mxu0 0.0
      %v1181 = vand.u32 %v858, 4294901760
      %v1182 = vsub.f32 %v858, %v1181
      %1183 = vmatpush1.msra.mxu0 %v1182
      %1184 = vmatprep.subr.mxu0 0.0
      %1185 = vmatpush1.msra.mxu0 0.0
      %1186 = vmatprep.subr.mxu0 0.0
      %1187 = vmatpush1.msra.mxu0 0.0
      %1188 = vmatprep.subr.mxu0 0.0
      %1189 = vmatpush1.msra.mxu0 0.0
      %1190 = vmatprep.subr.mxu0 0.0
      %1191 = vmatpush1.msra.mxu0 0.0
      %1192 = vmatprep.subr.mxu0 0.0
      %1193 = vmatpush1.msra.mxu0 0.0
      %1194 = vmatprep.subr.mxu0 0.0
      %1195 = vmatpush1.msra.mxu0 0.0
      %1196 = vmatprep.subr.mxu0 0.0
      %1197 = vmatpush1.msra.mxu0 0.0
      %1198 = vmatprep.subr.mxu0 0.0
      %1199 = vmatpush1.msra.mxu0 0.0
      %1200 = vmatprep.subr.mxu0 0.0
      %1201 = vmatpush1.msra.mxu0 0.0
      %1202 = vmatprep.subr.mxu0 0.0
      %1203 = vmatpush1.msra.mxu0 0.0
      %1204 = vmatprep.subr.mxu0 0.0
      %1205 = vmatpush1.msra.mxu0 0.0
      %1206 = vmatprep.subr.mxu0 0.0
      %1207 = vmatpush1.msra.mxu0 0.0
      %1208 = vmatprep.subr.mxu0 0.0
      %1209 = vmatpush1.msra.mxu0 0.0
      %1210 = vmatprep.subr.mxu0 0.0
      %1211 = vmatpush1.msra.mxu0 0.0
      %1212 = vmatprep.subr.mxu0 0.0
      %1213 = vmatpush1.msra.mxu0 0.0
      %1214 = vmatprep.subr.mxu0 0.0
      %1215 = vmatpush1.msra.mxu0 0.0
      %1216 = vmatprep.subr.mxu0 0.0
      %1217 = vmatpush1.msra.mxu0 0.0
      %1218 = vmatprep.subr.mxu0 0.0
      %1219 = vmatpush1.msra.mxu0 0.0
      %1220 = vmatprep.subr.mxu0 0.0
      %1221 = vmatpush1.msra.mxu0 0.0
      %1222 = vmatprep.subr.mxu0 0.0
      %1223 = vmatpush1.msra.mxu0 0.0
      %1224 = vmatprep.subr.mxu0 0.0
      %1225 = vmatpush1.msra.mxu0 0.0
      %1226 = vmatprep.subr.mxu0 0.0
      %1227 = vmatpush1.msra.mxu0 0.0
      %1228 = vmatprep.subr.mxu0 0.0
      %1229 = vmatpush1.msra.mxu0 0.0
      %1230 = vmatprep.subr.mxu0 0.0
      %1231 = vmatpush1.msra.mxu0 0.0
      %1232 = vmatprep.subr.mxu0 0.0
      %1233 = vmatpush1.msra.mxu0 0.0
      %1234 = vmatprep.subr.mxu0 0.0
      %1235 = vmatpush1.msra.mxu0 0.0
      %1236 = vmatprep.subr.mxu0 0.0
      %1237 = vmatpush1.msra.mxu0 0.0
      %1238 = vmatprep.mubr.f32.mxu0 0.0
      %v1239 = vand.u32 %v830, 4294901760
      %v1240 = vsub.f32 %v830, %v1239
      %1241 = vmatmul.mubr.f32.gmra.mrb[0].mxu0 %v1240
      %v1242 = vpop.f32.mrb[0].mxu0
      %v1243 = vadd.f32 %v1113, %v1242
      %v1244 = vpop.f32.mrb[0].mxu0
      %1245 = vmatprep.mubr.f32.mxu0 0.0
      %v1246 = vand.u32 %v833, 4294901760
      %v1247 = vsub.f32 %v833, %v1246
      %1248 = vmatmul.mubr.f32.gmra.mrb[0].mxu0 %v1247
      %v1249 = vpop.f32.mrb[0].mxu0
      %v1250 = vadd.f32 %v1119, %v1249
      %v1251 = vpop.f32.mrb[0].mxu0
      %1252 = vmatprep.mubr.f32.mxu0 0.0
      %v1253 = vand.u32 %v836, 4294901760
      %v1254 = vsub.f32 %v836, %v1253
      %1255 = vmatmul.mubr.f32.gmra.mrb[0].mxu0 %v1254
      %v1256 = vpop.f32.mrb[0].mxu0
      %v1257 = vadd.f32 %v1125, %v1256
      %v1258 = vpop.f32.mrb[0].mxu0
      %1259 = vmatprep.mubr.f32.mxu0 0.0
      %v1260 = vand.u32 %v839, 4294901760
      %v1261 = vsub.f32 %v839, %v1260
      %1262 = vmatmul.mubr.f32.gmra.mrb[0].mxu0 %v1261
      %v1263 = vpop.f32.mrb[0].mxu0
      %v1264 = vadd.f32 %v1131, %v1263
      %v1265 = vpop.f32.mrb[0].mxu0
      %1266 = vmatprep.mubr.f32.mxu0 0.0
      %v1267 = vand.u32 %v842, 4294901760
      %v1268 = vsub.f32 %v842, %v1267
      %1269 = vmatmul.mubr.f32.gmra.mrb[0].mxu0 %v1268
      %v1270 = vpop.f32.mrb[0].mxu0
      %v1271 = vadd.f32 %v1137, %v1270
      %v1272 = vpop.f32.mrb[0].mxu0
      %1273 = vmatprep.mubr.f32.mxu0 0.0
      %v1274 = vand.u32 %v845, 4294901760
      %v1275 = vsub.f32 %v845, %v1274
      %1276 = vmatmul.mubr.f32.gmra.mrb[0].mxu0 %v1275
      %v1277 = vpop.f32.mrb[0].mxu0
      %v1278 = vadd.f32 %v1143, %v1277
      %v1279 = vpop.f32.mrb[0].mxu0
      %1280 = vmatprep.mubr.f32.mxu0 0.0
      %v1281 = vand.u32 %v848, 4294901760
      %v1282 = vsub.f32 %v848, %v1281
      %1283 = vmatmul.mubr.f32.gmra.mrb[0].mxu0 %v1282
      %v1284 = vpop.f32.mrb[0].mxu0
      %v1285 = vadd.f32 %v1149, %v1284
      %v1286 = vpop.f32.mrb[0].mxu0
      %1287 = vmatprep.mubr.f32.mxu0 0.0
      %v1288 = vand.u32 %v851, 4294901760
      %v1289 = vsub.f32 %v851, %v1288
      %1290 = vmatmul.mubr.f32.gmra.mrb[0].mxu0 %v1289
      %v1291 = vpop.f32.mrb[0].mxu0
      %v1292 = vadd.f32 %v1155, %v1291
      %v1293 = vpop.f32.mrb[0].mxu0
      %1294 = vmatprep.mubr.f32.mxu0 0.0
      %v1295 = vand.u32 %v854, 4294901760
      %v1296 = vsub.f32 %v854, %v1295
      %1297 = vmatmul.mubr.f32.gmra.mrb[0].mxu0 %v1296
      %v1298 = vpop.f32.mrb[0].mxu0
      %v1299 = vadd.f32 %v1161, %v1298
      %v1300 = vpop.f32.mrb[0].mxu0
      %1301 = vdwg.mxu0
      %1302 = vmatprep.subr.mxu0 0.0
      %v1303 = vand.u32 %v816, 4294901760
      %1304 = vmatpush1.msra.mxu0 %v1303
      %1305 = vmatprep.subr.mxu0 0.0
      %v1306 = vand.u32 %v817, 4294901760
      %1307 = vmatpush1.msra.mxu0 %v1306
      %1308 = vmatprep.subr.mxu0 0.0
      %v1309 = vand.u32 %v818, 4294901760
      %1310 = vmatpush1.msra.mxu0 %v1309
      %1311 = vmatprep.subr.mxu0 0.0
      %v1312 = vand.u32 %v819, 4294901760
      %1313 = vmatpush1.msra.mxu0 %v1312
      %1314 = vmatprep.subr.mxu0 0.0
      %v1315 = vand.u32 %v858, 4294901760
      %1316 = vmatpush1.msra.mxu0 %v1315
      %1317 = vmatprep.subr.mxu0 0.0
      %1318 = vmatpush1.msra.mxu0 0.0
      %1319 = vmatprep.subr.mxu0 0.0
      %1320 = vmatpush1.msra.mxu0 0.0
      %1321 = vmatprep.subr.mxu0 0.0
      %1322 = vmatpush1.msra.mxu0 0.0
      %1323 = vmatprep.subr.mxu0 0.0
      %1324 = vmatpush1.msra.mxu0 0.0
      %1325 = vmatprep.subr.mxu0 0.0
      %1326 = vmatpush1.msra.mxu0 0.0
      %1327 = vmatprep.subr.mxu0 0.0
      %1328 = vmatpush1.msra.mxu0 0.0
      %1329 = vmatprep.subr.mxu0 0.0
      %1330 = vmatpush1.msra.mxu0 0.0
      %1331 = vmatprep.subr.mxu0 0.0
      %1332 = vmatpush1.msra.mxu0 0.0
      %1333 = vmatprep.subr.mxu0 0.0
      %1334 = vmatpush1.msra.mxu0 0.0
      %1335 = vmatprep.subr.mxu0 0.0
      %1336 = vmatpush1.msra.mxu0 0.0
      %1337 = vmatprep.subr.mxu0 0.0
      %1338 = vmatpush1.msra.mxu0 0.0
      %1339 = vmatprep.subr.mxu0 0.0
      %1340 = vmatpush1.msra.mxu0 0.0
      %1341 = vmatprep.subr.mxu0 0.0
      %1342 = vmatpush1.msra.mxu0 0.0
      %1343 = vmatprep.subr.mxu0 0.0
      %1344 = vmatpush1.msra.mxu0 0.0
      %1345 = vmatprep.subr.mxu0 0.0
      %1346 = vmatpush1.msra.mxu0 0.0
      %1347 = vmatprep.subr.mxu0 0.0
      %1348 = vmatpush1.msra.mxu0 0.0
      %1349 = vmatprep.subr.mxu0 0.0
      %1350 = vmatpush1.msra.mxu0 0.0
      %1351 = vmatprep.subr.mxu0 0.0
      %1352 = vmatpush1.msra.mxu0 0.0
      %1353 = vmatprep.subr.mxu0 0.0
      %1354 = vmatpush1.msra.mxu0 0.0
      %1355 = vmatprep.subr.mxu0 0.0
      %1356 = vmatpush1.msra.mxu0 0.0
      %1357 = vmatprep.subr.mxu0 0.0
      %1358 = vmatpush1.msra.mxu0 0.0
      %1359 = vmatprep.subr.mxu0 0.0
      %1360 = vmatpush1.msra.mxu0 0.0
      %1361 = vmatprep.subr.mxu0 0.0
      %1362 = vmatpush1.msra.mxu0 0.0
      %1363 = vmatprep.subr.mxu0 0.0
      %1364 = vmatpush1.msra.mxu0 0.0
      %1365 = vmatprep.subr.mxu0 0.0
      %1366 = vmatpush1.msra.mxu0 0.0
      %1367 = vmatprep.subr.mxu0 0.0
      %1368 = vmatpush1.msra.mxu0 0.0
      %1369 = vmatprep.subr.mxu0 0.0
      %1370 = vmatpush1.msra.mxu0 0.0
      %1371 = vmatprep.mubr.f32.mxu0 0.0
      %v1372 = vand.u32 %v830, 4294901760
      %v1373 = vsub.f32 %v830, %v1372
      %v1374 = vand.u32 %v1373, 4294901760
      %1375 = vmatmul.mubr.f32.gmra.mrb[0].mxu0 %v1374
      %v1376 = vpop.f32.mrb[0].mxu0
      %v1377 = vadd.f32 %v1243, %v1376
      %v1378 = vpop.f32.mrb[0].mxu0
      %1379 = vmatprep.mubr.f32.mxu0 0.0
      %v1380 = vand.u32 %v833, 4294901760
      %v1381 = vsub.f32 %v833, %v1380
      %v1382 = vand.u32 %v1381, 4294901760
      %1383 = vmatmul.mubr.f32.gmra.mrb[0].mxu0 %v1382
      %v1384 = vpop.f32.mrb[0].mxu0
      %v1385 = vadd.f32 %v1250, %v1384
      %v1386 = vpop.f32.mrb[0].mxu0
      %1387 = vmatprep.mubr.f32.mxu0 0.0
      %v1388 = vand.u32 %v836, 4294901760
      %v1389 = vsub.f32 %v836, %v1388
      %v1390 = vand.u32 %v1389, 4294901760
      %1391 = vmatmul.mubr.f32.gmra.mrb[0].mxu0 %v1390
      %v1392 = vpop.f32.mrb[0].mxu0
      %v1393 = vadd.f32 %v1257, %v1392
      %v1394 = vpop.f32.mrb[0].mxu0
      %1395 = vmatprep.mubr.f32.mxu0 0.0
      %v1396 = vand.u32 %v839, 4294901760
      %v1397 = vsub.f32 %v839, %v1396
      %v1398 = vand.u32 %v1397, 4294901760
      %1399 = vmatmul.mubr.f32.gmra.mrb[0].mxu0 %v1398
      %v1400 = vpop.f32.mrb[0].mxu0
      %v1401 = vadd.f32 %v1264, %v1400
      %v1402 = vpop.f32.mrb[0].mxu0
      %1403 = vmatprep.mubr.f32.mxu0 0.0
      %v1404 = vand.u32 %v842, 4294901760
      %v1405 = vsub.f32 %v842, %v1404
      %v1406 = vand.u32 %v1405, 4294901760
      %1407 = vmatmul.mubr.f32.gmra.mrb[0].mxu0 %v1406
      %v1408 = vpop.f32.mrb[0].mxu0
      %v1409 = vadd.f32 %v1271, %v1408
      %v1410 = vpop.f32.mrb[0].mxu0
      %1411 = vmatprep.mubr.f32.mxu0 0.0
      %v1412 = vand.u32 %v845, 4294901760
      %v1413 = vsub.f32 %v845, %v1412
      %v1414 = vand.u32 %v1413, 4294901760
      %1415 = vmatmul.mubr.f32.gmra.mrb[0].mxu0 %v1414
      %v1416 = vpop.f32.mrb[0].mxu0
      %v1417 = vadd.f32 %v1278, %v1416
      %v1418 = vpop.f32.mrb[0].mxu0
      %1419 = vmatprep.mubr.f32.mxu0 0.0
      %v1420 = vand.u32 %v848, 4294901760
      %v1421 = vsub.f32 %v848, %v1420
      %v1422 = vand.u32 %v1421, 4294901760
      %1423 = vmatmul.mubr.f32.gmra.mrb[0].mxu0 %v1422
      %v1424 = vpop.f32.mrb[0].mxu0
      %v1425 = vadd.f32 %v1285, %v1424
      %v1426 = vpop.f32.mrb[0].mxu0
      %1427 = vmatprep.mubr.f32.mxu0 0.0
      %v1428 = vand.u32 %v851, 4294901760
      %v1429 = vsub.f32 %v851, %v1428
      %v1430 = vand.u32 %v1429, 4294901760
      %1431 = vmatmul.mubr.f32.gmra.mrb[0].mxu0 %v1430
      %v1432 = vpop.f32.mrb[0].mxu0
      %v1433 = vadd.f32 %v1292, %v1432
      %v1434 = vpop.f32.mrb[0].mxu0
      %1435 = vmatprep.mubr.f32.mxu0 0.0
      %v1436 = vand.u32 %v854, 4294901760
      %v1437 = vsub.f32 %v854, %v1436
      %v1438 = vand.u32 %v1437, 4294901760
      %1439 = vmatmul.mubr.f32.gmra.mrb[0].mxu0 %v1438
      %v1440 = vpop.f32.mrb[0].mxu0
      %v1441 = vadd.f32 %v1299, %v1440
      %v1442 = vpop.f32.mrb[0].mxu0
      %1443 = vdwg.mxu0
      %1444 = vmatprep.subr.mxu0 0.0
      %v1445 = vand.u32 %v816, 4294901760
      %v1446 = vsub.f32 %v816, %v1445
      %v1447 = vand.u32 %v1446, 4294901760
      %1448 = vmatpush1.msra.mxu0 %v1447
      %1449 = vmatprep.subr.mxu0 0.0
      %v1450 = vand.u32 %v817, 4294901760
      %v1451 = vsub.f32 %v817, %v1450
      %v1452 = vand.u32 %v1451, 4294901760
      %1453 = vmatpush1.msra.mxu0 %v1452
      %1454 = vmatprep.subr.mxu0 0.0
      %v1455 = vand.u32 %v818, 4294901760
      %v1456 = vsub.f32 %v818, %v1455
      %v1457 = vand.u32 %v1456, 4294901760
      %1458 = vmatpush1.msra.mxu0 %v1457
      %1459 = vmatprep.subr.mxu0 0.0
      %v1460 = vand.u32 %v819, 4294901760
      %v1461 = vsub.f32 %v819, %v1460
      %v1462 = vand.u32 %v1461, 4294901760
      %1463 = vmatpush1.msra.mxu0 %v1462
      %1464 = vmatprep.subr.mxu0 0.0
      %v1465 = vand.u32 %v858, 4294901760
      %v1466 = vsub.f32 %v858, %v1465
      %v1467 = vand.u32 %v1466, 4294901760
      %1468 = vmatpush1.msra.mxu0 %v1467
      %1469 = vmatprep.subr.mxu0 0.0
      %1470 = vmatpush1.msra.mxu0 0.0
      %1471 = vmatprep.subr.mxu0 0.0
      %1472 = vmatpush1.msra.mxu0 0.0
      %1473 = vmatprep.subr.mxu0 0.0
      %1474 = vmatpush1.msra.mxu0 0.0
      %1475 = vmatprep.subr.mxu0 0.0
      %1476 = vmatpush1.msra.mxu0 0.0
      %1477 = vmatprep.subr.mxu0 0.0
      %1478 = vmatpush1.msra.mxu0 0.0
      %1479 = vmatprep.subr.mxu0 0.0
      %1480 = vmatpush1.msra.mxu0 0.0
      %1481 = vmatprep.subr.mxu0 0.0
      %1482 = vmatpush1.msra.mxu0 0.0
      %1483 = vmatprep.subr.mxu0 0.0
      %1484 = vmatpush1.msra.mxu0 0.0
      %1485 = vmatprep.subr.mxu0 0.0
      %1486 = vmatpush1.msra.mxu0 0.0
      %1487 = vmatprep.subr.mxu0 0.0
      %1488 = vmatpush1.msra.mxu0 0.0
      %1489 = vmatprep.subr.mxu0 0.0
      %1490 = vmatpush1.msra.mxu0 0.0
      %1491 = vmatprep.subr.mxu0 0.0
      %1492 = vmatpush1.msra.mxu0 0.0
      %1493 = vmatprep.subr.mxu0 0.0
      %1494 = vmatpush1.msra.mxu0 0.0
      %1495 = vmatprep.subr.mxu0 0.0
      %1496 = vmatpush1.msra.mxu0 0.0
      %1497 = vmatprep.subr.mxu0 0.0
      %1498 = vmatpush1.msra.mxu0 0.0
      %1499 = vmatprep.subr.mxu0 0.0
      %1500 = vmatpush1.msra.mxu0 0.0
      %1501 = vmatprep.subr.mxu0 0.0
      %1502 = vmatpush1.msra.mxu0 0.0
      %1503 = vmatprep.subr.mxu0 0.0
      %1504 = vmatpush1.msra.mxu0 0.0
      %1505 = vmatprep.subr.mxu0 0.0
      %1506 = vmatpush1.msra.mxu0 0.0
      %1507 = vmatprep.subr.mxu0 0.0
      %1508 = vmatpush1.msra.mxu0 0.0
      %1509 = vmatprep.subr.mxu0 0.0
      %1510 = vmatpush1.msra.mxu0 0.0
      %1511 = vmatprep.subr.mxu0 0.0
      %1512 = vmatpush1.msra.mxu0 0.0
      %1513 = vmatprep.subr.mxu0 0.0
      %1514 = vmatpush1.msra.mxu0 0.0
      %1515 = vmatprep.subr.mxu0 0.0
      %1516 = vmatpush1.msra.mxu0 0.0
      %1517 = vmatprep.subr.mxu0 0.0
      %1518 = vmatpush1.msra.mxu0 0.0
      %1519 = vmatprep.subr.mxu0 0.0
      %1520 = vmatpush1.msra.mxu0 0.0
      %1521 = vmatprep.subr.mxu0 0.0
      %1522 = vmatpush1.msra.mxu0 0.0
      %1523 = vmatprep.mubr.f32.mxu0 0.0
      %v1524 = vand.u32 %v830, 4294901760
      %1525 = vmatmul.mubr.f32.gmra.mrb[0].mxu0 %v1524
      %v1526 = vpop.f32.mrb[0].mxu0
      %v1527 = vadd.f32 %v1377, %v1526
      %v1528 = vpop.f32.mrb[0].mxu0
      %1529 = vmatprep.mubr.f32.mxu0 0.0
      %v1530 = vand.u32 %v833, 4294901760
      %1531 = vmatmul.mubr.f32.gmra.mrb[0].mxu0 %v1530
      %v1532 = vpop.f32.mrb[0].mxu0
      %v1533 = vadd.f32 %v1385, %v1532
      %v1534 = vpop.f32.mrb[0].mxu0
      %1535 = vmatprep.mubr.f32.mxu0 0.0
      %v1536 = vand.u32 %v836, 4294901760
      %1537 = vmatmul.mubr.f32.gmra.mrb[0].mxu0 %v1536
      %v1538 = vpop.f32.mrb[0].mxu0
      %v1539 = vadd.f32 %v1393, %v1538
      %v1540 = vpop.f32.mrb[0].mxu0
      %1541 = vmatprep.mubr.f32.mxu0 0.0
      %v1542 = vand.u32 %v839, 4294901760
      %1543 = vmatmul.mubr.f32.gmra.mrb[0].mxu0 %v1542
      %v1544 = vpop.f32.mrb[0].mxu0
      %v1545 = vadd.f32 %v1401, %v1544
      %v1546 = vpop.f32.mrb[0].mxu0
      %1547 = vmatprep.mubr.f32.mxu0 0.0
      %v1548 = vand.u32 %v842, 4294901760
      %1549 = vmatmul.mubr.f32.gmra.mrb[0].mxu0 %v1548
      %v1550 = vpop.f32.mrb[0].mxu0
      %v1551 = vadd.f32 %v1409, %v1550
      %v1552 = vpop.f32.mrb[0].mxu0
      %1553 = vmatprep.mubr.f32.mxu0 0.0
      %v1554 = vand.u32 %v845, 4294901760
      %1555 = vmatmul.mubr.f32.gmra.mrb[0].mxu0 %v1554
      %v1556 = vpop.f32.mrb[0].mxu0
      %v1557 = vadd.f32 %v1417, %v1556
      %v1558 = vpop.f32.mrb[0].mxu0
      %1559 = vmatprep.mubr.f32.mxu0 0.0
      %v1560 = vand.u32 %v848, 4294901760
      %1561 = vmatmul.mubr.f32.gmra.mrb[0].mxu0 %v1560
      %v1562 = vpop.f32.mrb[0].mxu0
      %v1563 = vadd.f32 %v1425, %v1562
      %v1564 = vpop.f32.mrb[0].mxu0
      %1565 = vmatprep.mubr.f32.mxu0 0.0
      %v1566 = vand.u32 %v851, 4294901760
      %1567 = vmatmul.mubr.f32.gmra.mrb[0].mxu0 %v1566
      %v1568 = vpop.f32.mrb[0].mxu0
      %v1569 = vadd.f32 %v1433, %v1568
      %v1570 = vpop.f32.mrb[0].mxu0
      %1571 = vmatprep.mubr.f32.mxu0 0.0
      %v1572 = vand.u32 %v854, 4294901760
      %1573 = vmatmul.mubr.f32.gmra.mrb[0].mxu0 %v1572
      %v1574 = vpop.f32.mrb[0].mxu0
      %v1575 = vadd.f32 %v1441, %v1574
      %v1576 = vpop.f32.mrb[0].mxu0
      %1577 = vdwg.mxu0
      %1578 = vmatprep.subr.mxu0 0.0
      %v1579 = vand.u32 %v816, 4294901760
      %1580 = vmatpush1.msra.mxu0 %v1579
      %1581 = vmatprep.subr.mxu0 0.0
      %v1582 = vand.u32 %v817, 4294901760
      %1583 = vmatpush1.msra.mxu0 %v1582
      %1584 = vmatprep.subr.mxu0 0.0
      %v1585 = vand.u32 %v818, 4294901760
      %1586 = vmatpush1.msra.mxu0 %v1585
      %1587 = vmatprep.subr.mxu0 0.0
      %v1588 = vand.u32 %v819, 4294901760
      %1589 = vmatpush1.msra.mxu0 %v1588
      %1590 = vmatprep.subr.mxu0 0.0
      %v1591 = vand.u32 %v858, 4294901760
      %1592 = vmatpush1.msra.mxu0 %v1591
      %1593 = vmatprep.subr.mxu0 0.0
      %1594 = vmatpush1.msra.mxu0 0.0
      %1595 = vmatprep.subr.mxu0 0.0
      %1596 = vmatpush1.msra.mxu0 0.0
      %1597 = vmatprep.subr.mxu0 0.0
      %1598 = vmatpush1.msra.mxu0 0.0
      %1599 = vmatprep.subr.mxu0 0.0
      %1600 = vmatpush1.msra.mxu0 0.0
      %1601 = vmatprep.subr.mxu0 0.0
      %1602 = vmatpush1.msra.mxu0 0.0
      %1603 = vmatprep.subr.mxu0 0.0
      %1604 = vmatpush1.msra.mxu0 0.0
      %1605 = vmatprep.subr.mxu0 0.0
      %1606 = vmatpush1.msra.mxu0 0.0
      %1607 = vmatprep.subr.mxu0 0.0
      %1608 = vmatpush1.msra.mxu0 0.0
      %1609 = vmatprep.subr.mxu0 0.0
      %1610 = vmatpush1.msra.mxu0 0.0
      %1611 = vmatprep.subr.mxu0 0.0
      %1612 = vmatpush1.msra.mxu0 0.0
      %1613 = vmatprep.subr.mxu0 0.0
      %1614 = vmatpush1.msra.mxu0 0.0
      %1615 = vmatprep.subr.mxu0 0.0
      %1616 = vmatpush1.msra.mxu0 0.0
      %1617 = vmatprep.subr.mxu0 0.0
      %1618 = vmatpush1.msra.mxu0 0.0
      %1619 = vmatprep.subr.mxu0 0.0
      %1620 = vmatpush1.msra.mxu0 0.0
      %1621 = vmatprep.subr.mxu0 0.0
      %1622 = vmatpush1.msra.mxu0 0.0
      %1623 = vmatprep.subr.mxu0 0.0
      %1624 = vmatpush1.msra.mxu0 0.0
      %1625 = vmatprep.subr.mxu0 0.0
      %1626 = vmatpush1.msra.mxu0 0.0
      %1627 = vmatprep.subr.mxu0 0.0
      %1628 = vmatpush1.msra.mxu0 0.0
      %1629 = vmatprep.subr.mxu0 0.0
      %1630 = vmatpush1.msra.mxu0 0.0
      %1631 = vmatprep.subr.mxu0 0.0
      %1632 = vmatpush1.msra.mxu0 0.0
      %1633 = vmatprep.subr.mxu0 0.0
      %1634 = vmatpush1.msra.mxu0 0.0
      %1635 = vmatprep.subr.mxu0 0.0
      %1636 = vmatpush1.msra.mxu0 0.0
      %1637 = vmatprep.subr.mxu0 0.0
      %1638 = vmatpush1.msra.mxu0 0.0
      %1639 = vmatprep.subr.mxu0 0.0
      %1640 = vmatpush1.msra.mxu0 0.0
      %1641 = vmatprep.subr.mxu0 0.0
      %1642 = vmatpush1.msra.mxu0 0.0
      %1643 = vmatprep.subr.mxu0 0.0
      %1644 = vmatpush1.msra.mxu0 0.0
      %1645 = vmatprep.subr.mxu0 0.0
      %1646 = vmatpush1.msra.mxu0 0.0
      %1647 = vmatprep.mubr.f32.mxu0 0.0
      %v1648 = vand.u32 %v830, 4294901760
      %1649 = vmatmul.mubr.f32.gmra.mrb[0].mxu0 %v1648
      %v1650 = vpop.f32.mrb[0].mxu0
      %v1651 = vadd.f32 %v1527, %v1650
      %v1652 = vpop.f32.mrb[0].mxu0
      %1653 = vmatprep.mubr.f32.mxu0 0.0
      %v1654 = vand.u32 %v833, 4294901760
      %1655 = vmatmul.mubr.f32.gmra.mrb[0].mxu0 %v1654
      %v1656 = vpop.f32.mrb[0].mxu0
      %v1657 = vadd.f32 %v1533, %v1656
      %v1658 = vpop.f32.mrb[0].mxu0
      %1659 = vmatprep.mubr.f32.mxu0 0.0
      %v1660 = vand.u32 %v836, 4294901760
      %1661 = vmatmul.mubr.f32.gmra.mrb[0].mxu0 %v1660
      %v1662 = vpop.f32.mrb[0].mxu0
      %v1663 = vadd.f32 %v1539, %v1662
      %v1664 = vpop.f32.mrb[0].mxu0
      %1665 = vmatprep.mubr.f32.mxu0 0.0
      %v1666 = vand.u32 %v839, 4294901760
      %1667 = vmatmul.mubr.f32.gmra.mrb[0].mxu0 %v1666
      %v1668 = vpop.f32.mrb[0].mxu0
      %v1669 = vadd.f32 %v1545, %v1668
      %v1670 = vpop.f32.mrb[0].mxu0
      %1671 = vmatprep.mubr.f32.mxu0 0.0
      %v1672 = vand.u32 %v842, 4294901760
      %1673 = vmatmul.mubr.f32.gmra.mrb[0].mxu0 %v1672
      %v1674 = vpop.f32.mrb[0].mxu0
      %v1675 = vadd.f32 %v1551, %v1674
      %v1676 = vpop.f32.mrb[0].mxu0
      %1677 = vmatprep.mubr.f32.mxu0 0.0
      %v1678 = vand.u32 %v845, 4294901760
      %1679 = vmatmul.mubr.f32.gmra.mrb[0].mxu0 %v1678
      %v1680 = vpop.f32.mrb[0].mxu0
      %v1681 = vadd.f32 %v1557, %v1680
      %v1682 = vpop.f32.mrb[0].mxu0
      %1683 = vmatprep.mubr.f32.mxu0 0.0
      %v1684 = vand.u32 %v848, 4294901760
      %1685 = vmatmul.mubr.f32.gmra.mrb[0].mxu0 %v1684
      %v1686 = vpop.f32.mrb[0].mxu0
      %v1687 = vadd.f32 %v1563, %v1686
      %v1688 = vpop.f32.mrb[0].mxu0
      %1689 = vmatprep.mubr.f32.mxu0 0.0
      %v1690 = vand.u32 %v851, 4294901760
      %1691 = vmatmul.mubr.f32.gmra.mrb[0].mxu0 %v1690
      %v1692 = vpop.f32.mrb[0].mxu0
      %v1693 = vadd.f32 %v1569, %v1692
      %v1694 = vpop.f32.mrb[0].mxu0
      %1695 = vmatprep.mubr.f32.mxu0 0.0
      %v1696 = vand.u32 %v854, 4294901760
      %1697 = vmatmul.mubr.f32.gmra.mrb[0].mxu0 %v1696
      %v1698 = vpop.f32.mrb[0].mxu0
      %v1699 = vadd.f32 %v1575, %v1698
      %v1700 = vpop.f32.mrb[0].mxu0
      %1701 = vdwg.mxu0
      %v1702 = vld [vmem:[%s306] sm:$0xff]
      %v1703 = vld [vmem:[%s306 + $0x8] sm:$0xff]
      %v1704 = vld [vmem:[%s306 + $0x10] sm:$0xff]
      %v1705 = vld [vmem:[%s306 + $0x18] sm:$0xff]
      %v1706 = vld [vmem:[%s306 + $0x20] sm:$0xff]
      %v1707 = vld [vmem:[%s306 + $0x28] sm:$0xff]
      %v1708 = vld [vmem:[%s306 + $0x30] sm:$0xff]
      %v1709 = vld [vmem:[%s306 + $0x38] sm:$0xff]
      %v1710 = vld [vmem:[%s306 + $0x40] sm:$0xff]
      %1712 = vset.pattern.permute.xlu0 0
      %1713 = vperm.xlu0 %1712, %v1702
      %v1714 = vpop.permute.xlu0 %1713
      %1717 = vset.pattern.permute.xlu0 0
      %1718 = vperm.xlu0 %1717, %v1703
      %v1719 = vpop.permute.xlu0 %1718
      %1722 = vset.pattern.permute.xlu0 0
      %1723 = vperm.xlu0 %1722, %v1704
      %v1724 = vpop.permute.xlu0 %1723
      %1727 = vset.pattern.permute.xlu0 0
      %1728 = vperm.xlu0 %1727, %v1705
      %v1729 = vpop.permute.xlu0 %1728
      %1732 = vset.pattern.permute.xlu0 0
      %1733 = vperm.xlu0 %1732, %v1706
      %v1734 = vpop.permute.xlu0 %1733
      %1737 = vset.pattern.permute.xlu0 0
      %1738 = vperm.xlu0 %1737, %v1707
      %v1739 = vpop.permute.xlu0 %1738
      %1742 = vset.pattern.permute.xlu0 0
      %1743 = vperm.xlu0 %1742, %v1708
      %v1744 = vpop.permute.xlu0 %1743
      %1747 = vset.pattern.permute.xlu0 0
      %1748 = vperm.xlu0 %1747, %v1709
      %v1749 = vpop.permute.xlu0 %1748
      %1752 = vset.pattern.permute.xlu0 0
      %1753 = vperm.xlu0 %1752, %v1710
      %v1754 = vpop.permute.xlu0 %1753
      %v1756 = vmul.f32 %v1651, %v1714
      %v1757 = vmul.f32 %v1657, %v1719
      %v1758 = vmul.f32 %v1663, %v1724
      %v1759 = vmul.f32 %v1669, %v1729
      %v1760 = vmul.f32 %v1675, %v1734
      %v1761 = vmul.f32 %v1681, %v1739
      %v1762 = vmul.f32 %v1687, %v1744
      %v1763 = vmul.f32 %v1693, %v1749
      %v1764 = vmul.f32 %v1699, %v1754
      %vm1765 = vcmask 64512
      %v1766 = vsel %vm1765, %v1756, 0.0
      %v1767 = vsel %vm1765, %v1757, 0.0
      %v1768 = vadd.f32 %v1766, %v1767
      %v1769 = vsel %vm1765, %v1758, 0.0
      %v1770 = vadd.f32 %v1768, %v1769
      %v1771 = vsel %vm1765, %v1759, 0.0
      %v1772 = vadd.f32 %v1770, %v1771
      %v1773 = vsel %vm1765, %v1760, 0.0
      %v1774 = vadd.f32 %v1772, %v1773
      %v1775 = vsel %vm1765, %v1761, 0.0
      %v1776 = vadd.f32 %v1774, %v1775
      %v1777 = vsel %vm1765, %v1762, 0.0
      %v1778 = vadd.f32 %v1776, %v1777
      %v1779 = vsel %vm1765, %v1763, 0.0
      %v1780 = vadd.f32 %v1778, %v1779
      %v1781 = vsel %vm1765, %v1764, 0.0
      %v1782 = vadd.f32 %v1780, %v1781
      %v1783 = vrot.slane %v1782, 4
      %v1784 = vadd.f32 %v1782, %v1783
      %v1785 = vrot.slane %v1784, 2
      %v1786 = vadd.f32 %v1784, %v1785
      %v1787 = vrot.slane %v1786, 1
      %v1788 = vadd.f32 %v1786, %v1787
      %vm1789 = vcmask 57344
      %1790 = vst.msk [vmem:[%s323] sm:$0x1] %vm1789, %v1788
      %v1791 = vmul.f32 %v1756, %v1651
      %v1792 = vmul.f32 %v1757, %v1657
      %v1793 = vmul.f32 %v1758, %v1663
      %v1794 = vmul.f32 %v1759, %v1669
      %v1795 = vmul.f32 %v1760, %v1675
      %v1796 = vmul.f32 %v1761, %v1681
      %v1797 = vmul.f32 %v1762, %v1687
      %v1798 = vmul.f32 %v1763, %v1693
      %v1799 = vmul.f32 %v1764, %v1699
      %v1800 = vsel %vm1765, %v1791, 0.0
      %v1801 = vsel %vm1765, %v1792, 0.0
      %v1802 = vadd.f32 %v1800, %v1801
      %v1803 = vsel %vm1765, %v1793, 0.0
      %v1804 = vadd.f32 %v1802, %v1803
      %v1805 = vsel %vm1765, %v1794, 0.0
      %v1806 = vadd.f32 %v1804, %v1805
      %v1807 = vsel %vm1765, %v1795, 0.0
      %v1808 = vadd.f32 %v1806, %v1807
      %v1809 = vsel %vm1765, %v1796, 0.0
      %v1810 = vadd.f32 %v1808, %v1809
      %v1811 = vsel %vm1765, %v1797, 0.0
      %v1812 = vadd.f32 %v1810, %v1811
      %v1813 = vsel %vm1765, %v1798, 0.0
      %v1814 = vadd.f32 %v1812, %v1813
      %v1815 = vsel %vm1765, %v1799, 0.0
      %v1816 = vadd.f32 %v1814, %v1815
      %v1817 = vrot.slane %v1816, 4
      %v1818 = vadd.f32 %v1816, %v1817
      %v1819 = vrot.slane %v1818, 2
      %v1820 = vadd.f32 %v1818, %v1819
      %v1821 = vrot.slane %v1820, 1
      %v1822 = vadd.f32 %v1820, %v1821
      %1823 = vst.msk [vmem:[%s329] sm:$0x1] %vm1789, %v1822
      %1824 = vst.msk [vmem:[%s316] sm:$0xff] %vm1765, %v1651
      %1825 = vst.msk [vmem:[%s316 + $0x8] sm:$0xff] %vm1765, %v1657
      %1826 = vst.msk [vmem:[%s316 + $0x10] sm:$0xff] %vm1765, %v1663
      %1827 = vst.msk [vmem:[%s316 + $0x18] sm:$0xff] %vm1765, %v1669
      %1828 = vst.msk [vmem:[%s316 + $0x20] sm:$0xff] %vm1765, %v1675
      %1829 = vst.msk [vmem:[%s316 + $0x28] sm:$0xff] %vm1765, %v1681
      %1830 = vst.msk [vmem:[%s316 + $0x30] sm:$0xff] %vm1765, %v1687
      %1831 = vst.msk [vmem:[%s316 + $0x38] sm:$0xff] %vm1765, %v1693
      %1832 = vst.msk [vmem:[%s316 + $0x40] sm:$0xff] %vm1765, %v1699
      %s1833 = smul.u32 9, %s23
      %p1834 = scmp.lt.s32.totalorder %s22, 1
      %s1835 = scalar_select %p1834, %s22, 1
      %p1836 = scmp.lt.s32.totalorder %s1833, 8
      %s1837 = scalar_select %p1836, %s1833, 8
      %s1838 = smul.addr %s1835, 9
      %s1839 = sadd.s32 %s1837, %s1838
      %s1840 = smul.addr %s1839, 8
      %s1841 = scalar_lea.vmem %s4, %s1840
      %p1842 = scmp.lt.s32.totalorder %s22, 1
      %s1843 = scalar_select %p1842, %s22, 1
      %p1844 = scmp.lt.s32.totalorder %s23, 0
      %s1845 = scalar_select %p1844, %s23, 0
      %s1846 = sadd.s32 %s1845, %s1843
      %s1847 = scalar_lea.vmem %s5, %s1846
      %p1848 = scmp.lt.s32.totalorder %s22, 1
      %s1849 = scalar_select %p1848, %s22, 1
      %p1850 = scmp.lt.s32.totalorder %s23, 0
      %s1851 = scalar_select %p1850, %s23, 0
      %s1852 = sadd.s32 %s1851, %s1849
      %s1853 = scalar_lea.vmem %s6, %s1852
      // Predicated region
      $region37: #{residual_forward.4} parent=35 // pred_check
        %p1854 = pneg %p144
      $region38: #{residual_forward.4} parent=35 // pred_check_branch
        %1856 = sbr.rel (%p1854) target = $region40
      $region39: #{residual_forward.4} parent=35 // pred_region
        %s1857 = smul.u32 9, %s23
      $region40: #{residual_forward.4} parent=35 // pred_fallthru
        _
      // Predicated region
      $region41: #{residual_forward.4} parent=35 // pred_check
        %p1858 = pneg %p172
      $region42: #{residual_forward.4} parent=35 // pred_check_branch
        %1860 = sbr.rel (%p1858) target = $region44
      $region43: #{residual_forward.4} parent=35 // pred_region
        _
      $region44: #{residual_forward.4} parent=35 // pred_fallthru
        _
      // Predicated region
      $region45: #{residual_forward.4} parent=35 // pred_check
        %p1861 = pneg %p200
      $region46: #{residual_forward.4} parent=35 // pred_check_branch
        %1863 = sbr.rel (%p1861) target = $region48
      $region47: #{residual_forward.4} parent=35 // pred_region
        _
      $region48: #{residual_forward.4} parent=35 // pred_fallthru
        _
    $region36: #{residual_forward.4} parent=5 // pred_fallthru
      _
    %p1864 = scmp.le.s32.totalorder 2, %s13
    // Predicated region
    $region49: #{residual_forward.4} parent=5 // pred_check
      %p1865 = pneg %p1864
    $region50: #{residual_forward.4} parent=5 // pred_check_branch
      %1867 = sbr.rel (%p1865) target = $region52
    $region51: #{residual_forward.4} parent=5 // pred_region
      %s1868 = ssub.s32 %s13, 2
      // Predicated region
      $region53: #{residual_forward.4} parent=51 // pred_check
        %p1869 = pneg %p150
      $region54: #{residual_forward.4} parent=51 // pred_check_branch
        %1871 = sbr.rel (%p1869) target = $region56
      $region55: #{residual_forward.4} parent=51 // pred_region
        %s1872 = smul.u32 9, %s25
        %p1873 = scmp.lt.s32.totalorder %s24, 1
        %s1874 = scalar_select %p1873, %s24, 1
        %p1875 = scmp.lt.s32.totalorder %s1872, 8
        %s1876 = scalar_select %p1875, %s1872, 8
        %s1877 = smul.addr %s1874, 9
        %s1878 = sadd.s32 %s1876, %s1877
        %s1879 = smul.addr %s1878, 8
        %s1880 = scalar_lea.vmem %s4, %s1879
      $region56: #{residual_forward.4} parent=51 // pred_fallthru
        _
      // Predicated region
      $region57: #{residual_forward.4} parent=51 // pred_check
        %p1881 = pneg %p178
      $region58: #{residual_forward.4} parent=51 // pred_check_branch
        %1883 = sbr.rel (%p1881) target = $region60
      $region59: #{residual_forward.4} parent=51 // pred_region
        %p1884 = scmp.lt.s32.totalorder %s24, 1
        %s1885 = scalar_select %p1884, %s24, 1
        %p1886 = scmp.lt.s32.totalorder %s25, 0
        %s1887 = scalar_select %p1886, %s25, 0
        %s1888 = sadd.s32 %s1887, %s1885
        %s1889 = scalar_lea.vmem %s5, %s1888
      $region60: #{residual_forward.4} parent=51 // pred_fallthru
        _
      // Predicated region
      $region61: #{residual_forward.4} parent=51 // pred_check
        %p1890 = pneg %p206
      $region62: #{residual_forward.4} parent=51 // pred_check_branch
        %1892 = sbr.rel (%p1890) target = $region64
      $region63: #{residual_forward.4} parent=51 // pred_region
        %p1893 = scmp.lt.s32.totalorder %s24, 1
        %s1894 = scalar_select %p1893, %s24, 1
        %p1895 = scmp.lt.s32.totalorder %s25, 0
        %s1896 = scalar_select %p1895, %s25, 0
        %s1897 = sadd.s32 %s1896, %s1894
        %s1898 = scalar_lea.vmem %s6, %s1897
      $region64: #{residual_forward.4} parent=51 // pred_fallthru
        _
    $region52: #{residual_forward.4} parent=5 // pred_fallthru
      _
  $region6: #{residual_forward.4} parent=0 // loop_footer
    %s17 = sadd.s32 1, %s13
  $region7: #{residual_forward.4} parent=0 // loop_footer_branch
    %12 = sbr.rel target = $region3
  $region8: #{residual_forward.4} parent=0 // loop_exit
    _

// kernel: residual_forward.6
$region0: #{residual_forward.6}
  #allocation0 [shape = 'u32[]', space=smem, size = 0x4, offset = 0x4, fixed_abs, tag = 'smem constant byte address 0x4 - core index']
  #allocation1 [shape = 'u32[144,128]{1,0:T(1,128)}', space=vmem, size = 0x12000, scoped, tag = 'internal scratch']
  #allocation2 [shape = 'f32[80,72]{1,0:T(8,128)}', space=vmem, size = 0xa000, scoped, tag = 'scratch operand']
  %s0 = inlined_call_operand.vmem [shape: f32[2,1,102,8], index: 0, kind: input, shape index: {}]
  %s1 = inlined_call_operand.vmem [shape: f32[72,8], index: 1, kind: input, shape index: {}]
  %s2 = inlined_call_operand.vmem [shape: f32[1,8], index: 2, kind: input, shape index: {}]
  %s3 = inlined_call_operand.vmem [shape: f32[80,1], index: 3, kind: input, shape index: {}]
  %s4 = inlined_call_operand.vmem [shape: f32[2,80,8], index: 4, kind: output, shape index: {0}]
  %s5 = inlined_call_operand.vmem [shape: f32[2,1,1,8], index: 5, kind: output, shape index: {1}]
  %s6 = inlined_call_operand.vmem [shape: f32[2,1,1,8], index: 6, kind: output, shape index: {2}]
  %7 = xla_tuple %s4, %s5, %s6
  %s8 = sld [smem:[#allocation0]]
  $region65: #{residual_forward.6} parent=0
    _
  %s10 = ssub.s32 1, %s8
  %s11 = scalar_select 0, %s10, %s8
  loop: start=0, step=1, limit=4
  $region2: #{residual_forward.6} parent=0 // loop_pre_header
    _
  $region3: #{residual_forward.6} parent=0 // loop_header
    %s13 = sphi 0, %s17
    %p14 = scmp.ge.s32.totalorder %s13, 4
    %s20 = sphi 0, %s32
    %s21 = sphi 0, %s28
    %s22 = sphi 0, %s20
    %s23 = sphi 0, %s21
    %s24 = sphi 0, %s22
    %s25 = sphi 0, %s23
    %s35 = sphi 0, %s37
    %s38 = sphi 0, %s35
    %s39 = sphi 0, %s38
    %s55 = sphi 0, %s39
    %s59 = sphi 0, %s59
    %s61 = sphi 0, %s59
    %s62 = sphi 0, %s61
    %s76 = sphi 0, %s62
    %s80 = sphi 0, %s80
    %s82 = sphi 0, %s80
    %s83 = sphi 0, %s82
    %s97 = sphi 0, %s83
    %s103 = sphi 0, %s105
    %s106 = sphi 0, %s103
    %s107 = sphi 0, %s106
    %s123 = sphi 0, %s107
    %s131 = sphi 0, %s133
    %s134 = sphi 0, %s131
    %s135 = sphi 0, %s134
    %s151 = sphi 0, %s135
    %s159 = sphi 0, %s161
    %s162 = sphi 0, %s159
    %s163 = sphi 0, %s162
    %s179 = sphi 0, %s163
    %s187 = sphi 0, %s189
    %s190 = sphi 0, %s187
    %s191 = sphi 0, %s190
    %s207 = sphi 0, %s191
  $region4: #{residual_forward.6} parent=0 // loop_header_branch
    %16 = sbr.rel (%p14) target = $region8
  $region5: #{residual_forward.6} parent=0 // loop_body
    %s18 = ssub.s32 %s13, 1
    %s19 = ssub.s32 %s13, 2
    %s26 = sadd.s32 1, %s21
    %p27 = scmp.ge.s32.totalorder %s26, 1
    %s28 = scalar_select %p27, 0, %s26
    %s29 = sadd.s32 1, %s20
    %s30 = scalar_select %p27, %s29, %s20
    %p31 = scmp.ge.s32.totalorder %s30, 2
    %s32 = scalar_select %p31, 0, %s30
    %s33 = ssub.s32 %s20, %s32
    %p34 = scmp.eq.s32.totalorder %s33, 0
    %s36 = sadd.s32 %s35, 1
    %s37 = scalar_select %p34, %s35, %s36
    %p40 = pneg %p34
    %p41 = scmp.eq.s32.totalorder %s13, 1
    %p42 = por %p40, %p41
    %p43 = scmp.ne.s32.totalorder %s35, %s38
    %p44 = scmp.eq.s32.totalorder %s13, 0
    %p45 = por %p43, %p44
    %p46 = scmp.ne.s32.totalorder %s35, %s38
    %p47 = scmp.eq.s32.totalorder %s18, 1
    %p48 = por %p46, %p47
    %p49 = scmp.ne.s32.totalorder %s38, %s39
    %p50 = scmp.eq.s32.totalorder %s18, 0
    %p51 = por %p49, %p50
    %p52 = scmp.ne.s32.totalorder %s38, %s39
    %p53 = scmp.eq.s32.totalorder %s19, 1
    %p54 = por %p52, %p53
    %p56 = scmp.ne.s32.totalorder %s39, %s55
    %p57 = scmp.eq.s32.totalorder %s19, 0
    %p58 = por %p56, %p57
    %s60 = sadd.s32 %s59, 1
    %p63 = scmp.eq.s32.totalorder %s13, 1
    %p64 = scmp.ne.s32.totalorder %s59, %s61
    %p65 = scmp.eq.s32.totalorder %s13, 0
    %p66 = por %p64, %p65
    %p67 = scmp.ne.s32.totalorder %s59, %s61
    %p68 = scmp.eq.s32.totalorder %s18, 1
    %p69 = por %p67, %p68
    %p70 = scmp.ne.s32.totalorder %s61, %s62
    %p71 = scmp.eq.s32.totalorder %s18, 0
    %p72 = por %p70, %p71
    %p73 = scmp.ne.s32.totalorder %s61, %s62
    %p74 = scmp.eq.s32.totalorder %s19, 1
    %p75 = por %p73, %p74
    %p77 = scmp.ne.s32.totalorder %s62, %s76
    %p78 = scmp.eq.s32.totalorder %s19, 0
    %p79 = por %p77, %p78
    %s81 = sadd.s32 %s80, 1
    %p84 = scmp.eq.s32.totalorder %s13, 1
    %p85 = scmp.ne.s32.totalorder %s80, %s82
    %p86 = scmp.eq.s32.totalorder %s13, 0
    %p87 = por %p85, %p86
    %p88 = scmp.ne.s32.totalorder %s80, %s82
    %p89 = scmp.eq.s32.totalorder %s18, 1
    %p90 = por %p88, %p89
    %p91 = scmp.ne.s32.totalorder %s82, %s83
    %p92 = scmp.eq.s32.totalorder %s18, 0
    %p93 = por %p91, %p92
    %p94 = scmp.ne.s32.totalorder %s82, %s83
    %p95 = scmp.eq.s32.totalorder %s19, 1
    %p96 = por %p94, %p95
    %p98 = scmp.ne.s32.totalorder %s83, %s97
    %p99 = scmp.eq.s32.totalorder %s19, 0
    %p100 = por %p98, %p99
    %s101 = ssub.s32 %s21, %s28
    %p102 = scmp.eq.s32.totalorder %s101, 0
    %s104 = sadd.s32 %s103, 1
    %s105 = scalar_select %p102, %s103, %s104
    %p108 = pneg %p102
    %p109 = scmp.eq.s32.totalorder %s13, 1
    %p110 = por %p108, %p109
    %p111 = scmp.ne.s32.totalorder %s103, %s106
    %p112 = scmp.eq.s32.totalorder %s13, 0
    %p113 = por %p111, %p112
    %p114 = scmp.ne.s32.totalorder %s103, %s106
    %p115 = scmp.eq.s32.totalorder %s18, 1
    %p116 = por %p114, %p115
    %p117 = scmp.ne.s32.totalorder %s106, %s107
    %p118 = scmp.eq.s32.totalorder %s18, 0
    %p119 = por %p117, %p118
    %p120 = scmp.ne.s32.totalorder %s106, %s107
    %p121 = scmp.eq.s32.totalorder %s19, 1
    %p122 = por %p120, %p121
    %p124 = scmp.ne.s32.totalorder %s107, %s123
    %p125 = scmp.eq.s32.totalorder %s19, 0
    %p126 = por %p124, %p125
    %s127 = ssub.s32 %s20, %s32
    %s128 = ssub.s32 %s21, %s28
    %s129 = sor.u32 %s127, %s128
    %p130 = scmp.eq.s32.totalorder %s129, 0
    %s132 = sadd.s32 %s131, 1
    %s133 = scalar_select %p130, %s131, %s132
    %p136 = pneg %p130
    %p137 = scmp.eq.s32.totalorder %s13, 1
    %p138 = por %p136, %p137
    %p139 = scmp.ne.s32.totalorder %s131, %s134
    %p140 = scmp.eq.s32.totalorder %s13, 0
    %p141 = por %p139, %p140
    %p142 = scmp.ne.s32.totalorder %s131, %s134
    %p143 = scmp.eq.s32.totalorder %s18, 1
    %p144 = por %p142, %p143
    %p145 = scmp.ne.s32.totalorder %s134, %s135
    %p146 = scmp.eq.s32.totalorder %s18, 0
    %p147 = por %p145, %p146
    %p148 = scmp.ne.s32.totalorder %s134, %s135
    %p149 = scmp.eq.s32.totalorder %s19, 1
    %p150 = por %p148, %p149
    %p152 = scmp.ne.s32.totalorder %s135, %s151
    %p153 = scmp.eq.s32.totalorder %s19, 0
    %p154 = por %p152, %p153
    %s155 = ssub.s32 %s20, %s32
    %s156 = ssub.s32 %s21, %s28
    %s157 = sor.u32 %s155, %s156
    %p158 = scmp.eq.s32.totalorder %s157, 0
    %s160 = sadd.s32 %s159, 1
    %s161 = scalar_select %p158, %s159, %s160
    %p164 = pneg %p158
    %p165 = scmp.eq.s32.totalorder %s13, 1
    %p166 = por %p164, %p165
    %p167 = scmp.ne.s32.totalorder %s159, %s162
    %p168 = scmp.eq.s32.totalorder %s13, 0
    %p169 = por %p167, %p168
    %p170 = scmp.ne.s32.totalorder %s159, %s162
    %p171 = scmp.eq.s32.totalorder %s18, 1
    %p172 = por %p170, %p171
    %p173 = scmp.ne.s32.totalorder %s162, %s163
    %p174 = scmp.eq.s32.totalorder %s18, 0
    %p175 = por %p173, %p174
    %p176 = scmp.ne.s32.totalorder %s162, %s163
    %p177 = scmp.eq.s32.totalorder %s19, 1
    %p178 = por %p176, %p177
    %p180 = scmp.ne.s32.totalorder %s163, %s179
    %p181 = scmp.eq.s32.totalorder %s19, 0
    %p182 = por %p180, %p181
    %s183 = ssub.s32 %s20, %s32
    %s184 = ssub.s32 %s21, %s28
    %s185 = sor.u32 %s183, %s184
    %p186 = scmp.eq.s32.totalorder %s185, 0
    %s188 = sadd.s32 %s187, 1
    %s189 = scalar_select %p186, %s187, %s188
    %p192 = pneg %p186
    %p193 = scmp.eq.s32.totalorder %s13, 1
    %p194 = por %p192, %p193
    %p195 = scmp.ne.s32.totalorder %s187, %s190
    %p196 = scmp.eq.s32.totalorder %s13, 0
    %p197 = por %p195, %p196
    %p198 = scmp.ne.s32.totalorder %s187, %s190
    %p199 = scmp.eq.s32.totalorder %s18, 1
    %p200 = por %p198, %p199
    %p201 = scmp.ne.s32.totalorder %s190, %s191
    %p202 = scmp.eq.s32.totalorder %s18, 0
    %p203 = por %p201, %p202
    %p204 = scmp.ne.s32.totalorder %s190, %s191
    %p205 = scmp.eq.s32.totalorder %s19, 1
    %p206 = por %p204, %p205
    %p208 = scmp.ne.s32.totalorder %s191, %s207
    %p209 = scmp.eq.s32.totalorder %s19, 0
    %p210 = por %p208, %p209
    %p211 = scmp.le.s32.totalorder 1, %s13
    %p212 = scmp.lt.s32.totalorder %s13, 3
    %p213 = pnand %p211, %p212
    %p214 = pneg %p213
    // Predicated region
    $region9: #{residual_forward.6} parent=5 // pred_check
      _
    $region10: #{residual_forward.6} parent=5 // pred_check_branch
      %216 = sbr.rel (%p213) target = $region12
    $region11: #{residual_forward.6} parent=5 // pred_region
      %s217 = ssub.s32 %s13, 1
      // Predicated region
      $region13: #{residual_forward.6} parent=11 // pred_check
        %p218 = pneg %p72
      $region14: #{residual_forward.6} parent=11 // pred_check_branch
        %220 = sbr.rel (%p218) target = $region16
      $region15: #{residual_forward.6} parent=11 // pred_region
        _
      $region16: #{residual_forward.6} parent=11 // pred_fallthru
        _
      // Predicated region
      $region17: #{residual_forward.6} parent=11 // pred_check
        %p221 = pneg %p93
      $region18: #{residual_forward.6} parent=11 // pred_check_branch
        %223 = sbr.rel (%p221) target = $region20
      $region19: #{residual_forward.6} parent=11 // pred_region
        _
      $region20: #{residual_forward.6} parent=11 // pred_fallthru
        _
      // Predicated region
      $region21: #{residual_forward.6} parent=11 // pred_check
        %p224 = pneg %p119
      $region22: #{residual_forward.6} parent=11 // pred_check_branch
        %226 = sbr.rel (%p224) target = $region24
      $region23: #{residual_forward.6} parent=11 // pred_region
        %s227 = smul.u32 10, %s23
        %p228 = scmp.lt.s32.totalorder %s227, 9
        %s229 = scalar_select %p228, %s227, 9
        %s230 = smul.addr %s229, 8
        %s231 = scalar_lea.vmem %s3, %s230
        %s232 = smul.u32 10, %s23
      $region24: #{residual_forward.6} parent=11 // pred_fallthru
        _
    $region12: #{residual_forward.6} parent=5 // pred_fallthru
      _
    %p233 = scmp.lt.s32.totalorder %s13, 2
    // Predicated region
    $region25: #{residual_forward.6} parent=5 // pred_check
      %p234 = pneg %p233
    $region26: #{residual_forward.6} parent=5 // pred_check_branch
      %236 = sbr.rel (%p234) target = $region28
    $region27: #{residual_forward.6} parent=5 // pred_region
      // Predicated region
      $region29: #{residual_forward.6} parent=27 // pred_check
        %p237 = pneg %p45
      $region30: #{residual_forward.6} parent=27 // pred_check_branch
        %239 = sbr.rel (%p237) target = $region32
      $region31: #{residual_forward.6} parent=27 // pred_region
        %p240 = scmp.lt.s32.totalorder %s20, 1
        %s241 = scalar_select %p240, %s20, 1
        %s242 = smul.addr %s241, 13
        %s243 = smul.addr %s242, 8
        %s244 = scalar_lea.vmem %s0, %s243
      $region32: #{residual_forward.6} parent=27 // pred_fallthru
        _
    $region28: #{residual_forward.6} parent=5 // pred_fallthru
      _
    %p245 = scmp.le.s32.totalorder 1, %s13
    %p246 = scmp.lt.s32.totalorder %s13, 3
    %p247 = pnand %p245, %p246
    %p248 = pneg %p247
    // Predicated region
    $region33: #{residual_forward.6} parent=5 // pred_check
      _
    $region34: #{residual_forward.6} parent=5 // pred_check_branch
      %250 = sbr.rel (%p247) target = $region36
    $region35: #{residual_forward.6} parent=5 // pred_region
      %s251 = ssub.s32 %s13, 1
      %p252 = scmp.lt.s32.totalorder %s22, 1
      %s253 = scalar_select %p252, %s22, 1
      %s254 = smul.addr %s253, 13
      %s255 = smul.addr %s254, 8
      %s256 = scalar_lea.vmem %s0, %s255
      %p257 = pneg %p51
      %p258 = pneg %p48
      %p259 = pneg %p72
      %p260 = pneg %p69
      %p261 = pneg %p93
      %p262 = pneg %p90
      %s263 = smul.u32 10, %s23
      %p264 = scmp.lt.s32.totalorder %s263, 9
      %s265 = scalar_select %p264, %s263, 9
      %s266 = smul.addr %s265, 8
      %s267 = scalar_lea.vmem %s3, %s266
      %p268 = pneg %p119
      %p269 = pneg %p116
      %p270 = pneg %p147
      %p271 = pneg %p144
      %s272 = smul.u32 10, %s23
      %p273 = scmp.lt.s32.totalorder %s22, 1
      %s274 = scalar_select %p273, %s22, 1
      %p275 = scmp.lt.s32.totalorder %s272, 9
      %s276 = scalar_select %p275, %s272, 9
      %s277 = smul.addr %s274, 10
      %s278 = sadd.s32 %s276, %s277
      %s279 = smul.addr %s278, 8
      %s280 = scalar_lea.vmem %s4, %s279
      %p281 = pneg %p175
      %p282 = pneg %p172
      %p283 = scmp.lt.s32.totalorder %s22, 1
      %s284 = scalar_select %p283, %s22, 1
      %p285 = scmp.lt.s32.totalorder %s23, 0
      %s286 = scalar_select %p285, %s23, 0
      %s287 = sadd.s32 %s286, %s284
      %s288 = scalar_lea.vmem %s5, %s287
      %p289 = pneg %p203
      %p290 = pneg %p200
      %p291 = scmp.lt.s32.totalorder %s22, 1
      %s292 = scalar_select %p291, %s22, 1
      %p293 = scmp.lt.s32.totalorder %s23, 0
      %s294 = scalar_select %p293, %s23, 0
      %s295 = sadd.s32 %s294, %s292
      %s296 = scalar_lea.vmem %s6, %s295
      %p297 = scmp.lt.s32.totalorder %s22, 1
      %s298 = scalar_select %p297, %s22, 1
      %s299 = smul.addr %s298, 13
      %s300 = smul.addr %s299, 8
      %s301 = scalar_lea.vmem %s0, %s300
      %s302 = smul.u32 10, %s23
      %p303 = scmp.lt.s32.totalorder %s302, 9
      %s304 = scalar_select %p303, %s302, 9
      %s305 = smul.addr %s304, 8
      %s306 = scalar_lea.vmem %s3, %s305
      %s307 = smul.u32 10, %s23
      %s308 = smul.u32 10, %s23
      %p309 = scmp.lt.s32.totalorder %s22, 1
      %s310 = scalar_select %p309, %s22, 1
      %p311 = scmp.lt.s32.totalorder %s308, 9
      %s312 = scalar_select %p311, %s308, 9
      %s313 = smul.addr %s310, 10
      %s314 = sadd.s32 %s312, %s313
      %s315 = smul.addr %s314, 8
      %s316 = scalar_lea.vmem %s4, %s315
      %s317 = smul.u32 10, %s23
      %p318 = scmp.lt.s32.totalorder %s22, 1
      %s319 = scalar_select %p318, %s22, 1
      %p320 = scmp.lt.s32.totalorder %s23, 0
      %s321 = scalar_select %p320, %s23, 0
      %s322 = sadd.s32 %s321, %s319
      %s323 = scalar_lea.vmem %s5, %s322
      %p324 = scmp.lt.s32.totalorder %s22, 1
      %s325 = scalar_select %p324, %s22, 1
      %p326 = scmp.lt.s32.totalorder %s23, 0
      %s327 = scalar_select %p326, %s23, 0
      %s328 = sadd.s32 %s327, %s325
      %s329 = scalar_lea.vmem %s6, %s328
      %s330 = smul.u32 %s23, 80
      %s331 = scalar_lea.vmem %s301, %s330
      %v332 = vld [vmem:[%s331] sm:$0xff]
      %v333 = vld [vmem:[%s331 + $0x8] sm:$0xff]
      %v334 = vld [vmem:[%s331 + $0x10] sm:$0xff]
      %v335 = vld [vmem:[%s331 + $0x18] sm:$0xff]
      %v336 = vld [vmem:[%s331 + $0x20] sm:$0xff]
      %v337 = vld [vmem:[%s331 + $0x28] sm:$0xff]
      %v338 = vld [vmem:[%s331 + $0x30] sm:$0xff]
      %v339 = vld [vmem:[%s331 + $0x38] sm:$0xff]
      %v340 = vld [vmem:[%s331 + $0x40] sm:$0xff]
      %v341 = vld [vmem:[%s331 + $0x48] sm:$0xff]
      %vm342 = vcmask 64512
      %343 = vst.msk [vmem:[#allocation2] sm:$0xff] %vm342, %v332
      %344 = vst.msk [vmem:[#allocation2 + $0x8] sm:$0xff] %vm342, %v333
      %345 = vst.msk [vmem:[#allocation2 + $0x10] sm:$0xff] %vm342, %v334
      %346 = vst.msk [vmem:[#allocation2 + $0x18] sm:$0xff] %vm342, %v335
      %347 = vst.msk [vmem:[#allocation2 + $0x20] sm:$0xff] %vm342, %v336
      %348 = vst.msk [vmem:[#allocation2 + $0x28] sm:$0xff] %vm342, %v337
      %349 = vst.msk [vmem:[#allocation2 + $0x30] sm:$0xff] %vm342, %v338
      %350 = vst.msk [vmem:[#allocation2 + $0x38] sm:$0xff] %vm342, %v339
      %351 = vst.msk [vmem:[#allocation2 + $0x40] sm:$0xff] %vm342, %v340
      %352 = vst.msk [vmem:[#allocation2 + $0x48] sm:$0xff] %vm342, %v341
      %s353 = sadd.s32 %s330, 1
      %s354 = scalar_lea.vmem %s301, %s353
      %v355 = vld [vmem:[%s354] sm:$0xff]
      %v356 = vld [vmem:[%s354 + $0x8] sm:$0xff]
      %v357 = vld [vmem:[%s354 + $0x10] sm:$0xff]
      %v358 = vld [vmem:[%s354 + $0x18] sm:$0xff]
      %v359 = vld [vmem:[%s354 + $0x20] sm:$0xff]
      %v360 = vld [vmem:[%s354 + $0x28] sm:$0xff]
      %v361 = vld [vmem:[%s354 + $0x30] sm:$0xff]
      %v362 = vld [vmem:[%s354 + $0x38] sm:$0xff]
      %v363 = vld [vmem:[%s354 + $0x40] sm:$0xff]
      %v364 = vld [vmem:[%s354 + $0x48] sm:$0xff]
      %375 = vrot.lane.b32.xlu0 %v355, 8
      %v376 = vpop.permute.xlu0 %375
      %377 = vrot.lane.b32.xlu0 %v356, 8
      %v378 = vpop.permute.xlu0 %377
      %379 = vrot.lane.b32.xlu0 %v357, 8
      %v380 = vpop.permute.xlu0 %379
      %381 = vrot.lane.b32.xlu0 %v358, 8
      %v382 = vpop.permute.xlu0 %381
      %383 = vrot.lane.b32.xlu0 %v359, 8
      %v384 = vpop.permute.xlu0 %383
      %385 = vrot.lane.b32.xlu0 %v360, 8
      %v386 = vpop.permute.xlu0 %385
      %387 = vrot.lane.b32.xlu0 %v361, 8
      %v388 = vpop.permute.xlu0 %387
      %389 = vrot.lane.b32.xlu0 %v362, 8
      %v390 = vpop.permute.xlu0 %389
      %391 = vrot.lane.b32.xlu0 %v363, 8
      %v392 = vpop.permute.xlu0 %391
      %393 = vrot.lane.b32.xlu0 %v364, 8
      %v394 = vpop.permute.xlu0 %393
      %vm405 = vcmask 130112
      %406 = vst.msk [vmem:[#allocation2] sm:$0xff] %vm405, %v376
      %407 = vst.msk [vmem:[#allocation2 + $0x8] sm:$0xff] %vm405, %v378
      %408 = vst.msk [vmem:[#allocation2 + $0x10] sm:$0xff] %vm405, %v380
      %409 = vst.msk [vmem:[#allocation2 + $0x18] sm:$0xff] %vm405, %v382
      %410 = vst.msk [vmem:[#allocation2 + $0x20] sm:$0xff] %vm405, %v384
      %411 = vst.msk [vmem:[#allocation2 + $0x28] sm:$0xff] %vm405, %v386
      %412 = vst.msk [vmem:[#allocation2 + $0x30] sm:$0xff] %vm405, %v388
      %413 = vst.msk [vmem:[#allocation2 + $0x38] sm:$0xff] %vm405, %v390
      %414 = vst.msk [vmem:[#allocation2 + $0x40] sm:$0xff] %vm405, %v392
      %415 = vst.msk [vmem:[#allocation2 + $0x48] sm:$0xff] %vm405, %v394
      %s416 = sadd.s32 %s330, 2
      %s417 = scalar_lea.vmem %s301, %s416
      %v418 = vld [vmem:[%s417] sm:$0xff]
      %v419 = vld [vmem:[%s417 + $0x8] sm:$0xff]
      %v420 = vld [vmem:[%s417 + $0x10] sm:$0xff]
      %v421 = vld [vmem:[%s417 + $0x18] sm:$0xff]
      %v422 = vld [vmem:[%s417 + $0x20] sm:$0xff]
      %v423 = vld [vmem:[%s417 + $0x28] sm:$0xff]
      %v424 = vld [vmem:[%s417 + $0x30] sm:$0xff]
      %v425 = vld [vmem:[%s417 + $0x38] sm:$0xff]
      %v426 = vld [vmem:[%s417 + $0x40] sm:$0xff]
      %v427 = vld [vmem:[%s417 + $0x48] sm:$0xff]
      %438 = vrot.lane.b32.xlu0 %v418, 16
      %v439 = vpop.permute.xlu0 %438
      %440 = vrot.lane.b32.xlu0 %v419, 16
      %v441 = vpop.permute.xlu0 %440
      %442 = vrot.lane.b32.xlu0 %v420, 16
      %v443 = vpop.permute.xlu0 %442
      %444 = vrot.lane.b32.xlu0 %v421, 16
      %v445 = vpop.permute.xlu0 %444
      %446 = vrot.lane.b32.xlu0 %v422, 16
      %v447 = vpop.permute.xlu0 %446
      %448 = vrot.lane.b32.xlu0 %v423, 16
      %v449 = vpop.permute.xlu0 %448
      %450 = vrot.lane.b32.xlu0 %v424, 16
      %v451 = vpop.permute.xlu0 %450
      %452 = vrot.lane.b32.xlu0 %v425, 16
      %v453 = vpop.permute.xlu0 %452
      %454 = vrot.lane.b32.xlu0 %v426, 16
      %v455 = vpop.permute.xlu0 %454
      %456 = vrot.lane.b32.xlu0 %v427, 16
      %v457 = vpop.permute.xlu0 %456
      %vm468 = vcmask 195712
      %469 = vst.msk [vmem:[#allocation2] sm:$0xff] %vm468, %v439
      %470 = vst.msk [vmem:[#allocation2 + $0x8] sm:$0xff] %vm468, %v441
      %471 = vst.msk [vmem:[#allocation2 + $0x10] sm:$0xff] %vm468, %v443
      %472 = vst.msk [vmem:[#allocation2 + $0x18] sm:$0xff] %vm468, %v445
      %473 = vst.msk [vmem:[#allocation2 + $0x20] sm:$0xff] %vm468, %v447
      %474 = vst.msk [vmem:[#allocation2 + $0x28] sm:$0xff] %vm468, %v449
      %475 = vst.msk [vmem:[#allocation2 + $0x30] sm:$0xff] %vm468, %v451
      %476 = vst.msk [vmem:[#allocation2 + $0x38] sm:$0xff] %vm468, %v453
      %477 = vst.msk [vmem:[#allocation2 + $0x40] sm:$0xff] %vm468, %v455
      %478 = vst.msk [vmem:[#allocation2 + $0x48] sm:$0xff] %vm468, %v457
      %s479 = sadd.s32 %s330, 10
      %s480 = scalar_lea.vmem %s301, %s479
      %v481 = vld [vmem:[%s480] sm:$0xff]
      %v482 = vld [vmem:[%s480 + $0x8] sm:$0xff]
      %v483 = vld [vmem:[%s480 + $0x10] sm:$0xff]
      %v484 = vld [vmem:[%s480 + $0x18] sm:$0xff]
      %v485 = vld [vmem:[%s480 + $0x20] sm:$0xff]
      %v486 = vld [vmem:[%s480 + $0x28] sm:$0xff]
      %v487 = vld [vmem:[%s480 + $0x30] sm:$0xff]
      %v488 = vld [vmem:[%s480 + $0x38] sm:$0xff]
      %v489 = vld [vmem:[%s480 + $0x40] sm:$0xff]
      %v490 = vld [vmem:[%s480 + $0x48] sm:$0xff]
      %501 = vrot.lane.b32.xlu0 %v481, 24
      %v502 = vpop.permute.xlu0 %501
      %503 = vrot.lane.b32.xlu0 %v482, 24
      %v504 = vpop.permute.xlu0 %503
      %505 = vrot.lane.b32.xlu0 %v483, 24
      %v506 = vpop.permute.xlu0 %505
      %507 = vrot.lane.b32.xlu0 %v484, 24
      %v508 = vpop.permute.xlu0 %507
      %509 = vrot.lane.b32.xlu0 %v485, 24
      %v510 = vpop.permute.xlu0 %509
      %511 = vrot.lane.b32.xlu0 %v486, 24
      %v512 = vpop.permute.xlu0 %511
      %513 = vrot.lane.b32.xlu0 %v487, 24
      %v514 = vpop.permute.xlu0 %513
      %515 = vrot.lane.b32.xlu0 %v488, 24
      %v516 = vpop.permute.xlu0 %515
      %517 = vrot.lane.b32.xlu0 %v489, 24
      %v518 = vpop.permute.xlu0 %517
      %519 = vrot.lane.b32.xlu0 %v490, 24
      %v520 = vpop.permute.xlu0 %519
      %vm531 = vcmask 261312
      %532 = vst.msk [vmem:[#allocation2] sm:$0xff] %vm531, %v502
      %533 = vst.msk [vmem:[#allocation2 + $0x8] sm:$0xff] %vm531, %v504
      %534 = vst.msk [vmem:[#allocation2 + $0x10] sm:$0xff] %vm531, %v506
      %535 = vst.msk [vmem:[#allocation2 + $0x18] sm:$0xff] %vm531, %v508
      %536 = vst.msk [vmem:[#allocation2 + $0x20] sm:$0xff] %vm531, %v510
      %537 = vst.msk [vmem:[#allocation2 + $0x28] sm:$0xff] %vm531, %v512
      %538 = vst.msk [vmem:[#allocation2 + $0x30] sm:$0xff] %vm531, %v514
      %539 = vst.msk [vmem:[#allocation2 + $0x38] sm:$0xff] %vm531, %v516
      %540 = vst.msk [vmem:[#allocation2 + $0x40] sm:$0xff] %vm531, %v518
      %541 = vst.msk [vmem:[#allocation2 + $0x48] sm:$0xff] %vm531, %v520
      %s542 = sadd.s32 %s330, 11
      %s543 = scalar_lea.vmem %s301, %s542
      %v544 = vld [vmem:[%s543] sm:$0xff]
      %v545 = vld [vmem:[%s543 + $0x8] sm:$0xff]
      %v546 = vld [vmem:[%s543 + $0x10] sm:$0xff]
      %v547 = vld [vmem:[%s543 + $0x18] sm:$0xff]
      %v548 = vld [vmem:[%s543 + $0x20] sm:$0xff]
      %v549 = vld [vmem:[%s543 + $0x28] sm:$0xff]
      %v550 = vld [vmem:[%s543 + $0x30] sm:$0xff]
      %v551 = vld [vmem:[%s543 + $0x38] sm:$0xff]
      %v552 = vld [vmem:[%s543 + $0x40] sm:$0xff]
      %v553 = vld [vmem:[%s543 + $0x48] sm:$0xff]
      %564 = vrot.lane.b32.xlu0 %v544, 32
      %v565 = vpop.permute.xlu0 %564
      %566 = vrot.lane.b32.xlu0 %v545, 32
      %v567 = vpop.permute.xlu0 %566
      %568 = vrot.lane.b32.xlu0 %v546, 32
      %v569 = vpop.permute.xlu0 %568
      %570 = vrot.lane.b32.xlu0 %v547, 32
      %v571 = vpop.permute.xlu0 %570
      %572 = vrot.lane.b32.xlu0 %v548, 32
      %v573 = vpop.permute.xlu0 %572
      %574 = vrot.lane.b32.xlu0 %v549, 32
      %v575 = vpop.permute.xlu0 %574
      %576 = vrot.lane.b32.xlu0 %v550, 32
      %v577 = vpop.permute.xlu0 %576
      %578 = vrot.lane.b32.xlu0 %v551, 32
      %v579 = vpop.permute.xlu0 %578
      %580 = vrot.lane.b32.xlu0 %v552, 32
      %v581 = vpop.permute.xlu0 %580
      %582 = vrot.lane.b32.xlu0 %v553, 32
      %v583 = vpop.permute.xlu0 %582
      %vm594 = vcmask 326912
      %595 = vst.msk [vmem:[#allocation2] sm:$0xff] %vm594, %v565
      %596 = vst.msk [vmem:[#allocation2 + $0x8] sm:$0xff] %vm594, %v567
      %597 = vst.msk [vmem:[#allocation2 + $0x10] sm:$0xff] %vm594, %v569
      %598 = vst.msk [vmem:[#allocation2 + $0x18] sm:$0xff] %vm594, %v571
      %599 = vst.msk [vmem:[#allocation2 + $0x20] sm:$0xff] %vm594, %v573
      %600 = vst.msk [vmem:[#allocation2 + $0x28] sm:$0xff] %vm594, %v575
      %601 = vst.msk [vmem:[#allocation2 + $0x30] sm:$0xff] %vm594, %v577
      %602 = vst.msk [vmem:[#allocation2 + $0x38] sm:$0xff] %vm594, %v579
      %603 = vst.msk [vmem:[#allocation2 + $0x40] sm:$0xff] %vm594, %v581
      %604 = vst.msk [vmem:[#allocation2 + $0x48] sm:$0xff] %vm594, %v583
      %s605 = sadd.s32 %s330, 12
      %s606 = scalar_lea.vmem %s301, %s605
      %v607 = vld [vmem:[%s606] sm:$0xff]
      %v608 = vld [vmem:[%s606 + $0x8] sm:$0xff]
      %v609 = vld [vmem:[%s606 + $0x10] sm:$0xff]
      %v610 = vld [vmem:[%s606 + $0x18] sm:$0xff]
      %v611 = vld [vmem:[%s606 + $0x20] sm:$0xff]
      %v612 = vld [vmem:[%s606 + $0x28] sm:$0xff]
      %v613 = vld [vmem:[%s606 + $0x30] sm:$0xff]
      %v614 = vld [vmem:[%s606 + $0x38] sm:$0xff]
      %v615 = vld [vmem:[%s606 + $0x40] sm:$0xff]
      %v616 = vld [vmem:[%s606 + $0x48] sm:$0xff]
      %627 = vrot.lane.b32.xlu0 %v607, 40
      %v628 = vpop.permute.xlu0 %627
      %629 = vrot.lane.b32.xlu0 %v608, 40
      %v630 = vpop.permute.xlu0 %629
      %631 = vrot.lane.b32.xlu0 %v609, 40
      %v632 = vpop.permute.xlu0 %631
      %633 = vrot.lane.b32.xlu0 %v610, 40
      %v634 = vpop.permute.xlu0 %633
      %635 = vrot.lane.b32.xlu0 %v611, 40
      %v636 = vpop.permute.xlu0 %635
      %637 = vrot.lane.b32.xlu0 %v612, 40
      %v638 = vpop.permute.xlu0 %637
      %639 = vrot.lane.b32.xlu0 %v613, 40
      %v640 = vpop.permute.xlu0 %639
      %641 = vrot.lane.b32.xlu0 %v614, 40
      %v642 = vpop.permute.xlu0 %641
      %643 = vrot.lane.b32.xlu0 %v615, 40
      %v644 = vpop.permute.xlu0 %643
      %645 = vrot.lane.b32.xlu0 %v616, 40
      %v646 = vpop.permute.xlu0 %645
      %vm657 = vcmask 392512
      %658 = vst.msk [vmem:[#allocation2] sm:$0xff] %vm657, %v628
      %659 = vst.msk [vmem:[#allocation2 + $0x8] sm:$0xff] %vm657, %v630
      %660 = vst.msk [vmem:[#allocation2 + $0x10] sm:$0xff] %vm657, %v632
      %661 = vst.msk [vmem:[#allocation2 + $0x18] sm:$0xff] %vm657, %v634
      %662 = vst.msk [vmem:[#allocation2 + $0x20] sm:$0xff] %vm657, %v636
      %663 = vst.msk [vmem:[#allocation2 + $0x28] sm:$0xff] %vm657, %v638
      %664 = vst.msk [vmem:[#allocation2 + $0x30] sm:$0xff] %vm657, %v640
      %665 = vst.msk [vmem:[#allocation2 + $0x38] sm:$0xff] %vm657, %v642
      %666 = vst.msk [vmem:[#allocation2 + $0x40] sm:$0xff] %vm657, %v644
      %667 = vst.msk [vmem:[#allocation2 + $0x48] sm:$0xff] %vm657, %v646
      %s668 = sadd.s32 %s330, 20
      %s669 = scalar_lea.vmem %s301, %s668
      %v670 = vld [vmem:[%s669] sm:$0xff]
      %v671 = vld [vmem:[%s669 + $0x8] sm:$0xff]
      %v672 = vld [vmem:[%s669 + $0x10] sm:$0xff]
      %v673 = vld [vmem:[%s669 + $0x18] sm:$0xff]
      %v674 = vld [vmem:[%s669 + $0x20] sm:$0xff]
      %v675 = vld [vmem:[%s669 + $0x28] sm:$0xff]
      %v676 = vld [vmem:[%s669 + $0x30] sm:$0xff]
      %v677 = vld [vmem:[%s669 + $0x38] sm:$0xff]
      %v678 = vld [vmem:[%s669 + $0x40] sm:$0xff]
      %v679 = vld [vmem:[%s669 + $0x48] sm:$0xff]
      %690 = vrot.lane.b32.xlu0 %v670, 48
      %v691 = vpop.permute.xlu0 %690
      %692 = vrot.lane.b32.xlu0 %v671, 48
      %v693 = vpop.permute.xlu0 %692
      %694 = vrot.lane.b32.xlu0 %v672, 48
      %v695 = vpop.permute.xlu0 %694
      %696 = vrot.lane.b32.xlu0 %v673, 48
      %v697 = vpop.permute.xlu0 %696
      %698 = vrot.lane.b32.xlu0 %v674, 48
      %v699 = vpop.permute.xlu0 %698
      %700 = vrot.lane.b32.xlu0 %v675, 48
      %v701 = vpop.permute.xlu0 %700
      %702 = vrot.lane.b32.xlu0 %v676, 48
      %v703 = vpop.permute.xlu0 %702
      %704 = vrot.lane.b32.xlu0 %v677, 48
      %v705 = vpop.permute.xlu0 %704
      %706 = vrot.lane.b32.xlu0 %v678, 48
      %v707 = vpop.permute.xlu0 %706
      %708 = vrot.lane.b32.xlu0 %v679, 48
      %v709 = vpop.permute.xlu0 %708
      %vm720 = vcmask 458112
      %721 = vst.msk [vmem:[#allocation2] sm:$0xff] %vm720, %v691
      %722 = vst.msk [vmem:[#allocation2 + $0x8] sm:$0xff] %vm720, %v693
      %723 = vst.msk [vmem:[#allocation2 + $0x10] sm:$0xff] %vm720, %v695
      %724 = vst.msk [vmem:[#allocation2 + $0x18] sm:$0xff] %vm720, %v697
      %725 = vst.msk [vmem:[#allocation2 + $0x20] sm:$0xff] %vm720, %v699
      %726 = vst.msk [vmem:[#allocation2 + $0x28] sm:$0xff] %vm720, %v701
      %727 = vst.msk [vmem:[#allocation2 + $0x30] sm:$0xff] %vm720, %v703
      %728 = vst.msk [vmem:[#allocation2 + $0x38] sm:$0xff] %vm720, %v705
      %729 = vst.msk [vmem:[#allocation2 + $0x40] sm:$0xff] %vm720, %v707
      %730 = vst.msk [vmem:[#allocation2 + $0x48] sm:$0xff] %vm720, %v709
      %s731 = sadd.s32 %s330, 21
      %s732 = scalar_lea.vmem %s301, %s731
      %v733 = vld [vmem:[%s732] sm:$0xff]
      %v734 = vld [vmem:[%s732 + $0x8] sm:$0xff]
      %v735 = vld [vmem:[%s732 + $0x10] sm:$0xff]
      %v736 = vld [vmem:[%s732 + $0x18] sm:$0xff]
      %v737 = vld [vmem:[%s732 + $0x20] sm:$0xff]
      %v738 = vld [vmem:[%s732 + $0x28] sm:$0xff]
      %v739 = vld [vmem:[%s732 + $0x30] sm:$0xff]
      %v740 = vld [vmem:[%s732 + $0x38] sm:$0xff]
      %v741 = vld [vmem:[%s732 + $0x40] sm:$0xff]
      %v742 = vld [vmem:[%s732 + $0x48] sm:$0xff]
      %753 = vrot.lane.b32.xlu0 %v733, 56
      %v754 = vpop.permute.xlu0 %753
      %755 = vrot.lane.b32.xlu0 %v734, 56
      %v756 = vpop.permute.xlu0 %755
      %757 = vrot.lane.b32.xlu0 %v735, 56
      %v758 = vpop.permute.xlu0 %757
      %759 = vrot.lane.b32.xlu0 %v736, 56
      %v760 = vpop.permute.xlu0 %759
      %761 = vrot.lane.b32.xlu0 %v737, 56
      %v762 = vpop.permute.xlu0 %761
      %763 = vrot.lane.b32.xlu0 %v738, 56
      %v764 = vpop.permute.xlu0 %763
      %765 = vrot.lane.b32.xlu0 %v739, 56
      %v766 = vpop.permute.xlu0 %765
      %767 = vrot.lane.b32.xlu0 %v740, 56
      %v768 = vpop.permute.xlu0 %767
      %769 = vrot.lane.b32.xlu0 %v741, 56
      %v770 = vpop.permute.xlu0 %769
      %771 = vrot.lane.b32.xlu0 %v742, 56
      %v772 = vpop.permute.xlu0 %771
      %vm783 = vcmask 523712
      %784 = vst.msk [vmem:[#allocation2] sm:$0xff] %vm783, %v754
      %785 = vst.msk [vmem:[#allocation2 + $0x8] sm:$0xff] %vm783, %v756
      %786 = vst.msk [vmem:[#allocation2 + $0x10] sm:$0xff] %vm783, %v758
      %787 = vst.msk [vmem:[#allocation2 + $0x18] sm:$0xff] %vm783, %v760
      %788 = vst.msk [vmem:[#allocation2 + $0x20] sm:$0xff] %vm783, %v762
      %789 = vst.msk [vmem:[#allocation2 + $0x28] sm:$0xff] %vm783, %v764
      %790 = vst.msk [vmem:[#allocation2 + $0x30] sm:$0xff] %vm783, %v766
      %791 = vst.msk [vmem:[#allocation2 + $0x38] sm:$0xff] %vm783, %v768
      %792 = vst.msk [vmem:[#allocation2 + $0x40] sm:$0xff] %vm783, %v770
      %793 = vst.msk [vmem:[#allocation2 + $0x48] sm:$0xff] %vm783, %v772
      %s794 = sadd.s32 %s330, 22
      %s795 = scalar_lea.vmem %s301, %s794
      %v796 = vld [vmem:[%s795] sm:$0xff]
      %v797 = vld [vmem:[%s795 + $0x8] sm:$0xff]
      %v798 = vld [vmem:[%s795 + $0x10] sm:$0xff]
      %v799 = vld [vmem:[%s795 + $0x18] sm:$0xff]
      %v800 = vld [vmem:[%s795 + $0x20] sm:$0xff]
      %v801 = vld [vmem:[%s795 + $0x28] sm:$0xff]
      %v802 = vld [vmem:[%s795 + $0x30] sm:$0xff]
      %v803 = vld [vmem:[%s795 + $0x38] sm:$0xff]
      %v804 = vld [vmem:[%s795 + $0x40] sm:$0xff]
      %v805 = vld [vmem:[%s795 + $0x48] sm:$0xff]
      %816 = vrot.lane.b32.xlu0 %v796, 64
      %v817 = vpop.permute.xlu0 %816
      %818 = vrot.lane.b32.xlu0 %v797, 64
      %v819 = vpop.permute.xlu0 %818
      %820 = vrot.lane.b32.xlu0 %v798, 64
      %v821 = vpop.permute.xlu0 %820
      %822 = vrot.lane.b32.xlu0 %v799, 64
      %v823 = vpop.permute.xlu0 %822
      %824 = vrot.lane.b32.xlu0 %v800, 64
      %v825 = vpop.permute.xlu0 %824
      %826 = vrot.lane.b32.xlu0 %v801, 64
      %v827 = vpop.permute.xlu0 %826
      %828 = vrot.lane.b32.xlu0 %v802, 64
      %v829 = vpop.permute.xlu0 %828
      %830 = vrot.lane.b32.xlu0 %v803, 64
      %v831 = vpop.permute.xlu0 %830
      %832 = vrot.lane.b32.xlu0 %v804, 64
      %v833 = vpop.permute.xlu0 %832
      %834 = vrot.lane.b32.xlu0 %v805, 64
      %v835 = vpop.permute.xlu0 %834
      %vm846 = vcmask 589312
      %847 = vst.msk [vmem:[#allocation2] sm:$0xff] %vm846, %v817
      %848 = vst.msk [vmem:[#allocation2 + $0x8] sm:$0xff] %vm846, %v819
      %849 = vst.msk [vmem:[#allocation2 + $0x10] sm:$0xff] %vm846, %v821
      %850 = vst.msk [vmem:[#allocation2 + $0x18] sm:$0xff] %vm846, %v823
      %851 = vst.msk [vmem:[#allocation2 + $0x20] sm:$0xff] %vm846, %v825
      %852 = vst.msk [vmem:[#allocation2 + $0x28] sm:$0xff] %vm846, %v827
      %853 = vst.msk [vmem:[#allocation2 + $0x30] sm:$0xff] %vm846, %v829
      %854 = vst.msk [vmem:[#allocation2 + $0x38] sm:$0xff] %vm846, %v831
      %855 = vst.msk [vmem:[#allocation2 + $0x40] sm:$0xff] %vm846, %v833
      %856 = vst.msk [vmem:[#allocation2 + $0x48] sm:$0xff] %vm846, %v835
      %v857 = vld [vmem:[#allocation2] sm:$0xff]
      %v858 = vld [vmem:[#allocation2 + $0x8] sm:$0xff]
      %v859 = vld [vmem:[#allocation2 + $0x10] sm:$0xff]
      %v860 = vld [vmem:[#allocation2 + $0x18] sm:$0xff]
      %v861 = vld [vmem:[#allocation2 + $0x20] sm:$0xff]
      %v862 = vld [vmem:[#allocation2 + $0x28] sm:$0xff]
      %v863 = vld [vmem:[#allocation2 + $0x30] sm:$0xff]
      %v864 = vld [vmem:[#allocation2 + $0x38] sm:$0xff]
      %v865 = vld [vmem:[#allocation2 + $0x40] sm:$0xff]
      %v866 = vld [vmem:[#allocation2 + $0x48] sm:$0xff]
      %v867 = vld [vmem:[%s1] sm:$0xff]
      %v868 = vld [vmem:[%s1 + $0x8] sm:$0xff]
      %v869 = vld [vmem:[%s1 + $0x10] sm:$0xff]
      %v870 = vld [vmem:[%s1 + $0x18] sm:$0xff]
      %v871 = vld [vmem:[%s1 + $0x20] sm:$0xff]
      %v872 = vld [vmem:[%s1 + $0x28] sm:$0xff]
      %v873 = vld [vmem:[%s1 + $0x30] sm:$0xff]
      %v874 = vld [vmem:[%s1 + $0x38] sm:$0xff]
      %v875 = vld [vmem:[%s1 + $0x40] sm:$0xff]
      %v876 = vld [vmem:[%s2] sm:$0x1]
      %v878 = vlaneseq
      %v879 = vshrl.u32 %v878, 7
      %v880 = vsub.s32 0, %v879
      %v881 = vrot.slane %v876, %v880
      %vm883 = vcmask 588800
      %v885 = vsel %vm883, %v857, 0
      %v888 = vsel %vm883, %v858, 0
      %v891 = vsel %vm883, %v859, 0
      %v894 = vsel %vm883, %v860, 0
      %v897 = vsel %vm883, %v861, 0
      %v900 = vsel %vm883, %v862, 0
      %v903 = vsel %vm883, %v863, 0
      %v906 = vsel %vm883, %v864, 0
      %v909 = vsel %vm883, %v865, 0
      %v912 = vsel %vm883, %v866, 0
      %914 = vmatprep.subr.mxu0 0.0
      %v915 = vand.u32 %v867, 4294901760
      %916 = vmatpush1.msra.mxu0 %v915
      %917 = vmatprep.subr.mxu0 0.0
      %v918 = vand.u32 %v868, 4294901760
      %919 = vmatpush1.msra.mxu0 %v918
      %920 = vmatprep.subr.mxu0 0.0
      %v921 = vand.u32 %v869, 4294901760
      %922 = vmatpush1.msra.mxu0 %v921
      %923 = vmatprep.subr.mxu0 0.0
      %v924 = vand.u32 %v870, 4294901760
      %925 = vmatpush1.msra.mxu0 %v924
      %926 = vmatprep.subr.mxu0 0.0
      %v927 = vand.u32 %v871, 4294901760
      %928 = vmatpush1.msra.mxu0 %v927
      %929 = vmatprep.subr.mxu0 0.0
      %v930 = vand.u32 %v872, 4294901760
      %931 = vmatpush1.msra.mxu0 %v930
      %932 = vmatprep.subr.mxu0 0.0
      %v933 = vand.u32 %v873, 4294901760
      %934 = vmatpush1.msra.mxu0 %v933
      %935 = vmatprep.subr.mxu0 0.0
      %v936 = vand.u32 %v874, 4294901760
      %937 = vmatpush1.msra.mxu0 %v936
      %938 = vmatprep.subr.mxu0 0.0
      %v939 = vand.u32 %v875, 4294901760
      %940 = vmatpush1.msra.mxu0 %v939
      %941 = vmatprep.subr.mxu0 0.0
      %942 = vmatpush1.msra.mxu0 0.0
      %943 = vmatprep.subr.mxu0 0.0
      %944 = vmatpush1.msra.mxu0 0.0
      %945 = vmatprep.subr.mxu0 0.0
      %946 = vmatpush1.msra.mxu0 0.0
      %947 = vmatprep.subr.mxu0 0.0
      %948 = vmatpush1.msra.mxu0 0.0
      %949 = vmatprep.subr.mxu0 0.0
      %950 = vmatpush1.msra.mxu0 0.0
      %951 = vmatprep.subr.mxu0 0.0
      %952 = vmatpush1.msra.mxu0 0.0
      %953 = vmatprep.subr.mxu0 0.0
      %954 = vmatpush1.msra.mxu0 0.0
      %955 = vmatprep.subr.mxu0 0.0
      %956 = vmatpush1.msra.mxu0 0.0
      %957 = vmatprep.subr.mxu0 0.0
      %958 = vmatpush1.msra.mxu0 0.0
      %959 = vmatprep.subr.mxu0 0.0
      %960 = vmatpush1.msra.mxu0 0.0
      %961 = vmatprep.subr.mxu0 0.0
      %962 = vmatpush1.msra.mxu0 0.0
      %963 = vmatprep.subr.mxu0 0.0
      %964 = vmatpush1.msra.mxu0 0.0
      %965 = vmatprep.subr.mxu0 0.0
      %966 = vmatpush1.msra.mxu0 0.0
      %967 = vmatprep.subr.mxu0 0.0
      %968 = vmatpush1.msra.mxu0 0.0
      %969 = vmatprep.subr.mxu0 0.0
      %970 = vmatpush1.msra.mxu0 0.0
      %971 = vmatprep.subr.mxu0 0.0
      %972 = vmatpush1.msra.mxu0 0.0
      %973 = vmatprep.subr.mxu0 0.0
      %974 = vmatpush1.msra.mxu0 0.0
      %975 = vmatprep.subr.mxu0 0.0
      %976 = vmatpush1.msra.mxu0 0.0
      %977 = vmatprep.subr.mxu0 0.0
      %978 = vmatpush1.msra.mxu0 0.0
      %979 = vmatprep.subr.mxu0 0.0
      %980 = vmatpush1.msra.mxu0 0.0
      %981 = vmatprep.subr.mxu0 0.0
      %982 = vmatpush1.msra.mxu0 0.0
      %983 = vmatprep.subr.mxu0 0.0
      %984 = vmatpush1.msra.mxu0 0.0
      %985 = vmatprep.subr.mxu0 0.0
      %986 = vmatpush1.msra.mxu0 0.0
      %987 = vmatprep.mubr.f32.mxu0 0.0
      %v988 = vand.u32 %v885, 4294901760
      %v989 = vsub.f32 %v885, %v988
      %v990 = vand.u32 %v989, 4294901760
      %v991 = vsub.f32 %v989, %v990
      %v992 = vand.u32 %v991, 4294901760
      %993 = vmatmul.mubr.f32.gmra.mrb[0].mxu0 %v992
      %v994 = vpop.f32.mrb[0].mxu0
      %v995 = vadd.f32 %v881, %v994
      %v996 = vpop.f32.mrb[0].mxu0
      %997 = vmatprep.mubr.f32.mxu0 0.0
      %v998 = vand.u32 %v888, 4294901760
      %v999 = vsub.f32 %v888, %v998
      %v1000 = vand.u32 %v999, 4294901760
      %v1001 = vsub.f32 %v999, %v1000
      %v1002 = vand.u32 %v1001, 4294901760
      %1003 = vmatmul.mubr.f32.gmra.mrb[0].mxu0 %v1002
      %v1004 = vpop.f32.mrb[0].mxu0
      %v1005 = vadd.f32 %v881, %v1004
      %v1006 = vpop.f32.mrb[0].mxu0
      %1007 = vmatprep.mubr.f32.mxu0 0.0
      %v1008 = vand.u32 %v891, 4294901760
      %v1009 = vsub.f32 %v891, %v1008
      %v1010 = vand.u32 %v1009, 4294901760
      %v1011 = vsub.f32 %v1009, %v1010
      %v1012 = vand.u32 %v1011, 4294901760
      %1013 = vmatmul.mubr.f32.gmra.mrb[0].mxu0 %v1012
      %v1014 = vpop.f32.mrb[0].mxu0
      %v1015 = vadd.f32 %v881, %v1014
      %v1016 = vpop.f32.mrb[0].mxu0
      %1017 = vmatprep.mubr.f32.mxu0 0.0
      %v1018 = vand.u32 %v894, 4294901760
      %v1019 = vsub.f32 %v894, %v1018
      %v1020 = vand.u32 %v1019, 4294901760
      %v1021 = vsub.f32 %v1019, %v1020
      %v1022 = vand.u32 %v1021, 4294901760
      %1023 = vmatmul.mubr.f32.gmra.mrb[0].mxu0 %v1022
      %v1024 = vpop.f32.mrb[0].mxu0
      %v1025 = vadd.f32 %v881, %v1024
      %v1026 = vpop.f32.mrb[0].mxu0
      %1027 = vmatprep.mubr.f32.mxu0 0.0
      %v1028 = vand.u32 %v897, 4294901760
      %v1029 = vsub.f32 %v897, %v1028
      %v1030 = vand.u32 %v1029, 4294901760
      %v1031 = vsub.f32 %v1029, %v1030
      %v1032 = vand.u32 %v1031, 4294901760
      %1033 = vmatmul.mubr.f32.gmra.mrb[0].mxu0 %v1032
      %v1034 = vpop.f32.mrb[0].mxu0
      %v1035 = vadd.f32 %v881, %v1034
      %v1036 = vpop.f32.mrb[0].mxu0
      %1037 = vmatprep.mubr.f32.mxu0 0.0
      %v1038 = vand.u32 %v900, 4294901760
      %v1039 = vsub.f32 %v900, %v1038
      %v1040 = vand.u32 %v1039, 4294901760
      %v1041 = vsub.f32 %v1039, %v1040
      %v1042 = vand.u32 %v1041, 4294901760
      %1043 = vmatmul.mubr.f32.gmra.mrb[0].mxu0 %v1042
      %v1044 = vpop.f32.mrb[0].mxu0
      %v1045 = vadd.f32 %v881, %v1044
      %v1046 = vpop.f32.mrb[0].mxu0
      %1047 = vmatprep.mubr.f32.mxu0 0.0
      %v1048 = vand.u32 %v903, 4294901760
      %v1049 = vsub.f32 %v903, %v1048
      %v1050 = vand.u32 %v1049, 4294901760
      %v1051 = vsub.f32 %v1049, %v1050
      %v1052 = vand.u32 %v1051, 4294901760
      %1053 = vmatmul.mubr.f32.gmra.mrb[0].mxu0 %v1052
      %v1054 = vpop.f32.mrb[0].mxu0
      %v1055 = vadd.f32 %v881, %v1054
      %v1056 = vpop.f32.mrb[0].mxu0
      %1057 = vmatprep.mubr.f32.mxu0 0.0
      %v1058 = vand.u32 %v906, 4294901760
      %v1059 = vsub.f32 %v906, %v1058
      %v1060 = vand.u32 %v1059, 4294901760
      %v1061 = vsub.f32 %v1059, %v1060
      %v1062 = vand.u32 %v1061, 4294901760
      %1063 = vmatmul.mubr.f32.gmra.mrb[0].mxu0 %v1062
      %v1064 = vpop.f32.mrb[0].mxu0
      %v1065 = vadd.f32 %v881, %v1064
      %v1066 = vpop.f32.mrb[0].mxu0
      %1067 = vmatprep.mubr.f32.mxu0 0.0
      %v1068 = vand.u32 %v909, 4294901760
      %v1069 = vsub.f32 %v909, %v1068
      %v1070 = vand.u32 %v1069, 4294901760
      %v1071 = vsub.f32 %v1069, %v1070
      %v1072 = vand.u32 %v1071, 4294901760
      %1073 = vmatmul.mubr.f32.gmra.mrb[0].mxu0 %v1072
      %v1074 = vpop.f32.mrb[0].mxu0
      %v1075 = vadd.f32 %v881, %v1074
      %v1076 = vpop.f32.mrb[0].mxu0
      %1077 = vmatprep.mubr.f32.mxu0 0.0
      %v1078 = vand.u32 %v912, 4294901760
      %v1079 = vsub.f32 %v912, %v1078
      %v1080 = vand.u32 %v1079, 4294901760
      %v1081 = vsub.f32 %v1079, %v1080
      %v1082 = vand.u32 %v1081, 4294901760
      %1083 = vmatmul.mubr.f32.gmra.mrb[0].mxu0 %v1082
      %v1084 = vpop.f32.mrb[0].mxu0
      %v1085 = vadd.f32 %v881, %v1084
      %v1086 = vpop.f32.mrb[0].mxu0
      %1087 = vdwg.mxu0
      %1088 = vmatprep.subr.mxu0 0.0
      %v1089 = vand.u32 %v867, 4294901760
      %v1090 = vsub.f32 %v867, %v1089
      %v1091 = vand.u32 %v1090, 4294901760
      %v1092 = vsub.f32 %v1090, %v1091
      %v1093 = vand.u32 %v1092, 4294901760
      %1094 = vmatpush1.msra.mxu0 %v1093
      %1095 = vmatprep.subr.mxu0 0.0
      %v1096 = vand.u32 %v868, 4294901760
      %v1097 = vsub.f32 %v868, %v1096
      %v1098 = vand.u32 %v1097, 4294901760
      %v1099 = vsub.f32 %v1097, %v1098
      %v1100 = vand.u32 %v1099, 4294901760
      %1101 = vmatpush1.msra.mxu0 %v1100
      %1102 = vmatprep.subr.mxu0 0.0
      %v1103 = vand.u32 %v869, 4294901760
      %v1104 = vsub.f32 %v869, %v1103
      %v1105 = vand.u32 %v1104, 4294901760
      %v1106 = vsub.f32 %v1104, %v1105
      %v1107 = vand.u32 %v1106, 4294901760
      %1108 = vmatpush1.msra.mxu0 %v1107
      %1109 = vmatprep.subr.mxu0 0.0
      %v1110 = vand.u32 %v870, 4294901760
      %v1111 = vsub.f32 %v870, %v1110
      %v1112 = vand.u32 %v1111, 4294901760
      %v1113 = vsub.f32 %v1111, %v1112
      %v1114 = vand.u32 %v1113, 4294901760
      %1115 = vmatpush1.msra.mxu0 %v1114
      %1116 = vmatprep.subr.mxu0 0.0
      %v1117 = vand.u32 %v871, 4294901760
      %v1118 = vsub.f32 %v871, %v1117
      %v1119 = vand.u32 %v1118, 4294901760
      %v1120 = vsub.f32 %v1118, %v1119
      %v1121 = vand.u32 %v1120, 4294901760
      %1122 = vmatpush1.msra.mxu0 %v1121
      %1123 = vmatprep.subr.mxu0 0.0
      %v1124 = vand.u32 %v872, 4294901760
      %v1125 = vsub.f32 %v872, %v1124
      %v1126 = vand.u32 %v1125, 4294901760
      %v1127 = vsub.f32 %v1125, %v1126
      %v1128 = vand.u32 %v1127, 4294901760
      %1129 = vmatpush1.msra.mxu0 %v1128
      %1130 = vmatprep.subr.mxu0 0.0
      %v1131 = vand.u32 %v873, 4294901760
      %v1132 = vsub.f32 %v873, %v1131
      %v1133 = vand.u32 %v1132, 4294901760
      %v1134 = vsub.f32 %v1132, %v1133
      %v1135 = vand.u32 %v1134, 4294901760
      %1136 = vmatpush1.msra.mxu0 %v1135
      %1137 = vmatprep.subr.mxu0 0.0
      %v1138 = vand.u32 %v874, 4294901760
      %v1139 = vsub.f32 %v874, %v1138
      %v1140 = vand.u32 %v1139, 4294901760
      %v1141 = vsub.f32 %v1139, %v1140
      %v1142 = vand.u32 %v1141, 4294901760
      %1143 = vmatpush1.msra.mxu0 %v1142
      %1144 = vmatprep.subr.mxu0 0.0
      %v1145 = vand.u32 %v875, 4294901760
      %v1146 = vsub.f32 %v875, %v1145
      %v1147 = vand.u32 %v1146, 4294901760
      %v1148 = vsub.f32 %v1146, %v1147
      %v1149 = vand.u32 %v1148, 4294901760
      %1150 = vmatpush1.msra.mxu0 %v1149
      %1151 = vmatprep.subr.mxu0 0.0
      %1152 = vmatpush1.msra.mxu0 0.0
      %1153 = vmatprep.subr.mxu0 0.0
      %1154 = vmatpush1.msra.mxu0 0.0
      %1155 = vmatprep.subr.mxu0 0.0
      %1156 = vmatpush1.msra.mxu0 0.0
      %1157 = vmatprep.subr.mxu0 0.0
      %1158 = vmatpush1.msra.mxu0 0.0
      %1159 = vmatprep.subr.mxu0 0.0
      %1160 = vmatpush1.msra.mxu0 0.0
      %1161 = vmatprep.subr.mxu0 0.0
      %1162 = vmatpush1.msra.mxu0 0.0
      %1163 = vmatprep.subr.mxu0 0.0
      %1164 = vmatpush1.msra.mxu0 0.0
      %1165 = vmatprep.subr.mxu0 0.0
      %1166 = vmatpush1.msra.mxu0 0.0
      %1167 = vmatprep.subr.mxu0 0.0
      %1168 = vmatpush1.msra.mxu0 0.0
      %1169 = vmatprep.subr.mxu0 0.0
      %1170 = vmatpush1.msra.mxu0 0.0
      %1171 = vmatprep.subr.mxu0 0.0
      %1172 = vmatpush1.msra.mxu0 0.0
      %1173 = vmatprep.subr.mxu0 0.0
      %1174 = vmatpush1.msra.mxu0 0.0
      %1175 = vmatprep.subr.mxu0 0.0
      %1176 = vmatpush1.msra.mxu0 0.0
      %1177 = vmatprep.subr.mxu0 0.0
      %1178 = vmatpush1.msra.mxu0 0.0
      %1179 = vmatprep.subr.mxu0 0.0
      %1180 = vmatpush1.msra.mxu0 0.0
      %1181 = vmatprep.subr.mxu0 0.0
      %1182 = vmatpush1.msra.mxu0 0.0
      %1183 = vmatprep.subr.mxu0 0.0
      %1184 = vmatpush1.msra.mxu0 0.0
      %1185 = vmatprep.subr.mxu0 0.0
      %1186 = vmatpush1.msra.mxu0 0.0
      %1187 = vmatprep.subr.mxu0 0.0
      %1188 = vmatpush1.msra.mxu0 0.0
      %1189 = vmatprep.subr.mxu0 0.0
      %1190 = vmatpush1.msra.mxu0 0.0
      %1191 = vmatprep.subr.mxu0 0.0
      %1192 = vmatpush1.msra.mxu0 0.0
      %1193 = vmatprep.subr.mxu0 0.0
      %1194 = vmatpush1.msra.mxu0 0.0
      %1195 = vmatprep.subr.mxu0 0.0
      %1196 = vmatpush1.msra.mxu0 0.0
      %1197 = vmatprep.mubr.f32.mxu0 0.0
      %v1198 = vand.u32 %v885, 4294901760
      %1199 = vmatmul.mubr.f32.gmra.mrb[0].mxu0 %v1198
      %v1200 = vpop.f32.mrb[0].mxu0
      %v1201 = vadd.f32 %v995, %v1200
      %v1202 = vpop.f32.mrb[0].mxu0
      %1203 = vmatprep.mubr.f32.mxu0 0.0
      %v1204 = vand.u32 %v888, 4294901760
      %1205 = vmatmul.mubr.f32.gmra.mrb[0].mxu0 %v1204
      %v1206 = vpop.f32.mrb[0].mxu0
      %v1207 = vadd.f32 %v1005, %v1206
      %v1208 = vpop.f32.mrb[0].mxu0
      %1209 = vmatprep.mubr.f32.mxu0 0.0
      %v1210 = vand.u32 %v891, 4294901760
      %1211 = vmatmul.mubr.f32.gmra.mrb[0].mxu0 %v1210
      %v1212 = vpop.f32.mrb[0].mxu0
      %v1213 = vadd.f32 %v1015, %v1212
      %v1214 = vpop.f32.mrb[0].mxu0
      %1215 = vmatprep.mubr.f32.mxu0 0.0
      %v1216 = vand.u32 %v894, 4294901760
      %1217 = vmatmul.mubr.f32.gmra.mrb[0].mxu0 %v1216
      %v1218 = vpop.f32.mrb[0].mxu0
      %v1219 = vadd.f32 %v1025, %v1218
      %v1220 = vpop.f32.mrb[0].mxu0
      %1221 = vmatprep.mubr.f32.mxu0 0.0
      %v1222 = vand.u32 %v897, 4294901760
      %1223 = vmatmul.mubr.f32.gmra.mrb[0].mxu0 %v1222
      %v1224 = vpop.f32.mrb[0].mxu0
      %v1225 = vadd.f32 %v1035, %v1224
      %v1226 = vpop.f32.mrb[0].mxu0
      %1227 = vmatprep.mubr.f32.mxu0 0.0
      %v1228 = vand.u32 %v900, 4294901760
      %1229 = vmatmul.mubr.f32.gmra.mrb[0].mxu0 %v1228
      %v1230 = vpop.f32.mrb[0].mxu0
      %v1231 = vadd.f32 %v1045, %v1230
      %v1232 = vpop.f32.mrb[0].mxu0
      %1233 = vmatprep.mubr.f32.mxu0 0.0
      %v1234 = vand.u32 %v903, 4294901760
      %1235 = vmatmul.mubr.f32.gmra.mrb[0].mxu0 %v1234
      %v1236 = vpop.f32.mrb[0].mxu0
      %v1237 = vadd.f32 %v1055, %v1236
      %v1238 = vpop.f32.mrb[0].mxu0
      %1239 = vmatprep.mubr.f32.mxu0 0.0
      %v1240 = vand.u32 %v906, 4294901760
      %1241 = vmatmul.mubr.f32.gmra.mrb[0].mxu0 %v1240
      %v1242 = vpop.f32.mrb[0].mxu0
      %v1243 = vadd.f32 %v1065, %v1242
      %v1244 = vpop.f32.mrb[0].mxu0
      %1245 = vmatprep.mubr.f32.mxu0 0.0
      %v1246 = vand.u32 %v909, 4294901760
      %1247 = vmatmul.mubr.f32.gmra.mrb[0].mxu0 %v1246
      %v1248 = vpop.f32.mrb[0].mxu0
      %v1249 = vadd.f32 %v1075, %v1248
      %v1250 = vpop.f32.mrb[0].mxu0
      %1251 = vmatprep.mubr.f32.mxu0 0.0
      %v1252 = vand.u32 %v912, 4294901760
      %1253 = vmatmul.mubr.f32.gmra.mrb[0].mxu0 %v1252
      %v1254 = vpop.f32.mrb[0].mxu0
      %v1255 = vadd.f32 %v1085, %v1254
      %v1256 = vpop.f32.mrb[0].mxu0
      %1257 = vdwg.mxu0
      %1258 = vmatprep.subr.mxu0 0.0
      %v1259 = vand.u32 %v867, 4294901760
      %v1260 = vsub.f32 %v867, %v1259
      %1261 = vmatpush1.msra.mxu0 %v1260
      %1262 = vmatprep.subr.mxu0 0.0
      %v1263 = vand.u32 %v868, 4294901760
      %v1264 = vsub.f32 %v868, %v1263
      %1265 = vmatpush1.msra.mxu0 %v1264
      %1266 = vmatprep.subr.mxu0 0.0
      %v1267 = vand.u32 %v869, 4294901760
      %v1268 = vsub.f32 %v869, %v1267
      %1269 = vmatpush1.msra.mxu0 %v1268
      %1270 = vmatprep.subr.mxu0 0.0
      %v1271 = vand.u32 %v870, 4294901760
      %v1272 = vsub.f32 %v870, %v1271
      %1273 = vmatpush1.msra.mxu0 %v1272
      %1274 = vmatprep.subr.mxu0 0.0
      %v1275 = vand.u32 %v871, 4294901760
      %v1276 = vsub.f32 %v871, %v1275
      %1277 = vmatpush1.msra.mxu0 %v1276
      %1278 = vmatprep.subr.mxu0 0.0
      %v1279 = vand.u32 %v872, 4294901760
      %v1280 = vsub.f32 %v872, %v1279
      %1281 = vmatpush1.msra.mxu0 %v1280
      %1282 = vmatprep.subr.mxu0 0.0
      %v1283 = vand.u32 %v873, 4294901760
      %v1284 = vsub.f32 %v873, %v1283
      %1285 = vmatpush1.msra.mxu0 %v1284
      %1286 = vmatprep.subr.mxu0 0.0
      %v1287 = vand.u32 %v874, 4294901760
      %v1288 = vsub.f32 %v874, %v1287
      %1289 = vmatpush1.msra.mxu0 %v1288
      %1290 = vmatprep.subr.mxu0 0.0
      %v1291 = vand.u32 %v875, 4294901760
      %v1292 = vsub.f32 %v875, %v1291
      %1293 = vmatpush1.msra.mxu0 %v1292
      %1294 = vmatprep.subr.mxu0 0.0
      %1295 = vmatpush1.msra.mxu0 0.0
      %1296 = vmatprep.subr.mxu0 0.0
      %1297 = vmatpush1.msra.mxu0 0.0
      %1298 = vmatprep.subr.mxu0 0.0
      %1299 = vmatpush1.msra.mxu0 0.0
      %1300 = vmatprep.subr.mxu0 0.0
      %1301 = vmatpush1.msra.mxu0 0.0
      %1302 = vmatprep.subr.mxu0 0.0
      %1303 = vmatpush1.msra.mxu0 0.0
      %1304 = vmatprep.subr.mxu0 0.0
      %1305 = vmatpush1.msra.mxu0 0.0
      %1306 = vmatprep.subr.mxu0 0.0
      %1307 = vmatpush1.msra.mxu0 0.0
      %1308 = vmatprep.subr.mxu0 0.0
      %1309 = vmatpush1.msra.mxu0 0.0
      %1310 = vmatprep.subr.mxu0 0.0
      %1311 = vmatpush1.msra.mxu0 0.0
      %1312 = vmatprep.subr.mxu0 0.0
      %1313 = vmatpush1.msra.mxu0 0.0
      %1314 = vmatprep.subr.mxu0 0.0
      %1315 = vmatpush1.msra.mxu0 0.0
      %1316 = vmatprep.subr.mxu0 0.0
      %1317 = vmatpush1.msra.mxu0 0.0
      %1318 = vmatprep.subr.mxu0 0.0
      %1319 = vmatpush1.msra.mxu0 0.0
      %1320 = vmatprep.subr.mxu0 0.0
      %1321 = vmatpush1.msra.mxu0 0.0
      %1322 = vmatprep.subr.mxu0 0.0
      %1323 = vmatpush1.msra.mxu0 0.0
      %1324 = vmatprep.subr.mxu0 0.0
      %1325 = vmatpush1.msra.mxu0 0.0
      %1326 = vmatprep.subr.mxu0 0.0
      %1327 = vmatpush1.msra.mxu0 0.0
      %1328 = vmatprep.subr.mxu0 0.0
      %1329 = vmatpush1.msra.mxu0 0.0
      %1330 = vmatprep.subr.mxu0 0.0
      %1331 = vmatpush1.msra.mxu0 0.0
      %1332 = vmatprep.subr.mxu0 0.0
      %1333 = vmatpush1.msra.mxu0 0.0
      %1334 = vmatprep.subr.mxu0 0.0
      %1335 = vmatpush1.msra.mxu0 0.0
      %1336 = vmatprep.subr.mxu0 0.0
      %1337 = vmatpush1.msra.mxu0 0.0
      %1338 = vmatprep.subr.mxu0 0.0
      %1339 = vmatpush1.msra.mxu0 0.0
      %1340 = vmatprep.mubr.f32.mxu0 0.0
      %v1341 = vand.u32 %v885, 4294901760
      %v1342 = vsub.f32 %v885, %v1341
      %1343 = vmatmul.mubr.f32.gmra.mrb[0].mxu0 %v1342
      %v1344 = vpop.f32.mrb[0].mxu0
      %v1345 = vadd.f32 %v1201, %v1344
      %v1346 = vpop.f32.mrb[0].mxu0
      %1347 = vmatprep.mubr.f32.mxu0 0.0
      %v1348 = vand.u32 %v888, 4294901760
      %v1349 = vsub.f32 %v888, %v1348
      %1350 = vmatmul.mubr.f32.gmra.mrb[0].mxu0 %v1349
      %v1351 = vpop.f32.mrb[0].mxu0
      %v1352 = vadd.f32 %v1207, %v1351
      %v1353 = vpop.f32.mrb[0].mxu0
      %1354 = vmatprep.mubr.f32.mxu0 0.0
      %v1355 = vand.u32 %v891, 4294901760
      %v1356 = vsub.f32 %v891, %v1355
      %1357 = vmatmul.mubr.f32.gmra.mrb[0].mxu0 %v1356
      %v1358 = vpop.f32.mrb[0].mxu0
      %v1359 = vadd.f32 %v1213, %v1358
      %v1360 = vpop.f32.mrb[0].mxu0
      %1361 = vmatprep.mubr.f32.mxu0 0.0
      %v1362 = vand.u32 %v894, 4294901760
      %v1363 = vsub.f32 %v894, %v1362
      %1364 = vmatmul.mubr.f32.gmra.mrb[0].mxu0 %v1363
      %v1365 = vpop.f32.mrb[0].mxu0
      %v1366 = vadd.f32 %v1219, %v1365
      %v1367 = vpop.f32.mrb[0].mxu0
      %1368 = vmatprep.mubr.f32.mxu0 0.0
      %v1369 = vand.u32 %v897, 4294901760
      %v1370 = vsub.f32 %v897, %v1369
      %1371 = vmatmul.mubr.f32.gmra.mrb[0].mxu0 %v1370
      %v1372 = vpop.f32.mrb[0].mxu0
      %v1373 = vadd.f32 %v1225, %v1372
      %v1374 = vpop.f32.mrb[0].mxu0
      %1375 = vmatprep.mubr.f32.mxu0 0.0
      %v1376 = vand.u32 %v900, 4294901760
      %v1377 = vsub.f32 %v900, %v1376
      %1378 = vmatmul.mubr.f32.gmra.mrb[0].mxu0 %v1377
      %v1379 = vpop.f32.mrb[0].mxu0
      %v1380 = vadd.f32 %v1231, %v1379
      %v1381 = vpop.f32.mrb[0].mxu0
      %1382 = vmatprep.mubr.f32.mxu0 0.0
      %v1383 = vand.u32 %v903, 4294901760
      %v1384 = vsub.f32 %v903, %v1383
      %1385 = vmatmul.mubr.f32.gmra.mrb[0].mxu0 %v1384
      %v1386 = vpop.f32.mrb[0].mxu0
      %v1387 = vadd.f32 %v1237, %v1386
      %v1388 = vpop.f32.mrb[0].mxu0
      %1389 = vmatprep.mubr.f32.mxu0 0.0
      %v1390 = vand.u32 %v906, 4294901760
      %v1391 = vsub.f32 %v906, %v1390
      %1392 = vmatmul.mubr.f32.gmra.mrb[0].mxu0 %v1391
      %v1393 = vpop.f32.mrb[0].mxu0
      %v1394 = vadd.f32 %v1243, %v1393
      %v1395 = vpop.f32.mrb[0].mxu0
      %1396 = vmatprep.mubr.f32.mxu0 0.0
      %v1397 = vand.u32 %v909, 4294901760
      %v1398 = vsub.f32 %v909, %v1397
      %1399 = vmatmul.mubr.f32.gmra.mrb[0].mxu0 %v1398
      %v1400 = vpop.f32.mrb[0].mxu0
      %v1401 = vadd.f32 %v1249, %v1400
      %v1402 = vpop.f32.mrb[0].mxu0
      %1403 = vmatprep.mubr.f32.mxu0 0.0
      %v1404 = vand.u32 %v912, 4294901760
      %v1405 = vsub.f32 %v912, %v1404
      %1406 = vmatmul.mubr.f32.gmra.mrb[0].mxu0 %v1405
      %v1407 = vpop.f32.mrb[0].mxu0
      %v1408 = vadd.f32 %v1255, %v1407
      %v1409 = vpop.f32.mrb[0].mxu0
      %1410 = vdwg.mxu0
      %1411 = vmatprep.subr.mxu0 0.0
      %v1412 = vand.u32 %v867, 4294901760
      %1413 = vmatpush1.msra.mxu0 %v1412
      %1414 = vmatprep.subr.mxu0 0.0
      %v1415 = vand.u32 %v868, 4294901760
      %1416 = vmatpush1.msra.mxu0 %v1415
      %1417 = vmatprep.subr.mxu0 0.0
      %v1418 = vand.u32 %v869, 4294901760
      %1419 = vmatpush1.msra.mxu0 %v1418
      %1420 = vmatprep.subr.mxu0 0.0
      %v1421 = vand.u32 %v870, 4294901760
      %1422 = vmatpush1.msra.mxu0 %v1421
      %1423 = vmatprep.subr.mxu0 0.0
      %v1424 = vand.u32 %v871, 4294901760
      %1425 = vmatpush1.msra.mxu0 %v1424
      %1426 = vmatprep.subr.mxu0 0.0
      %v1427 = vand.u32 %v872, 4294901760
      %1428 = vmatpush1.msra.mxu0 %v1427
      %1429 = vmatprep.subr.mxu0 0.0
      %v1430 = vand.u32 %v873, 4294901760
      %1431 = vmatpush1.msra.mxu0 %v1430
      %1432 = vmatprep.subr.mxu0 0.0
      %v1433 = vand.u32 %v874, 4294901760
      %1434 = vmatpush1.msra.mxu0 %v1433
      %1435 = vmatprep.subr.mxu0 0.0
      %v1436 = vand.u32 %v875, 4294901760
      %1437 = vmatpush1.msra.mxu0 %v1436
      %1438 = vmatprep.subr.mxu0 0.0
      %1439 = vmatpush1.msra.mxu0 0.0
      %1440 = vmatprep.subr.mxu0 0.0
      %1441 = vmatpush1.msra.mxu0 0.0
      %1442 = vmatprep.subr.mxu0 0.0
      %1443 = vmatpush1.msra.mxu0 0.0
      %1444 = vmatprep.subr.mxu0 0.0
      %1445 = vmatpush1.msra.mxu0 0.0
      %1446 = vmatprep.subr.mxu0 0.0
      %1447 = vmatpush1.msra.mxu0 0.0
      %1448 = vmatprep.subr.mxu0 0.0
      %1449 = vmatpush1.msra.mxu0 0.0
      %1450 = vmatprep.subr.mxu0 0.0
      %1451 = vmatpush1.msra.mxu0 0.0
      %1452 = vmatprep.subr.mxu0 0.0
      %1453 = vmatpush1.msra.mxu0 0.0
      %1454 = vmatprep.subr.mxu0 0.0
      %1455 = vmatpush1.msra.mxu0 0.0
      %1456 = vmatprep.subr.mxu0 0.0
      %1457 = vmatpush1.msra.mxu0 0.0
      %1458 = vmatprep.subr.mxu0 0.0
      %1459 = vmatpush1.msra.mxu0 0.0
      %1460 = vmatprep.subr.mxu0 0.0
      %1461 = vmatpush1.msra.mxu0 0.0
      %1462 = vmatprep.subr.mxu0 0.0
      %1463 = vmatpush1.msra.mxu0 0.0
      %1464 = vmatprep.subr.mxu0 0.0
      %1465 = vmatpush1.msra.mxu0 0.0
      %1466 = vmatprep.subr.mxu0 0.0
      %1467 = vmatpush1.msra.mxu0 0.0
      %1468 = vmatprep.subr.mxu0 0.0
      %1469 = vmatpush1.msra.mxu0 0.0
      %1470 = vmatprep.subr.mxu0 0.0
      %1471 = vmatpush1.msra.mxu0 0.0
      %1472 = vmatprep.subr.mxu0 0.0
      %1473 = vmatpush1.msra.mxu0 0.0
      %1474 = vmatprep.subr.mxu0 0.0
      %1475 = vmatpush1.msra.mxu0 0.0
      %1476 = vmatprep.subr.mxu0 0.0
      %1477 = vmatpush1.msra.mxu0 0.0
      %1478 = vmatprep.subr.mxu0 0.0
      %1479 = vmatpush1.msra.mxu0 0.0
      %1480 = vmatprep.subr.mxu0 0.0
      %1481 = vmatpush1.msra.mxu0 0.0
      %1482 = vmatprep.subr.mxu0 0.0
      %1483 = vmatpush1.msra.mxu0 0.0
      %1484 = vmatprep.mubr.f32.mxu0 0.0
      %v1485 = vand.u32 %v885, 4294901760
      %v1486 = vsub.f32 %v885, %v1485
      %v1487 = vand.u32 %v1486, 4294901760
      %1488 = vmatmul.mubr.f32.gmra.mrb[0].mxu0 %v1487
      %v1489 = vpop.f32.mrb[0].mxu0
      %v1490 = vadd.f32 %v1345, %v1489
      %v1491 = vpop.f32.mrb[0].mxu0
      %1492 = vmatprep.mubr.f32.mxu0 0.0
      %v1493 = vand.u32 %v888, 4294901760
      %v1494 = vsub.f32 %v888, %v1493
      %v1495 = vand.u32 %v1494, 4294901760
      %1496 = vmatmul.mubr.f32.gmra.mrb[0].mxu0 %v1495
      %v1497 = vpop.f32.mrb[0].mxu0
      %v1498 = vadd.f32 %v1352, %v1497
      %v1499 = vpop.f32.mrb[0].mxu0
      %1500 = vmatprep.mubr.f32.mxu0 0.0
      %v1501 = vand.u32 %v891, 4294901760
      %v1502 = vsub.f32 %v891, %v1501
      %v1503 = vand.u32 %v1502, 4294901760
      %1504 = vmatmul.mubr.f32.gmra.mrb[0].mxu0 %v1503
      %v1505 = vpop.f32.mrb[0].mxu0
      %v1506 = vadd.f32 %v1359, %v1505
      %v1507 = vpop.f32.mrb[0].mxu0
      %1508 = vmatprep.mubr.f32.mxu0 0.0
      %v1509 = vand.u32 %v894, 4294901760
      %v1510 = vsub.f32 %v894, %v1509
      %v1511 = vand.u32 %v1510, 4294901760
      %1512 = vmatmul.mubr.f32.gmra.mrb[0].mxu0 %v1511
      %v1513 = vpop.f32.mrb[0].mxu0
      %v1514 = vadd.f32 %v1366, %v1513
      %v1515 = vpop.f32.mrb[0].mxu0
      %1516 = vmatprep.mubr.f32.mxu0 0.0
      %v1517 = vand.u32 %v897, 4294901760
      %v1518 = vsub.f32 %v897, %v1517
      %v1519 = vand.u32 %v1518, 4294901760
      %1520 = vmatmul.mubr.f32.gmra.mrb[0].mxu0 %v1519
      %v1521 = vpop.f32.mrb[0].mxu0
      %v1522 = vadd.f32 %v1373, %v1521
      %v1523 = vpop.f32.mrb[0].mxu0
      %1524 = vmatprep.mubr.f32.mxu0 0.0
      %v1525 = vand.u32 %v900, 4294901760
      %v1526 = vsub.f32 %v900, %v1525
      %v1527 = vand.u32 %v1526, 4294901760
      %1528 = vmatmul.mubr.f32.gmra.mrb[0].mxu0 %v1527
      %v1529 = vpop.f32.mrb[0].mxu0
      %v1530 = vadd.f32 %v1380, %v1529
      %v1531 = vpop.f32.mrb[0].mxu0
      %1532 = vmatprep.mubr.f32.mxu0 0.0
      %v1533 = vand.u32 %v903, 4294901760
      %v1534 = vsub.f32 %v903, %v1533
      %v1535 = vand.u32 %v1534, 4294901760
      %1536 = vmatmul.mubr.f32.gmra.mrb[0].mxu0 %v1535
      %v1537 = vpop.f32.mrb[0].mxu0
      %v1538 = vadd.f32 %v1387, %v1537
      %v1539 = vpop.f32.mrb[0].mxu0
      %1540 = vmatprep.mubr.f32.mxu0 0.0
      %v1541 = vand.u32 %v906, 4294901760
      %v1542 = vsub.f32 %v906, %v1541
      %v1543 = vand.u32 %v1542, 4294901760
      %1544 = vmatmul.mubr.f32.gmra.mrb[0].mxu0 %v1543
      %v1545 = vpop.f32.mrb[0].mxu0
      %v1546 = vadd.f32 %v1394, %v1545
      %v1547 = vpop.f32.mrb[0].mxu0
      %1548 = vmatprep.mubr.f32.mxu0 0.0
      %v1549 = vand.u32 %v909, 4294901760
      %v1550 = vsub.f32 %v909, %v1549
      %v1551 = vand.u32 %v1550, 4294901760
      %1552 = vmatmul.mubr.f32.gmra.mrb[0].mxu0 %v1551
      %v1553 = vpop.f32.mrb[0].mxu0
      %v1554 = vadd.f32 %v1401, %v1553
      %v1555 = vpop.f32.mrb[0].mxu0
      %1556 = vmatprep.mubr.f32.mxu0 0.0
      %v1557 = vand.u32 %v912, 4294901760
      %v1558 = vsub.f32 %v912, %v1557
      %v1559 = vand.u32 %v1558, 4294901760
      %1560 = vmatmul.mubr.f32.gmra.mrb[0].mxu0 %v1559
      %v1561 = vpop.f32.mrb[0].mxu0
      %v1562 = vadd.f32 %v1408, %v1561
      %v1563 = vpop.f32.mrb[0].mxu0
      %1564 = vdwg.mxu0
      %1565 = vmatprep.subr.mxu0 0.0
      %v1566 = vand.u32 %v867, 4294901760
      %v1567 = vsub.f32 %v867, %v1566
      %v1568 = vand.u32 %v1567, 4294901760
      %1569 = vmatpush1.msra.mxu0 %v1568
      %1570 = vmatprep.subr.mxu0 0.0
      %v1571 = vand.u32 %v868, 4294901760
      %v1572 = vsub.f32 %v868, %v1571
      %v1573 = vand.u32 %v1572, 4294901760
      %1574 = vmatpush1.msra.mxu0 %v1573
      %1575 = vmatprep.subr.mxu0 0.0
      %v1576 = vand.u32 %v869, 4294901760
      %v1577 = vsub.f32 %v869, %v1576
      %v1578 = vand.u32 %v1577, 4294901760
      %1579 = vmatpush1.msra.mxu0 %v1578
      %1580 = vmatprep.subr.mxu0 0.0
      %v1581 = vand.u32 %v870, 4294901760
      %v1582 = vsub.f32 %v870, %v1581
      %v1583 = vand.u32 %v1582, 4294901760
      %1584 = vmatpush1.msra.mxu0 %v1583
      %1585 = vmatprep.subr.mxu0 0.0
      %v1586 = vand.u32 %v871, 4294901760
      %v1587 = vsub.f32 %v871, %v1586
      %v1588 = vand.u32 %v1587, 4294901760
      %1589 = vmatpush1.msra.mxu0 %v1588
      %1590 = vmatprep.subr.mxu0 0.0
      %v1591 = vand.u32 %v872, 4294901760
      %v1592 = vsub.f32 %v872, %v1591
      %v1593 = vand.u32 %v1592, 4294901760
      %1594 = vmatpush1.msra.mxu0 %v1593
      %1595 = vmatprep.subr.mxu0 0.0
      %v1596 = vand.u32 %v873, 4294901760
      %v1597 = vsub.f32 %v873, %v1596
      %v1598 = vand.u32 %v1597, 4294901760
      %1599 = vmatpush1.msra.mxu0 %v1598
      %1600 = vmatprep.subr.mxu0 0.0
      %v1601 = vand.u32 %v874, 4294901760
      %v1602 = vsub.f32 %v874, %v1601
      %v1603 = vand.u32 %v1602, 4294901760
      %1604 = vmatpush1.msra.mxu0 %v1603
      %1605 = vmatprep.subr.mxu0 0.0
      %v1606 = vand.u32 %v875, 4294901760
      %v1607 = vsub.f32 %v875, %v1606
      %v1608 = vand.u32 %v1607, 4294901760
      %1609 = vmatpush1.msra.mxu0 %v1608
      %1610 = vmatprep.subr.mxu0 0.0
      %1611 = vmatpush1.msra.mxu0 0.0
      %1612 = vmatprep.subr.mxu0 0.0
      %1613 = vmatpush1.msra.mxu0 0.0
      %1614 = vmatprep.subr.mxu0 0.0
      %1615 = vmatpush1.msra.mxu0 0.0
      %1616 = vmatprep.subr.mxu0 0.0
      %1617 = vmatpush1.msra.mxu0 0.0
      %1618 = vmatprep.subr.mxu0 0.0
      %1619 = vmatpush1.msra.mxu0 0.0
      %1620 = vmatprep.subr.mxu0 0.0
      %1621 = vmatpush1.msra.mxu0 0.0
      %1622 = vmatprep.subr.mxu0 0.0
      %1623 = vmatpush1.msra.mxu0 0.0
      %1624 = vmatprep.subr.mxu0 0.0
      %1625 = vmatpush1.msra.mxu0 0.0
      %1626 = vmatprep.subr.mxu0 0.0
      %1627 = vmatpush1.msra.mxu0 0.0
      %1628 = vmatprep.subr.mxu0 0.0
      %1629 = vmatpush1.msra.mxu0 0.0
      %1630 = vmatprep.subr.mxu0 0.0
      %1631 = vmatpush1.msra.mxu0 0.0
      %1632 = vmatprep.subr.mxu0 0.0
      %1633 = vmatpush1.msra.mxu0 0.0
      %1634 = vmatprep.subr.mxu0 0.0
      %1635 = vmatpush1.msra.mxu0 0.0
      %1636 = vmatprep.subr.mxu0 0.0
      %1637 = vmatpush1.msra.mxu0 0.0
      %1638 = vmatprep.subr.mxu0 0.0
      %1639 = vmatpush1.msra.mxu0 0.0
      %1640 = vmatprep.subr.mxu0 0.0
      %1641 = vmatpush1.msra.mxu0 0.0
      %1642 = vmatprep.subr.mxu0 0.0
      %1643 = vmatpush1.msra.mxu0 0.0
      %1644 = vmatprep.subr.mxu0 0.0
      %1645 = vmatpush1.msra.mxu0 0.0
      %1646 = vmatprep.subr.mxu0 0.0
      %1647 = vmatpush1.msra.mxu0 0.0
      %1648 = vmatprep.subr.mxu0 0.0
      %1649 = vmatpush1.msra.mxu0 0.0
      %1650 = vmatprep.subr.mxu0 0.0
      %1651 = vmatpush1.msra.mxu0 0.0
      %1652 = vmatprep.subr.mxu0 0.0
      %1653 = vmatpush1.msra.mxu0 0.0
      %1654 = vmatprep.subr.mxu0 0.0
      %1655 = vmatpush1.msra.mxu0 0.0
      %1656 = vmatprep.mubr.f32.mxu0 0.0
      %v1657 = vand.u32 %v885, 4294901760
      %1658 = vmatmul.mubr.f32.gmra.mrb[0].mxu0 %v1657
      %v1659 = vpop.f32.mrb[0].mxu0
      %v1660 = vadd.f32 %v1490, %v1659
      %v1661 = vpop.f32.mrb[0].mxu0
      %1662 = vmatprep.mubr.f32.mxu0 0.0
      %v1663 = vand.u32 %v888, 4294901760
      %1664 = vmatmul.mubr.f32.gmra.mrb[0].mxu0 %v1663
      %v1665 = vpop.f32.mrb[0].mxu0
      %v1666 = vadd.f32 %v1498, %v1665
      %v1667 = vpop.f32.mrb[0].mxu0
      %1668 = vmatprep.mubr.f32.mxu0 0.0
      %v1669 = vand.u32 %v891, 4294901760
      %1670 = vmatmul.mubr.f32.gmra.mrb[0].mxu0 %v1669
      %v1671 = vpop.f32.mrb[0].mxu0
      %v1672 = vadd.f32 %v1506, %v1671
      %v1673 = vpop.f32.mrb[0].mxu0
      %1674 = vmatprep.mubr.f32.mxu0 0.0
      %v1675 = vand.u32 %v894, 4294901760
      %1676 = vmatmul.mubr.f32.gmra.mrb[0].mxu0 %v1675
      %v1677 = vpop.f32.mrb[0].mxu0
      %v1678 = vadd.f32 %v1514, %v1677
      %v1679 = vpop.f32.mrb[0].mxu0
      %1680 = vmatprep.mubr.f32.mxu0 0.0
      %v1681 = vand.u32 %v897, 4294901760
      %1682 = vmatmul.mubr.f32.gmra.mrb[0].mxu0 %v1681
      %v1683 = vpop.f32.mrb[0].mxu0
      %v1684 = vadd.f32 %v1522, %v1683
      %v1685 = vpop.f32.mrb[0].mxu0
      %1686 = vmatprep.mubr.f32.mxu0 0.0
      %v1687 = vand.u32 %v900, 4294901760
      %1688 = vmatmul.mubr.f32.gmra.mrb[0].mxu0 %v1687
      %v1689 = vpop.f32.mrb[0].mxu0
      %v1690 = vadd.f32 %v1530, %v1689
      %v1691 = vpop.f32.mrb[0].mxu0
      %1692 = vmatprep.mubr.f32.mxu0 0.0
      %v1693 = vand.u32 %v903, 4294901760
      %1694 = vmatmul.mubr.f32.gmra.mrb[0].mxu0 %v1693
      %v1695 = vpop.f32.mrb[0].mxu0
      %v1696 = vadd.f32 %v1538, %v1695
      %v1697 = vpop.f32.mrb[0].mxu0
      %1698 = vmatprep.mubr.f32.mxu0 0.0
      %v1699 = vand.u32 %v906, 4294901760
      %1700 = vmatmul.mubr.f32.gmra.mrb[0].mxu0 %v1699
      %v1701 = vpop.f32.mrb[0].mxu0
      %v1702 = vadd.f32 %v1546, %v1701
      %v1703 = vpop.f32.mrb[0].mxu0
      %1704 = vmatprep.mubr.f32.mxu0 0.0
      %v1705 = vand.u32 %v909, 4294901760
      %1706 = vmatmul.mubr.f32.gmra.mrb[0].mxu0 %v1705
      %v1707 = vpop.f32.mrb[0].mxu0
      %v1708 = vadd.f32 %v1554, %v1707
      %v1709 = vpop.f32.mrb[0].mxu0
      %1710 = vmatprep.mubr.f32.mxu0 0.0
      %v1711 = vand.u32 %v912, 4294901760
      %1712 = vmatmul.mubr.f32.gmra.mrb[0].mxu0 %v1711
      %v1713 = vpop.f32.mrb[0].mxu0
      %v1714 = vadd.f32 %v1562, %v1713
      %v1715 = vpop.f32.mrb[0].mxu0
      %1716 = vdwg.mxu0
      %1717 = vmatprep.subr.mxu0 0.0
      %v1718 = vand.u32 %v867, 4294901760
      %1719 = vmatpush1.msra.mxu0 %v1718
      %1720 = vmatprep.subr.mxu0 0.0
      %v1721 = vand.u32 %v868, 4294901760
      %1722 = vmatpush1.msra.mxu0 %v1721
      %1723 = vmatprep.subr.mxu0 0.0
      %v1724 = vand.u32 %v869, 4294901760
      %1725 = vmatpush1.msra.mxu0 %v1724
      %1726 = vmatprep.subr.mxu0 0.0
      %v1727 = vand.u32 %v870, 4294901760
      %1728 = vmatpush1.msra.mxu0 %v1727
      %1729 = vmatprep.subr.mxu0 0.0
      %v1730 = vand.u32 %v871, 4294901760
      %1731 = vmatpush1.msra.mxu0 %v1730
      %1732 = vmatprep.subr.mxu0 0.0
      %v1733 = vand.u32 %v872, 4294901760
      %1734 = vmatpush1.msra.mxu0 %v1733
      %1735 = vmatprep.subr.mxu0 0.0
      %v1736 = vand.u32 %v873, 4294901760
      %1737 = vmatpush1.msra.mxu0 %v1736
      %1738 = vmatprep.subr.mxu0 0.0
      %v1739 = vand.u32 %v874, 4294901760
      %1740 = vmatpush1.msra.mxu0 %v1739
      %1741 = vmatprep.subr.mxu0 0.0
      %v1742 = vand.u32 %v875, 4294901760
      %1743 = vmatpush1.msra.mxu0 %v1742
      %1744 = vmatprep.subr.mxu0 0.0
      %1745 = vmatpush1.msra.mxu0 0.0
      %1746 = vmatprep.subr.mxu0 0.0
      %1747 = vmatpush1.msra.mxu0 0.0
      %1748 = vmatprep.subr.mxu0 0.0
      %1749 = vmatpush1.msra.mxu0 0.0
      %1750 = vmatprep.subr.mxu0 0.0
      %1751 = vmatpush1.msra.mxu0 0.0
      %1752 = vmatprep.subr.mxu0 0.0
      %1753 = vmatpush1.msra.mxu0 0.0
      %1754 = vmatprep.subr.mxu0 0.0
      %1755 = vmatpush1.msra.mxu0 0.0
      %1756 = vmatprep.subr.mxu0 0.0
      %1757 = vmatpush1.msra.mxu0 0.0
      %1758 = vmatprep.subr.mxu0 0.0
      %1759 = vmatpush1.msra.mxu0 0.0
      %1760 = vmatprep.subr.mxu0 0.0
      %1761 = vmatpush1.msra.mxu0 0.0
      %1762 = vmatprep.subr.mxu0 0.0
      %1763 = vmatpush1.msra.mxu0 0.0
      %1764 = vmatprep.subr.mxu0 0.0
      %1765 = vmatpush1.msra.mxu0 0.0
      %1766 = vmatprep.subr.mxu0 0.0
      %1767 = vmatpush1.msra.mxu0 0.0
      %1768 = vmatprep.subr.mxu0 0.0
      %1769 = vmatpush1.msra.mxu0 0.0
      %1770 = vmatprep.subr.mxu0 0.0
      %1771 = vmatpush1.msra.mxu0 0.0
      %1772 = vmatprep.subr.mxu0 0.0
      %1773 = vmatpush1.msra.mxu0 0.0
      %1774 = vmatprep.subr.mxu0 0.0
      %1775 = vmatpush1.msra.mxu0 0.0
      %1776 = vmatprep.subr.mxu0 0.0
      %1777 = vmatpush1.msra.mxu0 0.0
      %1778 = vmatprep.subr.mxu0 0.0
      %1779 = vmatpush1.msra.mxu0 0.0
      %1780 = vmatprep.subr.mxu0 0.0
      %1781 = vmatpush1.msra.mxu0 0.0
      %1782 = vmatprep.subr.mxu0 0.0
      %1783 = vmatpush1.msra.mxu0 0.0
      %1784 = vmatprep.subr.mxu0 0.0
      %1785 = vmatpush1.msra.mxu0 0.0
      %1786 = vmatprep.subr.mxu0 0.0
      %1787 = vmatpush1.msra.mxu0 0.0
      %1788 = vmatprep.subr.mxu0 0.0
      %1789 = vmatpush1.msra.mxu0 0.0
      %1790 = vmatprep.mubr.f32.mxu0 0.0
      %v1791 = vand.u32 %v885, 4294901760
      %1792 = vmatmul.mubr.f32.gmra.mrb[0].mxu0 %v1791
      %v1793 = vpop.f32.mrb[0].mxu0
      %v1794 = vadd.f32 %v1660, %v1793
      %v1795 = vpop.f32.mrb[0].mxu0
      %1796 = vmatprep.mubr.f32.mxu0 0.0
      %v1797 = vand.u32 %v888, 4294901760
      %1798 = vmatmul.mubr.f32.gmra.mrb[0].mxu0 %v1797
      %v1799 = vpop.f32.mrb[0].mxu0
      %v1800 = vadd.f32 %v1666, %v1799
      %v1801 = vpop.f32.mrb[0].mxu0
      %1802 = vmatprep.mubr.f32.mxu0 0.0
      %v1803 = vand.u32 %v891, 4294901760
      %1804 = vmatmul.mubr.f32.gmra.mrb[0].mxu0 %v1803
      %v1805 = vpop.f32.mrb[0].mxu0
      %v1806 = vadd.f32 %v1672, %v1805
      %v1807 = vpop.f32.mrb[0].mxu0
      %1808 = vmatprep.mubr.f32.mxu0 0.0
      %v1809 = vand.u32 %v894, 4294901760
      %1810 = vmatmul.mubr.f32.gmra.mrb[0].mxu0 %v1809
      %v1811 = vpop.f32.mrb[0].mxu0
      %v1812 = vadd.f32 %v1678, %v1811
      %v1813 = vpop.f32.mrb[0].mxu0
      %1814 = vmatprep.mubr.f32.mxu0 0.0
      %v1815 = vand.u32 %v897, 4294901760
      %1816 = vmatmul.mubr.f32.gmra.mrb[0].mxu0 %v1815
      %v1817 = vpop.f32.mrb[0].mxu0
      %v1818 = vadd.f32 %v1684, %v1817
      %v1819 = vpop.f32.mrb[0].mxu0
      %1820 = vmatprep.mubr.f32.mxu0 0.0
      %v1821 = vand.u32 %v900, 4294901760
      %1822 = vmatmul.mubr.f32.gmra.mrb[0].mxu0 %v1821
      %v1823 = vpop.f32.mrb[0].mxu0
      %v1824 = vadd.f32 %v1690, %v1823
      %v1825 = vpop.f32.mrb[0].mxu0
      %1826 = vmatprep.mubr.f32.mxu0 0.0
      %v1827 = vand.u32 %v903, 4294901760
      %1828 = vmatmul.mubr.f32.gmra.mrb[0].mxu0 %v1827
      %v1829 = vpop.f32.mrb[0].mxu0
      %v1830 = vadd.f32 %v1696, %v1829
      %v1831 = vpop.f32.mrb[0].mxu0
      %1832 = vmatprep.mubr.f32.mxu0 0.0
      %v1833 = vand.u32 %v906, 4294901760
      %1834 = vmatmul.mubr.f32.gmra.mrb[0].mxu0 %v1833
      %v1835 = vpop.f32.mrb[0].mxu0
      %v1836 = vadd.f32 %v1702, %v1835
      %v1837 = vpop.f32.mrb[0].mxu0
      %1838 = vmatprep.mubr.f32.mxu0 0.0
      %v1839 = vand.u32 %v909, 4294901760
      %1840 = vmatmul.mubr.f32.gmra.mrb[0].mxu0 %v1839
      %v1841 = vpop.f32.mrb[0].mxu0
      %v1842 = vadd.f32 %v1708, %v1841
      %v1843 = vpop.f32.mrb[0].mxu0
      %1844 = vmatprep.mubr.f32.mxu0 0.0
      %v1845 = vand.u32 %v912, 4294901760
      %1846 = vmatmul.mubr.f32.gmra.mrb[0].mxu0 %v1845
      %v1847 = vpop.f32.mrb[0].mxu0
      %v1848 = vadd.f32 %v1714, %v1847
      %v1849 = vpop.f32.mrb[0].mxu0
      %1850 = vdwg.mxu0
      %v1851 = vld [vmem:[%s306] sm:$0xff]
      %v1852 = vld [vmem:[%s306 + $0x8] sm:$0xff]
      %v1853 = vld [vmem:[%s306 + $0x10] sm:$0xff]
      %v1854 = vld [vmem:[%s306 + $0x18] sm:$0xff]
      %v1855 = vld [vmem:[%s306 + $0x20] sm:$0xff]
      %v1856 = vld [vmem:[%s306 + $0x28] sm:$0xff]
      %v1857 = vld [vmem:[%s306 + $0x30] sm:$0xff]
      %v1858 = vld [vmem:[%s306 + $0x38] sm:$0xff]
      %v1859 = vld [vmem:[%s306 + $0x40] sm:$0xff]
      %v1860 = vld [vmem:[%s306 + $0x48] sm:$0xff]
      %1862 = vset.pattern.permute.xlu0 0
      %1863 = vperm.xlu0 %1862, %v1851
      %v1864 = vpop.permute.xlu0 %1863
      %1867 = vset.pattern.permute.xlu0 0
      %1868 = vperm.xlu0 %1867, %v1852
      %v1869 = vpop.permute.xlu0 %1868
      %1872 = vset.pattern.permute.xlu0 0
      %1873 = vperm.xlu0 %1872, %v1853
      %v1874 = vpop.permute.xlu0 %1873
      %1877 = vset.pattern.permute.xlu0 0
      %1878 = vperm.xlu0 %1877, %v1854
      %v1879 = vpop.permute.xlu0 %1878
      %1882 = vset.pattern.permute.xlu0 0
      %1883 = vperm.xlu0 %1882, %v1855
      %v1884 = vpop.permute.xlu0 %1883
      %1887 = vset.pattern.permute.xlu0 0
      %1888 = vperm.xlu0 %1887, %v1856
      %v1889 = vpop.permute.xlu0 %1888
      %1892 = vset.pattern.permute.xlu0 0
      %1893 = vperm.xlu0 %1892, %v1857
      %v1894 = vpop.permute.xlu0 %1893
      %1897 = vset.pattern.permute.xlu0 0
      %1898 = vperm.xlu0 %1897, %v1858
      %v1899 = vpop.permute.xlu0 %1898
      %1902 = vset.pattern.permute.xlu0 0
      %1903 = vperm.xlu0 %1902, %v1859
      %v1904 = vpop.permute.xlu0 %1903
      %1907 = vset.pattern.permute.xlu0 0
      %1908 = vperm.xlu0 %1907, %v1860
      %v1909 = vpop.permute.xlu0 %1908
      %v1911 = vmul.f32 %v1794, %v1864
      %v1912 = vmul.f32 %v1800, %v1869
      %v1913 = vmul.f32 %v1806, %v1874
      %v1914 = vmul.f32 %v1812, %v1879
      %v1915 = vmul.f32 %v1818, %v1884
      %v1916 = vmul.f32 %v1824, %v1889
      %v1917 = vmul.f32 %v1830, %v1894
      %v1918 = vmul.f32 %v1836, %v1899
      %v1919 = vmul.f32 %v1842, %v1904
      %v1920 = vmul.f32 %v1848, %v1909
      %v1921 = vsel %vm342, %v1911, 0.0
      %v1922 = vsel %vm342, %v1912, 0.0
      %v1923 = vadd.f32 %v1921, %v1922
      %v1924 = vsel %vm342, %v1913, 0.0
      %v1925 = vadd.f32 %v1923, %v1924
      %v1926 = vsel %vm342, %v1914, 0.0
      %v1927 = vadd.f32 %v1925, %v1926
      %v1928 = vsel %vm342, %v1915, 0.0
      %v1929 = vadd.f32 %v1927, %v1928
      %v1930 = vsel %vm342, %v1916, 0.0
      %v1931 = vadd.f32 %v1929, %v1930
      %v1932 = vsel %vm342, %v1917, 0.0
      %v1933 = vadd.f32 %v1931, %v1932
      %v1934 = vsel %vm342, %v1918, 0.0
      %v1935 = vadd.f32 %v1933, %v1934
      %v1936 = vsel %vm342, %v1919, 0.0
      %v1937 = vadd.f32 %v1935, %v1936
      %v1938 = vsel %vm342, %v1920, 0.0
      %v1939 = vadd.f32 %v1937, %v1938
      %v1940 = vrot.slane %v1939, 4
      %v1941 = vadd.f32 %v1939, %v1940
      %v1942 = vrot.slane %v1941, 2
      %v1943 = vadd.f32 %v1941, %v1942
      %v1944 = vrot.slane %v1943, 1
      %v1945 = vadd.f32 %v1943, %v1944
      %vm1946 = vcmask 57344
      %1947 = vst.msk [vmem:[%s323] sm:$0x1] %vm1946, %v1945
      %v1948 = vmul.f32 %v1911, %v1794
      %v1949 = vmul.f32 %v1912, %v1800
      %v1950 = vmul.f32 %v1913, %v1806
      %v1951 = vmul.f32 %v1914, %v1812
      %v1952 = vmul.f32 %v1915, %v1818
      %v1953 = vmul.f32 %v1916, %v1824
      %v1954 = vmul.f32 %v1917, %v1830
      %v1955 = vmul.f32 %v1918, %v1836
      %v1956 = vmul.f32 %v1919, %v1842
      %v1957 = vmul.f32 %v1920, %v1848
      %v1958 = vsel %vm342, %v1948, 0.0
      %v1959 = vsel %vm342, %v1949, 0.0
      %v1960 = vadd.f32 %v1958, %v1959
      %v1961 = vsel %vm342, %v1950, 0.0
      %v1962 = vadd.f32 %v1960, %v1961
      %v1963 = vsel %vm342, %v1951, 0.0
      %v1964 = vadd.f32 %v1962, %v1963
      %v1965 = vsel %vm342, %v1952, 0.0
      %v1966 = vadd.f32 %v1964, %v1965
      %v1967 = vsel %vm342, %v1953, 0.0
      %v1968 = vadd.f32 %v1966, %v1967
      %v1969 = vsel %vm342, %v1954, 0.0
      %v1970 = vadd.f32 %v1968, %v1969
      %v1971 = vsel %vm342, %v1955, 0.0
      %v1972 = vadd.f32 %v1970, %v1971
      %v1973 = vsel %vm342, %v1956, 0.0
      %v1974 = vadd.f32 %v1972, %v1973
      %v1975 = vsel %vm342, %v1957, 0.0
      %v1976 = vadd.f32 %v1974, %v1975
      %v1977 = vrot.slane %v1976, 4
      %v1978 = vadd.f32 %v1976, %v1977
      %v1979 = vrot.slane %v1978, 2
      %v1980 = vadd.f32 %v1978, %v1979
      %v1981 = vrot.slane %v1980, 1
      %v1982 = vadd.f32 %v1980, %v1981
      %1983 = vst.msk [vmem:[%s329] sm:$0x1] %vm1946, %v1982
      %1984 = vst.msk [vmem:[%s316] sm:$0xff] %vm342, %v1794
      %1985 = vst.msk [vmem:[%s316 + $0x8] sm:$0xff] %vm342, %v1800
      %1986 = vst.msk [vmem:[%s316 + $0x10] sm:$0xff] %vm342, %v1806
      %1987 = vst.msk [vmem:[%s316 + $0x18] sm:$0xff] %vm342, %v1812
      %1988 = vst.msk [vmem:[%s316 + $0x20] sm:$0xff] %vm342, %v1818
      %1989 = vst.msk [vmem:[%s316 + $0x28] sm:$0xff] %vm342, %v1824
      %1990 = vst.msk [vmem:[%s316 + $0x30] sm:$0xff] %vm342, %v1830
      %1991 = vst.msk [vmem:[%s316 + $0x38] sm:$0xff] %vm342, %v1836
      %1992 = vst.msk [vmem:[%s316 + $0x40] sm:$0xff] %vm342, %v1842
      %1993 = vst.msk [vmem:[%s316 + $0x48] sm:$0xff] %vm342, %v1848
      %s1994 = smul.u32 10, %s23
      %p1995 = scmp.lt.s32.totalorder %s22, 1
      %s1996 = scalar_select %p1995, %s22, 1
      %p1997 = scmp.lt.s32.totalorder %s1994, 9
      %s1998 = scalar_select %p1997, %s1994, 9
      %s1999 = smul.addr %s1996, 10
      %s2000 = sadd.s32 %s1998, %s1999
      %s2001 = smul.addr %s2000, 8
      %s2002 = scalar_lea.vmem %s4, %s2001
      %p2003 = scmp.lt.s32.totalorder %s22, 1
      %s2004 = scalar_select %p2003, %s22, 1
      %p2005 = scmp.lt.s32.totalorder %s23, 0
      %s2006 = scalar_select %p2005, %s23, 0
      %s2007 = sadd.s32 %s2006, %s2004
      %s2008 = scalar_lea.vmem %s5, %s2007
      %p2009 = scmp.lt.s32.totalorder %s22, 1
      %s2010 = scalar_select %p2009, %s22, 1
      %p2011 = scmp.lt.s32.totalorder %s23, 0
      %s2012 = scalar_select %p2011, %s23, 0
      %s2013 = sadd.s32 %s2012, %s2010
      %s2014 = scalar_lea.vmem %s6, %s2013
      // Predicated region
      $region37: #{residual_forward.6} parent=35 // pred_check
        %p2015 = pneg %p144
      $region38: #{residual_forward.6} parent=35 // pred_check_branch
        %2017 = sbr.rel (%p2015) target = $region40
      $region39: #{residual_forward.6} parent=35 // pred_region
        %s2018 = smul.u32 10, %s23
      $region40: #{residual_forward.6} parent=35 // pred_fallthru
        _
      // Predicated region
      $region41: #{residual_forward.6} parent=35 // pred_check
        %p2019 = pneg %p172
      $region42: #{residual_forward.6} parent=35 // pred_check_branch
        %2021 = sbr.rel (%p2019) target = $region44
      $region43: #{residual_forward.6} parent=35 // pred_region
        _
      $region44: #{residual_forward.6} parent=35 // pred_fallthru
        _
      // Predicated region
      $region45: #{residual_forward.6} parent=35 // pred_check
        %p2022 = pneg %p200
      $region46: #{residual_forward.6} parent=35 // pred_check_branch
        %2024 = sbr.rel (%p2022) target = $region48
      $region47: #{residual_forward.6} parent=35 // pred_region
        _
      $region48: #{residual_forward.6} parent=35 // pred_fallthru
        _
    $region36: #{residual_forward.6} parent=5 // pred_fallthru
      _
    %p2025 = scmp.le.s32.totalorder 2, %s13
    // Predicated region
    $region49: #{residual_forward.6} parent=5 // pred_check
      %p2026 = pneg %p2025
    $region50: #{residual_forward.6} parent=5 // pred_check_branch
      %2028 = sbr.rel (%p2026) target = $region52
    $region51: #{residual_forward.6} parent=5 // pred_region
      %s2029 = ssub.s32 %s13, 2
      // Predicated region
      $region53: #{residual_forward.6} parent=51 // pred_check
        %p2030 = pneg %p150
      $region54: #{residual_forward.6} parent=51 // pred_check_branch
        %2032 = sbr.rel (%p2030) target = $region56
      $region55: #{residual_forward.6} parent=51 // pred_region
        %s2033 = smul.u32 10, %s25
        %p2034 = scmp.lt.s32.totalorder %s24, 1
        %s2035 = scalar_select %p2034, %s24, 1
        %p2036 = scmp.lt.s32.totalorder %s2033, 9
        %s2037 = scalar_select %p2036, %s2033, 9
        %s2038 = smul.addr %s2035, 10
        %s2039 = sadd.s32 %s2037, %s2038
        %s2040 = smul.addr %s2039, 8
        %s2041 = scalar_lea.vmem %s4, %s2040
      $region56: #{residual_forward.6} parent=51 // pred_fallthru
        _
      // Predicated region
      $region57: #{residual_forward.6} parent=51 // pred_check
        %p2042 = pneg %p178
      $region58: #{residual_forward.6} parent=51 // pred_check_branch
        %2044 = sbr.rel (%p2042) target = $region60
      $region59: #{residual_forward.6} parent=51 // pred_region
        %p2045 = scmp.lt.s32.totalorder %s24, 1
        %s2046 = scalar_select %p2045, %s24, 1
        %p2047 = scmp.lt.s32.totalorder %s25, 0
        %s2048 = scalar_select %p2047, %s25, 0
        %s2049 = sadd.s32 %s2048, %s2046
        %s2050 = scalar_lea.vmem %s5, %s2049
      $region60: #{residual_forward.6} parent=51 // pred_fallthru
        _
      // Predicated region
      $region61: #{residual_forward.6} parent=51 // pred_check
        %p2051 = pneg %p206
      $region62: #{residual_forward.6} parent=51 // pred_check_branch
        %2053 = sbr.rel (%p2051) target = $region64
      $region63: #{residual_forward.6} parent=51 // pred_region
        %p2054 = scmp.lt.s32.totalorder %s24, 1
        %s2055 = scalar_select %p2054, %s24, 1
        %p2056 = scmp.lt.s32.totalorder %s25, 0
        %s2057 = scalar_select %p2056, %s25, 0
        %s2058 = sadd.s32 %s2057, %s2055
        %s2059 = scalar_lea.vmem %s6, %s2058
      $region64: #{residual_forward.6} parent=51 // pred_fallthru
        _
    $region52: #{residual_forward.6} parent=5 // pred_fallthru
      _
  $region6: #{residual_forward.6} parent=0 // loop_footer
    %s17 = sadd.s32 1, %s13
  $region7: #{residual_forward.6} parent=0 // loop_footer_branch
    %12 = sbr.rel target = $region3
  $region8: #{residual_forward.6} parent=0 // loop_exit
    _

// kernel: residual_forward.7
$region0: #{residual_forward.7}
  #allocation0 [shape = 'u32[]', space=smem, size = 0x4, offset = 0x4, fixed_abs, tag = 'smem constant byte address 0x4 - core index']
  #allocation1 [shape = 'u32[144,128]{1,0:T(1,128)}', space=vmem, size = 0x12000, scoped, tag = 'internal scratch']
  %s0 = inlined_call_operand.vmem [shape: f32[2,80,8], index: 0, kind: input, shape index: {}]
  %s1 = inlined_call_operand.vmem [shape: f32[2,1,1,8], index: 1, kind: input, shape index: {}]
  %s2 = inlined_call_operand.vmem [shape: f32[2,1,1,8], index: 2, kind: input, shape index: {}]
  %s3 = inlined_call_operand.vmem [shape: f32[1,8], index: 3, kind: input, shape index: {}]
  %s4 = inlined_call_operand.vmem [shape: f32[1,8], index: 4, kind: input, shape index: {}]
  %s5 = inlined_call_operand.vmem [shape: f32[2,80,4], index: 5, kind: input, shape index: {}]
  %s6 = inlined_call_operand.vmem [shape: f32[4,8], index: 6, kind: input, shape index: {}]
  %s7 = inlined_call_operand.vmem [shape: f32[1,8], index: 7, kind: input, shape index: {}]
  %s8 = inlined_call_operand.vmem [shape: f32[2,80,8], index: 8, kind: output, shape index: {}]
  %s9 = sld [smem:[#allocation0]]
  $region65: #{residual_forward.7} parent=0
    _
  %s11 = ssub.s32 1, %s9
  %s12 = scalar_select 0, %s11, %s9
  loop: start=0, step=1, limit=4
  $region2: #{residual_forward.7} parent=0 // loop_pre_header
    _
  $region3: #{residual_forward.7} parent=0 // loop_header
    %s14 = sphi 0, %s18
    %p15 = scmp.ge.s32.totalorder %s14, 4
    %s21 = sphi 0, %s33
    %s22 = sphi 0, %s29
    %s23 = sphi 0, %s21
    %s24 = sphi 0, %s22
    %s25 = sphi 0, %s23
    %s26 = sphi 0, %s24
    %s38 = sphi 0, %s40
    %s41 = sphi 0, %s38
    %s42 = sphi 0, %s41
    %s58 = sphi 0, %s42
    %s62 = sphi 0, %s62
    %s64 = sphi 0, %s62
    %s65 = sphi 0, %s64
    %s79 = sphi 0, %s65
    %s83 = sphi 0, %s83
    %s85 = sphi 0, %s83
    %s86 = sphi 0, %s85
    %s100 = sphi 0, %s86
    %s104 = sphi 0, %s104
    %s106 = sphi 0, %s104
    %s107 = sphi 0, %s106
    %s121 = sphi 0, %s107
    %s125 = sphi 0, %s125
    %s127 = sphi 0, %s125
    %s128 = sphi 0, %s127
    %s142 = sphi 0, %s128
    %s150 = sphi 0, %s152
    %s153 = sphi 0, %s150
    %s154 = sphi 0, %s153
    %s170 = sphi 0, %s154
    %s174 = sphi 0, %s174
    %s176 = sphi 0, %s174
    %s177 = sphi 0, %s176
    %s191 = sphi 0, %s177
    %s195 = sphi 0, %s195
    %s197 = sphi 0, %s195
    %s198 = sphi 0, %s197
    %s212 = sphi 0, %s198
    %s220 = sphi 0, %s222
    %s223 = sphi 0, %s220
    %s224 = sphi 0, %s223
    %s240 = sphi 0, %s224
  $region4: #{residual_forward.7} parent=0 // loop_header_branch
    %17 = sbr.rel (%p15) target = $region8
  $region5: #{residual_forward.7} parent=0 // loop_body
    %s19 = ssub.s32 %s14, 1
    %s20 = ssub.s32 %s14, 2
    %s27 = sadd.s32 1, %s22
    %p28 = scmp.ge.s32.totalorder %s27, 1
    %s29 = scalar_select %p28, 0, %s27
    %s30 = sadd.s32 1, %s21
    %s31 = scalar_select %p28, %s30, %s21
    %p32 = scmp.ge.s32.totalorder %s31, 2
    %s33 = scalar_select %p32, 0, %s31
    %s34 = ssub.s32 %s21, %s33
    %s35 = ssub.s32 %s22, %s29
    %s36 = sor.u32 %s34, %s35
    %p37 = scmp.eq.s32.totalorder %s36, 0
    %s39 = sadd.s32 %s38, 1
    %s40 = scalar_select %p37, %s38, %s39
    %p43 = pneg %p37
    %p44 = scmp.eq.s32.totalorder %s14, 1
    %p45 = por %p43, %p44
    %p46 = scmp.ne.s32.totalorder %s38, %s41
    %p47 = scmp.eq.s32.totalorder %s14, 0
    %p48 = por %p46, %p47
    %p49 = scmp.ne.s32.totalorder %s38, %s41
    %p50 = scmp.eq.s32.totalorder %s19, 1
    %p51 = por %p49, %p50
    %p52 = scmp.ne.s32.totalorder %s41, %s42
    %p53 = scmp.eq.s32.totalorder %s19, 0
    %p54 = por %p52, %p53
    %p55 = scmp.ne.s32.totalorder %s41, %s42
    %p56 = scmp.eq.s32.totalorder %s20, 1
    %p57 = por %p55, %p56
    %p59 = scmp.ne.s32.totalorder %s42, %s58
    %p60 = scmp.eq.s32.totalorder %s20, 0
    %p61 = por %p59, %p60
    %s63 = sadd.s32 %s62, 1
    %p66 = scmp.eq.s32.totalorder %s14, 1
    %p67 = scmp.ne.s32.totalorder %s62, %s64
    %p68 = scmp.eq.s32.totalorder %s14, 0
    %p69 = por %p67, %p68
    %p70 = scmp.ne.s32.totalorder %s62, %s64
    %p71 = scmp.eq.s32.totalorder %s19, 1
    %p72 = por %p70, %p71
    %p73 = scmp.ne.s32.totalorder %s64, %s65
    %p74 = scmp.eq.s32.totalorder %s19, 0
    %p75 = por %p73, %p74
    %p76 = scmp.ne.s32.totalorder %s64, %s65
    %p77 = scmp.eq.s32.totalorder %s20, 1
    %p78 = por %p76, %p77
    %p80 = scmp.ne.s32.totalorder %s65, %s79
    %p81 = scmp.eq.s32.totalorder %s20, 0
    %p82 = por %p80, %p81
    %s84 = sadd.s32 %s83, 1
    %p87 = scmp.eq.s32.totalorder %s14, 1
    %p88 = scmp.ne.s32.totalorder %s83, %s85
    %p89 = scmp.eq.s32.totalorder %s14, 0
    %p90 = por %p88, %p89
    %p91 = scmp.ne.s32.totalorder %s83, %s85
    %p92 = scmp.eq.s32.totalorder %s19, 1
    %p93 = por %p91, %p92
    %p94 = scmp.ne.s32.totalorder %s85, %s86
    %p95 = scmp.eq.s32.totalorder %s19, 0
    %p96 = por %p94, %p95
    %p97 = scmp.ne.s32.totalorder %s85, %s86
    %p98 = scmp.eq.s32.totalorder %s20, 1
    %p99 = por %p97, %p98
    %p101 = scmp.ne.s32.totalorder %s86, %s100
    %p102 = scmp.eq.s32.totalorder %s20, 0
    %p103 = por %p101, %p102
    %s105 = sadd.s32 %s104, 1
    %p108 = scmp.eq.s32.totalorder %s14, 1
    %p109 = scmp.ne.s32.totalorder %s104, %s106
    %p110 = scmp.eq.s32.totalorder %s14, 0
    %p111 = por %p109, %p110
    %p112 = scmp.ne.s32.totalorder %s104, %s106
    %p113 = scmp.eq.s32.totalorder %s19, 1
    %p114 = por %p112, %p113
    %p115 = scmp.ne.s32.totalorder %s106, %s107
    %p116 = scmp.eq.s32.totalorder %s19, 0
    %p117 = por %p115, %p116
    %p118 = scmp.ne.s32.totalorder %s106, %s107
    %p119 = scmp.eq.s32.totalorder %s20, 1
    %p120 = por %p118, %p119
    %p122 = scmp.ne.s32.totalorder %s107, %s121
    %p123 = scmp.eq.s32.totalorder %s20, 0
    %p124 = por %p122, %p123
    %s126 = sadd.s32 %s125, 1
    %p129 = scmp.eq.s32.totalorder %s14, 1
    %p130 = scmp.ne.s32.totalorder %s125, %s127
    %p131 = scmp.eq.s32.totalorder %s14, 0
    %p132 = por %p130, %p131
    %p133 = scmp.ne.s32.totalorder %s125, %s127
    %p134 = scmp.eq.s32.totalorder %s19, 1
    %p135 = por %p133, %p134
    %p136 = scmp.ne.s32.totalorder %s127, %s128
    %p137 = scmp.eq.s32.totalorder %s19, 0
    %p138 = por %p136, %p137
    %p139 = scmp.ne.s32.totalorder %s127, %s128
    %p140 = scmp.eq.s32.totalorder %s20, 1
    %p141 = por %p139, %p140
    %p143 = scmp.ne.s32.totalorder %s128, %s142
    %p144 = scmp.eq.s32.totalorder %s20, 0
    %p145 = por %p143, %p144
    %s146 = ssub.s32 %s21, %s33
    %s147 = ssub.s32 %s22, %s29
    %s148 = sor.u32 %s146, %s147
    %p149 = scmp.eq.s32.totalorder %s148, 0
    %s151 = sadd.s32 %s150, 1
    %s152 = scalar_select %p149, %s150, %s151
    %p155 = pneg %p149
    %p156 = scmp.eq.s32.totalorder %s14, 1
    %p157 = por %p155, %p156
    %p158 = scmp.ne.s32.totalorder %s150, %s153
    %p159 = scmp.eq.s32.totalorder %s14, 0
    %p160 = por %p158, %p159
    %p161 = scmp.ne.s32.totalorder %s150, %s153
    %p162 = scmp.eq.s32.totalorder %s19, 1
    %p163 = por %p161, %p162
    %p164 = scmp.ne.s32.totalorder %s153, %s154
    %p165 = scmp.eq.s32.totalorder %s19, 0
    %p166 = por %p164, %p165
    %p167 = scmp.ne.s32.totalorder %s153, %s154
    %p168 = scmp.eq.s32.totalorder %s20, 1
    %p169 = por %p167, %p168
    %p171 = scmp.ne.s32.totalorder %s154, %s170
    %p172 = scmp.eq.s32.totalorder %s20, 0
    %p173 = por %p171, %p172
    %s175 = sadd.s32 %s174, 1
    %p178 = scmp.eq.s32.totalorder %s14, 1
    %p179 = scmp.ne.s32.totalorder %s174, %s176
    %p180 = scmp.eq.s32.totalorder %s14, 0
    %p181 = por %p179, %p180
    %p182 = scmp.ne.s32.totalorder %s174, %s176
    %p183 = scmp.eq.s32.totalorder %s19, 1
    %p184 = por %p182, %p183
    %p185 = scmp.ne.s32.totalorder %s176, %s177
    %p186 = scmp.eq.s32.totalorder %s19, 0
    %p187 = por %p185, %p186
    %p188 = scmp.ne.s32.totalorder %s176, %s177
    %p189 = scmp.eq.s32.totalorder %s20, 1
    %p190 = por %p188, %p189
    %p192 = scmp.ne.s32.totalorder %s177, %s191
    %p193 = scmp.eq.s32.totalorder %s20, 0
    %p194 = por %p192, %p193
    %s196 = sadd.s32 %s195, 1
    %p199 = scmp.eq.s32.totalorder %s14, 1
    %p200 = scmp.ne.s32.totalorder %s195, %s197
    %p201 = scmp.eq.s32.totalorder %s14, 0
    %p202 = por %p200, %p201
    %p203 = scmp.ne.s32.totalorder %s195, %s197
    %p204 = scmp.eq.s32.totalorder %s19, 1
    %p205 = por %p203, %p204
    %p206 = scmp.ne.s32.totalorder %s197, %s198
    %p207 = scmp.eq.s32.totalorder %s19, 0
    %p208 = por %p206, %p207
    %p209 = scmp.ne.s32.totalorder %s197, %s198
    %p210 = scmp.eq.s32.totalorder %s20, 1
    %p211 = por %p209, %p210
    %p213 = scmp.ne.s32.totalorder %s198, %s212
    %p214 = scmp.eq.s32.totalorder %s20, 0
    %p215 = por %p213, %p214
    %s216 = ssub.s32 %s21, %s33
    %s217 = ssub.s32 %s22, %s29
    %s218 = sor.u32 %s216, %s217
    %p219 = scmp.eq.s32.totalorder %s218, 0
    %s221 = sadd.s32 %s220, 1
    %s222 = scalar_select %p219, %s220, %s221
    %p225 = pneg %p219
    %p226 = scmp.eq.s32.totalorder %s14, 1
    %p227 = por %p225, %p226
    %p228 = scmp.ne.s32.totalorder %s220, %s223
    %p229 = scmp.eq.s32.totalorder %s14, 0
    %p230 = por %p228, %p229
    %p231 = scmp.ne.s32.totalorder %s220, %s223
    %p232 = scmp.eq.s32.totalorder %s19, 1
    %p233 = por %p231, %p232
    %p234 = scmp.ne.s32.totalorder %s223, %s224
    %p235 = scmp.eq.s32.totalorder %s19, 0
    %p236 = por %p234, %p235
    %p237 = scmp.ne.s32.totalorder %s223, %s224
    %p238 = scmp.eq.s32.totalorder %s20, 1
    %p239 = por %p237, %p238
    %p241 = scmp.ne.s32.totalorder %s224, %s240
    %p242 = scmp.eq.s32.totalorder %s20, 0
    %p243 = por %p241, %p242
    %p244 = scmp.le.s32.totalorder 1, %s14
    %p245 = scmp.lt.s32.totalorder %s14, 3
    %p246 = pnand %p244, %p245
    %p247 = pneg %p246
    // Predicated region
    $region9: #{residual_forward.7} parent=5 // pred_check
      _
    $region10: #{residual_forward.7} parent=5 // pred_check_branch
      %249 = sbr.rel (%p246) target = $region12
    $region11: #{residual_forward.7} parent=5 // pred_region
      %s250 = ssub.s32 %s14, 1
      // Predicated region
      $region13: #{residual_forward.7} parent=11 // pred_check
        %p251 = pneg %p75
      $region14: #{residual_forward.7} parent=11 // pred_check_branch
        %253 = sbr.rel (%p251) target = $region16
      $region15: #{residual_forward.7} parent=11 // pred_region
        _
      $region16: #{residual_forward.7} parent=11 // pred_fallthru
        _
      // Predicated region
      $region17: #{residual_forward.7} parent=11 // pred_check
        %p254 = pneg %p96
      $region18: #{residual_forward.7} parent=11 // pred_check_branch
        %256 = sbr.rel (%p254) target = $region20
      $region19: #{residual_forward.7} parent=11 // pred_region
        _
      $region20: #{residual_forward.7} parent=11 // pred_fallthru
        _
      // Predicated region
      $region21: #{residual_forward.7} parent=11 // pred_check
        %p257 = pneg %p117
      $region22: #{residual_forward.7} parent=11 // pred_check_branch
        %259 = sbr.rel (%p257) target = $region24
      $region23: #{residual_forward.7} parent=11 // pred_region
        _
      $region24: #{residual_forward.7} parent=11 // pred_fallthru
        _
      // Predicated region
      $region25: #{residual_forward.7} parent=11 // pred_check
        %p260 = pneg %p138
      $region26: #{residual_forward.7} parent=11 // pred_check_branch
        %262 = sbr.rel (%p260) target = $region28
      $region27: #{residual_forward.7} parent=11 // pred_region
        _
      $region28: #{residual_forward.7} parent=11 // pred_fallthru
        _
      // Predicated region
      $region29: #{residual_forward.7} parent=11 // pred_check
        %p263 = pneg %p187
      $region30: #{residual_forward.7} parent=11 // pred_check_branch
        %265 = sbr.rel (%p263) target = $region32
      $region31: #{residual_forward.7} parent=11 // pred_region
        _
      $region32: #{residual_forward.7} parent=11 // pred_fallthru
        _
      // Predicated region
      $region33: #{residual_forward.7} parent=11 // pred_check
        %p266 = pneg %p208
      $region34: #{residual_forward.7} parent=11 // pred_check_branch
        %268 = sbr.rel (%p266) target = $region36
      $region35: #{residual_forward.7} parent=11 // pred_region
        _
      $region36: #{residual_forward.7} parent=11 // pred_fallthru
        _
    $region12: #{residual_forward.7} parent=5 // pred_fallthru
      _
    %p269 = scmp.lt.s32.totalorder %s14, 2
    // Predicated region
    $region37: #{residual_forward.7} parent=5 // pred_check
      %p270 = pneg %p269
    $region38: #{residual_forward.7} parent=5 // pred_check_branch
      %272 = sbr.rel (%p270) target = $region40
    $region39: #{residual_forward.7} parent=5 // pred_region
      // Predicated region
      $region41: #{residual_forward.7} parent=39 // pred_check
        %p273 = pneg %p48
      $region42: #{residual_forward.7} parent=39 // pred_check_branch
        %275 = sbr.rel (%p273) target = $region44
      $region43: #{residual_forward.7} parent=39 // pred_region
        %s276 = smul.u32 10, %s22
        %p277 = scmp.lt.s32.totalorder %s21, 1
        %s278 = scalar_select %p277, %s21, 1
        %p279 = scmp.lt.s32.totalorder %s276, 9
        %s280 = scalar_select %p279, %s276, 9
        %s281 = smul.addr %s278, 10
        %s282 = sadd.s32 %s280, %s281
        %s283 = smul.addr %s282, 8
        %s284 = scalar_lea.vmem %s0, %s283
        %s285 = smul.u32 10, %s22
      $region44: #{residual_forward.7} parent=39 // pred_fallthru
        _
      // Predicated region
      $region45: #{residual_forward.7} parent=39 // pred_check
        %p286 = pneg %p160
      $region46: #{residual_forward.7} parent=39 // pred_check_branch
        %288 = sbr.rel (%p286) target = $region48
      $region47: #{residual_forward.7} parent=39 // pred_region
        %s289 = smul.u32 10, %s22
        %p290 = scmp.lt.s32.totalorder %s21, 1
        %s291 = scalar_select %p290, %s21, 1
        %p292 = scmp.lt.s32.totalorder %s289, 9
        %s293 = scalar_select %p292, %s289, 9
        %s294 = smul.addr %s291, 10
        %s295 = sadd.s32 %s293, %s294
        %s296 = smul.addr %s295, 8
        %s297 = scalar_lea.vmem %s5, %s296
        %s298 = smul.u32 10, %s22
      $region48: #{residual_forward.7} parent=39 // pred_fallthru
        _
    $region40: #{residual_forward.7} parent=5 // pred_fallthru
      _
    %p299 = scmp.le.s32.totalorder 1, %s14
    %p300 = scmp.lt.s32.totalorder %s14, 3
    %p301 = pnand %p299, %p300
    %p302 = pneg %p301
    // Predicated region
    $region49: #{residual_forward.7} parent=5 // pred_check
      _
    $region50: #{residual_forward.7} parent=5 // pred_check_branch
      %304 = sbr.rel (%p301) target = $region52
    $region51: #{residual_forward.7} parent=5 // pred_region
      %s305 = ssub.s32 %s14, 1
      %s306 = smul.u32 10, %s24
      %p307 = scmp.lt.s32.totalorder %s23, 1
      %s308 = scalar_select %p307, %s23, 1
      %p309 = scmp.lt.s32.totalorder %s306, 9
      %s310 = scalar_select %p309, %s306, 9
      %s311 = smul.addr %s308, 10
      %s312 = sadd.s32 %s310, %s311
      %s313 = smul.addr %s312, 8
      %s314 = scalar_lea.vmem %s0, %s313
      %p315 = pneg %p54
      %p316 = pneg %p51
      %p317 = pneg %p75
      %p318 = pneg %p72
      %p319 = pneg %p96
      %p320 = pneg %p93
      %p321 = pneg %p117
      %p322 = pneg %p114
      %p323 = pneg %p138
      %p324 = pneg %p135
      %s325 = smul.u32 10, %s24
      %p326 = scmp.lt.s32.totalorder %s23, 1
      %s327 = scalar_select %p326, %s23, 1
      %p328 = scmp.lt.s32.totalorder %s325, 9
      %s329 = scalar_select %p328, %s325, 9
      %s330 = smul.addr %s327, 10
      %s331 = sadd.s32 %s329, %s330
      %s332 = smul.addr %s331, 8
      %s333 = scalar_lea.vmem %s5, %s332
      %p334 = pneg %p166
      %p335 = pneg %p163
      %p336 = pneg %p187
      %p337 = pneg %p184
      %p338 = pneg %p208
      %p339 = pneg %p205
      %p340 = pneg %p236
      %p341 = pneg %p233
      %s342 = smul.u32 10, %s24
      %p343 = scmp.lt.s32.totalorder %s23, 1
      %s344 = scalar_select %p343, %s23, 1
      %p345 = scmp.lt.s32.totalorder %s342, 9
      %s346 = scalar_select %p345, %s342, 9
      %s347 = smul.addr %s344, 10
      %s348 = sadd.s32 %s346, %s347
      %s349 = smul.addr %s348, 8
      %s350 = scalar_lea.vmem %s8, %s349
      %s351 = smul.u32 10, %s24
      %p352 = scmp.lt.s32.totalorder %s23, 1
      %s353 = scalar_select %p352, %s23, 1
      %p354 = scmp.lt.s32.totalorder %s351, 9
      %s355 = scalar_select %p354, %s351, 9
      %s356 = smul.addr %s353, 10
      %s357 = sadd.s32 %s355, %s356
      %s358 = smul.addr %s357, 8
      %s359 = scalar_lea.vmem %s0, %s358
      %s360 = smul.u32 10, %s24
      %s361 = smul.u32 10, %s24
      %p362 = scmp.lt.s32.totalorder %s23, 1
      %s363 = scalar_select %p362, %s23, 1
      %p364 = scmp.lt.s32.totalorder %s361, 9
      %s365 = scalar_select %p364, %s361, 9
      %s366 = smul.addr %s363, 10
      %s367 = sadd.s32 %s365, %s366
      %s368 = smul.addr %s367, 8
      %s369 = scalar_lea.vmem %s5, %s368
      %s370 = smul.u32 10, %s24
      %s371 = smul.u32 10, %s24
      %p372 = scmp.lt.s32.totalorder %s23, 1
      %s373 = scalar_select %p372, %s23, 1
      %p374 = scmp.lt.s32.totalorder %s371, 9
      %s375 = scalar_select %p374, %s371, 9
      %s376 = smul.addr %s373, 10
      %s377 = sadd.s32 %s375, %s376
      %s378 = smul.addr %s377, 8
      %s379 = scalar_lea.vmem %s8, %s378
      %s380 = smul.u32 10, %s24
      %v381 = vld [vmem:[%s1] sm:$0x1]
      %v382 = vld [vmem:[%s1 + $0x1] sm:$0x1]
      %v383 = vld [vmem:[%s2] sm:$0x1]
      %v384 = vld [vmem:[%s2 + $0x1] sm:$0x1]
      %v385 = vld [vmem:[%s3] sm:$0x1]
      %v386 = vld [vmem:[%s4] sm:$0x1]
      %vm387 = vcmask 57344
      %v388 = vsel %vm387, %v381, 0.0
      %v389 = vsel %vm387, %v382, 0.0
      %v390 = vadd.f32 %v388, %v389
      %v391 = vrot.slane %v390, 4
      %v392 = vadd.f32 %v390, %v391
      %v393 = vrot.slane %v392, 2
      %v394 = vadd.f32 %v392, %v393
      %v395 = vrot.slane %v394, 1
      %v396 = vadd.f32 %v394, %v395
      %v397 = vsel %vm387, %v383, 0.0
      %v398 = vsel %vm387, %v384, 0.0
      %v399 = vadd.f32 %v397, %v398
      %v400 = vrot.slane %v399, 4
      %v401 = vadd.f32 %v399, %v400
      %v402 = vrot.slane %v401, 2
      %v403 = vadd.f32 %v401, %v402
      %v404 = vrot.slane %v403, 1
      %v405 = vadd.f32 %v403, %v404
      %v406 = vmul.f32 %v396, 0.0078125
      %v407 = vmul.f32 %v405, 0.0078125
      %v408 = vmul.f32 %v406, %v406
      %v409 = vsub.f32 %v407, %v408
      %v410 = vmax.f32 %v409, 0.0
      %v411 = vadd.f32 %v410, 1e-05
      %v412 = vrsqrt.pop %v411
      %v413 = vmul.f32 %v385, %v412
      %v414 = vmul.f32 %v406, %v413
      %v415 = vsub.f32 %v386, %v414
      %v416 = vld [vmem:[%s359] sm:$0xff]
      %v417 = vld [vmem:[%s359 + $0x8] sm:$0xff]
      %v418 = vld [vmem:[%s359 + $0x10] sm:$0xff]
      %v419 = vld [vmem:[%s359 + $0x18] sm:$0xff]
      %v420 = vld [vmem:[%s359 + $0x20] sm:$0xff]
      %v421 = vld [vmem:[%s359 + $0x28] sm:$0xff]
      %v422 = vld [vmem:[%s359 + $0x30] sm:$0xff]
      %v423 = vld [vmem:[%s359 + $0x38] sm:$0xff]
      %v424 = vld [vmem:[%s359 + $0x40] sm:$0xff]
      %v425 = vld [vmem:[%s359 + $0x48] sm:$0xff]
      %v427 = vlaneseq
      %v428 = vshrl.u32 %v427, 7
      %v429 = vsub.s32 0, %v428
      %v430 = vrot.slane %v413, %v429
      %v432 = vmul.f32 %v416, %v430
      %v433 = vmul.f32 %v417, %v430
      %v434 = vmul.f32 %v418, %v430
      %v435 = vmul.f32 %v419, %v430
      %v436 = vmul.f32 %v420, %v430
      %v437 = vmul.f32 %v421, %v430
      %v438 = vmul.f32 %v422, %v430
      %v439 = vmul.f32 %v423, %v430
      %v440 = vmul.f32 %v424, %v430
      %v441 = vmul.f32 %v425, %v430
      %v443 = vlaneseq
      %v444 = vshrl.u32 %v443, 7
      %v445 = vsub.s32 0, %v444
      %v446 = vrot.slane %v415, %v445
      %v448 = vadd.f32 %v432, %v446
      %v449 = vadd.f32 %v433, %v446
      %v450 = vadd.f32 %v434, %v446
      %v451 = vadd.f32 %v435, %v446
      %v452 = vadd.f32 %v436, %v446
      %v453 = vadd.f32 %v437, %v446
      %v454 = vadd.f32 %v438, %v446
      %v455 = vadd.f32 %v439, %v446
      %v456 = vadd.f32 %v440, %v446
      %v457 = vadd.f32 %v441, %v446
      %v458 = vld [vmem:[%s369] sm:$0xff]
      %v459 = vld [vmem:[%s369 + $0x8] sm:$0xff]
      %v460 = vld [vmem:[%s369 + $0x10] sm:$0xff]
      %v461 = vld [vmem:[%s369 + $0x18] sm:$0xff]
      %v462 = vld [vmem:[%s369 + $0x20] sm:$0xff]
      %v463 = vld [vmem:[%s369 + $0x28] sm:$0xff]
      %v464 = vld [vmem:[%s369 + $0x30] sm:$0xff]
      %v465 = vld [vmem:[%s369 + $0x38] sm:$0xff]
      %v466 = vld [vmem:[%s369 + $0x40] sm:$0xff]
      %v467 = vld [vmem:[%s369 + $0x48] sm:$0xff]
      %v468 = vld [vmem:[%s6] sm:$0xf]
      %v469 = vld [vmem:[%s7] sm:$0x1]
      %v471 = vlaneseq
      %v472 = vshrl.u32 %v471, 7
      %v473 = vsub.s32 0, %v472
      %v474 = vrot.slane %v469, %v473
      %vm476 = vcmask 31744
      %v478 = vsel %vm476, %v458, 0
      %v481 = vsel %vm476, %v459, 0
      %v484 = vsel %vm476, %v460, 0
      %v487 = vsel %vm476, %v461, 0
      %v490 = vsel %vm476, %v462, 0
      %v493 = vsel %vm476, %v463, 0
      %v496 = vsel %vm476, %v464, 0
      %v499 = vsel %vm476, %v465, 0
      %v502 = vsel %vm476, %v466, 0
      %v505 = vsel %vm476, %v467, 0
      %vm507 = vcmask 1043456
      %v509 = vsel %vm507, %v468, 0
      %511 = vmatprep.subr.mxu0 0.0
      %v512 = vand.u32 %v509, 4294901760
      %513 = vmatpush1.msra.mxu0 %v512
      %514 = vmatprep.subr.mxu0 0.0
      %515 = vmatpush1.msra.mxu0 0.0
      %516 = vmatprep.subr.mxu0 0.0
      %517 = vmatpush1.msra.mxu0 0.0
      %518 = vmatprep.subr.mxu0 0.0
      %519 = vmatpush1.msra.mxu0 0.0
      %520 = vmatprep.subr.mxu0 0.0
      %521 = vmatpush1.msra.mxu0 0.0
      %522 = vmatprep.subr.mxu0 0.0
      %523 = vmatpush1.msra.mxu0 0.0
      %524 = vmatprep.subr.mxu0 0.0
      %525 = vmatpush1.msra.mxu0 0.0
      %526 = vmatprep.subr.mxu0 0.0
      %527 = vmatpush1.msra.mxu0 0.0
      %528 = vmatprep.subr.mxu0 0.0
      %529 = vmatpush1.msra.mxu0 0.0
      %530 = vmatprep.subr.mxu0 0.0
      %531 = vmatpush1.msra.mxu0 0.0
      %532 = vmatprep.subr.mxu0 0.0
      %533 = vmatpush1.msra.mxu0 0.0
      %534 = vmatprep.subr.mxu0 0.0
      %535 = vmatpush1.msra.mxu0 0.0
      %536 = vmatprep.subr.mxu0 0.0
      %537 = vmatpush1.msra.mxu0 0.0
      %538 = vmatprep.subr.mxu0 0.0
      %539 = vmatpush1.msra.mxu0 0.0
      %540 = vmatprep.subr.mxu0 0.0
      %541 = vmatpush1.msra.mxu0 0.0
      %542 = vmatprep.subr.mxu0 0.0
      %543 = vmatpush1.msra.mxu0 0.0
      %544 = vmatprep.subr.mxu0 0.0
      %545 = vmatpush1.msra.mxu0 0.0
      %546 = vmatprep.subr.mxu0 0.0
      %547 = vmatpush1.msra.mxu0 0.0
      %548 = vmatprep.subr.mxu0 0.0
      %549 = vmatpush1.msra.mxu0 0.0
      %550 = vmatprep.subr.mxu0 0.0
      %551 = vmatpush1.msra.mxu0 0.0
      %552 = vmatprep.subr.mxu0 0.0
      %553 = vmatpush1.msra.mxu0 0.0
      %554 = vmatprep.subr.mxu0 0.0
      %555 = vmatpush1.msra.mxu0 0.0
      %556 = vmatprep.subr.mxu0 0.0
      %557 = vmatpush1.msra.mxu0 0.0
      %558 = vmatprep.subr.mxu0 0.0
      %559 = vmatpush1.msra.mxu0 0.0
      %560 = vmatprep.subr.mxu0 0.0
      %561 = vmatpush1.msra.mxu0 0.0
      %562 = vmatprep.subr.mxu0 0.0
      %563 = vmatpush1.msra.mxu0 0.0
      %564 = vmatprep.subr.mxu0 0.0
      %565 = vmatpush1.msra.mxu0 0.0
      %566 = vmatprep.subr.mxu0 0.0
      %567 = vmatpush1.msra.mxu0 0.0
      %568 = vmatprep.subr.mxu0 0.0
      %569 = vmatpush1.msra.mxu0 0.0
      %570 = vmatprep.subr.mxu0 0.0
      %571 = vmatpush1.msra.mxu0 0.0
      %572 = vmatprep.subr.mxu0 0.0
      %573 = vmatpush1.msra.mxu0 0.0
      %574 = vmatprep.subr.mxu0 0.0
      %575 = vmatpush1.msra.mxu0 0.0
      %576 = vmatprep.mubr.f32.mxu0 0.0
      %v577 = vand.u32 %v478, 4294901760
      %v578 = vsub.f32 %v478, %v577
      %v579 = vand.u32 %v578, 4294901760
      %v580 = vsub.f32 %v578, %v579
      %v581 = vand.u32 %v580, 4294901760
      %582 = vmatmul.mubr.f32.gmra.mrb[0].mxu0 %v581
      %v583 = vpop.f32.mrb[0].mxu0
      %v584 = vadd.f32 %v474, %v583
      %v585 = vpop.f32.mrb[0].mxu0
      %586 = vmatprep.mubr.f32.mxu0 0.0
      %v587 = vand.u32 %v481, 4294901760
      %v588 = vsub.f32 %v481, %v587
      %v589 = vand.u32 %v588, 4294901760
      %v590 = vsub.f32 %v588, %v589
      %v591 = vand.u32 %v590, 4294901760
      %592 = vmatmul.mubr.f32.gmra.mrb[0].mxu0 %v591
      %v593 = vpop.f32.mrb[0].mxu0
      %v594 = vadd.f32 %v474, %v593
      %v595 = vpop.f32.mrb[0].mxu0
      %596 = vmatprep.mubr.f32.mxu0 0.0
      %v597 = vand.u32 %v484, 4294901760
      %v598 = vsub.f32 %v484, %v597
      %v599 = vand.u32 %v598, 4294901760
      %v600 = vsub.f32 %v598, %v599
      %v601 = vand.u32 %v600, 4294901760
      %602 = vmatmul.mubr.f32.gmra.mrb[0].mxu0 %v601
      %v603 = vpop.f32.mrb[0].mxu0
      %v604 = vadd.f32 %v474, %v603
      %v605 = vpop.f32.mrb[0].mxu0
      %606 = vmatprep.mubr.f32.mxu0 0.0
      %v607 = vand.u32 %v487, 4294901760
      %v608 = vsub.f32 %v487, %v607
      %v609 = vand.u32 %v608, 4294901760
      %v610 = vsub.f32 %v608, %v609
      %v611 = vand.u32 %v610, 4294901760
      %612 = vmatmul.mubr.f32.gmra.mrb[0].mxu0 %v611
      %v613 = vpop.f32.mrb[0].mxu0
      %v614 = vadd.f32 %v474, %v613
      %v615 = vpop.f32.mrb[0].mxu0
      %616 = vmatprep.mubr.f32.mxu0 0.0
      %v617 = vand.u32 %v490, 4294901760
      %v618 = vsub.f32 %v490, %v617
      %v619 = vand.u32 %v618, 4294901760
      %v620 = vsub.f32 %v618, %v619
      %v621 = vand.u32 %v620, 4294901760
      %622 = vmatmul.mubr.f32.gmra.mrb[0].mxu0 %v621
      %v623 = vpop.f32.mrb[0].mxu0
      %v624 = vadd.f32 %v474, %v623
      %v625 = vpop.f32.mrb[0].mxu0
      %626 = vmatprep.mubr.f32.mxu0 0.0
      %v627 = vand.u32 %v493, 4294901760
      %v628 = vsub.f32 %v493, %v627
      %v629 = vand.u32 %v628, 4294901760
      %v630 = vsub.f32 %v628, %v629
      %v631 = vand.u32 %v630, 4294901760
      %632 = vmatmul.mubr.f32.gmra.mrb[0].mxu0 %v631
      %v633 = vpop.f32.mrb[0].mxu0
      %v634 = vadd.f32 %v474, %v633
      %v635 = vpop.f32.mrb[0].mxu0
      %636 = vmatprep.mubr.f32.mxu0 0.0
      %v637 = vand.u32 %v496, 4294901760
      %v638 = vsub.f32 %v496, %v637
      %v639 = vand.u32 %v638, 4294901760
      %v640 = vsub.f32 %v638, %v639
      %v641 = vand.u32 %v640, 4294901760
      %642 = vmatmul.mubr.f32.gmra.mrb[0].mxu0 %v641
      %v643 = vpop.f32.mrb[0].mxu0
      %v644 = vadd.f32 %v474, %v643
      %v645 = vpop.f32.mrb[0].mxu0
      %646 = vmatprep.mubr.f32.mxu0 0.0
      %v647 = vand.u32 %v499, 4294901760
      %v648 = vsub.f32 %v499, %v647
      %v649 = vand.u32 %v648, 4294901760
      %v650 = vsub.f32 %v648, %v649
      %v651 = vand.u32 %v650, 4294901760
      %652 = vmatmul.mubr.f32.gmra.mrb[0].mxu0 %v651
      %v653 = vpop.f32.mrb[0].mxu0
      %v654 = vadd.f32 %v474, %v653
      %v655 = vpop.f32.mrb[0].mxu0
      %656 = vmatprep.mubr.f32.mxu0 0.0
      %v657 = vand.u32 %v502, 4294901760
      %v658 = vsub.f32 %v502, %v657
      %v659 = vand.u32 %v658, 4294901760
      %v660 = vsub.f32 %v658, %v659
      %v661 = vand.u32 %v660, 4294901760
      %662 = vmatmul.mubr.f32.gmra.mrb[0].mxu0 %v661
      %v663 = vpop.f32.mrb[0].mxu0
      %v664 = vadd.f32 %v474, %v663
      %v665 = vpop.f32.mrb[0].mxu0
      %666 = vmatprep.mubr.f32.mxu0 0.0
      %v667 = vand.u32 %v505, 4294901760
      %v668 = vsub.f32 %v505, %v667
      %v669 = vand.u32 %v668, 4294901760
      %v670 = vsub.f32 %v668, %v669
      %v671 = vand.u32 %v670, 4294901760
      %672 = vmatmul.mubr.f32.gmra.mrb[0].mxu0 %v671
      %v673 = vpop.f32.mrb[0].mxu0
      %v674 = vadd.f32 %v474, %v673
      %v675 = vpop.f32.mrb[0].mxu0
      %676 = vdwg.mxu0
      %677 = vmatprep.subr.mxu0 0.0
      %v678 = vand.u32 %v509, 4294901760
      %v679 = vsub.f32 %v509, %v678
      %v680 = vand.u32 %v679, 4294901760
      %v681 = vsub.f32 %v679, %v680
      %v682 = vand.u32 %v681, 4294901760
      %683 = vmatpush1.msra.mxu0 %v682
      %684 = vmatprep.subr.mxu0 0.0
      %685 = vmatpush1.msra.mxu0 0.0
      %686 = vmatprep.subr.mxu0 0.0
      %687 = vmatpush1.msra.mxu0 0.0
      %688 = vmatprep.subr.mxu0 0.0
      %689 = vmatpush1.msra.mxu0 0.0
      %690 = vmatprep.subr.mxu0 0.0
      %691 = vmatpush1.msra.mxu0 0.0
      %692 = vmatprep.subr.mxu0 0.0
      %693 = vmatpush1.msra.mxu0 0.0
      %694 = vmatprep.subr.mxu0 0.0
      %695 = vmatpush1.msra.mxu0 0.0
      %696 = vmatprep.subr.mxu0 0.0
      %697 = vmatpush1.msra.mxu0 0.0
      %698 = vmatprep.subr.mxu0 0.0
      %699 = vmatpush1.msra.mxu0 0.0
      %700 = vmatprep.subr.mxu0 0.0
      %701 = vmatpush1.msra.mxu0 0.0
      %702 = vmatprep.subr.mxu0 0.0
      %703 = vmatpush1.msra.mxu0 0.0
      %704 = vmatprep.subr.mxu0 0.0
      %705 = vmatpush1.msra.mxu0 0.0
      %706 = vmatprep.subr.mxu0 0.0
      %707 = vmatpush1.msra.mxu0 0.0
      %708 = vmatprep.subr.mxu0 0.0
      %709 = vmatpush1.msra.mxu0 0.0
      %710 = vmatprep.subr.mxu0 0.0
      %711 = vmatpush1.msra.mxu0 0.0
      %712 = vmatprep.subr.mxu0 0.0
      %713 = vmatpush1.msra.mxu0 0.0
      %714 = vmatprep.subr.mxu0 0.0
      %715 = vmatpush1.msra.mxu0 0.0
      %716 = vmatprep.subr.mxu0 0.0
      %717 = vmatpush1.msra.mxu0 0.0
      %718 = vmatprep.subr.mxu0 0.0
      %719 = vmatpush1.msra.mxu0 0.0
      %720 = vmatprep.subr.mxu0 0.0
      %721 = vmatpush1.msra.mxu0 0.0
      %722 = vmatprep.subr.mxu0 0.0
      %723 = vmatpush1.msra.mxu0 0.0
      %724 = vmatprep.subr.mxu0 0.0
      %725 = vmatpush1.msra.mxu0 0.0
      %726 = vmatprep.subr.mxu0 0.0
      %727 = vmatpush1.msra.mxu0 0.0
      %728 = vmatprep.subr.mxu0 0.0
      %729 = vmatpush1.msra.mxu0 0.0
      %730 = vmatprep.subr.mxu0 0.0
      %731 = vmatpush1.msra.mxu0 0.0
      %732 = vmatprep.subr.mxu0 0.0
      %733 = vmatpush1.msra.mxu0 0.0
      %734 = vmatprep.subr.mxu0 0.0
      %735 = vmatpush1.msra.mxu0 0.0
      %736 = vmatprep.subr.mxu0 0.0
      %737 = vmatpush1.msra.mxu0 0.0
      %738 = vmatprep.subr.mxu0 0.0
      %739 = vmatpush1.msra.mxu0 0.0
      %740 = vmatprep.subr.mxu0 0.0
      %741 = vmatpush1.msra.mxu0 0.0
      %742 = vmatprep.subr.mxu0 0.0
      %743 = vmatpush1.msra.mxu0 0.0
      %744 = vmatprep.subr.mxu0 0.0
      %745 = vmatpush1.msra.mxu0 0.0
      %746 = vmatprep.mubr.f32.mxu0 0.0
      %v747 = vand.u32 %v478, 4294901760
      %748 = vmatmul.mubr.f32.gmra.mrb[0].mxu0 %v747
      %v749 = vpop.f32.mrb[0].mxu0
      %v750 = vadd.f32 %v584, %v749
      %v751 = vpop.f32.mrb[0].mxu0
      %752 = vmatprep.mubr.f32.mxu0 0.0
      %v753 = vand.u32 %v481, 4294901760
      %754 = vmatmul.mubr.f32.gmra.mrb[0].mxu0 %v753
      %v755 = vpop.f32.mrb[0].mxu0
      %v756 = vadd.f32 %v594, %v755
      %v757 = vpop.f32.mrb[0].mxu0
      %758 = vmatprep.mubr.f32.mxu0 0.0
      %v759 = vand.u32 %v484, 4294901760
      %760 = vmatmul.mubr.f32.gmra.mrb[0].mxu0 %v759
      %v761 = vpop.f32.mrb[0].mxu0
      %v762 = vadd.f32 %v604, %v761
      %v763 = vpop.f32.mrb[0].mxu0
      %764 = vmatprep.mubr.f32.mxu0 0.0
      %v765 = vand.u32 %v487, 4294901760
      %766 = vmatmul.mubr.f32.gmra.mrb[0].mxu0 %v765
      %v767 = vpop.f32.mrb[0].mxu0
      %v768 = vadd.f32 %v614, %v767
      %v769 = vpop.f32.mrb[0].mxu0
      %770 = vmatprep.mubr.f32.mxu0 0.0
      %v771 = vand.u32 %v490, 4294901760
      %772 = vmatmul.mubr.f32.gmra.mrb[0].mxu0 %v771
      %v773 = vpop.f32.mrb[0].mxu0
      %v774 = vadd.f32 %v624, %v773
      %v775 = vpop.f32.mrb[0].mxu0
      %776 = vmatprep.mubr.f32.mxu0 0.0
      %v777 = vand.u32 %v493, 4294901760
      %778 = vmatmul.mubr.f32.gmra.mrb[0].mxu0 %v777
      %v779 = vpop.f32.mrb[0].mxu0
      %v780 = vadd.f32 %v634, %v779
      %v781 = vpop.f32.mrb[0].mxu0
      %782 = vmatprep.mubr.f32.mxu0 0.0
      %v783 = vand.u32 %v496, 4294901760
      %784 = vmatmul.mubr.f32.gmra.mrb[0].mxu0 %v783
      %v785 = vpop.f32.mrb[0].mxu0
      %v786 = vadd.f32 %v644, %v785
      %v787 = vpop.f32.mrb[0].mxu0
      %788 = vmatprep.mubr.f32.mxu0 0.0
      %v789 = vand.u32 %v499, 4294901760
      %790 = vmatmul.mubr.f32.gmra.mrb[0].mxu0 %v789
      %v791 = vpop.f32.mrb[0].mxu0
      %v792 = vadd.f32 %v654, %v791
      %v793 = vpop.f32.mrb[0].mxu0
      %794 = vmatprep.mubr.f32.mxu0 0.0
      %v795 = vand.u32 %v502, 4294901760
      %796 = vmatmul.mubr.f32.gmra.mrb[0].mxu0 %v795
      %v797 = vpop.f32.mrb[0].mxu0
      %v798 = vadd.f32 %v664, %v797
      %v799 = vpop.f32.mrb[0].mxu0
      %800 = vmatprep.mubr.f32.mxu0 0.0
      %v801 = vand.u32 %v505, 4294901760
      %802 = vmatmul.mubr.f32.gmra.mrb[0].mxu0 %v801
      %v803 = vpop.f32.mrb[0].mxu0
      %v804 = vadd.f32 %v674, %v803
      %v805 = vpop.f32.mrb[0].mxu0
      %806 = vdwg.mxu0
      %807 = vmatprep.subr.mxu0 0.0
      %v808 = vand.u32 %v509, 4294901760
      %v809 = vsub.f32 %v509, %v808
      %810 = vmatpush1.msra.mxu0 %v809
      %811 = vmatprep.subr.mxu0 0.0
      %812 = vmatpush1.msra.mxu0 0.0
      %813 = vmatprep.subr.mxu0 0.0
      %814 = vmatpush1.msra.mxu0 0.0
      %815 = vmatprep.subr.mxu0 0.0
      %816 = vmatpush1.msra.mxu0 0.0
      %817 = vmatprep.subr.mxu0 0.0
      %818 = vmatpush1.msra.mxu0 0.0
      %819 = vmatprep.subr.mxu0 0.0
      %820 = vmatpush1.msra.mxu0 0.0
      %821 = vmatprep.subr.mxu0 0.0
      %822 = vmatpush1.msra.mxu0 0.0
      %823 = vmatprep.subr.mxu0 0.0
      %824 = vmatpush1.msra.mxu0 0.0
      %825 = vmatprep.subr.mxu0 0.0
      %826 = vmatpush1.msra.mxu0 0.0
      %827 = vmatprep.subr.mxu0 0.0
      %828 = vmatpush1.msra.mxu0 0.0
      %829 = vmatprep.subr.mxu0 0.0
      %830 = vmatpush1.msra.mxu0 0.0
      %831 = vmatprep.subr.mxu0 0.0
      %832 = vmatpush1.msra.mxu0 0.0
      %833 = vmatprep.subr.mxu0 0.0
      %834 = vmatpush1.msra.mxu0 0.0
      %835 = vmatprep.subr.mxu0 0.0
      %836 = vmatpush1.msra.mxu0 0.0
      %837 = vmatprep.subr.mxu0 0.0
      %838 = vmatpush1.msra.mxu0 0.0
      %839 = vmatprep.subr.mxu0 0.0
      %840 = vmatpush1.msra.mxu0 0.0
      %841 = vmatprep.subr.mxu0 0.0
      %842 = vmatpush1.msra.mxu0 0.0
      %843 = vmatprep.subr.mxu0 0.0
      %844 = vmatpush1.msra.mxu0 0.0
      %845 = vmatprep.subr.mxu0 0.0
      %846 = vmatpush1.msra.mxu0 0.0
      %847 = vmatprep.subr.mxu0 0.0
      %848 = vmatpush1.msra.mxu0 0.0
      %849 = vmatprep.subr.mxu0 0.0
      %850 = vmatpush1.msra.mxu0 0.0
      %851 = vmatprep.subr.mxu0 0.0
      %852 = vmatpush1.msra.mxu0 0.0
      %853 = vmatprep.subr.mxu0 0.0
      %854 = vmatpush1.msra.mxu0 0.0
      %855 = vmatprep.subr.mxu0 0.0
      %856 = vmatpush1.msra.mxu0 0.0
      %857 = vmatprep.subr.mxu0 0.0
      %858 = vmatpush1.msra.mxu0 0.0
      %859 = vmatprep.subr.mxu0 0.0
      %860 = vmatpush1.msra.mxu0 0.0
      %861 = vmatprep.subr.mxu0 0.0
      %862 = vmatpush1.msra.mxu0 0.0
      %863 = vmatprep.subr.mxu0 0.0
      %864 = vmatpush1.msra.mxu0 0.0
      %865 = vmatprep.subr.mxu0 0.0
      %866 = vmatpush1.msra.mxu0 0.0
      %867 = vmatprep.subr.mxu0 0.0
      %868 = vmatpush1.msra.mxu0 0.0
      %869 = vmatprep.subr.mxu0 0.0
      %870 = vmatpush1.msra.mxu0 0.0
      %871 = vmatprep.subr.mxu0 0.0
      %872 = vmatpush1.msra.mxu0 0.0
      %873 = vmatprep.mubr.f32.mxu0 0.0
      %v874 = vand.u32 %v478, 4294901760
      %v875 = vsub.f32 %v478, %v874
      %876 = vmatmul.mubr.f32.gmra.mrb[0].mxu0 %v875
      %v877 = vpop.f32.mrb[0].mxu0
      %v878 = vadd.f32 %v750, %v877
      %v879 = vpop.f32.mrb[0].mxu0
      %880 = vmatprep.mubr.f32.mxu0 0.0
      %v881 = vand.u32 %v481, 4294901760
      %v882 = vsub.f32 %v481, %v881
      %883 = vmatmul.mubr.f32.gmra.mrb[0].mxu0 %v882
      %v884 = vpop.f32.mrb[0].mxu0
      %v885 = vadd.f32 %v756, %v884
      %v886 = vpop.f32.mrb[0].mxu0
      %887 = vmatprep.mubr.f32.mxu0 0.0
      %v888 = vand.u32 %v484, 4294901760
      %v889 = vsub.f32 %v484, %v888
      %890 = vmatmul.mubr.f32.gmra.mrb[0].mxu0 %v889
      %v891 = vpop.f32.mrb[0].mxu0
      %v892 = vadd.f32 %v762, %v891
      %v893 = vpop.f32.mrb[0].mxu0
      %894 = vmatprep.mubr.f32.mxu0 0.0
      %v895 = vand.u32 %v487, 4294901760
      %v896 = vsub.f32 %v487, %v895
      %897 = vmatmul.mubr.f32.gmra.mrb[0].mxu0 %v896
      %v898 = vpop.f32.mrb[0].mxu0
      %v899 = vadd.f32 %v768, %v898
      %v900 = vpop.f32.mrb[0].mxu0
      %901 = vmatprep.mubr.f32.mxu0 0.0
      %v902 = vand.u32 %v490, 4294901760
      %v903 = vsub.f32 %v490, %v902
      %904 = vmatmul.mubr.f32.gmra.mrb[0].mxu0 %v903
      %v905 = vpop.f32.mrb[0].mxu0
      %v906 = vadd.f32 %v774, %v905
      %v907 = vpop.f32.mrb[0].mxu0
      %908 = vmatprep.mubr.f32.mxu0 0.0
      %v909 = vand.u32 %v493, 4294901760
      %v910 = vsub.f32 %v493, %v909
      %911 = vmatmul.mubr.f32.gmra.mrb[0].mxu0 %v910
      %v912 = vpop.f32.mrb[0].mxu0
      %v913 = vadd.f32 %v780, %v912
      %v914 = vpop.f32.mrb[0].mxu0
      %915 = vmatprep.mubr.f32.mxu0 0.0
      %v916 = vand.u32 %v496, 4294901760
      %v917 = vsub.f32 %v496, %v916
      %918 = vmatmul.mubr.f32.gmra.mrb[0].mxu0 %v917
      %v919 = vpop.f32.mrb[0].mxu0
      %v920 = vadd.f32 %v786, %v919
      %v921 = vpop.f32.mrb[0].mxu0
      %922 = vmatprep.mubr.f32.mxu0 0.0
      %v923 = vand.u32 %v499, 4294901760
      %v924 = vsub.f32 %v499, %v923
      %925 = vmatmul.mubr.f32.gmra.mrb[0].mxu0 %v924
      %v926 = vpop.f32.mrb[0].mxu0
      %v927 = vadd.f32 %v792, %v926
      %v928 = vpop.f32.mrb[0].mxu0
      %929 = vmatprep.mubr.f32.mxu0 0.0
      %v930 = vand.u32 %v502, 4294901760
      %v931 = vsub.f32 %v502, %v930
      %932 = vmatmul.mubr.f32.gmra.mrb[0].mxu0 %v931
      %v933 = vpop.f32.mrb[0].mxu0
      %v934 = vadd.f32 %v798, %v933
      %v935 = vpop.f32.mrb[0].mxu0
      %936 = vmatprep.mubr.f32.mxu0 0.0
      %v937 = vand.u32 %v505, 4294901760
      %v938 = vsub.f32 %v505, %v937
      %939 = vmatmul.mubr.f32.gmra.mrb[0].mxu0 %v938
      %v940 = vpop.f32.mrb[0].mxu0
      %v941 = vadd.f32 %v804, %v940
      %v942 = vpop.f32.mrb[0].mxu0
      %943 = vdwg.mxu0
      %944 = vmatprep.subr.mxu0 0.0
      %v945 = vand.u32 %v509, 4294901760
      %946 = vmatpush1.msra.mxu0 %v945
      %947 = vmatprep.subr.mxu0 0.0
      %948 = vmatpush1.msra.mxu0 0.0
      %949 = vmatprep.subr.mxu0 0.0
      %950 = vmatpush1.msra.mxu0 0.0
      %951 = vmatprep.subr.mxu0 0.0
      %952 = vmatpush1.msra.mxu0 0.0
      %953 = vmatprep.subr.mxu0 0.0
      %954 = vmatpush1.msra.mxu0 0.0
      %955 = vmatprep.subr.mxu0 0.0
      %956 = vmatpush1.msra.mxu0 0.0
      %957 = vmatprep.subr.mxu0 0.0
      %958 = vmatpush1.msra.mxu0 0.0
      %959 = vmatprep.subr.mxu0 0.0
      %960 = vmatpush1.msra.mxu0 0.0
      %961 = vmatprep.subr.mxu0 0.0
      %962 = vmatpush1.msra.mxu0 0.0
      %963 = vmatprep.subr.mxu0 0.0
      %964 = vmatpush1.msra.mxu0 0.0
      %965 = vmatprep.subr.mxu0 0.0
      %966 = vmatpush1.msra.mxu0 0.0
      %967 = vmatprep.subr.mxu0 0.0
      %968 = vmatpush1.msra.mxu0 0.0
      %969 = vmatprep.subr.mxu0 0.0
      %970 = vmatpush1.msra.mxu0 0.0
      %971 = vmatprep.subr.mxu0 0.0
      %972 = vmatpush1.msra.mxu0 0.0
      %973 = vmatprep.subr.mxu0 0.0
      %974 = vmatpush1.msra.mxu0 0.0
      %975 = vmatprep.subr.mxu0 0.0
      %976 = vmatpush1.msra.mxu0 0.0
      %977 = vmatprep.subr.mxu0 0.0
      %978 = vmatpush1.msra.mxu0 0.0
      %979 = vmatprep.subr.mxu0 0.0
      %980 = vmatpush1.msra.mxu0 0.0
      %981 = vmatprep.subr.mxu0 0.0
      %982 = vmatpush1.msra.mxu0 0.0
      %983 = vmatprep.subr.mxu0 0.0
      %984 = vmatpush1.msra.mxu0 0.0
      %985 = vmatprep.subr.mxu0 0.0
      %986 = vmatpush1.msra.mxu0 0.0
      %987 = vmatprep.subr.mxu0 0.0
      %988 = vmatpush1.msra.mxu0 0.0
      %989 = vmatprep.subr.mxu0 0.0
      %990 = vmatpush1.msra.mxu0 0.0
      %991 = vmatprep.subr.mxu0 0.0
      %992 = vmatpush1.msra.mxu0 0.0
      %993 = vmatprep.subr.mxu0 0.0
      %994 = vmatpush1.msra.mxu0 0.0
      %995 = vmatprep.subr.mxu0 0.0
      %996 = vmatpush1.msra.mxu0 0.0
      %997 = vmatprep.subr.mxu0 0.0
      %998 = vmatpush1.msra.mxu0 0.0
      %999 = vmatprep.subr.mxu0 0.0
      %1000 = vmatpush1.msra.mxu0 0.0
      %1001 = vmatprep.subr.mxu0 0.0
      %1002 = vmatpush1.msra.mxu0 0.0
      %1003 = vmatprep.subr.mxu0 0.0
      %1004 = vmatpush1.msra.mxu0 0.0
      %1005 = vmatprep.subr.mxu0 0.0
      %1006 = vmatpush1.msra.mxu0 0.0
      %1007 = vmatprep.subr.mxu0 0.0
      %1008 = vmatpush1.msra.mxu0 0.0
      %1009 = vmatprep.mubr.f32.mxu0 0.0
      %v1010 = vand.u32 %v478, 4294901760
      %v1011 = vsub.f32 %v478, %v1010
      %v1012 = vand.u32 %v1011, 4294901760
      %1013 = vmatmul.mubr.f32.gmra.mrb[0].mxu0 %v1012
      %v1014 = vpop.f32.mrb[0].mxu0
      %v1015 = vadd.f32 %v878, %v1014
      %v1016 = vpop.f32.mrb[0].mxu0
      %1017 = vmatprep.mubr.f32.mxu0 0.0
      %v1018 = vand.u32 %v481, 4294901760
      %v1019 = vsub.f32 %v481, %v1018
      %v1020 = vand.u32 %v1019, 4294901760
      %1021 = vmatmul.mubr.f32.gmra.mrb[0].mxu0 %v1020
      %v1022 = vpop.f32.mrb[0].mxu0
      %v1023 = vadd.f32 %v885, %v1022
      %v1024 = vpop.f32.mrb[0].mxu0
      %1025 = vmatprep.mubr.f32.mxu0 0.0
      %v1026 = vand.u32 %v484, 4294901760
      %v1027 = vsub.f32 %v484, %v1026
      %v1028 = vand.u32 %v1027, 4294901760
      %1029 = vmatmul.mubr.f32.gmra.mrb[0].mxu0 %v1028
      %v1030 = vpop.f32.mrb[0].mxu0
      %v1031 = vadd.f32 %v892, %v1030
      %v1032 = vpop.f32.mrb[0].mxu0
      %1033 = vmatprep.mubr.f32.mxu0 0.0
      %v1034 = vand.u32 %v487, 4294901760
      %v1035 = vsub.f32 %v487, %v1034
      %v1036 = vand.u32 %v1035, 4294901760
      %1037 = vmatmul.mubr.f32.gmra.mrb[0].mxu0 %v1036
      %v1038 = vpop.f32.mrb[0].mxu0
      %v1039 = vadd.f32 %v899, %v1038
      %v1040 = vpop.f32.mrb[0].mxu0
      %1041 = vmatprep.mubr.f32.mxu0 0.0
      %v1042 = vand.u32 %v490, 4294901760
      %v1043 = vsub.f32 %v490, %v1042
      %v1044 = vand.u32 %v1043, 4294901760
      %1045 = vmatmul.mubr.f32.gmra.mrb[0].mxu0 %v1044
      %v1046 = vpop.f32.mrb[0].mxu0
      %v1047 = vadd.f32 %v906, %v1046
      %v1048 = vpop.f32.mrb[0].mxu0
      %1049 = vmatprep.mubr.f32.mxu0 0.0
      %v1050 = vand.u32 %v493, 4294901760
      %v1051 = vsub.f32 %v493, %v1050
      %v1052 = vand.u32 %v1051, 4294901760
      %1053 = vmatmul.mubr.f32.gmra.mrb[0].mxu0 %v1052
      %v1054 = vpop.f32.mrb[0].mxu0
      %v1055 = vadd.f32 %v913, %v1054
      %v1056 = vpop.f32.mrb[0].mxu0
      %1057 = vmatprep.mubr.f32.mxu0 0.0
      %v1058 = vand.u32 %v496, 4294901760
      %v1059 = vsub.f32 %v496, %v1058
      %v1060 = vand.u32 %v1059, 4294901760
      %1061 = vmatmul.mubr.f32.gmra.mrb[0].mxu0 %v1060
      %v1062 = vpop.f32.mrb[0].mxu0
      %v1063 = vadd.f32 %v920, %v1062
      %v1064 = vpop.f32.mrb[0].mxu0
      %1065 = vmatprep.mubr.f32.mxu0 0.0
      %v1066 = vand.u32 %v499, 4294901760
      %v1067 = vsub.f32 %v499, %v1066
      %v1068 = vand.u32 %v1067, 4294901760
      %1069 = vmatmul.mubr.f32.gmra.mrb[0].mxu0 %v1068
      %v1070 = vpop.f32.mrb[0].mxu0
      %v1071 = vadd.f32 %v927, %v1070
      %v1072 = vpop.f32.mrb[0].mxu0
      %1073 = vmatprep.mubr.f32.mxu0 0.0
      %v1074 = vand.u32 %v502, 4294901760
      %v1075 = vsub.f32 %v502, %v1074
      %v1076 = vand.u32 %v1075, 4294901760
      %1077 = vmatmul.mubr.f32.gmra.mrb[0].mxu0 %v1076
      %v1078 = vpop.f32.mrb[0].mxu0
      %v1079 = vadd.f32 %v934, %v1078
      %v1080 = vpop.f32.mrb[0].mxu0
      %1081 = vmatprep.mubr.f32.mxu0 0.0
      %v1082 = vand.u32 %v505, 4294901760
      %v1083 = vsub.f32 %v505, %v1082
      %v1084 = vand.u32 %v1083, 4294901760
      %1085 = vmatmul.mubr.f32.gmra.mrb[0].mxu0 %v1084
      %v1086 = vpop.f32.mrb[0].mxu0
      %v1087 = vadd.f32 %v941, %v1086
      %v1088 = vpop.f32.mrb[0].mxu0
      %1089 = vdwg.mxu0
      %1090 = vmatprep.subr.mxu0 0.0
      %v1091 = vand.u32 %v509, 4294901760
      %v1092 = vsub.f32 %v509, %v1091
      %v1093 = vand.u32 %v1092, 4294901760
      %1094 = vmatpush1.msra.mxu0 %v1093
      %1095 = vmatprep.subr.mxu0 0.0
      %1096 = vmatpush1.msra.mxu0 0.0
      %1097 = vmatprep.subr.mxu0 0.0
      %1098 = vmatpush1.msra.mxu0 0.0
      %1099 = vmatprep.subr.mxu0 0.0
      %1100 = vmatpush1.msra.mxu0 0.0
      %1101 = vmatprep.subr.mxu0 0.0
      %1102 = vmatpush1.msra.mxu0 0.0
      %1103 = vmatprep.subr.mxu0 0.0
      %1104 = vmatpush1.msra.mxu0 0.0
      %1105 = vmatprep.subr.mxu0 0.0
      %1106 = vmatpush1.msra.mxu0 0.0
      %1107 = vmatprep.subr.mxu0 0.0
      %1108 = vmatpush1.msra.mxu0 0.0
      %1109 = vmatprep.subr.mxu0 0.0
      %1110 = vmatpush1.msra.mxu0 0.0
      %1111 = vmatprep.subr.mxu0 0.0
      %1112 = vmatpush1.msra.mxu0 0.0
      %1113 = vmatprep.subr.mxu0 0.0
      %1114 = vmatpush1.msra.mxu0 0.0
      %1115 = vmatprep.subr.mxu0 0.0
      %1116 = vmatpush1.msra.mxu0 0.0
      %1117 = vmatprep.subr.mxu0 0.0
      %1118 = vmatpush1.msra.mxu0 0.0
      %1119 = vmatprep.subr.mxu0 0.0
      %1120 = vmatpush1.msra.mxu0 0.0
      %1121 = vmatprep.subr.mxu0 0.0
      %1122 = vmatpush1.msra.mxu0 0.0
      %1123 = vmatprep.subr.mxu0 0.0
      %1124 = vmatpush1.msra.mxu0 0.0
      %1125 = vmatprep.subr.mxu0 0.0
      %1126 = vmatpush1.msra.mxu0 0.0
      %1127 = vmatprep.subr.mxu0 0.0
      %1128 = vmatpush1.msra.mxu0 0.0
      %1129 = vmatprep.subr.mxu0 0.0
      %1130 = vmatpush1.msra.mxu0 0.0
      %1131 = vmatprep.subr.mxu0 0.0
      %1132 = vmatpush1.msra.mxu0 0.0
      %1133 = vmatprep.subr.mxu0 0.0
      %1134 = vmatpush1.msra.mxu0 0.0
      %1135 = vmatprep.subr.mxu0 0.0
      %1136 = vmatpush1.msra.mxu0 0.0
      %1137 = vmatprep.subr.mxu0 0.0
      %1138 = vmatpush1.msra.mxu0 0.0
      %1139 = vmatprep.subr.mxu0 0.0
      %1140 = vmatpush1.msra.mxu0 0.0
      %1141 = vmatprep.subr.mxu0 0.0
      %1142 = vmatpush1.msra.mxu0 0.0
      %1143 = vmatprep.subr.mxu0 0.0
      %1144 = vmatpush1.msra.mxu0 0.0
      %1145 = vmatprep.subr.mxu0 0.0
      %1146 = vmatpush1.msra.mxu0 0.0
      %1147 = vmatprep.subr.mxu0 0.0
      %1148 = vmatpush1.msra.mxu0 0.0
      %1149 = vmatprep.subr.mxu0 0.0
      %1150 = vmatpush1.msra.mxu0 0.0
      %1151 = vmatprep.subr.mxu0 0.0
      %1152 = vmatpush1.msra.mxu0 0.0
      %1153 = vmatprep.subr.mxu0 0.0
      %1154 = vmatpush1.msra.mxu0 0.0
      %1155 = vmatprep.subr.mxu0 0.0
      %1156 = vmatpush1.msra.mxu0 0.0
      %1157 = vmatprep.mubr.f32.mxu0 0.0
      %v1158 = vand.u32 %v478, 4294901760
      %1159 = vmatmul.mubr.f32.gmra.mrb[0].mxu0 %v1158
      %v1160 = vpop.f32.mrb[0].mxu0
      %v1161 = vadd.f32 %v1015, %v1160
      %v1162 = vpop.f32.mrb[0].mxu0
      %1163 = vmatprep.mubr.f32.mxu0 0.0
      %v1164 = vand.u32 %v481, 4294901760
      %1165 = vmatmul.mubr.f32.gmra.mrb[0].mxu0 %v1164
      %v1166 = vpop.f32.mrb[0].mxu0
      %v1167 = vadd.f32 %v1023, %v1166
      %v1168 = vpop.f32.mrb[0].mxu0
      %1169 = vmatprep.mubr.f32.mxu0 0.0
      %v1170 = vand.u32 %v484, 4294901760
      %1171 = vmatmul.mubr.f32.gmra.mrb[0].mxu0 %v1170
      %v1172 = vpop.f32.mrb[0].mxu0
      %v1173 = vadd.f32 %v1031, %v1172
      %v1174 = vpop.f32.mrb[0].mxu0
      %1175 = vmatprep.mubr.f32.mxu0 0.0
      %v1176 = vand.u32 %v487, 4294901760
      %1177 = vmatmul.mubr.f32.gmra.mrb[0].mxu0 %v1176
      %v1178 = vpop.f32.mrb[0].mxu0
      %v1179 = vadd.f32 %v1039, %v1178
      %v1180 = vpop.f32.mrb[0].mxu0
      %1181 = vmatprep.mubr.f32.mxu0 0.0
      %v1182 = vand.u32 %v490, 4294901760
      %1183 = vmatmul.mubr.f32.gmra.mrb[0].mxu0 %v1182
      %v1184 = vpop.f32.mrb[0].mxu0
      %v1185 = vadd.f32 %v1047, %v1184
      %v1186 = vpop.f32.mrb[0].mxu0
      %1187 = vmatprep.mubr.f32.mxu0 0.0
      %v1188 = vand.u32 %v493, 4294901760
      %1189 = vmatmul.mubr.f32.gmra.mrb[0].mxu0 %v1188
      %v1190 = vpop.f32.mrb[0].mxu0
      %v1191 = vadd.f32 %v1055, %v1190
      %v1192 = vpop.f32.mrb[0].mxu0
      %1193 = vmatprep.mubr.f32.mxu0 0.0
      %v1194 = vand.u32 %v496, 4294901760
      %1195 = vmatmul.mubr.f32.gmra.mrb[0].mxu0 %v1194
      %v1196 = vpop.f32.mrb[0].mxu0
      %v1197 = vadd.f32 %v1063, %v1196
      %v1198 = vpop.f32.mrb[0].mxu0
      %1199 = vmatprep.mubr.f32.mxu0 0.0
      %v1200 = vand.u32 %v499, 4294901760
      %1201 = vmatmul.mubr.f32.gmra.mrb[0].mxu0 %v1200
      %v1202 = vpop.f32.mrb[0].mxu0
      %v1203 = vadd.f32 %v1071, %v1202
      %v1204 = vpop.f32.mrb[0].mxu0
      %1205 = vmatprep.mubr.f32.mxu0 0.0
      %v1206 = vand.u32 %v502, 4294901760
      %1207 = vmatmul.mubr.f32.gmra.mrb[0].mxu0 %v1206
      %v1208 = vpop.f32.mrb[0].mxu0
      %v1209 = vadd.f32 %v1079, %v1208
      %v1210 = vpop.f32.mrb[0].mxu0
      %1211 = vmatprep.mubr.f32.mxu0 0.0
      %v1212 = vand.u32 %v505, 4294901760
      %1213 = vmatmul.mubr.f32.gmra.mrb[0].mxu0 %v1212
      %v1214 = vpop.f32.mrb[0].mxu0
      %v1215 = vadd.f32 %v1087, %v1214
      %v1216 = vpop.f32.mrb[0].mxu0
      %1217 = vdwg.mxu0
      %1218 = vmatprep.subr.mxu0 0.0
      %v1219 = vand.u32 %v509, 4294901760
      %1220 = vmatpush1.msra.mxu0 %v1219
      %1221 = vmatprep.subr.mxu0 0.0
      %1222 = vmatpush1.msra.mxu0 0.0
      %1223 = vmatprep.subr.mxu0 0.0
      %1224 = vmatpush1.msra.mxu0 0.0
      %1225 = vmatprep.subr.mxu0 0.0
      %1226 = vmatpush1.msra.mxu0 0.0
      %1227 = vmatprep.subr.mxu0 0.0
      %1228 = vmatpush1.msra.mxu0 0.0
      %1229 = vmatprep.subr.mxu0 0.0
      %1230 = vmatpush1.msra.mxu0 0.0
      %1231 = vmatprep.subr.mxu0 0.0
      %1232 = vmatpush1.msra.mxu0 0.0
      %1233 = vmatprep.subr.mxu0 0.0
      %1234 = vmatpush1.msra.mxu0 0.0
      %1235 = vmatprep.subr.mxu0 0.0
      %1236 = vmatpush1.msra.mxu0 0.0
      %1237 = vmatprep.subr.mxu0 0.0
      %1238 = vmatpush1.msra.mxu0 0.0
      %1239 = vmatprep.subr.mxu0 0.0
      %1240 = vmatpush1.msra.mxu0 0.0
      %1241 = vmatprep.subr.mxu0 0.0
      %1242 = vmatpush1.msra.mxu0 0.0
      %1243 = vmatprep.subr.mxu0 0.0
      %1244 = vmatpush1.msra.mxu0 0.0
      %1245 = vmatprep.subr.mxu0 0.0
      %1246 = vmatpush1.msra.mxu0 0.0
      %1247 = vmatprep.subr.mxu0 0.0
      %1248 = vmatpush1.msra.mxu0 0.0
      %1249 = vmatprep.subr.mxu0 0.0
      %1250 = vmatpush1.msra.mxu0 0.0
      %1251 = vmatprep.subr.mxu0 0.0
      %1252 = vmatpush1.msra.mxu0 0.0
      %1253 = vmatprep.subr.mxu0 0.0
      %1254 = vmatpush1.msra.mxu0 0.0
      %1255 = vmatprep.subr.mxu0 0.0
      %1256 = vmatpush1.msra.mxu0 0.0
      %1257 = vmatprep.subr.mxu0 0.0
      %1258 = vmatpush1.msra.mxu0 0.0
      %1259 = vmatprep.subr.mxu0 0.0
      %1260 = vmatpush1.msra.mxu0 0.0
      %1261 = vmatprep.subr.mxu0 0.0
      %1262 = vmatpush1.msra.mxu0 0.0
      %1263 = vmatprep.subr.mxu0 0.0
      %1264 = vmatpush1.msra.mxu0 0.0
      %1265 = vmatprep.subr.mxu0 0.0
      %1266 = vmatpush1.msra.mxu0 0.0
      %1267 = vmatprep.subr.mxu0 0.0
      %1268 = vmatpush1.msra.mxu0 0.0
      %1269 = vmatprep.subr.mxu0 0.0
      %1270 = vmatpush1.msra.mxu0 0.0
      %1271 = vmatprep.subr.mxu0 0.0
      %1272 = vmatpush1.msra.mxu0 0.0
      %1273 = vmatprep.subr.mxu0 0.0
      %1274 = vmatpush1.msra.mxu0 0.0
      %1275 = vmatprep.subr.mxu0 0.0
      %1276 = vmatpush1.msra.mxu0 0.0
      %1277 = vmatprep.subr.mxu0 0.0
      %1278 = vmatpush1.msra.mxu0 0.0
      %1279 = vmatprep.subr.mxu0 0.0
      %1280 = vmatpush1.msra.mxu0 0.0
      %1281 = vmatprep.subr.mxu0 0.0
      %1282 = vmatpush1.msra.mxu0 0.0
      %1283 = vmatprep.mubr.f32.mxu0 0.0
      %v1284 = vand.u32 %v478, 4294901760
      %1285 = vmatmul.mubr.f32.gmra.mrb[0].mxu0 %v1284
      %v1286 = vpop.f32.mrb[0].mxu0
      %v1287 = vadd.f32 %v1161, %v1286
      %v1288 = vpop.f32.mrb[0].mxu0
      %1289 = vmatprep.mubr.f32.mxu0 0.0
      %v1290 = vand.u32 %v481, 4294901760
      %1291 = vmatmul.mubr.f32.gmra.mrb[0].mxu0 %v1290
      %v1292 = vpop.f32.mrb[0].mxu0
      %v1293 = vadd.f32 %v1167, %v1292
      %v1294 = vpop.f32.mrb[0].mxu0
      %1295 = vmatprep.mubr.f32.mxu0 0.0
      %v1296 = vand.u32 %v484, 4294901760
      %1297 = vmatmul.mubr.f32.gmra.mrb[0].mxu0 %v1296
      %v1298 = vpop.f32.mrb[0].mxu0
      %v1299 = vadd.f32 %v1173, %v1298
      %v1300 = vpop.f32.mrb[0].mxu0
      %1301 = vmatprep.mubr.f32.mxu0 0.0
      %v1302 = vand.u32 %v487, 4294901760
      %1303 = vmatmul.mubr.f32.gmra.mrb[0].mxu0 %v1302
      %v1304 = vpop.f32.mrb[0].mxu0
      %v1305 = vadd.f32 %v1179, %v1304
      %v1306 = vpop.f32.mrb[0].mxu0
      %1307 = vmatprep.mubr.f32.mxu0 0.0
      %v1308 = vand.u32 %v490, 4294901760
      %1309 = vmatmul.mubr.f32.gmra.mrb[0].mxu0 %v1308
      %v1310 = vpop.f32.mrb[0].mxu0
      %v1311 = vadd.f32 %v1185, %v1310
      %v1312 = vpop.f32.mrb[0].mxu0
      %1313 = vmatprep.mubr.f32.mxu0 0.0
      %v1314 = vand.u32 %v493, 4294901760
      %1315 = vmatmul.mubr.f32.gmra.mrb[0].mxu0 %v1314
      %v1316 = vpop.f32.mrb[0].mxu0
      %v1317 = vadd.f32 %v1191, %v1316
      %v1318 = vpop.f32.mrb[0].mxu0
      %1319 = vmatprep.mubr.f32.mxu0 0.0
      %v1320 = vand.u32 %v496, 4294901760
      %1321 = vmatmul.mubr.f32.gmra.mrb[0].mxu0 %v1320
      %v1322 = vpop.f32.mrb[0].mxu0
      %v1323 = vadd.f32 %v1197, %v1322
      %v1324 = vpop.f32.mrb[0].mxu0
      %1325 = vmatprep.mubr.f32.mxu0 0.0
      %v1326 = vand.u32 %v499, 4294901760
      %1327 = vmatmul.mubr.f32.gmra.mrb[0].mxu0 %v1326
      %v1328 = vpop.f32.mrb[0].mxu0
      %v1329 = vadd.f32 %v1203, %v1328
      %v1330 = vpop.f32.mrb[0].mxu0
      %1331 = vmatprep.mubr.f32.mxu0 0.0
      %v1332 = vand.u32 %v502, 4294901760
      %1333 = vmatmul.mubr.f32.gmra.mrb[0].mxu0 %v1332
      %v1334 = vpop.f32.mrb[0].mxu0
      %v1335 = vadd.f32 %v1209, %v1334
      %v1336 = vpop.f32.mrb[0].mxu0
      %1337 = vmatprep.mubr.f32.mxu0 0.0
      %v1338 = vand.u32 %v505, 4294901760
      %1339 = vmatmul.mubr.f32.gmra.mrb[0].mxu0 %v1338
      %v1340 = vpop.f32.mrb[0].mxu0
      %v1341 = vadd.f32 %v1215, %v1340
      %v1342 = vpop.f32.mrb[0].mxu0
      %1343 = vdwg.mxu0
      %v1344 = vadd.f32 %v448, %v1287
      %v1345 = vadd.f32 %v449, %v1293
      %v1346 = vadd.f32 %v450, %v1299
      %v1347 = vadd.f32 %v451, %v1305
      %v1348 = vadd.f32 %v452, %v1311
      %v1349 = vadd.f32 %v453, %v1317
      %v1350 = vadd.f32 %v454, %v1323
      %v1351 = vadd.f32 %v455, %v1329
      %v1352 = vadd.f32 %v456, %v1335
      %v1353 = vadd.f32 %v457, %v1341
      %v1354 = vmax.f32 %v1344, 0.0
      %v1355 = vmax.f32 %v1345, 0.0
      %v1356 = vmax.f32 %v1346, 0.0
      %v1357 = vmax.f32 %v1347, 0.0
      %v1358 = vmax.f32 %v1348, 0.0
      %v1359 = vmax.f32 %v1349, 0.0
      %v1360 = vmax.f32 %v1350, 0.0
      %v1361 = vmax.f32 %v1351, 0.0
      %v1362 = vmax.f32 %v1352, 0.0
      %v1363 = vmax.f32 %v1353, 0.0
      %vm1364 = vcmask 64512
      %1365 = vst.msk [vmem:[%s379] sm:$0xff] %vm1364, %v1354
      %1366 = vst.msk [vmem:[%s379 + $0x8] sm:$0xff] %vm1364, %v1355
      %1367 = vst.msk [vmem:[%s379 + $0x10] sm:$0xff] %vm1364, %v1356
      %1368 = vst.msk [vmem:[%s379 + $0x18] sm:$0xff] %vm1364, %v1357
      %1369 = vst.msk [vmem:[%s379 + $0x20] sm:$0xff] %vm1364, %v1358
      %1370 = vst.msk [vmem:[%s379 + $0x28] sm:$0xff] %vm1364, %v1359
      %1371 = vst.msk [vmem:[%s379 + $0x30] sm:$0xff] %vm1364, %v1360
      %1372 = vst.msk [vmem:[%s379 + $0x38] sm:$0xff] %vm1364, %v1361
      %1373 = vst.msk [vmem:[%s379 + $0x40] sm:$0xff] %vm1364, %v1362
      %1374 = vst.msk [vmem:[%s379 + $0x48] sm:$0xff] %vm1364, %v1363
      %s1375 = smul.u32 10, %s24
      %p1376 = scmp.lt.s32.totalorder %s23, 1
      %s1377 = scalar_select %p1376, %s23, 1
      %p1378 = scmp.lt.s32.totalorder %s1375, 9
      %s1379 = scalar_select %p1378, %s1375, 9
      %s1380 = smul.addr %s1377, 10
      %s1381 = sadd.s32 %s1379, %s1380
      %s1382 = smul.addr %s1381, 8
      %s1383 = scalar_lea.vmem %s8, %s1382
      // Predicated region
      $region53: #{residual_forward.7} parent=51 // pred_check
        %p1384 = pneg %p233
      $region54: #{residual_forward.7} parent=51 // pred_check_branch
        %1386 = sbr.rel (%p1384) target = $region56
      $region55: #{residual_forward.7} parent=51 // pred_region
        %s1387 = smul.u32 10, %s24
      $region56: #{residual_forward.7} parent=51 // pred_fallthru
        _
    $region52: #{residual_forward.7} parent=5 // pred_fallthru
      _
    %p1388 = scmp.le.s32.totalorder 2, %s14
    // Predicated region
    $region57: #{residual_forward.7} parent=5 // pred_check
      %p1389 = pneg %p1388
    $region58: #{residual_forward.7} parent=5 // pred_check_branch
      %1391 = sbr.rel (%p1389) target = $region60
    $region59: #{residual_forward.7} parent=5 // pred_region
      %s1392 = ssub.s32 %s14, 2
      // Predicated region
      $region61: #{residual_forward.7} parent=59 // pred_check
        %p1393 = pneg %p239
      $region62: #{residual_forward.7} parent=59 // pred_check_branch
        %1395 = sbr.rel (%p1393) target = $region64
      $region63: #{residual_forward.7} parent=59 // pred_region
        %s1396 = smul.u32 10, %s26
        %p1397 = scmp.lt.s32.totalorder %s25, 1
        %s1398 = scalar_select %p1397, %s25, 1
        %p1399 = scmp.lt.s32.totalorder %s1396, 9
        %s1400 = scalar_select %p1399, %s1396, 9
        %s1401 = smul.addr %s1398, 10
        %s1402 = sadd.s32 %s1400, %s1401
        %s1403 = smul.addr %s1402, 8
        %s1404 = scalar_lea.vmem %s8, %s1403
      $region64: #{residual_forward.7} parent=59 // pred_fallthru
        _
    $region60: #{residual_forward.7} parent=5 // pred_fallthru
      _
  $region6: #{residual_forward.7} parent=0 // loop_footer
    %s18 = sadd.s32 1, %s14
  $region7: #{residual_forward.7} parent=0 // loop_footer_branch
    %13 = sbr.rel target = $region3
  $region8: #{residual_forward.7} parent=0 // loop_exit
    _

</llo_original>
